<compile_context>
chip_gen: v5e
topology: v5e:2x2
jax: 0.10.0
libtpu: 0.0.40
codegen_flags: <defaults>
</compile_context>

<pallas_src>
import functools

import jax
import jax.numpy as jnp
from jax.experimental import pallas as pl
from jax.experimental.pallas import tpu as pltpu

_BN_EPS = 1e-5
_VMEM_LIMIT = 32 * 1024 * 1024   # safe scoped-VMEM budget on v5e/v6e/v7x


def _round_up(x, m):
    return ((x + m - 1) // m) * m


def _choose_tm(M, K_total):
    """M-tile: big enough to amortize per-step overhead, small enough to
    double-buffer comfortably in VMEM on every TPU generation."""
    if M <= 512:
        return max(16, _round_up(M, 16))          # single block
    tm = (2 * 1024 * 1024) // max(1, 2 * K_total)  # ~2 MiB of bf16 patch rows
    tm = max(512, min(4096, (tm // 512) * 512))
    return tm


# -----------------------------------------------------------------------------
# Pallas kernels: fused  (patches @ W) + shift  [+ ReLU]
# (BN scale is pre-folded into W; accumulation and epilogue are f32.)
# -----------------------------------------------------------------------------
def _fused_matmul_kernel(x_ref, w_ref, shift_ref, o_ref, *, relu):
    acc = jnp.dot(x_ref[...], w_ref[...], preferred_element_type=jnp.float32)
    y = acc + shift_ref[...]
    if relu:
        y = jnp.maximum(y, 0.0)
    o_ref[...] = y.astype(o_ref.dtype)


def _fused_matmul2_kernel(xa_ref, xb_ref, wa_ref, wb_ref, shift_ref, o_ref, *,
                          relu):
    # Split-K variant used to fuse the decoder skip-connection concatenation.
    acc = jnp.dot(xa_ref[...], wa_ref[...], preferred_element_type=jnp.float32)
    acc = acc + jnp.dot(xb_ref[...], wb_ref[...],
                        preferred_element_type=jnp.float32)
    y = acc + shift_ref[...]
    if relu:
        y = jnp.maximum(y, 0.0)
    o_ref[...] = y.astype(o_ref.dtype)


def fused_matmul(x, w, shift, *, relu):
    """x:(M,K), w:(K,N), shift:(N,) -> (M,N) f32; bf16 MXU operands."""
    M, K = x.shape
    N = w.shape[1]
    TM = _choose_tm(M, K)
    Mp = _round_up(M, TM)
    xb = x.astype(jnp.bfloat16)
    if Mp != M:
        xb = jnp.pad(xb, ((0, Mp - M), (0, 0)))
    out = pl.pallas_call(
        functools.partial(_fused_matmul_kernel, relu=relu),
        out_shape=jax.ShapeDtypeStruct((Mp, N), jnp.float32),
        grid=(Mp // TM,),
        in_specs=[
            pl.BlockSpec((TM, K), lambda i: (i, 0)),
            pl.BlockSpec((K, N), lambda i: (0, 0)),
            pl.BlockSpec((1, N), lambda i: (0, 0)),
        ],
        out_specs=pl.BlockSpec((TM, N), lambda i: (i, 0)),
        compiler_params=pltpu.CompilerParams(
            dimension_semantics=("parallel",),
            vmem_limit_bytes=_VMEM_LIMIT),
    )(xb, w.astype(jnp.bfloat16), shift.reshape(1, N).astype(jnp.float32))
    return out[:M] if Mp != M else out


def fused_matmul2(xa, xb, wa, wb, shift, *, relu):
    """(xa@wa + xb@wb) + shift, optional ReLU.  Split-K, bf16 MXU operands."""
    M, Ka = xa.shape
    Kb = xb.shape[1]
    N = wa.shape[1]
    TM = _choose_tm(M, Ka + Kb)
    Mp = _round_up(M, TM)
    xa_b = xa.astype(jnp.bfloat16)
    xb_b = xb.astype(jnp.bfloat16)
    if Mp != M:
        pad = ((0, Mp - M), (0, 0))
        xa_b = jnp.pad(xa_b, pad)
        xb_b = jnp.pad(xb_b, pad)
    out = pl.pallas_call(
        functools.partial(_fused_matmul2_kernel, relu=relu),
        out_shape=jax.ShapeDtypeStruct((Mp, N), jnp.float32),
        grid=(Mp // TM,),
        in_specs=[
            pl.BlockSpec((TM, Ka), lambda i: (i, 0)),
            pl.BlockSpec((TM, Kb), lambda i: (i, 0)),
            pl.BlockSpec((Ka, N), lambda i: (0, 0)),
            pl.BlockSpec((Kb, N), lambda i: (0, 0)),
            pl.BlockSpec((1, N), lambda i: (0, 0)),
        ],
        out_specs=pl.BlockSpec((TM, N), lambda i: (i, 0)),
        compiler_params=pltpu.CompilerParams(
            dimension_semantics=("parallel",),
            vmem_limit_bytes=_VMEM_LIMIT),
    )(xa_b, xb_b, wa.astype(jnp.bfloat16), wb.astype(jnp.bfloat16),
      shift.reshape(1, N).astype(jnp.float32))
    return out[:M] if Mp != M else out


# -----------------------------------------------------------------------------
# Glue: im2col (bf16) and weight repacking with BN scale folded in
# -----------------------------------------------------------------------------
def _im2col_3x3(x_pad, H, W):
    # x_pad: (N, H+2, W+2, C) -> (N*H*W, 9*C); column order (dy, dx, c)
    N = x_pad.shape[0]
    C = x_pad.shape[-1]
    cols = [x_pad[:, dy:dy + H, dx:dx + W, :]
            for dy in range(3) for dx in range(3)]
    return jnp.concatenate(cols, axis=-1).reshape(N * H * W, 9 * C)


def _pack_w3x3(w_oihw, scale):
    # (Cout,Cin,3,3) -> (9*Cin, Cout), rows ordered (dy, dx, cin); scale folded.
    cout = w_oihw.shape[0]
    w = jnp.transpose(w_oihw, (2, 3, 1, 0)) * scale   # (3,3,Cin,Cout)
    return w.reshape(-1, cout)


def conv3x3_bn_relu(x, w_oihw, scale, shift, *, relu=True):
    """3x3 conv, stride 1, pad 1 (NHWC), fused BN/bias (+ReLU) in Pallas."""
    N, H, W, _ = x.shape
    Cout = w_oihw.shape[0]
    xp = jnp.pad(x.astype(jnp.bfloat16), ((0, 0), (1, 1), (1, 1), (0, 0)))
    patches = _im2col_3x3(xp, H, W)
    y = fused_matmul(patches, _pack_w3x3(w_oihw, scale), shift, relu=relu)
    return y.reshape(N, H, W, Cout)


def conv3x3_bn_relu_skip(xa, xb, w_oihw, scale, shift, *, relu=True):
    """3x3 conv over channel-concat([xa, xb]) WITHOUT materializing the concat:
    the K reduction is split across two bf16 matmuls inside one kernel."""
    N, H, W, Ca = xa.shape
    Cb = xb.shape[-1]
    Cout = w_oihw.shape[0]
    pa = _im2col_3x3(jnp.pad(xa.astype(jnp.bfloat16),
                             ((0, 0), (1, 1), (1, 1), (0, 0))), H, W)
    pb = _im2col_3x3(jnp.pad(xb.astype(jnp.bfloat16),
                             ((0, 0), (1, 1), (1, 1), (0, 0))), H, W)
    w = jnp.transpose(w_oihw, (2, 3, 1, 0)) * scale       # (3,3,Ca+Cb,Cout)
    wa = w[:, :, :Ca, :].reshape(9 * Ca, Cout)
    wb = w[:, :, Ca:, :].reshape(9 * Cb, Cout)
    y = fused_matmul2(pa, pb, wa, wb, shift, relu=relu)
    return y.reshape(N, H, W, Cout)


def conv_transpose3x3_s2(x, wt_iohw, bias):
    """ConvTranspose2d(k=3, s=2, p=1, op=1) via exact 4-phase (output-parity)
    decomposition: one tiny conv per parity, no zero-dilated input."""
    N, H, W, Cin = x.shape
    Cout = wt_iohw.shape[1]
    # Flipped kernel in (dy, dx, cin, cout) order: wf[dy,dx] = wt[:, :, 2-dy, 2-dx]
    wf = jnp.transpose(jnp.flip(wt_iohw, axis=(2, 3)), (2, 3, 0, 1))
    xb = x.astype(jnp.bfloat16)
    xe = jnp.pad(xb, ((0, 0), (0, 1), (0, 1), (0, 0)))     # zero row/col at end
    M = N * H * W
    x00 = xb.reshape(M, Cin)                                # x[i, j]
    x01 = xe[:, :H, 1:W + 1, :].reshape(M, Cin)             # x[i, j+1]
    x10 = xe[:, 1:H + 1, :W, :].reshape(M, Cin)             # x[i+1, j]
    x11 = xe[:, 1:H + 1, 1:W + 1, :].reshape(M, Cin)        # x[i+1, j+1]

    y_ee = fused_matmul(x00, wf[1, 1], bias, relu=False)
    y_eo = fused_matmul(jnp.concatenate([x00, x01], axis=1),
                        jnp.concatenate([wf[1, 0], wf[1, 2]], axis=0),
                        bias, relu=False)
    y_oe = fused_matmul(jnp.concatenate([x00, x10], axis=1),
                        jnp.concatenate([wf[0, 1], wf[2, 1]], axis=0),
                        bias, relu=False)
    y_oo = fused_matmul(
        jnp.concatenate([x00, x01, x10, x11], axis=1),
        jnp.concatenate([wf[0, 0], wf[0, 2], wf[2, 0], wf[2, 2]], axis=0),
        bias, relu=False)

    def r(t):
        return t.reshape(N, H, W, Cout)
    even_rows = jnp.stack([r(y_ee), r(y_eo)], axis=3)       # (N,H,W,2,Cout)
    odd_rows = jnp.stack([r(y_oe), r(y_oo)], axis=3)
    y = jnp.stack([even_rows, odd_rows], axis=2)            # (N,H,2,W,2,Cout)
    return y.reshape(N, 2 * H, 2 * W, Cout)


def conv1x1(x, w_oihw, bias):
    N, H, W, Cin = x.shape
    Cout = w_oihw.shape[0]
    wmat = w_oihw.reshape(Cout, Cin).T                      # (Cin, Cout)
    y = fused_matmul(x.reshape(N * H * W, Cin), wmat, bias, relu=False)
    return y.reshape(N, H, W, Cout)


def maxpool2(x):
    # MaxPool2d(kernel=2, stride=2);  Dropout2d -> identity (eval mode)
    N, H, W, C = x.shape
    return x.reshape(N, H // 2, 2, W // 2, 2, C).max(axis=(2, 4))


def double_conv(p, x):
    x = conv3x3_bn_relu(x, p["w1"], p["scale1"], p["shift1"], relu=True)
    x = conv3x3_bn_relu(x, p["w2"], p["scale2"], p["shift2"], relu=True)
    return x


def double_conv_skip(p, x_up, x_skip):
    # First conv consumes [x_up, x_skip] channel-wise via split-K (no concat).
    x = conv3x3_bn_relu_skip(x_up, x_skip, p["w1"], p["scale1"], p["shift1"],
                             relu=True)
    x = conv3x3_bn_relu(x, p["w2"], p["scale2"], p["shift2"], relu=True)
    return x


# -----------------------------------------------------------------------------
# Parameter initialization (deterministic, PyTorch-default-style uniform)
# -----------------------------------------------------------------------------
def _init_conv(key, cout, cin, k):
    bound = 1.0 / jnp.sqrt(cin * k * k)
    kw, kb = jax.random.split(key)
    w = jax.random.uniform(kw, (cout, cin, k, k), jnp.float32, -bound, bound)
    b = jax.random.uniform(kb, (cout,), jnp.float32, -bound, bound)
    return w, b


def _init_double_conv(key, cin, cout):
    k1, k2 = jax.random.split(key)
    w1, b1 = _init_conv(k1, cout, cin, 3)
    w2, b2 = _init_conv(k2, cout, cout, 3)
    gamma = jnp.ones((cout,), jnp.float32)
    beta = jnp.zeros((cout,), jnp.float32)
    mean = jnp.zeros((cout,), jnp.float32)
    var = jnp.ones((cout,), jnp.float32)
    scale = gamma / jnp.sqrt(var + _BN_EPS)
    # fold conv bias + BN:  y = (xW) * scale + ((b - mean) * scale + beta)
    return {
        "w1": w1, "scale1": scale, "shift1": (b1 - mean) * scale + beta,
        "w2": w2, "scale2": scale, "shift2": (b2 - mean) * scale + beta,
    }


def _init_convtranspose(key, cin, cout, k):
    bound = 1.0 / jnp.sqrt(cin * k * k)
    kw, kb = jax.random.split(key)
    w = jax.random.uniform(kw, (cin, cout, k, k), jnp.float32, -bound, bound)
    b = jax.random.uniform(kb, (cout,), jnp.float32, -bound, bound)
    return {"w": w, "b": b}


def init_unet2d_params(key, in_channels, out_channels):
    keys = jax.random.split(key, 11)
    params = {
        "enc1": _init_double_conv(keys[0], in_channels, 16),
        "enc2": _init_double_conv(keys[1], 16, 32),
        "enc3": _init_double_conv(keys[2], 32, 64),
        "bottleneck": _init_double_conv(keys[3], 64, 128),
        "dec1": _init_double_conv(keys[4], 128, 64),
        "dec2": _init_double_conv(keys[5], 64, 32),
        "dec3": _init_double_conv(keys[6], 32, 16),
        "up1": _init_convtranspose(keys[7], 128, 64, 3),
        "up2": _init_convtranspose(keys[8], 64, 32, 3),
        "up3": _init_convtranspose(keys[9], 32, 16, 3),
    }
    wf, bf = _init_conv(keys[10], out_channels, 16, 1)
    params["final"] = {"w": wf, "b": bf}
    return params


# -----------------------------------------------------------------------------
# Forward pass (mirrors UNet2D.forward)
# -----------------------------------------------------------------------------
def unet2d_forward(params, x_nchw):
    x = jnp.transpose(x_nchw, (0, 2, 3, 1)).astype(jnp.float32)   # NCHW -> NHWC

    x0 = double_conv(params["enc1"], x)
    x1 = maxpool2(x0)
    x2 = double_conv(params["enc2"], x1)
    x3 = maxpool2(x2)
    x4 = double_conv(params["enc3"], x3)
    x5 = maxpool2(x4)
    x6 = double_conv(params["bottleneck"], x5)

    x7 = conv_transpose3x3_s2(x6, params["up1"]["w"], params["up1"]["b"])
    x8 = double_conv_skip(params["dec1"], x7, x4)
    x9 = conv_transpose3x3_s2(x8, params["up2"]["w"], params["up2"]["b"])
    x10 = double_conv_skip(params["dec2"], x9, x2)
    x11 = conv_transpose3x3_s2(x10, params["up3"]["w"], params["up3"]["b"])
    x12 = double_conv_skip(params["dec3"], x11, x0)

    out = conv1x1(x12, params["final"]["w"], params["final"]["b"])
    return jnp.transpose(out, (0, 3, 1, 2))                       # NHWC -> NCHW


if __name__ == "__main__":
    in_channels, out_channels = 4, 3
    key = jax.random.PRNGKey(0)
    kx, kp = jax.random.split(key)

    x = jax.random.normal(kx, (2, in_channels, 16, 16), jnp.float32)  # NCHW
    params = init_unet2d_params(kp, in_channels, out_channels)

    fwd = jax.jit(unet2d_forward)
    y = fwd(params, x)
    y = jax.block_until_ready(y)

    assert y.shape == (2, out_channels, 16, 16), y.shape
    assert bool(jnp.all(jnp.isfinite(y)))
    print("KERNEL_OK")
</pallas_src>

<mosaic_0001>
module attributes {stable_mosaic.version = 11 : i64} {
  func.func @_fused_matmul_kernel(%arg0: i32, %arg1: memref<512x36xbf16, #tpu.memory_space<vmem>>, %arg2: memref<36x16xbf16, #tpu.memory_space<vmem>>, %arg3: memref<1x16xf32, #tpu.memory_space<vmem>>, %arg4: memref<512x16xf32, #tpu.memory_space<vmem>>) attributes {dimension_semantics = [#tpu.dimension_semantics<parallel>], iteration_bounds = array<i64: 1>, scalar_prefetch = 0 : i64, scratch_operands = 0 : i64, tpu.core_type = #tpu.core_type<tc>, window_params = [{transform_indices = @transform_0, window_bounds = array<i64: 512, 36>}, {pipeline_mode = #tpu.pipeline_mode<synchronous>, transform_indices = @transform_1, window_bounds = array<i64: 36, 16>}, {pipeline_mode = #tpu.pipeline_mode<synchronous>, transform_indices = @transform_2, window_bounds = array<i64: 1, 16>}, {transform_indices = @transform_3, window_bounds = array<i64: 512, 16>}]} {
    %c0 = arith.constant 0 : index
    %c0_0 = arith.constant 0 : index
    %0 = vector.load %arg1[%c0, %c0_0] : memref<512x36xbf16, #tpu.memory_space<vmem>>, vector<512x36xbf16>
    %c0_1 = arith.constant 0 : index
    %c0_2 = arith.constant 0 : index
    %1 = vector.load %arg2[%c0_1, %c0_2] : memref<36x16xbf16, #tpu.memory_space<vmem>>, vector<36x16xbf16>
    %cst = arith.constant dense<0.000000e+00> : vector<512x16xf32>
    %2 = tpu.matmul %0, %1, %cst {dimension_numbers = #tpu.dot_dimension_numbers<[1], [0], [0], [1], [0, 0, 1, 1], [], []>} : vector<512x36xbf16>, vector<36x16xbf16>, vector<512x16xf32> -> vector<512x16xf32>
    %c0_3 = arith.constant 0 : index
    %c0_4 = arith.constant 0 : index
    %3 = vector.load %arg3[%c0_3, %c0_4] : memref<1x16xf32, #tpu.memory_space<vmem>>, vector<1x16xf32>
    %4 = vector.broadcast %3 : vector<1x16xf32> to vector<512x16xf32>
    %5 = arith.addf %2, %4 : vector<512x16xf32>
    %cst_5 = arith.constant 0.000000e+00 : f32
    %6 = vector.broadcast %cst_5 : f32 to vector<512x16xf32>
    %7 = arith.maximumf %5, %6 : vector<512x16xf32>
    %c0_6 = arith.constant 0 : index
    %c0_7 = arith.constant 0 : index
    %8 = vector.load %arg4[%c0_6, %c0_7] : memref<512x16xf32, #tpu.memory_space<vmem>>, vector<512x16xf32>
    tpu.vector_store %arg4[%c0_6, %c0_7], %7 {strides = array<i32>} : memref<512x16xf32, #tpu.memory_space<vmem>>, vector<512x16xf32>,
    return
  }
  func.func @transform_0(%arg0: i32) -> (i32, i32) {
    %c0_i32 = arith.constant 0 : i32
    %c0_i32_0 = arith.constant 0 : i32
    return %arg0, %c0_i32 : i32, i32
  }
  func.func @transform_1(%arg0: i32) -> (i32, i32) {
    %c0_i32 = arith.constant 0 : i32
    %c0_i32_0 = arith.constant 0 : i32
    %c0_i32_1 = arith.constant 0 : i32
    return %c0_i32, %c0_i32_0 : i32, i32
  }
  func.func @transform_2(%arg0: i32) -> (i32, i32) {
    %c0_i32 = arith.constant 0 : i32
    %c0_i32_0 = arith.constant 0 : i32
    %c0_i32_1 = arith.constant 0 : i32
    return %c0_i32, %c0_i32_0 : i32, i32
  }
  func.func @transform_3(%arg0: i32) -> (i32, i32) {
    %c0_i32 = arith.constant 0 : i32
    %c0_i32_0 = arith.constant 0 : i32
    return %arg0, %c0_i32 : i32, i32
  }
}

module attributes {stable_mosaic.version = 11 : i64} {
  func.func @_fused_matmul_kernel(%arg0: i32, %arg1: memref<512x144xbf16, #tpu.memory_space<vmem>>, %arg2: memref<144x16xbf16, #tpu.memory_space<vmem>>, %arg3: memref<1x16xf32, #tpu.memory_space<vmem>>, %arg4: memref<512x16xf32, #tpu.memory_space<vmem>>) attributes {dimension_semantics = [#tpu.dimension_semantics<parallel>], iteration_bounds = array<i64: 1>, scalar_prefetch = 0 : i64, scratch_operands = 0 : i64, tpu.core_type = #tpu.core_type<tc>, window_params = [{transform_indices = @transform_0, window_bounds = array<i64: 512, 144>}, {pipeline_mode = #tpu.pipeline_mode<synchronous>, transform_indices = @transform_1, window_bounds = array<i64: 144, 16>}, {pipeline_mode = #tpu.pipeline_mode<synchronous>, transform_indices = @transform_2, window_bounds = array<i64: 1, 16>}, {transform_indices = @transform_3, window_bounds = array<i64: 512, 16>}]} {
    %c0 = arith.constant 0 : index
    %c0_0 = arith.constant 0 : index
    %0 = vector.load %arg1[%c0, %c0_0] : memref<512x144xbf16, #tpu.memory_space<vmem>>, vector<512x144xbf16>
    %c0_1 = arith.constant 0 : index
    %c0_2 = arith.constant 0 : index
    %1 = vector.load %arg2[%c0_1, %c0_2] : memref<144x16xbf16, #tpu.memory_space<vmem>>, vector<144x16xbf16>
    %cst = arith.constant dense<0.000000e+00> : vector<512x16xf32>
    %2 = tpu.matmul %0, %1, %cst {dimension_numbers = #tpu.dot_dimension_numbers<[1], [0], [0], [1], [0, 0, 1, 1], [], []>} : vector<512x144xbf16>, vector<144x16xbf16>, vector<512x16xf32> -> vector<512x16xf32>
    %c0_3 = arith.constant 0 : index
    %c0_4 = arith.constant 0 : index
    %3 = vector.load %arg3[%c0_3, %c0_4] : memref<1x16xf32, #tpu.memory_space<vmem>>, vector<1x16xf32>
    %4 = vector.broadcast %3 : vector<1x16xf32> to vector<512x16xf32>
    %5 = arith.addf %2, %4 : vector<512x16xf32>
    %cst_5 = arith.constant 0.000000e+00 : f32
    %6 = vector.broadcast %cst_5 : f32 to vector<512x16xf32>
    %7 = arith.maximumf %5, %6 : vector<512x16xf32>
    %c0_6 = arith.constant 0 : index
    %c0_7 = arith.constant 0 : index
    %8 = vector.load %arg4[%c0_6, %c0_7] : memref<512x16xf32, #tpu.memory_space<vmem>>, vector<512x16xf32>
    tpu.vector_store %arg4[%c0_6, %c0_7], %7 {strides = array<i32>} : memref<512x16xf32, #tpu.memory_space<vmem>>, vector<512x16xf32>,
    return
  }
  func.func @transform_0(%arg0: i32) -> (i32, i32) {
    %c0_i32 = arith.constant 0 : i32
    %c0_i32_0 = arith.constant 0 : i32
    return %arg0, %c0_i32 : i32, i32
  }
  func.func @transform_1(%arg0: i32) -> (i32, i32) {
    %c0_i32 = arith.constant 0 : i32
    %c0_i32_0 = arith.constant 0 : i32
    %c0_i32_1 = arith.constant 0 : i32
    return %c0_i32, %c0_i32_0 : i32, i32
  }
  func.func @transform_2(%arg0: i32) -> (i32, i32) {
    %c0_i32 = arith.constant 0 : i32
    %c0_i32_0 = arith.constant 0 : i32
    %c0_i32_1 = arith.constant 0 : i32
    return %c0_i32, %c0_i32_0 : i32, i32
  }
  func.func @transform_3(%arg0: i32) -> (i32, i32) {
    %c0_i32 = arith.constant 0 : i32
    %c0_i32_0 = arith.constant 0 : i32
    return %arg0, %c0_i32 : i32, i32
  }
}

module attributes {stable_mosaic.version = 11 : i64} {
  func.func @_fused_matmul_kernel(%arg0: i32, %arg1: memref<128x144xbf16, #tpu.memory_space<vmem>>, %arg2: memref<144x32xbf16, #tpu.memory_space<vmem>>, %arg3: memref<1x32xf32, #tpu.memory_space<vmem>>, %arg4: memref<128x32xf32, #tpu.memory_space<vmem>>) attributes {dimension_semantics = [#tpu.dimension_semantics<parallel>], iteration_bounds = array<i64: 1>, scalar_prefetch = 0 : i64, scratch_operands = 0 : i64, tpu.core_type = #tpu.core_type<tc>, window_params = [{transform_indices = @transform_0, window_bounds = array<i64: 128, 144>}, {pipeline_mode = #tpu.pipeline_mode<synchronous>, transform_indices = @transform_1, window_bounds = array<i64: 144, 32>}, {pipeline_mode = #tpu.pipeline_mode<synchronous>, transform_indices = @transform_2, window_bounds = array<i64: 1, 32>}, {transform_indices = @transform_3, window_bounds = array<i64: 128, 32>}]} {
    %c0 = arith.constant 0 : index
    %c0_0 = arith.constant 0 : index
    %0 = vector.load %arg1[%c0, %c0_0] : memref<128x144xbf16, #tpu.memory_space<vmem>>, vector<128x144xbf16>
    %c0_1 = arith.constant 0 : index
    %c0_2 = arith.constant 0 : index
    %1 = vector.load %arg2[%c0_1, %c0_2] : memref<144x32xbf16, #tpu.memory_space<vmem>>, vector<144x32xbf16>
    %cst = arith.constant dense<0.000000e+00> : vector<128x32xf32>
    %2 = tpu.matmul %0, %1, %cst {dimension_numbers = #tpu.dot_dimension_numbers<[1], [0], [0], [1], [0, 0, 1, 1], [], []>} : vector<128x144xbf16>, vector<144x32xbf16>, vector<128x32xf32> -> vector<128x32xf32>
    %c0_3 = arith.constant 0 : index
    %c0_4 = arith.constant 0 : index
    %3 = vector.load %arg3[%c0_3, %c0_4] : memref<1x32xf32, #tpu.memory_space<vmem>>, vector<1x32xf32>
    %4 = vector.broadcast %3 : vector<1x32xf32> to vector<128x32xf32>
    %5 = arith.addf %2, %4 : vector<128x32xf32>
    %cst_5 = arith.constant 0.000000e+00 : f32
    %6 = vector.broadcast %cst_5 : f32 to vector<128x32xf32>
    %7 = arith.maximumf %5, %6 : vector<128x32xf32>
    %c0_6 = arith.constant 0 : index
    %c0_7 = arith.constant 0 : index
    %8 = vector.load %arg4[%c0_6, %c0_7] : memref<128x32xf32, #tpu.memory_space<vmem>>, vector<128x32xf32>
    tpu.vector_store %arg4[%c0_6, %c0_7], %7 {strides = array<i32>} : memref<128x32xf32, #tpu.memory_space<vmem>>, vector<128x32xf32>,
    return
  }
  func.func @transform_0(%arg0: i32) -> (i32, i32) {
    %c0_i32 = arith.constant 0 : i32
    %c0_i32_0 = arith.constant 0 : i32
    return %arg0, %c0_i32 : i32, i32
  }
  func.func @transform_1(%arg0: i32) -> (i32, i32) {
    %c0_i32 = arith.constant 0 : i32
    %c0_i32_0 = arith.constant 0 : i32
    %c0_i32_1 = arith.constant 0 : i32
    return %c0_i32, %c0_i32_0 : i32, i32
  }
  func.func @transform_2(%arg0: i32) -> (i32, i32) {
    %c0_i32 = arith.constant 0 : i32
    %c0_i32_0 = arith.constant 0 : i32
    %c0_i32_1 = arith.constant 0 : i32
    return %c0_i32, %c0_i32_0 : i32, i32
  }
  func.func @transform_3(%arg0: i32) -> (i32, i32) {
    %c0_i32 = arith.constant 0 : i32
    %c0_i32_0 = arith.constant 0 : i32
    return %arg0, %c0_i32 : i32, i32
  }
}

module attributes {stable_mosaic.version = 11 : i64} {
  func.func @_fused_matmul_kernel(%arg0: i32, %arg1: memref<128x288xbf16, #tpu.memory_space<vmem>>, %arg2: memref<288x32xbf16, #tpu.memory_space<vmem>>, %arg3: memref<1x32xf32, #tpu.memory_space<vmem>>, %arg4: memref<128x32xf32, #tpu.memory_space<vmem>>) attributes {dimension_semantics = [#tpu.dimension_semantics<parallel>], iteration_bounds = array<i64: 1>, scalar_prefetch = 0 : i64, scratch_operands = 0 : i64, tpu.core_type = #tpu.core_type<tc>, window_params = [{transform_indices = @transform_0, window_bounds = array<i64: 128, 288>}, {pipeline_mode = #tpu.pipeline_mode<synchronous>, transform_indices = @transform_1, window_bounds = array<i64: 288, 32>}, {pipeline_mode = #tpu.pipeline_mode<synchronous>, transform_indices = @transform_2, window_bounds = array<i64: 1, 32>}, {transform_indices = @transform_3, window_bounds = array<i64: 128, 32>}]} {
    %c0 = arith.constant 0 : index
    %c0_0 = arith.constant 0 : index
    %0 = vector.load %arg1[%c0, %c0_0] : memref<128x288xbf16, #tpu.memory_space<vmem>>, vector<128x288xbf16>
    %c0_1 = arith.constant 0 : index
    %c0_2 = arith.constant 0 : index
    %1 = vector.load %arg2[%c0_1, %c0_2] : memref<288x32xbf16, #tpu.memory_space<vmem>>, vector<288x32xbf16>
    %cst = arith.constant dense<0.000000e+00> : vector<128x32xf32>
    %2 = tpu.matmul %0, %1, %cst {dimension_numbers = #tpu.dot_dimension_numbers<[1], [0], [0], [1], [0, 0, 1, 1], [], []>} : vector<128x288xbf16>, vector<288x32xbf16>, vector<128x32xf32> -> vector<128x32xf32>
    %c0_3 = arith.constant 0 : index
    %c0_4 = arith.constant 0 : index
    %3 = vector.load %arg3[%c0_3, %c0_4] : memref<1x32xf32, #tpu.memory_space<vmem>>, vector<1x32xf32>
    %4 = vector.broadcast %3 : vector<1x32xf32> to vector<128x32xf32>
    %5 = arith.addf %2, %4 : vector<128x32xf32>
    %cst_5 = arith.constant 0.000000e+00 : f32
    %6 = vector.broadcast %cst_5 : f32 to vector<128x32xf32>
    %7 = arith.maximumf %5, %6 : vector<128x32xf32>
    %c0_6 = arith.constant 0 : index
    %c0_7 = arith.constant 0 : index
    %8 = vector.load %arg4[%c0_6, %c0_7] : memref<128x32xf32, #tpu.memory_space<vmem>>, vector<128x32xf32>
    tpu.vector_store %arg4[%c0_6, %c0_7], %7 {strides = array<i32>} : memref<128x32xf32, #tpu.memory_space<vmem>>, vector<128x32xf32>,
    return
  }
  func.func @transform_0(%arg0: i32) -> (i32, i32) {
    %c0_i32 = arith.constant 0 : i32
    %c0_i32_0 = arith.constant 0 : i32
    return %arg0, %c0_i32 : i32, i32
  }
  func.func @transform_1(%arg0: i32) -> (i32, i32) {
    %c0_i32 = arith.constant 0 : i32
    %c0_i32_0 = arith.constant 0 : i32
    %c0_i32_1 = arith.constant 0 : i32
    return %c0_i32, %c0_i32_0 : i32, i32
  }
  func.func @transform_2(%arg0: i32) -> (i32, i32) {
    %c0_i32 = arith.constant 0 : i32
    %c0_i32_0 = arith.constant 0 : i32
    %c0_i32_1 = arith.constant 0 : i32
    return %c0_i32, %c0_i32_0 : i32, i32
  }
  func.func @transform_3(%arg0: i32) -> (i32, i32) {
    %c0_i32 = arith.constant 0 : i32
    %c0_i32_0 = arith.constant 0 : i32
    return %arg0, %c0_i32 : i32, i32
  }
}

module attributes {stable_mosaic.version = 11 : i64} {
  func.func @_fused_matmul_kernel(%arg0: i32, %arg1: memref<32x288xbf16, #tpu.memory_space<vmem>>, %arg2: memref<288x64xbf16, #tpu.memory_space<vmem>>, %arg3: memref<1x64xf32, #tpu.memory_space<vmem>>, %arg4: memref<32x64xf32, #tpu.memory_space<vmem>>) attributes {dimension_semantics = [#tpu.dimension_semantics<parallel>], iteration_bounds = array<i64: 1>, scalar_prefetch = 0 : i64, scratch_operands = 0 : i64, tpu.core_type = #tpu.core_type<tc>, window_params = [{transform_indices = @transform_0, window_bounds = array<i64: 32, 288>}, {pipeline_mode = #tpu.pipeline_mode<synchronous>, transform_indices = @transform_1, window_bounds = array<i64: 288, 64>}, {pipeline_mode = #tpu.pipeline_mode<synchronous>, transform_indices = @transform_2, window_bounds = array<i64: 1, 64>}, {transform_indices = @transform_3, window_bounds = array<i64: 32, 64>}]} {
    %c0 = arith.constant 0 : index
    %c0_0 = arith.constant 0 : index
    %0 = vector.load %arg1[%c0, %c0_0] : memref<32x288xbf16, #tpu.memory_space<vmem>>, vector<32x288xbf16>
    %c0_1 = arith.constant 0 : index
    %c0_2 = arith.constant 0 : index
    %1 = vector.load %arg2[%c0_1, %c0_2] : memref<288x64xbf16, #tpu.memory_space<vmem>>, vector<288x64xbf16>
    %cst = arith.constant dense<0.000000e+00> : vector<32x64xf32>
    %2 = tpu.matmul %0, %1, %cst {dimension_numbers = #tpu.dot_dimension_numbers<[1], [0], [0], [1], [0, 0, 1, 1], [], []>} : vector<32x288xbf16>, vector<288x64xbf16>, vector<32x64xf32> -> vector<32x64xf32>
    %c0_3 = arith.constant 0 : index
    %c0_4 = arith.constant 0 : index
    %3 = vector.load %arg3[%c0_3, %c0_4] : memref<1x64xf32, #tpu.memory_space<vmem>>, vector<1x64xf32>
    %4 = vector.broadcast %3 : vector<1x64xf32> to vector<32x64xf32>
    %5 = arith.addf %2, %4 : vector<32x64xf32>
    %cst_5 = arith.constant 0.000000e+00 : f32
    %6 = vector.broadcast %cst_5 : f32 to vector<32x64xf32>
    %7 = arith.maximumf %5, %6 : vector<32x64xf32>
    %c0_6 = arith.constant 0 : index
    %c0_7 = arith.constant 0 : index
    %8 = vector.load %arg4[%c0_6, %c0_7] : memref<32x64xf32, #tpu.memory_space<vmem>>, vector<32x64xf32>
    tpu.vector_store %arg4[%c0_6, %c0_7], %7 {strides = array<i32>} : memref<32x64xf32, #tpu.memory_space<vmem>>, vector<32x64xf32>,
    return
  }
  func.func @transform_0(%arg0: i32) -> (i32, i32) {
    %c0_i32 = arith.constant 0 : i32
    %c0_i32_0 = arith.constant 0 : i32
    return %arg0, %c0_i32 : i32, i32
  }
  func.func @transform_1(%arg0: i32) -> (i32, i32) {
    %c0_i32 = arith.constant 0 : i32
    %c0_i32_0 = arith.constant 0 : i32
    %c0_i32_1 = arith.constant 0 : i32
    return %c0_i32, %c0_i32_0 : i32, i32
  }
  func.func @transform_2(%arg0: i32) -> (i32, i32) {
    %c0_i32 = arith.constant 0 : i32
    %c0_i32_0 = arith.constant 0 : i32
    %c0_i32_1 = arith.constant 0 : i32
    return %c0_i32, %c0_i32_0 : i32, i32
  }
  func.func @transform_3(%arg0: i32) -> (i32, i32) {
    %c0_i32 = arith.constant 0 : i32
    %c0_i32_0 = arith.constant 0 : i32
    return %arg0, %c0_i32 : i32, i32
  }
}

module attributes {stable_mosaic.version = 11 : i64} {
  func.func @_fused_matmul_kernel(%arg0: i32, %arg1: memref<32x576xbf16, #tpu.memory_space<vmem>>, %arg2: memref<576x64xbf16, #tpu.memory_space<vmem>>, %arg3: memref<1x64xf32, #tpu.memory_space<vmem>>, %arg4: memref<32x64xf32, #tpu.memory_space<vmem>>) attributes {dimension_semantics = [#tpu.dimension_semantics<parallel>], iteration_bounds = array<i64: 1>, scalar_prefetch = 0 : i64, scratch_operands = 0 : i64, tpu.core_type = #tpu.core_type<tc>, window_params = [{transform_indices = @transform_0, window_bounds = array<i64: 32, 576>}, {pipeline_mode = #tpu.pipeline_mode<synchronous>, transform_indices = @transform_1, window_bounds = array<i64: 576, 64>}, {pipeline_mode = #tpu.pipeline_mode<synchronous>, transform_indices = @transform_2, window_bounds = array<i64: 1, 64>}, {transform_indices = @transform_3, window_bounds = array<i64: 32, 64>}]} {
    %c0 = arith.constant 0 : index
    %c0_0 = arith.constant 0 : index
    %0 = vector.load %arg1[%c0, %c0_0] : memref<32x576xbf16, #tpu.memory_space<vmem>>, vector<32x576xbf16>
    %c0_1 = arith.constant 0 : index
    %c0_2 = arith.constant 0 : index
    %1 = vector.load %arg2[%c0_1, %c0_2] : memref<576x64xbf16, #tpu.memory_space<vmem>>, vector<576x64xbf16>
    %cst = arith.constant dense<0.000000e+00> : vector<32x64xf32>
    %2 = tpu.matmul %0, %1, %cst {dimension_numbers = #tpu.dot_dimension_numbers<[1], [0], [0], [1], [0, 0, 1, 1], [], []>} : vector<32x576xbf16>, vector<576x64xbf16>, vector<32x64xf32> -> vector<32x64xf32>
    %c0_3 = arith.constant 0 : index
    %c0_4 = arith.constant 0 : index
    %3 = vector.load %arg3[%c0_3, %c0_4] : memref<1x64xf32, #tpu.memory_space<vmem>>, vector<1x64xf32>
    %4 = vector.broadcast %3 : vector<1x64xf32> to vector<32x64xf32>
    %5 = arith.addf %2, %4 : vector<32x64xf32>
    %cst_5 = arith.constant 0.000000e+00 : f32
    %6 = vector.broadcast %cst_5 : f32 to vector<32x64xf32>
    %7 = arith.maximumf %5, %6 : vector<32x64xf32>
    %c0_6 = arith.constant 0 : index
    %c0_7 = arith.constant 0 : index
    %8 = vector.load %arg4[%c0_6, %c0_7] : memref<32x64xf32, #tpu.memory_space<vmem>>, vector<32x64xf32>
    tpu.vector_store %arg4[%c0_6, %c0_7], %7 {strides = array<i32>} : memref<32x64xf32, #tpu.memory_space<vmem>>, vector<32x64xf32>,
    return
  }
  func.func @transform_0(%arg0: i32) -> (i32, i32) {
    %c0_i32 = arith.constant 0 : i32
    %c0_i32_0 = arith.constant 0 : i32
    return %arg0, %c0_i32 : i32, i32
  }
  func.func @transform_1(%arg0: i32) -> (i32, i32) {
    %c0_i32 = arith.constant 0 : i32
    %c0_i32_0 = arith.constant 0 : i32
    %c0_i32_1 = arith.constant 0 : i32
    return %c0_i32, %c0_i32_0 : i32, i32
  }
  func.func @transform_2(%arg0: i32) -> (i32, i32) {
    %c0_i32 = arith.constant 0 : i32
    %c0_i32_0 = arith.constant 0 : i32
    %c0_i32_1 = arith.constant 0 : i32
    return %c0_i32, %c0_i32_0 : i32, i32
  }
  func.func @transform_3(%arg0: i32) -> (i32, i32) {
    %c0_i32 = arith.constant 0 : i32
    %c0_i32_0 = arith.constant 0 : i32
    return %arg0, %c0_i32 : i32, i32
  }
}

module attributes {stable_mosaic.version = 11 : i64} {
  func.func @_fused_matmul_kernel(%arg0: i32, %arg1: memref<16x576xbf16, #tpu.memory_space<vmem>>, %arg2: memref<576x128xbf16, #tpu.memory_space<vmem>>, %arg3: memref<1x128xf32, #tpu.memory_space<vmem>>, %arg4: memref<16x128xf32, #tpu.memory_space<vmem>>) attributes {dimension_semantics = [#tpu.dimension_semantics<parallel>], iteration_bounds = array<i64: 1>, scalar_prefetch = 0 : i64, scratch_operands = 0 : i64, tpu.core_type = #tpu.core_type<tc>, window_params = [{transform_indices = @transform_0, window_bounds = array<i64: 16, 576>}, {pipeline_mode = #tpu.pipeline_mode<synchronous>, transform_indices = @transform_1, window_bounds = array<i64: 576, 128>}, {pipeline_mode = #tpu.pipeline_mode<synchronous>, transform_indices = @transform_2, window_bounds = array<i64: 1, 128>}, {transform_indices = @transform_3, window_bounds = array<i64: 16, 128>}]} {
    %c0 = arith.constant 0 : index
    %c0_0 = arith.constant 0 : index
    %0 = vector.load %arg1[%c0, %c0_0] : memref<16x576xbf16, #tpu.memory_space<vmem>>, vector<16x576xbf16>
    %c0_1 = arith.constant 0 : index
    %c0_2 = arith.constant 0 : index
    %1 = vector.load %arg2[%c0_1, %c0_2] : memref<576x128xbf16, #tpu.memory_space<vmem>>, vector<576x128xbf16>
    %cst = arith.constant dense<0.000000e+00> : vector<16x128xf32>
    %2 = tpu.matmul %0, %1, %cst {dimension_numbers = #tpu.dot_dimension_numbers<[1], [0], [0], [1], [0, 0, 1, 1], [], []>} : vector<16x576xbf16>, vector<576x128xbf16>, vector<16x128xf32> -> vector<16x128xf32>
    %c0_3 = arith.constant 0 : index
    %c0_4 = arith.constant 0 : index
    %3 = vector.load %arg3[%c0_3, %c0_4] : memref<1x128xf32, #tpu.memory_space<vmem>>, vector<1x128xf32>
    %4 = vector.broadcast %3 : vector<1x128xf32> to vector<16x128xf32>
    %5 = arith.addf %2, %4 : vector<16x128xf32>
    %cst_5 = arith.constant 0.000000e+00 : f32
    %6 = vector.broadcast %cst_5 : f32 to vector<16x128xf32>
    %7 = arith.maximumf %5, %6 : vector<16x128xf32>
    %c0_6 = arith.constant 0 : index
    %c0_7 = arith.constant 0 : index
    %8 = vector.load %arg4[%c0_6, %c0_7] : memref<16x128xf32, #tpu.memory_space<vmem>>, vector<16x128xf32>
    tpu.vector_store %arg4[%c0_6, %c0_7], %7 {strides = array<i32>} : memref<16x128xf32, #tpu.memory_space<vmem>>, vector<16x128xf32>,
    return
  }
  func.func @transform_0(%arg0: i32) -> (i32, i32) {
    %c0_i32 = arith.constant 0 : i32
    %c0_i32_0 = arith.constant 0 : i32
    return %arg0, %c0_i32 : i32, i32
  }
  func.func @transform_1(%arg0: i32) -> (i32, i32) {
    %c0_i32 = arith.constant 0 : i32
    %c0_i32_0 = arith.constant 0 : i32
    %c0_i32_1 = arith.constant 0 : i32
    return %c0_i32, %c0_i32_0 : i32, i32
  }
  func.func @transform_2(%arg0: i32) -> (i32, i32) {
    %c0_i32 = arith.constant 0 : i32
    %c0_i32_0 = arith.constant 0 : i32
    %c0_i32_1 = arith.constant 0 : i32
    return %c0_i32, %c0_i32_0 : i32, i32
  }
  func.func @transform_3(%arg0: i32) -> (i32, i32) {
    %c0_i32 = arith.constant 0 : i32
    %c0_i32_0 = arith.constant 0 : i32
    return %arg0, %c0_i32 : i32, i32
  }
}

module attributes {stable_mosaic.version = 11 : i64} {
  func.func @_fused_matmul_kernel(%arg0: i32, %arg1: memref<16x1152xbf16, #tpu.memory_space<vmem>>, %arg2: memref<1152x128xbf16, #tpu.memory_space<vmem>>, %arg3: memref<1x128xf32, #tpu.memory_space<vmem>>, %arg4: memref<16x128xf32, #tpu.memory_space<vmem>>) attributes {dimension_semantics = [#tpu.dimension_semantics<parallel>], iteration_bounds = array<i64: 1>, scalar_prefetch = 0 : i64, scratch_operands = 0 : i64, tpu.core_type = #tpu.core_type<tc>, window_params = [{transform_indices = @transform_0, window_bounds = array<i64: 16, 1152>}, {pipeline_mode = #tpu.pipeline_mode<synchronous>, transform_indices = @transform_1, window_bounds = array<i64: 1152, 128>}, {pipeline_mode = #tpu.pipeline_mode<synchronous>, transform_indices = @transform_2, window_bounds = array<i64: 1, 128>}, {transform_indices = @transform_3, window_bounds = array<i64: 16, 128>}]} {
    %c0 = arith.constant 0 : index
    %c0_0 = arith.constant 0 : index
    %0 = vector.load %arg1[%c0, %c0_0] : memref<16x1152xbf16, #tpu.memory_space<vmem>>, vector<16x1152xbf16>
    %c0_1 = arith.constant 0 : index
    %c0_2 = arith.constant 0 : index
    %1 = vector.load %arg2[%c0_1, %c0_2] : memref<1152x128xbf16, #tpu.memory_space<vmem>>, vector<1152x128xbf16>
    %cst = arith.constant dense<0.000000e+00> : vector<16x128xf32>
    %2 = tpu.matmul %0, %1, %cst {dimension_numbers = #tpu.dot_dimension_numbers<[1], [0], [0], [1], [0, 0, 1, 1], [], []>} : vector<16x1152xbf16>, vector<1152x128xbf16>, vector<16x128xf32> -> vector<16x128xf32>
    %c0_3 = arith.constant 0 : index
    %c0_4 = arith.constant 0 : index
    %3 = vector.load %arg3[%c0_3, %c0_4] : memref<1x128xf32, #tpu.memory_space<vmem>>, vector<1x128xf32>
    %4 = vector.broadcast %3 : vector<1x128xf32> to vector<16x128xf32>
    %5 = arith.addf %2, %4 : vector<16x128xf32>
    %cst_5 = arith.constant 0.000000e+00 : f32
    %6 = vector.broadcast %cst_5 : f32 to vector<16x128xf32>
    %7 = arith.maximumf %5, %6 : vector<16x128xf32>
    %c0_6 = arith.constant 0 : index
    %c0_7 = arith.constant 0 : index
    %8 = vector.load %arg4[%c0_6, %c0_7] : memref<16x128xf32, #tpu.memory_space<vmem>>, vector<16x128xf32>
    tpu.vector_store %arg4[%c0_6, %c0_7], %7 {strides = array<i32>} : memref<16x128xf32, #tpu.memory_space<vmem>>, vector<16x128xf32>,
    return
  }
  func.func @transform_0(%arg0: i32) -> (i32, i32) {
    %c0_i32 = arith.constant 0 : i32
    %c0_i32_0 = arith.constant 0 : i32
    return %arg0, %c0_i32 : i32, i32
  }
  func.func @transform_1(%arg0: i32) -> (i32, i32) {
    %c0_i32 = arith.constant 0 : i32
    %c0_i32_0 = arith.constant 0 : i32
    %c0_i32_1 = arith.constant 0 : i32
    return %c0_i32, %c0_i32_0 : i32, i32
  }
  func.func @transform_2(%arg0: i32) -> (i32, i32) {
    %c0_i32 = arith.constant 0 : i32
    %c0_i32_0 = arith.constant 0 : i32
    %c0_i32_1 = arith.constant 0 : i32
    return %c0_i32, %c0_i32_0 : i32, i32
  }
  func.func @transform_3(%arg0: i32) -> (i32, i32) {
    %c0_i32 = arith.constant 0 : i32
    %c0_i32_0 = arith.constant 0 : i32
    return %arg0, %c0_i32 : i32, i32
  }
}

module attributes {stable_mosaic.version = 11 : i64} {
  func.func @_fused_matmul_kernel(%arg0: i32, %arg1: memref<16x256xbf16, #tpu.memory_space<vmem>>, %arg2: memref<256x64xbf16, #tpu.memory_space<vmem>>, %arg3: memref<1x64xf32, #tpu.memory_space<vmem>>, %arg4: memref<16x64xf32, #tpu.memory_space<vmem>>) attributes {dimension_semantics = [#tpu.dimension_semantics<parallel>], iteration_bounds = array<i64: 1>, scalar_prefetch = 0 : i64, scratch_operands = 0 : i64, tpu.core_type = #tpu.core_type<tc>, window_params = [{transform_indices = @transform_0, window_bounds = array<i64: 16, 256>}, {pipeline_mode = #tpu.pipeline_mode<synchronous>, transform_indices = @transform_1, window_bounds = array<i64: 256, 64>}, {pipeline_mode = #tpu.pipeline_mode<synchronous>, transform_indices = @transform_2, window_bounds = array<i64: 1, 64>}, {transform_indices = @transform_3, window_bounds = array<i64: 16, 64>}]} {
    %c0 = arith.constant 0 : index
    %c0_0 = arith.constant 0 : index
    %0 = vector.load %arg1[%c0, %c0_0] : memref<16x256xbf16, #tpu.memory_space<vmem>>, vector<16x256xbf16>
    %c0_1 = arith.constant 0 : index
    %c0_2 = arith.constant 0 : index
    %1 = vector.load %arg2[%c0_1, %c0_2] : memref<256x64xbf16, #tpu.memory_space<vmem>>, vector<256x64xbf16>
    %cst = arith.constant dense<0.000000e+00> : vector<16x64xf32>
    %2 = tpu.matmul %0, %1, %cst {dimension_numbers = #tpu.dot_dimension_numbers<[1], [0], [0], [1], [0, 0, 1, 1], [], []>} : vector<16x256xbf16>, vector<256x64xbf16>, vector<16x64xf32> -> vector<16x64xf32>
    %c0_3 = arith.constant 0 : index
    %c0_4 = arith.constant 0 : index
    %3 = vector.load %arg3[%c0_3, %c0_4] : memref<1x64xf32, #tpu.memory_space<vmem>>, vector<1x64xf32>
    %4 = vector.broadcast %3 : vector<1x64xf32> to vector<16x64xf32>
    %5 = arith.addf %2, %4 : vector<16x64xf32>
    %c0_5 = arith.constant 0 : index
    %c0_6 = arith.constant 0 : index
    %6 = vector.load %arg4[%c0_5, %c0_6] : memref<16x64xf32, #tpu.memory_space<vmem>>, vector<16x64xf32>
    tpu.vector_store %arg4[%c0_5, %c0_6], %5 {strides = array<i32>} : memref<16x64xf32, #tpu.memory_space<vmem>>, vector<16x64xf32>,
    return
  }
  func.func @transform_0(%arg0: i32) -> (i32, i32) {
    %c0_i32 = arith.constant 0 : i32
    %c0_i32_0 = arith.constant 0 : i32
    return %arg0, %c0_i32 : i32, i32
  }
  func.func @transform_1(%arg0: i32) -> (i32, i32) {
    %c0_i32 = arith.constant 0 : i32
    %c0_i32_0 = arith.constant 0 : i32
    %c0_i32_1 = arith.constant 0 : i32
    return %c0_i32, %c0_i32_0 : i32, i32
  }
  func.func @transform_2(%arg0: i32) -> (i32, i32) {
    %c0_i32 = arith.constant 0 : i32
    %c0_i32_0 = arith.constant 0 : i32
    %c0_i32_1 = arith.constant 0 : i32
    return %c0_i32, %c0_i32_0 : i32, i32
  }
  func.func @transform_3(%arg0: i32) -> (i32, i32) {
    %c0_i32 = arith.constant 0 : i32
    %c0_i32_0 = arith.constant 0 : i32
    return %arg0, %c0_i32 : i32, i32
  }
}

module attributes {stable_mosaic.version = 11 : i64} {
  func.func @_fused_matmul_kernel(%arg0: i32, %arg1: memref<16x512xbf16, #tpu.memory_space<vmem>>, %arg2: memref<512x64xbf16, #tpu.memory_space<vmem>>, %arg3: memref<1x64xf32, #tpu.memory_space<vmem>>, %arg4: memref<16x64xf32, #tpu.memory_space<vmem>>) attributes {dimension_semantics = [#tpu.dimension_semantics<parallel>], iteration_bounds = array<i64: 1>, scalar_prefetch = 0 : i64, scratch_operands = 0 : i64, tpu.core_type = #tpu.core_type<tc>, window_params = [{transform_indices = @transform_0, window_bounds = array<i64: 16, 512>}, {pipeline_mode = #tpu.pipeline_mode<synchronous>, transform_indices = @transform_1, window_bounds = array<i64: 512, 64>}, {pipeline_mode = #tpu.pipeline_mode<synchronous>, transform_indices = @transform_2, window_bounds = array<i64: 1, 64>}, {transform_indices = @transform_3, window_bounds = array<i64: 16, 64>}]} {
    %c0 = arith.constant 0 : index
    %c0_0 = arith.constant 0 : index
    %0 = vector.load %arg1[%c0, %c0_0] : memref<16x512xbf16, #tpu.memory_space<vmem>>, vector<16x512xbf16>
    %c0_1 = arith.constant 0 : index
    %c0_2 = arith.constant 0 : index
    %1 = vector.load %arg2[%c0_1, %c0_2] : memref<512x64xbf16, #tpu.memory_space<vmem>>, vector<512x64xbf16>
    %cst = arith.constant dense<0.000000e+00> : vector<16x64xf32>
    %2 = tpu.matmul %0, %1, %cst {dimension_numbers = #tpu.dot_dimension_numbers<[1], [0], [0], [1], [0, 0, 1, 1], [], []>} : vector<16x512xbf16>, vector<512x64xbf16>, vector<16x64xf32> -> vector<16x64xf32>
    %c0_3 = arith.constant 0 : index
    %c0_4 = arith.constant 0 : index
    %3 = vector.load %arg3[%c0_3, %c0_4] : memref<1x64xf32, #tpu.memory_space<vmem>>, vector<1x64xf32>
    %4 = vector.broadcast %3 : vector<1x64xf32> to vector<16x64xf32>
    %5 = arith.addf %2, %4 : vector<16x64xf32>
    %c0_5 = arith.constant 0 : index
    %c0_6 = arith.constant 0 : index
    %6 = vector.load %arg4[%c0_5, %c0_6] : memref<16x64xf32, #tpu.memory_space<vmem>>, vector<16x64xf32>
    tpu.vector_store %arg4[%c0_5, %c0_6], %5 {strides = array<i32>} : memref<16x64xf32, #tpu.memory_space<vmem>>, vector<16x64xf32>,
    return
  }
  func.func @transform_0(%arg0: i32) -> (i32, i32) {
    %c0_i32 = arith.constant 0 : i32
    %c0_i32_0 = arith.constant 0 : i32
    return %arg0, %c0_i32 : i32, i32
  }
  func.func @transform_1(%arg0: i32) -> (i32, i32) {
    %c0_i32 = arith.constant 0 : i32
    %c0_i32_0 = arith.constant 0 : i32
    %c0_i32_1 = arith.constant 0 : i32
    return %c0_i32, %c0_i32_0 : i32, i32
  }
  func.func @transform_2(%arg0: i32) -> (i32, i32) {
    %c0_i32 = arith.constant 0 : i32
    %c0_i32_0 = arith.constant 0 : i32
    %c0_i32_1 = arith.constant 0 : i32
    return %c0_i32, %c0_i32_0 : i32, i32
  }
  func.func @transform_3(%arg0: i32) -> (i32, i32) {
    %c0_i32 = arith.constant 0 : i32
    %c0_i32_0 = arith.constant 0 : i32
    return %arg0, %c0_i32 : i32, i32
  }
}

module attributes {stable_mosaic.version = 11 : i64} {
  func.func @_fused_matmul_kernel(%arg0: i32, %arg1: memref<16x128xbf16, #tpu.memory_space<vmem>>, %arg2: memref<128x64xbf16, #tpu.memory_space<vmem>>, %arg3: memref<1x64xf32, #tpu.memory_space<vmem>>, %arg4: memref<16x64xf32, #tpu.memory_space<vmem>>) attributes {dimension_semantics = [#tpu.dimension_semantics<parallel>], iteration_bounds = array<i64: 1>, scalar_prefetch = 0 : i64, scratch_operands = 0 : i64, tpu.core_type = #tpu.core_type<tc>, window_params = [{transform_indices = @transform_0, window_bounds = array<i64: 16, 128>}, {pipeline_mode = #tpu.pipeline_mode<synchronous>, transform_indices = @transform_1, window_bounds = array<i64: 128, 64>}, {pipeline_mode = #tpu.pipeline_mode<synchronous>, transform_indices = @transform_2, window_bounds = array<i64: 1, 64>}, {transform_indices = @transform_3, window_bounds = array<i64: 16, 64>}]} {
    %c0 = arith.constant 0 : index
    %c0_0 = arith.constant 0 : index
    %0 = vector.load %arg1[%c0, %c0_0] : memref<16x128xbf16, #tpu.memory_space<vmem>>, vector<16x128xbf16>
    %c0_1 = arith.constant 0 : index
    %c0_2 = arith.constant 0 : index
    %1 = vector.load %arg2[%c0_1, %c0_2] : memref<128x64xbf16, #tpu.memory_space<vmem>>, vector<128x64xbf16>
    %cst = arith.constant dense<0.000000e+00> : vector<16x64xf32>
    %2 = tpu.matmul %0, %1, %cst {dimension_numbers = #tpu.dot_dimension_numbers<[1], [0], [0], [1], [0, 0, 1, 1], [], []>} : vector<16x128xbf16>, vector<128x64xbf16>, vector<16x64xf32> -> vector<16x64xf32>
    %c0_3 = arith.constant 0 : index
    %c0_4 = arith.constant 0 : index
    %3 = vector.load %arg3[%c0_3, %c0_4] : memref<1x64xf32, #tpu.memory_space<vmem>>, vector<1x64xf32>
    %4 = vector.broadcast %3 : vector<1x64xf32> to vector<16x64xf32>
    %5 = arith.addf %2, %4 : vector<16x64xf32>
    %c0_5 = arith.constant 0 : index
    %c0_6 = arith.constant 0 : index
    %6 = vector.load %arg4[%c0_5, %c0_6] : memref<16x64xf32, #tpu.memory_space<vmem>>, vector<16x64xf32>
    tpu.vector_store %arg4[%c0_5, %c0_6], %5 {strides = array<i32>} : memref<16x64xf32, #tpu.memory_space<vmem>>, vector<16x64xf32>,
    return
  }
  func.func @transform_0(%arg0: i32) -> (i32, i32) {
    %c0_i32 = arith.constant 0 : i32
    %c0_i32_0 = arith.constant 0 : i32
    return %arg0, %c0_i32 : i32, i32
  }
  func.func @transform_1(%arg0: i32) -> (i32, i32) {
    %c0_i32 = arith.constant 0 : i32
    %c0_i32_0 = arith.constant 0 : i32
    %c0_i32_1 = arith.constant 0 : i32
    return %c0_i32, %c0_i32_0 : i32, i32
  }
  func.func @transform_2(%arg0: i32) -> (i32, i32) {
    %c0_i32 = arith.constant 0 : i32
    %c0_i32_0 = arith.constant 0 : i32
    %c0_i32_1 = arith.constant 0 : i32
    return %c0_i32, %c0_i32_0 : i32, i32
  }
  func.func @transform_3(%arg0: i32) -> (i32, i32) {
    %c0_i32 = arith.constant 0 : i32
    %c0_i32_0 = arith.constant 0 : i32
    return %arg0, %c0_i32 : i32, i32
  }
}

module attributes {stable_mosaic.version = 11 : i64} {
  func.func @_fused_matmul2_kernel(%arg0: i32, %arg1: memref<32x576xbf16, #tpu.memory_space<vmem>>, %arg2: memref<32x576xbf16, #tpu.memory_space<vmem>>, %arg3: memref<576x64xbf16, #tpu.memory_space<vmem>>, %arg4: memref<576x64xbf16, #tpu.memory_space<vmem>>, %arg5: memref<1x64xf32, #tpu.memory_space<vmem>>, %arg6: memref<32x64xf32, #tpu.memory_space<vmem>>) attributes {dimension_semantics = [#tpu.dimension_semantics<parallel>], iteration_bounds = array<i64: 1>, scalar_prefetch = 0 : i64, scratch_operands = 0 : i64, tpu.core_type = #tpu.core_type<tc>, window_params = [{transform_indices = @transform_0, window_bounds = array<i64: 32, 576>}, {transform_indices = @transform_1, window_bounds = array<i64: 32, 576>}, {pipeline_mode = #tpu.pipeline_mode<synchronous>, transform_indices = @transform_2, window_bounds = array<i64: 576, 64>}, {pipeline_mode = #tpu.pipeline_mode<synchronous>, transform_indices = @transform_3, window_bounds = array<i64: 576, 64>}, {pipeline_mode = #tpu.pipeline_mode<synchronous>, transform_indices = @transform_4, window_bounds = array<i64: 1, 64>}, {transform_indices = @transform_5, window_bounds = array<i64: 32, 64>}]} {
    %c0 = arith.constant 0 : index
    %c0_0 = arith.constant 0 : index
    %0 = vector.load %arg1[%c0, %c0_0] : memref<32x576xbf16, #tpu.memory_space<vmem>>, vector<32x576xbf16>
    %c0_1 = arith.constant 0 : index
    %c0_2 = arith.constant 0 : index
    %1 = vector.load %arg3[%c0_1, %c0_2] : memref<576x64xbf16, #tpu.memory_space<vmem>>, vector<576x64xbf16>
    %cst = arith.constant dense<0.000000e+00> : vector<32x64xf32>
    %2 = tpu.matmul %0, %1, %cst {dimension_numbers = #tpu.dot_dimension_numbers<[1], [0], [0], [1], [0, 0, 1, 1], [], []>} : vector<32x576xbf16>, vector<576x64xbf16>, vector<32x64xf32> -> vector<32x64xf32>
    %c0_3 = arith.constant 0 : index
    %c0_4 = arith.constant 0 : index
    %3 = vector.load %arg2[%c0_3, %c0_4] : memref<32x576xbf16, #tpu.memory_space<vmem>>, vector<32x576xbf16>
    %c0_5 = arith.constant 0 : index
    %c0_6 = arith.constant 0 : index
    %4 = vector.load %arg4[%c0_5, %c0_6] : memref<576x64xbf16, #tpu.memory_space<vmem>>, vector<576x64xbf16>
    %cst_7 = arith.constant dense<0.000000e+00> : vector<32x64xf32>
    %5 = tpu.matmul %3, %4, %cst_7 {dimension_numbers = #tpu.dot_dimension_numbers<[1], [0], [0], [1], [0, 0, 1, 1], [], []>} : vector<32x576xbf16>, vector<576x64xbf16>, vector<32x64xf32> -> vector<32x64xf32>
    %6 = arith.addf %2, %5 : vector<32x64xf32>
    %c0_8 = arith.constant 0 : index
    %c0_9 = arith.constant 0 : index
    %7 = vector.load %arg5[%c0_8, %c0_9] : memref<1x64xf32, #tpu.memory_space<vmem>>, vector<1x64xf32>
    %8 = vector.broadcast %7 : vector<1x64xf32> to vector<32x64xf32>
    %9 = arith.addf %6, %8 : vector<32x64xf32>
    %cst_10 = arith.constant 0.000000e+00 : f32
    %10 = vector.broadcast %cst_10 : f32 to vector<32x64xf32>
    %11 = arith.maximumf %9, %10 : vector<32x64xf32>
    %c0_11 = arith.constant 0 : index
    %c0_12 = arith.constant 0 : index
    %12 = vector.load %arg6[%c0_11, %c0_12] : memref<32x64xf32, #tpu.memory_space<vmem>>, vector<32x64xf32>
    tpu.vector_store %arg6[%c0_11, %c0_12], %11 {strides = array<i32>} : memref<32x64xf32, #tpu.memory_space<vmem>>, vector<32x64xf32>,
    return
  }
  func.func @transform_0(%arg0: i32) -> (i32, i32) {
    %c0_i32 = arith.constant 0 : i32
    %c0_i32_0 = arith.constant 0 : i32
    return %arg0, %c0_i32 : i32, i32
  }
  func.func @transform_1(%arg0: i32) -> (i32, i32) {
    %c0_i32 = arith.constant 0 : i32
    %c0_i32_0 = arith.constant 0 : i32
    return %arg0, %c0_i32 : i32, i32
  }
  func.func @transform_2(%arg0: i32) -> (i32, i32) {
    %c0_i32 = arith.constant 0 : i32
    %c0_i32_0 = arith.constant 0 : i32
    %c0_i32_1 = arith.constant 0 : i32
    return %c0_i32, %c0_i32_0 : i32, i32
  }
  func.func @transform_3(%arg0: i32) -> (i32, i32) {
    %c0_i32 = arith.constant 0 : i32
    %c0_i32_0 = arith.constant 0 : i32
    %c0_i32_1 = arith.constant 0 : i32
    return %c0_i32, %c0_i32_0 : i32, i32
  }
  func.func @transform_4(%arg0: i32) -> (i32, i32) {
    %c0_i32 = arith.constant 0 : i32
    %c0_i32_0 = arith.constant 0 : i32
    %c0_i32_1 = arith.constant 0 : i32
    return %c0_i32, %c0_i32_0 : i32, i32
  }
  func.func @transform_5(%arg0: i32) -> (i32, i32) {
    %c0_i32 = arith.constant 0 : i32
    %c0_i32_0 = arith.constant 0 : i32
    return %arg0, %c0_i32 : i32, i32
  }
}

module attributes {stable_mosaic.version = 11 : i64} {
  func.func @_fused_matmul_kernel(%arg0: i32, %arg1: memref<32x128xbf16, #tpu.memory_space<vmem>>, %arg2: memref<128x32xbf16, #tpu.memory_space<vmem>>, %arg3: memref<1x32xf32, #tpu.memory_space<vmem>>, %arg4: memref<32x32xf32, #tpu.memory_space<vmem>>) attributes {dimension_semantics = [#tpu.dimension_semantics<parallel>], iteration_bounds = array<i64: 1>, scalar_prefetch = 0 : i64, scratch_operands = 0 : i64, tpu.core_type = #tpu.core_type<tc>, window_params = [{transform_indices = @transform_0, window_bounds = array<i64: 32, 128>}, {pipeline_mode = #tpu.pipeline_mode<synchronous>, transform_indices = @transform_1, window_bounds = array<i64: 128, 32>}, {pipeline_mode = #tpu.pipeline_mode<synchronous>, transform_indices = @transform_2, window_bounds = array<i64: 1, 32>}, {transform_indices = @transform_3, window_bounds = array<i64: 32, 32>}]} {
    %c0 = arith.constant 0 : index
    %c0_0 = arith.constant 0 : index
    %0 = vector.load %arg1[%c0, %c0_0] : memref<32x128xbf16, #tpu.memory_space<vmem>>, vector<32x128xbf16>
    %c0_1 = arith.constant 0 : index
    %c0_2 = arith.constant 0 : index
    %1 = vector.load %arg2[%c0_1, %c0_2] : memref<128x32xbf16, #tpu.memory_space<vmem>>, vector<128x32xbf16>
    %cst = arith.constant dense<0.000000e+00> : vector<32x32xf32>
    %2 = tpu.matmul %0, %1, %cst {dimension_numbers = #tpu.dot_dimension_numbers<[1], [0], [0], [1], [0, 0, 1, 1], [], []>} : vector<32x128xbf16>, vector<128x32xbf16>, vector<32x32xf32> -> vector<32x32xf32>
    %c0_3 = arith.constant 0 : index
    %c0_4 = arith.constant 0 : index
    %3 = vector.load %arg3[%c0_3, %c0_4] : memref<1x32xf32, #tpu.memory_space<vmem>>, vector<1x32xf32>
    %4 = vector.broadcast %3 : vector<1x32xf32> to vector<32x32xf32>
    %5 = arith.addf %2, %4 : vector<32x32xf32>
    %c0_5 = arith.constant 0 : index
    %c0_6 = arith.constant 0 : index
    %6 = vector.load %arg4[%c0_5, %c0_6] : memref<32x32xf32, #tpu.memory_space<vmem>>, vector<32x32xf32>
    tpu.vector_store %arg4[%c0_5, %c0_6], %5 {strides = array<i32>} : memref<32x32xf32, #tpu.memory_space<vmem>>, vector<32x32xf32>,
    return
  }
  func.func @transform_0(%arg0: i32) -> (i32, i32) {
    %c0_i32 = arith.constant 0 : i32
    %c0_i32_0 = arith.constant 0 : i32
    return %arg0, %c0_i32 : i32, i32
  }
  func.func @transform_1(%arg0: i32) -> (i32, i32) {
    %c0_i32 = arith.constant 0 : i32
    %c0_i32_0 = arith.constant 0 : i32
    %c0_i32_1 = arith.constant 0 : i32
    return %c0_i32, %c0_i32_0 : i32, i32
  }
  func.func @transform_2(%arg0: i32) -> (i32, i32) {
    %c0_i32 = arith.constant 0 : i32
    %c0_i32_0 = arith.constant 0 : i32
    %c0_i32_1 = arith.constant 0 : i32
    return %c0_i32, %c0_i32_0 : i32, i32
  }
  func.func @transform_3(%arg0: i32) -> (i32, i32) {
    %c0_i32 = arith.constant 0 : i32
    %c0_i32_0 = arith.constant 0 : i32
    return %arg0, %c0_i32 : i32, i32
  }
}

module attributes {stable_mosaic.version = 11 : i64} {
  func.func @_fused_matmul_kernel(%arg0: i32, %arg1: memref<32x64xbf16, #tpu.memory_space<vmem>>, %arg2: memref<64x32xbf16, #tpu.memory_space<vmem>>, %arg3: memref<1x32xf32, #tpu.memory_space<vmem>>, %arg4: memref<32x32xf32, #tpu.memory_space<vmem>>) attributes {dimension_semantics = [#tpu.dimension_semantics<parallel>], iteration_bounds = array<i64: 1>, scalar_prefetch = 0 : i64, scratch_operands = 0 : i64, tpu.core_type = #tpu.core_type<tc>, window_params = [{transform_indices = @transform_0, window_bounds = array<i64: 32, 64>}, {pipeline_mode = #tpu.pipeline_mode<synchronous>, transform_indices = @transform_1, window_bounds = array<i64: 64, 32>}, {pipeline_mode = #tpu.pipeline_mode<synchronous>, transform_indices = @transform_2, window_bounds = array<i64: 1, 32>}, {transform_indices = @transform_3, window_bounds = array<i64: 32, 32>}]} {
    %c0 = arith.constant 0 : index
    %c0_0 = arith.constant 0 : index
    %0 = vector.load %arg1[%c0, %c0_0] : memref<32x64xbf16, #tpu.memory_space<vmem>>, vector<32x64xbf16>
    %c0_1 = arith.constant 0 : index
    %c0_2 = arith.constant 0 : index
    %1 = vector.load %arg2[%c0_1, %c0_2] : memref<64x32xbf16, #tpu.memory_space<vmem>>, vector<64x32xbf16>
    %cst = arith.constant dense<0.000000e+00> : vector<32x32xf32>
    %2 = tpu.matmul %0, %1, %cst {dimension_numbers = #tpu.dot_dimension_numbers<[1], [0], [0], [1], [0, 0, 1, 1], [], []>} : vector<32x64xbf16>, vector<64x32xbf16>, vector<32x32xf32> -> vector<32x32xf32>
    %c0_3 = arith.constant 0 : index
    %c0_4 = arith.constant 0 : index
    %3 = vector.load %arg3[%c0_3, %c0_4] : memref<1x32xf32, #tpu.memory_space<vmem>>, vector<1x32xf32>
    %4 = vector.broadcast %3 : vector<1x32xf32> to vector<32x32xf32>
    %5 = arith.addf %2, %4 : vector<32x32xf32>
    %c0_5 = arith.constant 0 : index
    %c0_6 = arith.constant 0 : index
    %6 = vector.load %arg4[%c0_5, %c0_6] : memref<32x32xf32, #tpu.memory_space<vmem>>, vector<32x32xf32>
    tpu.vector_store %arg4[%c0_5, %c0_6], %5 {strides = array<i32>} : memref<32x32xf32, #tpu.memory_space<vmem>>, vector<32x32xf32>,
    return
  }
  func.func @transform_0(%arg0: i32) -> (i32, i32) {
    %c0_i32 = arith.constant 0 : i32
    %c0_i32_0 = arith.constant 0 : i32
    return %arg0, %c0_i32 : i32, i32
  }
  func.func @transform_1(%arg0: i32) -> (i32, i32) {
    %c0_i32 = arith.constant 0 : i32
    %c0_i32_0 = arith.constant 0 : i32
    %c0_i32_1 = arith.constant 0 : i32
    return %c0_i32, %c0_i32_0 : i32, i32
  }
  func.func @transform_2(%arg0: i32) -> (i32, i32) {
    %c0_i32 = arith.constant 0 : i32
    %c0_i32_0 = arith.constant 0 : i32
    %c0_i32_1 = arith.constant 0 : i32
    return %c0_i32, %c0_i32_0 : i32, i32
  }
  func.func @transform_3(%arg0: i32) -> (i32, i32) {
    %c0_i32 = arith.constant 0 : i32
    %c0_i32_0 = arith.constant 0 : i32
    return %arg0, %c0_i32 : i32, i32
  }
}

module attributes {stable_mosaic.version = 11 : i64} {
  func.func @_fused_matmul_kernel(%arg0: i32, %arg1: memref<32x256xbf16, #tpu.memory_space<vmem>>, %arg2: memref<256x32xbf16, #tpu.memory_space<vmem>>, %arg3: memref<1x32xf32, #tpu.memory_space<vmem>>, %arg4: memref<32x32xf32, #tpu.memory_space<vmem>>) attributes {dimension_semantics = [#tpu.dimension_semantics<parallel>], iteration_bounds = array<i64: 1>, scalar_prefetch = 0 : i64, scratch_operands = 0 : i64, tpu.core_type = #tpu.core_type<tc>, window_params = [{transform_indices = @transform_0, window_bounds = array<i64: 32, 256>}, {pipeline_mode = #tpu.pipeline_mode<synchronous>, transform_indices = @transform_1, window_bounds = array<i64: 256, 32>}, {pipeline_mode = #tpu.pipeline_mode<synchronous>, transform_indices = @transform_2, window_bounds = array<i64: 1, 32>}, {transform_indices = @transform_3, window_bounds = array<i64: 32, 32>}]} {
    %c0 = arith.constant 0 : index
    %c0_0 = arith.constant 0 : index
    %0 = vector.load %arg1[%c0, %c0_0] : memref<32x256xbf16, #tpu.memory_space<vmem>>, vector<32x256xbf16>
    %c0_1 = arith.constant 0 : index
    %c0_2 = arith.constant 0 : index
    %1 = vector.load %arg2[%c0_1, %c0_2] : memref<256x32xbf16, #tpu.memory_space<vmem>>, vector<256x32xbf16>
    %cst = arith.constant dense<0.000000e+00> : vector<32x32xf32>
    %2 = tpu.matmul %0, %1, %cst {dimension_numbers = #tpu.dot_dimension_numbers<[1], [0], [0], [1], [0, 0, 1, 1], [], []>} : vector<32x256xbf16>, vector<256x32xbf16>, vector<32x32xf32> -> vector<32x32xf32>
    %c0_3 = arith.constant 0 : index
    %c0_4 = arith.constant 0 : index
    %3 = vector.load %arg3[%c0_3, %c0_4] : memref<1x32xf32, #tpu.memory_space<vmem>>, vector<1x32xf32>
    %4 = vector.broadcast %3 : vector<1x32xf32> to vector<32x32xf32>
    %5 = arith.addf %2, %4 : vector<32x32xf32>
    %c0_5 = arith.constant 0 : index
    %c0_6 = arith.constant 0 : index
    %6 = vector.load %arg4[%c0_5, %c0_6] : memref<32x32xf32, #tpu.memory_space<vmem>>, vector<32x32xf32>
    tpu.vector_store %arg4[%c0_5, %c0_6], %5 {strides = array<i32>} : memref<32x32xf32, #tpu.memory_space<vmem>>, vector<32x32xf32>,
    return
  }
  func.func @transform_0(%arg0: i32) -> (i32, i32) {
    %c0_i32 = arith.constant 0 : i32
    %c0_i32_0 = arith.constant 0 : i32
    return %arg0, %c0_i32 : i32, i32
  }
  func.func @transform_1(%arg0: i32) -> (i32, i32) {
    %c0_i32 = arith.constant 0 : i32
    %c0_i32_0 = arith.constant 0 : i32
    %c0_i32_1 = arith.constant 0 : i32
    return %c0_i32, %c0_i32_0 : i32, i32
  }
  func.func @transform_2(%arg0: i32) -> (i32, i32) {
    %c0_i32 = arith.constant 0 : i32
    %c0_i32_0 = arith.constant 0 : i32
    %c0_i32_1 = arith.constant 0 : i32
    return %c0_i32, %c0_i32_0 : i32, i32
  }
  func.func @transform_3(%arg0: i32) -> (i32, i32) {
    %c0_i32 = arith.constant 0 : i32
    %c0_i32_0 = arith.constant 0 : i32
    return %arg0, %c0_i32 : i32, i32
  }
}

module attributes {stable_mosaic.version = 11 : i64} {
  func.func @_fused_matmul2_kernel(%arg0: i32, %arg1: memref<128x288xbf16, #tpu.memory_space<vmem>>, %arg2: memref<128x288xbf16, #tpu.memory_space<vmem>>, %arg3: memref<288x32xbf16, #tpu.memory_space<vmem>>, %arg4: memref<288x32xbf16, #tpu.memory_space<vmem>>, %arg5: memref<1x32xf32, #tpu.memory_space<vmem>>, %arg6: memref<128x32xf32, #tpu.memory_space<vmem>>) attributes {dimension_semantics = [#tpu.dimension_semantics<parallel>], iteration_bounds = array<i64: 1>, scalar_prefetch = 0 : i64, scratch_operands = 0 : i64, tpu.core_type = #tpu.core_type<tc>, window_params = [{transform_indices = @transform_0, window_bounds = array<i64: 128, 288>}, {transform_indices = @transform_1, window_bounds = array<i64: 128, 288>}, {pipeline_mode = #tpu.pipeline_mode<synchronous>, transform_indices = @transform_2, window_bounds = array<i64: 288, 32>}, {pipeline_mode = #tpu.pipeline_mode<synchronous>, transform_indices = @transform_3, window_bounds = array<i64: 288, 32>}, {pipeline_mode = #tpu.pipeline_mode<synchronous>, transform_indices = @transform_4, window_bounds = array<i64: 1, 32>}, {transform_indices = @transform_5, window_bounds = array<i64: 128, 32>}]} {
    %c0 = arith.constant 0 : index
    %c0_0 = arith.constant 0 : index
    %0 = vector.load %arg1[%c0, %c0_0] : memref<128x288xbf16, #tpu.memory_space<vmem>>, vector<128x288xbf16>
    %c0_1 = arith.constant 0 : index
    %c0_2 = arith.constant 0 : index
    %1 = vector.load %arg3[%c0_1, %c0_2] : memref<288x32xbf16, #tpu.memory_space<vmem>>, vector<288x32xbf16>
    %cst = arith.constant dense<0.000000e+00> : vector<128x32xf32>
    %2 = tpu.matmul %0, %1, %cst {dimension_numbers = #tpu.dot_dimension_numbers<[1], [0], [0], [1], [0, 0, 1, 1], [], []>} : vector<128x288xbf16>, vector<288x32xbf16>, vector<128x32xf32> -> vector<128x32xf32>
    %c0_3 = arith.constant 0 : index
    %c0_4 = arith.constant 0 : index
    %3 = vector.load %arg2[%c0_3, %c0_4] : memref<128x288xbf16, #tpu.memory_space<vmem>>, vector<128x288xbf16>
    %c0_5 = arith.constant 0 : index
    %c0_6 = arith.constant 0 : index
    %4 = vector.load %arg4[%c0_5, %c0_6] : memref<288x32xbf16, #tpu.memory_space<vmem>>, vector<288x32xbf16>
    %cst_7 = arith.constant dense<0.000000e+00> : vector<128x32xf32>
    %5 = tpu.matmul %3, %4, %cst_7 {dimension_numbers = #tpu.dot_dimension_numbers<[1], [0], [0], [1], [0, 0, 1, 1], [], []>} : vector<128x288xbf16>, vector<288x32xbf16>, vector<128x32xf32> -> vector<128x32xf32>
    %6 = arith.addf %2, %5 : vector<128x32xf32>
    %c0_8 = arith.constant 0 : index
    %c0_9 = arith.constant 0 : index
    %7 = vector.load %arg5[%c0_8, %c0_9] : memref<1x32xf32, #tpu.memory_space<vmem>>, vector<1x32xf32>
    %8 = vector.broadcast %7 : vector<1x32xf32> to vector<128x32xf32>
    %9 = arith.addf %6, %8 : vector<128x32xf32>
    %cst_10 = arith.constant 0.000000e+00 : f32
    %10 = vector.broadcast %cst_10 : f32 to vector<128x32xf32>
    %11 = arith.maximumf %9, %10 : vector<128x32xf32>
    %c0_11 = arith.constant 0 : index
    %c0_12 = arith.constant 0 : index
    %12 = vector.load %arg6[%c0_11, %c0_12] : memref<128x32xf32, #tpu.memory_space<vmem>>, vector<128x32xf32>
    tpu.vector_store %arg6[%c0_11, %c0_12], %11 {strides = array<i32>} : memref<128x32xf32, #tpu.memory_space<vmem>>, vector<128x32xf32>,
    return
  }
  func.func @transform_0(%arg0: i32) -> (i32, i32) {
    %c0_i32 = arith.constant 0 : i32
    %c0_i32_0 = arith.constant 0 : i32
    return %arg0, %c0_i32 : i32, i32
  }
  func.func @transform_1(%arg0: i32) -> (i32, i32) {
    %c0_i32 = arith.constant 0 : i32
    %c0_i32_0 = arith.constant 0 : i32
    return %arg0, %c0_i32 : i32, i32
  }
  func.func @transform_2(%arg0: i32) -> (i32, i32) {
    %c0_i32 = arith.constant 0 : i32
    %c0_i32_0 = arith.constant 0 : i32
    %c0_i32_1 = arith.constant 0 : i32
    return %c0_i32, %c0_i32_0 : i32, i32
  }
  func.func @transform_3(%arg0: i32) -> (i32, i32) {
    %c0_i32 = arith.constant 0 : i32
    %c0_i32_0 = arith.constant 0 : i32
    %c0_i32_1 = arith.constant 0 : i32
    return %c0_i32, %c0_i32_0 : i32, i32
  }
  func.func @transform_4(%arg0: i32) -> (i32, i32) {
    %c0_i32 = arith.constant 0 : i32
    %c0_i32_0 = arith.constant 0 : i32
    %c0_i32_1 = arith.constant 0 : i32
    return %c0_i32, %c0_i32_0 : i32, i32
  }
  func.func @transform_5(%arg0: i32) -> (i32, i32) {
    %c0_i32 = arith.constant 0 : i32
    %c0_i32_0 = arith.constant 0 : i32
    return %arg0, %c0_i32 : i32, i32
  }
}

module attributes {stable_mosaic.version = 11 : i64} {
  func.func @_fused_matmul_kernel(%arg0: i32, %arg1: memref<128x64xbf16, #tpu.memory_space<vmem>>, %arg2: memref<64x16xbf16, #tpu.memory_space<vmem>>, %arg3: memref<1x16xf32, #tpu.memory_space<vmem>>, %arg4: memref<128x16xf32, #tpu.memory_space<vmem>>) attributes {dimension_semantics = [#tpu.dimension_semantics<parallel>], iteration_bounds = array<i64: 1>, scalar_prefetch = 0 : i64, scratch_operands = 0 : i64, tpu.core_type = #tpu.core_type<tc>, window_params = [{transform_indices = @transform_0, window_bounds = array<i64: 128, 64>}, {pipeline_mode = #tpu.pipeline_mode<synchronous>, transform_indices = @transform_1, window_bounds = array<i64: 64, 16>}, {pipeline_mode = #tpu.pipeline_mode<synchronous>, transform_indices = @transform_2, window_bounds = array<i64: 1, 16>}, {transform_indices = @transform_3, window_bounds = array<i64: 128, 16>}]} {
    %c0 = arith.constant 0 : index
    %c0_0 = arith.constant 0 : index
    %0 = vector.load %arg1[%c0, %c0_0] : memref<128x64xbf16, #tpu.memory_space<vmem>>, vector<128x64xbf16>
    %c0_1 = arith.constant 0 : index
    %c0_2 = arith.constant 0 : index
    %1 = vector.load %arg2[%c0_1, %c0_2] : memref<64x16xbf16, #tpu.memory_space<vmem>>, vector<64x16xbf16>
    %cst = arith.constant dense<0.000000e+00> : vector<128x16xf32>
    %2 = tpu.matmul %0, %1, %cst {dimension_numbers = #tpu.dot_dimension_numbers<[1], [0], [0], [1], [0, 0, 1, 1], [], []>} : vector<128x64xbf16>, vector<64x16xbf16>, vector<128x16xf32> -> vector<128x16xf32>
    %c0_3 = arith.constant 0 : index
    %c0_4 = arith.constant 0 : index
    %3 = vector.load %arg3[%c0_3, %c0_4] : memref<1x16xf32, #tpu.memory_space<vmem>>, vector<1x16xf32>
    %4 = vector.broadcast %3 : vector<1x16xf32> to vector<128x16xf32>
    %5 = arith.addf %2, %4 : vector<128x16xf32>
    %c0_5 = arith.constant 0 : index
    %c0_6 = arith.constant 0 : index
    %6 = vector.load %arg4[%c0_5, %c0_6] : memref<128x16xf32, #tpu.memory_space<vmem>>, vector<128x16xf32>
    tpu.vector_store %arg4[%c0_5, %c0_6], %5 {strides = array<i32>} : memref<128x16xf32, #tpu.memory_space<vmem>>, vector<128x16xf32>,
    return
  }
  func.func @transform_0(%arg0: i32) -> (i32, i32) {
    %c0_i32 = arith.constant 0 : i32
    %c0_i32_0 = arith.constant 0 : i32
    return %arg0, %c0_i32 : i32, i32
  }
  func.func @transform_1(%arg0: i32) -> (i32, i32) {
    %c0_i32 = arith.constant 0 : i32
    %c0_i32_0 = arith.constant 0 : i32
    %c0_i32_1 = arith.constant 0 : i32
    return %c0_i32, %c0_i32_0 : i32, i32
  }
  func.func @transform_2(%arg0: i32) -> (i32, i32) {
    %c0_i32 = arith.constant 0 : i32
    %c0_i32_0 = arith.constant 0 : i32
    %c0_i32_1 = arith.constant 0 : i32
    return %c0_i32, %c0_i32_0 : i32, i32
  }
  func.func @transform_3(%arg0: i32) -> (i32, i32) {
    %c0_i32 = arith.constant 0 : i32
    %c0_i32_0 = arith.constant 0 : i32
    return %arg0, %c0_i32 : i32, i32
  }
}

module attributes {stable_mosaic.version = 11 : i64} {
  func.func @_fused_matmul_kernel(%arg0: i32, %arg1: memref<128x32xbf16, #tpu.memory_space<vmem>>, %arg2: memref<32x16xbf16, #tpu.memory_space<vmem>>, %arg3: memref<1x16xf32, #tpu.memory_space<vmem>>, %arg4: memref<128x16xf32, #tpu.memory_space<vmem>>) attributes {dimension_semantics = [#tpu.dimension_semantics<parallel>], iteration_bounds = array<i64: 1>, scalar_prefetch = 0 : i64, scratch_operands = 0 : i64, tpu.core_type = #tpu.core_type<tc>, window_params = [{transform_indices = @transform_0, window_bounds = array<i64: 128, 32>}, {pipeline_mode = #tpu.pipeline_mode<synchronous>, transform_indices = @transform_1, window_bounds = array<i64: 32, 16>}, {pipeline_mode = #tpu.pipeline_mode<synchronous>, transform_indices = @transform_2, window_bounds = array<i64: 1, 16>}, {transform_indices = @transform_3, window_bounds = array<i64: 128, 16>}]} {
    %c0 = arith.constant 0 : index
    %c0_0 = arith.constant 0 : index
    %0 = vector.load %arg1[%c0, %c0_0] : memref<128x32xbf16, #tpu.memory_space<vmem>>, vector<128x32xbf16>
    %c0_1 = arith.constant 0 : index
    %c0_2 = arith.constant 0 : index
    %1 = vector.load %arg2[%c0_1, %c0_2] : memref<32x16xbf16, #tpu.memory_space<vmem>>, vector<32x16xbf16>
    %cst = arith.constant dense<0.000000e+00> : vector<128x16xf32>
    %2 = tpu.matmul %0, %1, %cst {dimension_numbers = #tpu.dot_dimension_numbers<[1], [0], [0], [1], [0, 0, 1, 1], [], []>} : vector<128x32xbf16>, vector<32x16xbf16>, vector<128x16xf32> -> vector<128x16xf32>
    %c0_3 = arith.constant 0 : index
    %c0_4 = arith.constant 0 : index
    %3 = vector.load %arg3[%c0_3, %c0_4] : memref<1x16xf32, #tpu.memory_space<vmem>>, vector<1x16xf32>
    %4 = vector.broadcast %3 : vector<1x16xf32> to vector<128x16xf32>
    %5 = arith.addf %2, %4 : vector<128x16xf32>
    %c0_5 = arith.constant 0 : index
    %c0_6 = arith.constant 0 : index
    %6 = vector.load %arg4[%c0_5, %c0_6] : memref<128x16xf32, #tpu.memory_space<vmem>>, vector<128x16xf32>
    tpu.vector_store %arg4[%c0_5, %c0_6], %5 {strides = array<i32>} : memref<128x16xf32, #tpu.memory_space<vmem>>, vector<128x16xf32>,
    return
  }
  func.func @transform_0(%arg0: i32) -> (i32, i32) {
    %c0_i32 = arith.constant 0 : i32
    %c0_i32_0 = arith.constant 0 : i32
    return %arg0, %c0_i32 : i32, i32
  }
  func.func @transform_1(%arg0: i32) -> (i32, i32) {
    %c0_i32 = arith.constant 0 : i32
    %c0_i32_0 = arith.constant 0 : i32
    %c0_i32_1 = arith.constant 0 : i32
    return %c0_i32, %c0_i32_0 : i32, i32
  }
  func.func @transform_2(%arg0: i32) -> (i32, i32) {
    %c0_i32 = arith.constant 0 : i32
    %c0_i32_0 = arith.constant 0 : i32
    %c0_i32_1 = arith.constant 0 : i32
    return %c0_i32, %c0_i32_0 : i32, i32
  }
  func.func @transform_3(%arg0: i32) -> (i32, i32) {
    %c0_i32 = arith.constant 0 : i32
    %c0_i32_0 = arith.constant 0 : i32
    return %arg0, %c0_i32 : i32, i32
  }
}

module attributes {stable_mosaic.version = 11 : i64} {
  func.func @_fused_matmul_kernel(%arg0: i32, %arg1: memref<128x128xbf16, #tpu.memory_space<vmem>>, %arg2: memref<128x16xbf16, #tpu.memory_space<vmem>>, %arg3: memref<1x16xf32, #tpu.memory_space<vmem>>, %arg4: memref<128x16xf32, #tpu.memory_space<vmem>>) attributes {dimension_semantics = [#tpu.dimension_semantics<parallel>], iteration_bounds = array<i64: 1>, scalar_prefetch = 0 : i64, scratch_operands = 0 : i64, tpu.core_type = #tpu.core_type<tc>, window_params = [{transform_indices = @transform_0, window_bounds = array<i64: 128, 128>}, {pipeline_mode = #tpu.pipeline_mode<synchronous>, transform_indices = @transform_1, window_bounds = array<i64: 128, 16>}, {pipeline_mode = #tpu.pipeline_mode<synchronous>, transform_indices = @transform_2, window_bounds = array<i64: 1, 16>}, {transform_indices = @transform_3, window_bounds = array<i64: 128, 16>}]} {
    %c0 = arith.constant 0 : index
    %c0_0 = arith.constant 0 : index
    %0 = vector.load %arg1[%c0, %c0_0] : memref<128x128xbf16, #tpu.memory_space<vmem>>, vector<128x128xbf16>
    %c0_1 = arith.constant 0 : index
    %c0_2 = arith.constant 0 : index
    %1 = vector.load %arg2[%c0_1, %c0_2] : memref<128x16xbf16, #tpu.memory_space<vmem>>, vector<128x16xbf16>
    %cst = arith.constant dense<0.000000e+00> : vector<128x16xf32>
    %2 = tpu.matmul %0, %1, %cst {dimension_numbers = #tpu.dot_dimension_numbers<[1], [0], [0], [1], [0, 0, 1, 1], [], []>} : vector<128x128xbf16>, vector<128x16xbf16>, vector<128x16xf32> -> vector<128x16xf32>
    %c0_3 = arith.constant 0 : index
    %c0_4 = arith.constant 0 : index
    %3 = vector.load %arg3[%c0_3, %c0_4] : memref<1x16xf32, #tpu.memory_space<vmem>>, vector<1x16xf32>
    %4 = vector.broadcast %3 : vector<1x16xf32> to vector<128x16xf32>
    %5 = arith.addf %2, %4 : vector<128x16xf32>
    %c0_5 = arith.constant 0 : index
    %c0_6 = arith.constant 0 : index
    %6 = vector.load %arg4[%c0_5, %c0_6] : memref<128x16xf32, #tpu.memory_space<vmem>>, vector<128x16xf32>
    tpu.vector_store %arg4[%c0_5, %c0_6], %5 {strides = array<i32>} : memref<128x16xf32, #tpu.memory_space<vmem>>, vector<128x16xf32>,
    return
  }
  func.func @transform_0(%arg0: i32) -> (i32, i32) {
    %c0_i32 = arith.constant 0 : i32
    %c0_i32_0 = arith.constant 0 : i32
    return %arg0, %c0_i32 : i32, i32
  }
  func.func @transform_1(%arg0: i32) -> (i32, i32) {
    %c0_i32 = arith.constant 0 : i32
    %c0_i32_0 = arith.constant 0 : i32
    %c0_i32_1 = arith.constant 0 : i32
    return %c0_i32, %c0_i32_0 : i32, i32
  }
  func.func @transform_2(%arg0: i32) -> (i32, i32) {
    %c0_i32 = arith.constant 0 : i32
    %c0_i32_0 = arith.constant 0 : i32
    %c0_i32_1 = arith.constant 0 : i32
    return %c0_i32, %c0_i32_0 : i32, i32
  }
  func.func @transform_3(%arg0: i32) -> (i32, i32) {
    %c0_i32 = arith.constant 0 : i32
    %c0_i32_0 = arith.constant 0 : i32
    return %arg0, %c0_i32 : i32, i32
  }
}

module attributes {stable_mosaic.version = 11 : i64} {
  func.func @_fused_matmul2_kernel(%arg0: i32, %arg1: memref<512x144xbf16, #tpu.memory_space<vmem>>, %arg2: memref<512x144xbf16, #tpu.memory_space<vmem>>, %arg3: memref<144x16xbf16, #tpu.memory_space<vmem>>, %arg4: memref<144x16xbf16, #tpu.memory_space<vmem>>, %arg5: memref<1x16xf32, #tpu.memory_space<vmem>>, %arg6: memref<512x16xf32, #tpu.memory_space<vmem>>) attributes {dimension_semantics = [#tpu.dimension_semantics<parallel>], iteration_bounds = array<i64: 1>, scalar_prefetch = 0 : i64, scratch_operands = 0 : i64, tpu.core_type = #tpu.core_type<tc>, window_params = [{transform_indices = @transform_0, window_bounds = array<i64: 512, 144>}, {transform_indices = @transform_1, window_bounds = array<i64: 512, 144>}, {pipeline_mode = #tpu.pipeline_mode<synchronous>, transform_indices = @transform_2, window_bounds = array<i64: 144, 16>}, {pipeline_mode = #tpu.pipeline_mode<synchronous>, transform_indices = @transform_3, window_bounds = array<i64: 144, 16>}, {pipeline_mode = #tpu.pipeline_mode<synchronous>, transform_indices = @transform_4, window_bounds = array<i64: 1, 16>}, {transform_indices = @transform_5, window_bounds = array<i64: 512, 16>}]} {
    %c0 = arith.constant 0 : index
    %c0_0 = arith.constant 0 : index
    %0 = vector.load %arg1[%c0, %c0_0] : memref<512x144xbf16, #tpu.memory_space<vmem>>, vector<512x144xbf16>
    %c0_1 = arith.constant 0 : index
    %c0_2 = arith.constant 0 : index
    %1 = vector.load %arg3[%c0_1, %c0_2] : memref<144x16xbf16, #tpu.memory_space<vmem>>, vector<144x16xbf16>
    %cst = arith.constant dense<0.000000e+00> : vector<512x16xf32>
    %2 = tpu.matmul %0, %1, %cst {dimension_numbers = #tpu.dot_dimension_numbers<[1], [0], [0], [1], [0, 0, 1, 1], [], []>} : vector<512x144xbf16>, vector<144x16xbf16>, vector<512x16xf32> -> vector<512x16xf32>
    %c0_3 = arith.constant 0 : index
    %c0_4 = arith.constant 0 : index
    %3 = vector.load %arg2[%c0_3, %c0_4] : memref<512x144xbf16, #tpu.memory_space<vmem>>, vector<512x144xbf16>
    %c0_5 = arith.constant 0 : index
    %c0_6 = arith.constant 0 : index
    %4 = vector.load %arg4[%c0_5, %c0_6] : memref<144x16xbf16, #tpu.memory_space<vmem>>, vector<144x16xbf16>
    %cst_7 = arith.constant dense<0.000000e+00> : vector<512x16xf32>
    %5 = tpu.matmul %3, %4, %cst_7 {dimension_numbers = #tpu.dot_dimension_numbers<[1], [0], [0], [1], [0, 0, 1, 1], [], []>} : vector<512x144xbf16>, vector<144x16xbf16>, vector<512x16xf32> -> vector<512x16xf32>
    %6 = arith.addf %2, %5 : vector<512x16xf32>
    %c0_8 = arith.constant 0 : index
    %c0_9 = arith.constant 0 : index
    %7 = vector.load %arg5[%c0_8, %c0_9] : memref<1x16xf32, #tpu.memory_space<vmem>>, vector<1x16xf32>
    %8 = vector.broadcast %7 : vector<1x16xf32> to vector<512x16xf32>
    %9 = arith.addf %6, %8 : vector<512x16xf32>
    %cst_10 = arith.constant 0.000000e+00 : f32
    %10 = vector.broadcast %cst_10 : f32 to vector<512x16xf32>
    %11 = arith.maximumf %9, %10 : vector<512x16xf32>
    %c0_11 = arith.constant 0 : index
    %c0_12 = arith.constant 0 : index
    %12 = vector.load %arg6[%c0_11, %c0_12] : memref<512x16xf32, #tpu.memory_space<vmem>>, vector<512x16xf32>
    tpu.vector_store %arg6[%c0_11, %c0_12], %11 {strides = array<i32>} : memref<512x16xf32, #tpu.memory_space<vmem>>, vector<512x16xf32>,
    return
  }
  func.func @transform_0(%arg0: i32) -> (i32, i32) {
    %c0_i32 = arith.constant 0 : i32
    %c0_i32_0 = arith.constant 0 : i32
    return %arg0, %c0_i32 : i32, i32
  }
  func.func @transform_1(%arg0: i32) -> (i32, i32) {
    %c0_i32 = arith.constant 0 : i32
    %c0_i32_0 = arith.constant 0 : i32
    return %arg0, %c0_i32 : i32, i32
  }
  func.func @transform_2(%arg0: i32) -> (i32, i32) {
    %c0_i32 = arith.constant 0 : i32
    %c0_i32_0 = arith.constant 0 : i32
    %c0_i32_1 = arith.constant 0 : i32
    return %c0_i32, %c0_i32_0 : i32, i32
  }
  func.func @transform_3(%arg0: i32) -> (i32, i32) {
    %c0_i32 = arith.constant 0 : i32
    %c0_i32_0 = arith.constant 0 : i32
    %c0_i32_1 = arith.constant 0 : i32
    return %c0_i32, %c0_i32_0 : i32, i32
  }
  func.func @transform_4(%arg0: i32) -> (i32, i32) {
    %c0_i32 = arith.constant 0 : i32
    %c0_i32_0 = arith.constant 0 : i32
    %c0_i32_1 = arith.constant 0 : i32
    return %c0_i32, %c0_i32_0 : i32, i32
  }
  func.func @transform_5(%arg0: i32) -> (i32, i32) {
    %c0_i32 = arith.constant 0 : i32
    %c0_i32_0 = arith.constant 0 : i32
    return %arg0, %c0_i32 : i32, i32
  }
}

module attributes {stable_mosaic.version = 11 : i64} {
  func.func @_fused_matmul_kernel(%arg0: i32, %arg1: memref<512x16xbf16, #tpu.memory_space<vmem>>, %arg2: memref<16x3xbf16, #tpu.memory_space<vmem>>, %arg3: memref<1x3xf32, #tpu.memory_space<vmem>>, %arg4: memref<512x3xf32, #tpu.memory_space<vmem>>) attributes {dimension_semantics = [#tpu.dimension_semantics<parallel>], iteration_bounds = array<i64: 1>, scalar_prefetch = 0 : i64, scratch_operands = 0 : i64, tpu.core_type = #tpu.core_type<tc>, window_params = [{transform_indices = @transform_0, window_bounds = array<i64: 512, 16>}, {pipeline_mode = #tpu.pipeline_mode<synchronous>, transform_indices = @transform_1, window_bounds = array<i64: 16, 3>}, {pipeline_mode = #tpu.pipeline_mode<synchronous>, transform_indices = @transform_2, window_bounds = array<i64: 1, 3>}, {transform_indices = @transform_3, window_bounds = array<i64: 512, 3>}]} {
    %c0 = arith.constant 0 : index
    %c0_0 = arith.constant 0 : index
    %0 = vector.load %arg1[%c0, %c0_0] : memref<512x16xbf16, #tpu.memory_space<vmem>>, vector<512x16xbf16>
    %c0_1 = arith.constant 0 : index
    %c0_2 = arith.constant 0 : index
    %1 = vector.load %arg2[%c0_1, %c0_2] : memref<16x3xbf16, #tpu.memory_space<vmem>>, vector<16x3xbf16>
    %cst = arith.constant dense<0.000000e+00> : vector<512x3xf32>
    %2 = tpu.matmul %0, %1, %cst {dimension_numbers = #tpu.dot_dimension_numbers<[1], [0], [0], [1], [0, 0, 1, 1], [], []>} : vector<512x16xbf16>, vector<16x3xbf16>, vector<512x3xf32> -> vector<512x3xf32>
    %c0_3 = arith.constant 0 : index
    %c0_4 = arith.constant 0 : index
    %3 = vector.load %arg3[%c0_3, %c0_4] : memref<1x3xf32, #tpu.memory_space<vmem>>, vector<1x3xf32>
    %4 = vector.broadcast %3 : vector<1x3xf32> to vector<512x3xf32>
    %5 = arith.addf %2, %4 : vector<512x3xf32>
    %c0_5 = arith.constant 0 : index
    %c0_6 = arith.constant 0 : index
    %6 = vector.load %arg4[%c0_5, %c0_6] : memref<512x3xf32, #tpu.memory_space<vmem>>, vector<512x3xf32>
    tpu.vector_store %arg4[%c0_5, %c0_6], %5 {strides = array<i32>} : memref<512x3xf32, #tpu.memory_space<vmem>>, vector<512x3xf32>,
    return
  }
  func.func @transform_0(%arg0: i32) -> (i32, i32) {
    %c0_i32 = arith.constant 0 : i32
    %c0_i32_0 = arith.constant 0 : i32
    return %arg0, %c0_i32 : i32, i32
  }
  func.func @transform_1(%arg0: i32) -> (i32, i32) {
    %c0_i32 = arith.constant 0 : i32
    %c0_i32_0 = arith.constant 0 : i32
    %c0_i32_1 = arith.constant 0 : i32
    return %c0_i32, %c0_i32_0 : i32, i32
  }
  func.func @transform_2(%arg0: i32) -> (i32, i32) {
    %c0_i32 = arith.constant 0 : i32
    %c0_i32_0 = arith.constant 0 : i32
    %c0_i32_1 = arith.constant 0 : i32
    return %c0_i32, %c0_i32_0 : i32, i32
  }
  func.func @transform_3(%arg0: i32) -> (i32, i32) {
    %c0_i32 = arith.constant 0 : i32
    %c0_i32_0 = arith.constant 0 : i32
    return %arg0, %c0_i32 : i32, i32
  }
}

</mosaic_0001>

<llo_original>
// kernel: unet2d_forward.27
$region0: #{unet2d_forward.27}
  #allocation0 [shape = 'u32[]', space=smem, size = 0x4, offset = 0x4, fixed_abs, tag = 'smem constant byte address 0x4 - core index']
  #allocation1 [shape = 'u32[72,128]{1,0:T(1,128)}', space=vmem, size = 0x9000, scoped, tag = 'internal scratch']
  %s0 = inlined_call_operand.vmem [shape: bf16[512,36], index: 0, kind: input, shape index: {}]
  %s1 = inlined_call_operand.vmem [shape: bf16[36,16], index: 1, kind: input, shape index: {}]
  %s2 = inlined_call_operand.vmem [shape: f32[1,16], index: 2, kind: input, shape index: {}]
  %s3 = inlined_call_operand.vmem [shape: f32[512,16], index: 3, kind: output, shape index: {}]
  %s4 = sld [smem:[#allocation0]]
  $region22: #{unet2d_forward.27} parent=0
    _
  %s6 = ssub.s32 1, %s4
  %s7 = scalar_select 0, %s6, %s4
  // Predicated region
  $region2: #{unet2d_forward.27} parent=0 // pred_check
    _
  $region3: #{unet2d_forward.27} parent=0 // pred_check_branch
    %9 = sbr.rel (0) target = $region5
  $region4: #{unet2d_forward.27} parent=0 // pred_region
    _
  $region5: #{unet2d_forward.27} parent=0 // pred_fallthru
    _
  // Predicated region
  $region6: #{unet2d_forward.27} parent=0 // pred_check
    _
  $region7: #{unet2d_forward.27} parent=0 // pred_check_branch
    %11 = sbr.rel (0) target = $region9
  $region8: #{unet2d_forward.27} parent=0 // pred_region
    _
  $region9: #{unet2d_forward.27} parent=0 // pred_fallthru
    _
  // Predicated region
  $region10: #{unet2d_forward.27} parent=0 // pred_check
    _
  $region11: #{unet2d_forward.27} parent=0 // pred_check_branch
    %13 = sbr.rel (0) target = $region13
  $region12: #{unet2d_forward.27} parent=0 // pred_region
    _
  $region13: #{unet2d_forward.27} parent=0 // pred_fallthru
    _
  %v15 = vld [vmem:[%s0] sm:$0xf]
  %v16 = vld [vmem:[%s0 + $0x4] sm:$0xf]
  %v17 = vld [vmem:[%s0 + $0x8] sm:$0xf]
  %v18 = vld [vmem:[%s0 + $0xc] sm:$0xf]
  %v19 = vld [vmem:[%s0 + $0x10] sm:$0xf]
  %v20 = vld [vmem:[%s0 + $0x14] sm:$0xf]
  %v21 = vld [vmem:[%s0 + $0x18] sm:$0xf]
  %v22 = vld [vmem:[%s0 + $0x1c] sm:$0xf]
  %v23 = vld [vmem:[%s0 + $0x20] sm:$0xf]
  %v24 = vld [vmem:[%s0 + $0x24] sm:$0xf]
  %v25 = vld [vmem:[%s0 + $0x28] sm:$0xf]
  %v26 = vld [vmem:[%s0 + $0x2c] sm:$0xf]
  %v27 = vld [vmem:[%s0 + $0x30] sm:$0xf]
  %v28 = vld [vmem:[%s0 + $0x34] sm:$0xf]
  %v29 = vld [vmem:[%s0 + $0x38] sm:$0xf]
  %v30 = vld [vmem:[%s0 + $0x3c] sm:$0xf]
  %v31 = vld [vmem:[%s0 + $0x40] sm:$0xf]
  %v32 = vld [vmem:[%s0 + $0x44] sm:$0xf]
  %v33 = vld [vmem:[%s0 + $0x48] sm:$0xf]
  %v34 = vld [vmem:[%s0 + $0x4c] sm:$0xf]
  %v35 = vld [vmem:[%s0 + $0x50] sm:$0xf]
  %v36 = vld [vmem:[%s0 + $0x54] sm:$0xf]
  %v37 = vld [vmem:[%s0 + $0x58] sm:$0xf]
  %v38 = vld [vmem:[%s0 + $0x5c] sm:$0xf]
  %v39 = vld [vmem:[%s0 + $0x60] sm:$0xf]
  %v40 = vld [vmem:[%s0 + $0x64] sm:$0xf]
  %v41 = vld [vmem:[%s0 + $0x68] sm:$0xf]
  %v42 = vld [vmem:[%s0 + $0x6c] sm:$0xf]
  %v43 = vld [vmem:[%s0 + $0x70] sm:$0xf]
  %v44 = vld [vmem:[%s0 + $0x74] sm:$0xf]
  %v45 = vld [vmem:[%s0 + $0x78] sm:$0xf]
  %v46 = vld [vmem:[%s0 + $0x7c] sm:$0xf]
  %v47 = vld [vmem:[%s0 + $0x80] sm:$0xf]
  %v48 = vld [vmem:[%s0 + $0x84] sm:$0xf]
  %v49 = vld [vmem:[%s0 + $0x88] sm:$0xf]
  %v50 = vld [vmem:[%s0 + $0x8c] sm:$0xf]
  %v51 = vld [vmem:[%s0 + $0x90] sm:$0xf]
  %v52 = vld [vmem:[%s0 + $0x94] sm:$0xf]
  %v53 = vld [vmem:[%s0 + $0x98] sm:$0xf]
  %v54 = vld [vmem:[%s0 + $0x9c] sm:$0xf]
  %v55 = vld [vmem:[%s0 + $0xa0] sm:$0xf]
  %v56 = vld [vmem:[%s0 + $0xa4] sm:$0xf]
  %v57 = vld [vmem:[%s0 + $0xa8] sm:$0xf]
  %v58 = vld [vmem:[%s0 + $0xac] sm:$0xf]
  %v59 = vld [vmem:[%s0 + $0xb0] sm:$0xf]
  %v60 = vld [vmem:[%s0 + $0xb4] sm:$0xf]
  %v61 = vld [vmem:[%s0 + $0xb8] sm:$0xf]
  %v62 = vld [vmem:[%s0 + $0xbc] sm:$0xf]
  %v63 = vld [vmem:[%s0 + $0xc0] sm:$0xf]
  %v64 = vld [vmem:[%s0 + $0xc4] sm:$0xf]
  %v65 = vld [vmem:[%s0 + $0xc8] sm:$0xf]
  %v66 = vld [vmem:[%s0 + $0xcc] sm:$0xf]
  %v67 = vld [vmem:[%s0 + $0xd0] sm:$0xf]
  %v68 = vld [vmem:[%s0 + $0xd4] sm:$0xf]
  %v69 = vld [vmem:[%s0 + $0xd8] sm:$0xf]
  %v70 = vld [vmem:[%s0 + $0xdc] sm:$0xf]
  %v71 = vld [vmem:[%s0 + $0xe0] sm:$0xf]
  %v72 = vld [vmem:[%s0 + $0xe4] sm:$0xf]
  %v73 = vld [vmem:[%s0 + $0xe8] sm:$0xf]
  %v74 = vld [vmem:[%s0 + $0xec] sm:$0xf]
  %v75 = vld [vmem:[%s0 + $0xf0] sm:$0xf]
  %v76 = vld [vmem:[%s0 + $0xf4] sm:$0xf]
  %v77 = vld [vmem:[%s0 + $0xf8] sm:$0xf]
  %v78 = vld [vmem:[%s0 + $0xfc] sm:$0xf]
  %v79 = vld [vmem:[%s1] sm:$0xf]
  %v80 = vld [vmem:[%s1 + $0x4] sm:$0xf]
  %v81 = vld [vmem:[%s1 + $0x8] sm:$0xf]
  %v82 = vld [vmem:[%s1 + $0xc] sm:$0xf]
  %v83 = vld [vmem:[%s1 + $0x10] sm:$0x3]
  %v84 = vld [vmem:[%s2] sm:$0x1]
  %v86 = vperm.slane %v84, 0
  %v152 = vunpack.c.l.b16 %v15
  %v153 = vunpack.c.l.b16 %v16
  %v154 = vunpack.c.l.b16 %v17
  %v155 = vunpack.c.l.b16 %v18
  %v156 = vunpack.c.l.b16 %v19
  %v157 = vunpack.c.l.b16 %v20
  %v158 = vunpack.c.l.b16 %v21
  %v159 = vunpack.c.l.b16 %v22
  %v160 = vunpack.c.l.b16 %v23
  %v161 = vunpack.c.l.b16 %v24
  %v162 = vunpack.c.l.b16 %v25
  %v163 = vunpack.c.l.b16 %v26
  %v164 = vunpack.c.l.b16 %v27
  %v165 = vunpack.c.l.b16 %v28
  %v166 = vunpack.c.l.b16 %v29
  %v167 = vunpack.c.l.b16 %v30
  %v168 = vunpack.c.l.b16 %v31
  %v169 = vunpack.c.l.b16 %v32
  %v170 = vunpack.c.l.b16 %v33
  %v171 = vunpack.c.l.b16 %v34
  %v172 = vunpack.c.l.b16 %v35
  %v173 = vunpack.c.l.b16 %v36
  %v174 = vunpack.c.l.b16 %v37
  %v175 = vunpack.c.l.b16 %v38
  %v176 = vunpack.c.l.b16 %v39
  %v177 = vunpack.c.l.b16 %v40
  %v178 = vunpack.c.l.b16 %v41
  %v179 = vunpack.c.l.b16 %v42
  %v180 = vunpack.c.l.b16 %v43
  %v181 = vunpack.c.l.b16 %v44
  %v182 = vunpack.c.l.b16 %v45
  %v183 = vunpack.c.l.b16 %v46
  %v184 = vunpack.c.l.b16 %v47
  %v185 = vunpack.c.l.b16 %v48
  %v186 = vunpack.c.l.b16 %v49
  %v187 = vunpack.c.l.b16 %v50
  %v188 = vunpack.c.l.b16 %v51
  %v189 = vunpack.c.l.b16 %v52
  %v190 = vunpack.c.l.b16 %v53
  %v191 = vunpack.c.l.b16 %v54
  %v192 = vunpack.c.l.b16 %v55
  %v193 = vunpack.c.l.b16 %v56
  %v194 = vunpack.c.l.b16 %v57
  %v195 = vunpack.c.l.b16 %v58
  %v196 = vunpack.c.l.b16 %v59
  %v197 = vunpack.c.l.b16 %v60
  %v198 = vunpack.c.l.b16 %v61
  %v199 = vunpack.c.l.b16 %v62
  %v200 = vunpack.c.l.b16 %v63
  %v201 = vunpack.c.l.b16 %v64
  %v202 = vunpack.c.l.b16 %v65
  %v203 = vunpack.c.l.b16 %v66
  %v204 = vunpack.c.l.b16 %v67
  %v205 = vunpack.c.l.b16 %v68
  %v206 = vunpack.c.l.b16 %v69
  %v207 = vunpack.c.l.b16 %v70
  %v208 = vunpack.c.l.b16 %v71
  %v209 = vunpack.c.l.b16 %v72
  %v210 = vunpack.c.l.b16 %v73
  %v211 = vunpack.c.l.b16 %v74
  %v212 = vunpack.c.l.b16 %v75
  %v213 = vunpack.c.l.b16 %v76
  %v214 = vunpack.c.l.b16 %v77
  %v215 = vunpack.c.l.b16 %v78
  %v216 = vpack.c.b16 %v153, %v152
  %v217 = vpack.c.b16 %v155, %v154
  %v218 = vpack.c.b16 %v157, %v156
  %v219 = vpack.c.b16 %v159, %v158
  %v220 = vpack.c.b16 %v161, %v160
  %v221 = vpack.c.b16 %v163, %v162
  %v222 = vpack.c.b16 %v165, %v164
  %v223 = vpack.c.b16 %v167, %v166
  %v224 = vpack.c.b16 %v169, %v168
  %v225 = vpack.c.b16 %v171, %v170
  %v226 = vpack.c.b16 %v173, %v172
  %v227 = vpack.c.b16 %v175, %v174
  %v228 = vpack.c.b16 %v177, %v176
  %v229 = vpack.c.b16 %v179, %v178
  %v230 = vpack.c.b16 %v181, %v180
  %v231 = vpack.c.b16 %v183, %v182
  %v232 = vpack.c.b16 %v185, %v184
  %v233 = vpack.c.b16 %v187, %v186
  %v234 = vpack.c.b16 %v189, %v188
  %v235 = vpack.c.b16 %v191, %v190
  %v236 = vpack.c.b16 %v193, %v192
  %v237 = vpack.c.b16 %v195, %v194
  %v238 = vpack.c.b16 %v197, %v196
  %v239 = vpack.c.b16 %v199, %v198
  %v240 = vpack.c.b16 %v201, %v200
  %v241 = vpack.c.b16 %v203, %v202
  %v242 = vpack.c.b16 %v205, %v204
  %v243 = vpack.c.b16 %v207, %v206
  %v244 = vpack.c.b16 %v209, %v208
  %v245 = vpack.c.b16 %v211, %v210
  %v246 = vpack.c.b16 %v213, %v212
  %v247 = vpack.c.b16 %v215, %v214
  %v253 = vunpack.c.l.b16 %v79
  %v254 = vunpack.c.l.b16 %v80
  %v255 = vunpack.c.l.b16 %v81
  %v256 = vunpack.c.l.b16 %v82
  %v257 = vunpack.c.l.b16 %v83
  %v258 = vpack.c.b16 %v254, %v253
  %v259 = vpack.c.b16 %v256, %v255
  %v260 = vpack.c.b16 %v257, %v257
  %vm263 = vcmask 293888
  %v265 = vsel %vm263, %v216, 0
  %v268 = vsel %vm263, %v217, 0
  %v271 = vsel %vm263, %v218, 0
  %v274 = vsel %vm263, %v219, 0
  %v277 = vsel %vm263, %v220, 0
  %v280 = vsel %vm263, %v221, 0
  %v283 = vsel %vm263, %v222, 0
  %v286 = vsel %vm263, %v223, 0
  %v289 = vsel %vm263, %v224, 0
  %v292 = vsel %vm263, %v225, 0
  %v295 = vsel %vm263, %v226, 0
  %v298 = vsel %vm263, %v227, 0
  %v301 = vsel %vm263, %v228, 0
  %v304 = vsel %vm263, %v229, 0
  %v307 = vsel %vm263, %v230, 0
  %v310 = vsel %vm263, %v231, 0
  %v313 = vsel %vm263, %v232, 0
  %v316 = vsel %vm263, %v233, 0
  %v319 = vsel %vm263, %v234, 0
  %v322 = vsel %vm263, %v235, 0
  %v325 = vsel %vm263, %v236, 0
  %v328 = vsel %vm263, %v237, 0
  %v331 = vsel %vm263, %v238, 0
  %v334 = vsel %vm263, %v239, 0
  %v337 = vsel %vm263, %v240, 0
  %v340 = vsel %vm263, %v241, 0
  %v343 = vsel %vm263, %v242, 0
  %v346 = vsel %vm263, %v243, 0
  %v349 = vsel %vm263, %v244, 0
  %v352 = vsel %vm263, %v245, 0
  %v355 = vsel %vm263, %v246, 0
  %v358 = vsel %vm263, %v247, 0
  %vm360 = vcmask 1041408
  %v362 = vsel %vm360, %v260, 0
  %364 = vmatpush.bf16.msra.mxu0 0
  %365 = vmatpush.bf16.msra.mxu0 0
  %366 = vmatpush.bf16.msra.mxu0 0
  %367 = vmatpush.bf16.msra.mxu0 0
  %368 = vmatpush.bf16.msra.mxu0 0
  %369 = vmatpush.bf16.msra.mxu0 %v362
  %370 = vmatpush.bf16.msra.mxu0 %v259
  %371 = vmatpush.bf16.msra.mxu0 %v258
  %372 = vmatmul.bf16.gmra.mxu0 %v265
  %v373 = vpop.f32.mrf.mxu0
  %v374 = vadd.f32 %v86, %v373
  %v375 = vpop.f32.mrf.mxu0
  %v376 = vadd.f32 %v86, %v375
  %377 = vmatmul.bf16.gmra.mxu0 %v268
  %v378 = vpop.f32.mrf.mxu0
  %v379 = vadd.f32 %v86, %v378
  %v380 = vpop.f32.mrf.mxu0
  %v381 = vadd.f32 %v86, %v380
  %382 = vmatmul.bf16.gmra.mxu0 %v271
  %v383 = vpop.f32.mrf.mxu0
  %v384 = vadd.f32 %v86, %v383
  %v385 = vpop.f32.mrf.mxu0
  %v386 = vadd.f32 %v86, %v385
  %387 = vmatmul.bf16.gmra.mxu0 %v274
  %v388 = vpop.f32.mrf.mxu0
  %v389 = vadd.f32 %v86, %v388
  %v390 = vpop.f32.mrf.mxu0
  %v391 = vadd.f32 %v86, %v390
  %392 = vmatmul.bf16.gmra.mxu0 %v277
  %v393 = vpop.f32.mrf.mxu0
  %v394 = vadd.f32 %v86, %v393
  %v395 = vpop.f32.mrf.mxu0
  %v396 = vadd.f32 %v86, %v395
  %397 = vmatmul.bf16.gmra.mxu0 %v280
  %v398 = vpop.f32.mrf.mxu0
  %v399 = vadd.f32 %v86, %v398
  %v400 = vpop.f32.mrf.mxu0
  %v401 = vadd.f32 %v86, %v400
  %402 = vmatmul.bf16.gmra.mxu0 %v283
  %v403 = vpop.f32.mrf.mxu0
  %v404 = vadd.f32 %v86, %v403
  %v405 = vpop.f32.mrf.mxu0
  %v406 = vadd.f32 %v86, %v405
  %407 = vmatmul.bf16.gmra.mxu0 %v286
  %v408 = vpop.f32.mrf.mxu0
  %v409 = vadd.f32 %v86, %v408
  %v410 = vpop.f32.mrf.mxu0
  %v411 = vadd.f32 %v86, %v410
  %412 = vmatmul.bf16.gmra.mxu0 %v289
  %v413 = vpop.f32.mrf.mxu0
  %v414 = vadd.f32 %v86, %v413
  %v415 = vpop.f32.mrf.mxu0
  %v416 = vadd.f32 %v86, %v415
  %417 = vmatmul.bf16.gmra.mxu0 %v292
  %v418 = vpop.f32.mrf.mxu0
  %v419 = vadd.f32 %v86, %v418
  %v420 = vpop.f32.mrf.mxu0
  %v421 = vadd.f32 %v86, %v420
  %422 = vmatmul.bf16.gmra.mxu0 %v295
  %v423 = vpop.f32.mrf.mxu0
  %v424 = vadd.f32 %v86, %v423
  %v425 = vpop.f32.mrf.mxu0
  %v426 = vadd.f32 %v86, %v425
  %427 = vmatmul.bf16.gmra.mxu0 %v298
  %v428 = vpop.f32.mrf.mxu0
  %v429 = vadd.f32 %v86, %v428
  %v430 = vpop.f32.mrf.mxu0
  %v431 = vadd.f32 %v86, %v430
  %432 = vmatmul.bf16.gmra.mxu0 %v301
  %v433 = vpop.f32.mrf.mxu0
  %v434 = vadd.f32 %v86, %v433
  %v435 = vpop.f32.mrf.mxu0
  %v436 = vadd.f32 %v86, %v435
  %437 = vmatmul.bf16.gmra.mxu0 %v304
  %v438 = vpop.f32.mrf.mxu0
  %v439 = vadd.f32 %v86, %v438
  %v440 = vpop.f32.mrf.mxu0
  %v441 = vadd.f32 %v86, %v440
  %442 = vmatmul.bf16.gmra.mxu0 %v307
  %v443 = vpop.f32.mrf.mxu0
  %v444 = vadd.f32 %v86, %v443
  %v445 = vpop.f32.mrf.mxu0
  %v446 = vadd.f32 %v86, %v445
  %447 = vmatmul.bf16.gmra.mxu0 %v310
  %v448 = vpop.f32.mrf.mxu0
  %v449 = vadd.f32 %v86, %v448
  %v450 = vpop.f32.mrf.mxu0
  %v451 = vadd.f32 %v86, %v450
  %452 = vmatmul.bf16.gmra.mxu0 %v313
  %v453 = vpop.f32.mrf.mxu0
  %v454 = vadd.f32 %v86, %v453
  %v455 = vpop.f32.mrf.mxu0
  %v456 = vadd.f32 %v86, %v455
  %457 = vmatmul.bf16.gmra.mxu0 %v316
  %v458 = vpop.f32.mrf.mxu0
  %v459 = vadd.f32 %v86, %v458
  %v460 = vpop.f32.mrf.mxu0
  %v461 = vadd.f32 %v86, %v460
  %462 = vmatmul.bf16.gmra.mxu0 %v319
  %v463 = vpop.f32.mrf.mxu0
  %v464 = vadd.f32 %v86, %v463
  %v465 = vpop.f32.mrf.mxu0
  %v466 = vadd.f32 %v86, %v465
  %467 = vmatmul.bf16.gmra.mxu0 %v322
  %v468 = vpop.f32.mrf.mxu0
  %v469 = vadd.f32 %v86, %v468
  %v470 = vpop.f32.mrf.mxu0
  %v471 = vadd.f32 %v86, %v470
  %472 = vmatmul.bf16.gmra.mxu0 %v325
  %v473 = vpop.f32.mrf.mxu0
  %v474 = vadd.f32 %v86, %v473
  %v475 = vpop.f32.mrf.mxu0
  %v476 = vadd.f32 %v86, %v475
  %477 = vmatmul.bf16.gmra.mxu0 %v328
  %v478 = vpop.f32.mrf.mxu0
  %v479 = vadd.f32 %v86, %v478
  %v480 = vpop.f32.mrf.mxu0
  %v481 = vadd.f32 %v86, %v480
  %482 = vmatmul.bf16.gmra.mxu0 %v331
  %v483 = vpop.f32.mrf.mxu0
  %v484 = vadd.f32 %v86, %v483
  %v485 = vpop.f32.mrf.mxu0
  %v486 = vadd.f32 %v86, %v485
  %487 = vmatmul.bf16.gmra.mxu0 %v334
  %v488 = vpop.f32.mrf.mxu0
  %v489 = vadd.f32 %v86, %v488
  %v490 = vpop.f32.mrf.mxu0
  %v491 = vadd.f32 %v86, %v490
  %492 = vmatmul.bf16.gmra.mxu0 %v337
  %v493 = vpop.f32.mrf.mxu0
  %v494 = vadd.f32 %v86, %v493
  %v495 = vpop.f32.mrf.mxu0
  %v496 = vadd.f32 %v86, %v495
  %497 = vmatmul.bf16.gmra.mxu0 %v340
  %v498 = vpop.f32.mrf.mxu0
  %v499 = vadd.f32 %v86, %v498
  %v500 = vpop.f32.mrf.mxu0
  %v501 = vadd.f32 %v86, %v500
  %502 = vmatmul.bf16.gmra.mxu0 %v343
  %v503 = vpop.f32.mrf.mxu0
  %v504 = vadd.f32 %v86, %v503
  %v505 = vpop.f32.mrf.mxu0
  %v506 = vadd.f32 %v86, %v505
  %507 = vmatmul.bf16.gmra.mxu0 %v346
  %v508 = vpop.f32.mrf.mxu0
  %v509 = vadd.f32 %v86, %v508
  %v510 = vpop.f32.mrf.mxu0
  %v511 = vadd.f32 %v86, %v510
  %512 = vmatmul.bf16.gmra.mxu0 %v349
  %v513 = vpop.f32.mrf.mxu0
  %v514 = vadd.f32 %v86, %v513
  %v515 = vpop.f32.mrf.mxu0
  %v516 = vadd.f32 %v86, %v515
  %517 = vmatmul.bf16.gmra.mxu0 %v352
  %v518 = vpop.f32.mrf.mxu0
  %v519 = vadd.f32 %v86, %v518
  %v520 = vpop.f32.mrf.mxu0
  %v521 = vadd.f32 %v86, %v520
  %522 = vmatmul.bf16.gmra.mxu0 %v355
  %v523 = vpop.f32.mrf.mxu0
  %v524 = vadd.f32 %v86, %v523
  %v525 = vpop.f32.mrf.mxu0
  %v526 = vadd.f32 %v86, %v525
  %527 = vmatmul.bf16.gmra.mxu0 %v358
  %v528 = vpop.f32.mrf.mxu0
  %v529 = vadd.f32 %v86, %v528
  %v530 = vpop.f32.mrf.mxu0
  %v531 = vadd.f32 %v86, %v530
  %532 = vdwg.mxu0
  %v533 = vmax.f32 %v374, 0.0
  %v534 = vmax.f32 %v376, 0.0
  %v535 = vmax.f32 %v379, 0.0
  %v536 = vmax.f32 %v381, 0.0
  %v537 = vmax.f32 %v384, 0.0
  %v538 = vmax.f32 %v386, 0.0
  %v539 = vmax.f32 %v389, 0.0
  %v540 = vmax.f32 %v391, 0.0
  %v541 = vmax.f32 %v394, 0.0
  %v542 = vmax.f32 %v396, 0.0
  %v543 = vmax.f32 %v399, 0.0
  %v544 = vmax.f32 %v401, 0.0
  %v545 = vmax.f32 %v404, 0.0
  %v546 = vmax.f32 %v406, 0.0
  %v547 = vmax.f32 %v409, 0.0
  %v548 = vmax.f32 %v411, 0.0
  %v549 = vmax.f32 %v414, 0.0
  %v550 = vmax.f32 %v416, 0.0
  %v551 = vmax.f32 %v419, 0.0
  %v552 = vmax.f32 %v421, 0.0
  %v553 = vmax.f32 %v424, 0.0
  %v554 = vmax.f32 %v426, 0.0
  %v555 = vmax.f32 %v429, 0.0
  %v556 = vmax.f32 %v431, 0.0
  %v557 = vmax.f32 %v434, 0.0
  %v558 = vmax.f32 %v436, 0.0
  %v559 = vmax.f32 %v439, 0.0
  %v560 = vmax.f32 %v441, 0.0
  %v561 = vmax.f32 %v444, 0.0
  %v562 = vmax.f32 %v446, 0.0
  %v563 = vmax.f32 %v449, 0.0
  %v564 = vmax.f32 %v451, 0.0
  %v565 = vmax.f32 %v454, 0.0
  %v566 = vmax.f32 %v456, 0.0
  %v567 = vmax.f32 %v459, 0.0
  %v568 = vmax.f32 %v461, 0.0
  %v569 = vmax.f32 %v464, 0.0
  %v570 = vmax.f32 %v466, 0.0
  %v571 = vmax.f32 %v469, 0.0
  %v572 = vmax.f32 %v471, 0.0
  %v573 = vmax.f32 %v474, 0.0
  %v574 = vmax.f32 %v476, 0.0
  %v575 = vmax.f32 %v479, 0.0
  %v576 = vmax.f32 %v481, 0.0
  %v577 = vmax.f32 %v484, 0.0
  %v578 = vmax.f32 %v486, 0.0
  %v579 = vmax.f32 %v489, 0.0
  %v580 = vmax.f32 %v491, 0.0
  %v581 = vmax.f32 %v494, 0.0
  %v582 = vmax.f32 %v496, 0.0
  %v583 = vmax.f32 %v499, 0.0
  %v584 = vmax.f32 %v501, 0.0
  %v585 = vmax.f32 %v504, 0.0
  %v586 = vmax.f32 %v506, 0.0
  %v587 = vmax.f32 %v509, 0.0
  %v588 = vmax.f32 %v511, 0.0
  %v589 = vmax.f32 %v514, 0.0
  %v590 = vmax.f32 %v516, 0.0
  %v591 = vmax.f32 %v519, 0.0
  %v592 = vmax.f32 %v521, 0.0
  %v593 = vmax.f32 %v524, 0.0
  %v594 = vmax.f32 %v526, 0.0
  %v595 = vmax.f32 %v529, 0.0
  %v596 = vmax.f32 %v531, 0.0
  %vm597 = vcmask 130048
  %598 = vst.msk [vmem:[%s3] sm:$0xff] %vm597, %v533
  %599 = vst.msk [vmem:[%s3 + $0x8] sm:$0xff] %vm597, %v534
  %600 = vst.msk [vmem:[%s3 + $0x10] sm:$0xff] %vm597, %v535
  %601 = vst.msk [vmem:[%s3 + $0x18] sm:$0xff] %vm597, %v536
  %602 = vst.msk [vmem:[%s3 + $0x20] sm:$0xff] %vm597, %v537
  %603 = vst.msk [vmem:[%s3 + $0x28] sm:$0xff] %vm597, %v538
  %604 = vst.msk [vmem:[%s3 + $0x30] sm:$0xff] %vm597, %v539
  %605 = vst.msk [vmem:[%s3 + $0x38] sm:$0xff] %vm597, %v540
  %606 = vst.msk [vmem:[%s3 + $0x40] sm:$0xff] %vm597, %v541
  %607 = vst.msk [vmem:[%s3 + $0x48] sm:$0xff] %vm597, %v542
  %608 = vst.msk [vmem:[%s3 + $0x50] sm:$0xff] %vm597, %v543
  %609 = vst.msk [vmem:[%s3 + $0x58] sm:$0xff] %vm597, %v544
  %610 = vst.msk [vmem:[%s3 + $0x60] sm:$0xff] %vm597, %v545
  %611 = vst.msk [vmem:[%s3 + $0x68] sm:$0xff] %vm597, %v546
  %612 = vst.msk [vmem:[%s3 + $0x70] sm:$0xff] %vm597, %v547
  %613 = vst.msk [vmem:[%s3 + $0x78] sm:$0xff] %vm597, %v548
  %614 = vst.msk [vmem:[%s3 + $0x80] sm:$0xff] %vm597, %v549
  %615 = vst.msk [vmem:[%s3 + $0x88] sm:$0xff] %vm597, %v550
  %616 = vst.msk [vmem:[%s3 + $0x90] sm:$0xff] %vm597, %v551
  %617 = vst.msk [vmem:[%s3 + $0x98] sm:$0xff] %vm597, %v552
  %618 = vst.msk [vmem:[%s3 + $0xa0] sm:$0xff] %vm597, %v553
  %619 = vst.msk [vmem:[%s3 + $0xa8] sm:$0xff] %vm597, %v554
  %620 = vst.msk [vmem:[%s3 + $0xb0] sm:$0xff] %vm597, %v555
  %621 = vst.msk [vmem:[%s3 + $0xb8] sm:$0xff] %vm597, %v556
  %622 = vst.msk [vmem:[%s3 + $0xc0] sm:$0xff] %vm597, %v557
  %623 = vst.msk [vmem:[%s3 + $0xc8] sm:$0xff] %vm597, %v558
  %624 = vst.msk [vmem:[%s3 + $0xd0] sm:$0xff] %vm597, %v559
  %625 = vst.msk [vmem:[%s3 + $0xd8] sm:$0xff] %vm597, %v560
  %626 = vst.msk [vmem:[%s3 + $0xe0] sm:$0xff] %vm597, %v561
  %627 = vst.msk [vmem:[%s3 + $0xe8] sm:$0xff] %vm597, %v562
  %628 = vst.msk [vmem:[%s3 + $0xf0] sm:$0xff] %vm597, %v563
  %629 = vst.msk [vmem:[%s3 + $0xf8] sm:$0xff] %vm597, %v564
  %630 = vst.msk [vmem:[%s3 + $0x100] sm:$0xff] %vm597, %v565
  %631 = vst.msk [vmem:[%s3 + $0x108] sm:$0xff] %vm597, %v566
  %632 = vst.msk [vmem:[%s3 + $0x110] sm:$0xff] %vm597, %v567
  %633 = vst.msk [vmem:[%s3 + $0x118] sm:$0xff] %vm597, %v568
  %634 = vst.msk [vmem:[%s3 + $0x120] sm:$0xff] %vm597, %v569
  %635 = vst.msk [vmem:[%s3 + $0x128] sm:$0xff] %vm597, %v570
  %636 = vst.msk [vmem:[%s3 + $0x130] sm:$0xff] %vm597, %v571
  %637 = vst.msk [vmem:[%s3 + $0x138] sm:$0xff] %vm597, %v572
  %638 = vst.msk [vmem:[%s3 + $0x140] sm:$0xff] %vm597, %v573
  %639 = vst.msk [vmem:[%s3 + $0x148] sm:$0xff] %vm597, %v574
  %640 = vst.msk [vmem:[%s3 + $0x150] sm:$0xff] %vm597, %v575
  %641 = vst.msk [vmem:[%s3 + $0x158] sm:$0xff] %vm597, %v576
  %642 = vst.msk [vmem:[%s3 + $0x160] sm:$0xff] %vm597, %v577
  %643 = vst.msk [vmem:[%s3 + $0x168] sm:$0xff] %vm597, %v578
  %644 = vst.msk [vmem:[%s3 + $0x170] sm:$0xff] %vm597, %v579
  %645 = vst.msk [vmem:[%s3 + $0x178] sm:$0xff] %vm597, %v580
  %646 = vst.msk [vmem:[%s3 + $0x180] sm:$0xff] %vm597, %v581
  %647 = vst.msk [vmem:[%s3 + $0x188] sm:$0xff] %vm597, %v582
  %648 = vst.msk [vmem:[%s3 + $0x190] sm:$0xff] %vm597, %v583
  %649 = vst.msk [vmem:[%s3 + $0x198] sm:$0xff] %vm597, %v584
  %650 = vst.msk [vmem:[%s3 + $0x1a0] sm:$0xff] %vm597, %v585
  %651 = vst.msk [vmem:[%s3 + $0x1a8] sm:$0xff] %vm597, %v586
  %652 = vst.msk [vmem:[%s3 + $0x1b0] sm:$0xff] %vm597, %v587
  %653 = vst.msk [vmem:[%s3 + $0x1b8] sm:$0xff] %vm597, %v588
  %654 = vst.msk [vmem:[%s3 + $0x1c0] sm:$0xff] %vm597, %v589
  %655 = vst.msk [vmem:[%s3 + $0x1c8] sm:$0xff] %vm597, %v590
  %656 = vst.msk [vmem:[%s3 + $0x1d0] sm:$0xff] %vm597, %v591
  %657 = vst.msk [vmem:[%s3 + $0x1d8] sm:$0xff] %vm597, %v592
  %658 = vst.msk [vmem:[%s3 + $0x1e0] sm:$0xff] %vm597, %v593
  %659 = vst.msk [vmem:[%s3 + $0x1e8] sm:$0xff] %vm597, %v594
  %660 = vst.msk [vmem:[%s3 + $0x1f0] sm:$0xff] %vm597, %v595
  %661 = vst.msk [vmem:[%s3 + $0x1f8] sm:$0xff] %vm597, %v596
  // Predicated region
  $region14: #{unet2d_forward.27} parent=0 // pred_check
    _
  $region15: #{unet2d_forward.27} parent=0 // pred_check_branch
    %663 = sbr.rel (0) target = $region17
  $region16: #{unet2d_forward.27} parent=0 // pred_region
    _
  $region17: #{unet2d_forward.27} parent=0 // pred_fallthru
    _
  // Predicated region
  $region18: #{unet2d_forward.27} parent=0 // pred_check
    _
  $region19: #{unet2d_forward.27} parent=0 // pred_check_branch
    %665 = sbr.rel (0) target = $region21
  $region20: #{unet2d_forward.27} parent=0 // pred_region
    _
  $region21: #{unet2d_forward.27} parent=0 // pred_fallthru
    _

// kernel: unet2d_forward.28
$region0: #{unet2d_forward.28}
  #allocation0 [shape = 'u32[]', space=smem, size = 0x4, offset = 0x4, fixed_abs, tag = 'smem constant byte address 0x4 - core index']
  #allocation1 [shape = 'u32[72,128]{1,0:T(1,128)}', space=vmem, size = 0x9000, scoped, tag = 'internal scratch']
  %s0 = inlined_call_operand.vmem [shape: bf16[512,144], index: 0, kind: input, shape index: {}]
  %s1 = inlined_call_operand.vmem [shape: bf16[144,16], index: 1, kind: input, shape index: {}]
  %s2 = inlined_call_operand.vmem [shape: f32[1,16], index: 2, kind: input, shape index: {}]
  %s3 = inlined_call_operand.vmem [shape: f32[512,16], index: 3, kind: output, shape index: {}]
  %s4 = sld [smem:[#allocation0]]
  $region22: #{unet2d_forward.28} parent=0
    _
  %s6 = ssub.s32 1, %s4
  %s7 = scalar_select 0, %s6, %s4
  // Predicated region
  $region2: #{unet2d_forward.28} parent=0 // pred_check
    _
  $region3: #{unet2d_forward.28} parent=0 // pred_check_branch
    %9 = sbr.rel (0) target = $region5
  $region4: #{unet2d_forward.28} parent=0 // pred_region
    _
  $region5: #{unet2d_forward.28} parent=0 // pred_fallthru
    _
  // Predicated region
  $region6: #{unet2d_forward.28} parent=0 // pred_check
    _
  $region7: #{unet2d_forward.28} parent=0 // pred_check_branch
    %11 = sbr.rel (0) target = $region9
  $region8: #{unet2d_forward.28} parent=0 // pred_region
    _
  $region9: #{unet2d_forward.28} parent=0 // pred_fallthru
    _
  // Predicated region
  $region10: #{unet2d_forward.28} parent=0 // pred_check
    _
  $region11: #{unet2d_forward.28} parent=0 // pred_check_branch
    %13 = sbr.rel (0) target = $region13
  $region12: #{unet2d_forward.28} parent=0 // pred_region
    _
  $region13: #{unet2d_forward.28} parent=0 // pred_fallthru
    _
  %v15 = vld [vmem:[%s0] sm:$0xff]
  %v16 = vld [vmem:[%s0 + $0x8] sm:$0xff]
  %v17 = vld [vmem:[%s0 + $0x10] sm:$0xff]
  %v18 = vld [vmem:[%s0 + $0x18] sm:$0xff]
  %v19 = vld [vmem:[%s0 + $0x20] sm:$0xff]
  %v20 = vld [vmem:[%s0 + $0x28] sm:$0xff]
  %v21 = vld [vmem:[%s0 + $0x30] sm:$0xff]
  %v22 = vld [vmem:[%s0 + $0x38] sm:$0xff]
  %v23 = vld [vmem:[%s0 + $0x40] sm:$0xff]
  %v24 = vld [vmem:[%s0 + $0x48] sm:$0xff]
  %v25 = vld [vmem:[%s0 + $0x50] sm:$0xff]
  %v26 = vld [vmem:[%s0 + $0x58] sm:$0xff]
  %v27 = vld [vmem:[%s0 + $0x60] sm:$0xff]
  %v28 = vld [vmem:[%s0 + $0x68] sm:$0xff]
  %v29 = vld [vmem:[%s0 + $0x70] sm:$0xff]
  %v30 = vld [vmem:[%s0 + $0x78] sm:$0xff]
  %v31 = vld [vmem:[%s0 + $0x80] sm:$0xff]
  %v32 = vld [vmem:[%s0 + $0x88] sm:$0xff]
  %v33 = vld [vmem:[%s0 + $0x90] sm:$0xff]
  %v34 = vld [vmem:[%s0 + $0x98] sm:$0xff]
  %v35 = vld [vmem:[%s0 + $0xa0] sm:$0xff]
  %v36 = vld [vmem:[%s0 + $0xa8] sm:$0xff]
  %v37 = vld [vmem:[%s0 + $0xb0] sm:$0xff]
  %v38 = vld [vmem:[%s0 + $0xb8] sm:$0xff]
  %v39 = vld [vmem:[%s0 + $0xc0] sm:$0xff]
  %v40 = vld [vmem:[%s0 + $0xc8] sm:$0xff]
  %v41 = vld [vmem:[%s0 + $0xd0] sm:$0xff]
  %v42 = vld [vmem:[%s0 + $0xd8] sm:$0xff]
  %v43 = vld [vmem:[%s0 + $0xe0] sm:$0xff]
  %v44 = vld [vmem:[%s0 + $0xe8] sm:$0xff]
  %v45 = vld [vmem:[%s0 + $0xf0] sm:$0xff]
  %v46 = vld [vmem:[%s0 + $0xf8] sm:$0xff]
  %v47 = vld [vmem:[%s0 + $0x100] sm:$0xff]
  %v48 = vld [vmem:[%s0 + $0x108] sm:$0xff]
  %v49 = vld [vmem:[%s0 + $0x110] sm:$0xff]
  %v50 = vld [vmem:[%s0 + $0x118] sm:$0xff]
  %v51 = vld [vmem:[%s0 + $0x120] sm:$0xff]
  %v52 = vld [vmem:[%s0 + $0x128] sm:$0xff]
  %v53 = vld [vmem:[%s0 + $0x130] sm:$0xff]
  %v54 = vld [vmem:[%s0 + $0x138] sm:$0xff]
  %v55 = vld [vmem:[%s0 + $0x140] sm:$0xff]
  %v56 = vld [vmem:[%s0 + $0x148] sm:$0xff]
  %v57 = vld [vmem:[%s0 + $0x150] sm:$0xff]
  %v58 = vld [vmem:[%s0 + $0x158] sm:$0xff]
  %v59 = vld [vmem:[%s0 + $0x160] sm:$0xff]
  %v60 = vld [vmem:[%s0 + $0x168] sm:$0xff]
  %v61 = vld [vmem:[%s0 + $0x170] sm:$0xff]
  %v62 = vld [vmem:[%s0 + $0x178] sm:$0xff]
  %v63 = vld [vmem:[%s0 + $0x180] sm:$0xff]
  %v64 = vld [vmem:[%s0 + $0x188] sm:$0xff]
  %v65 = vld [vmem:[%s0 + $0x190] sm:$0xff]
  %v66 = vld [vmem:[%s0 + $0x198] sm:$0xff]
  %v67 = vld [vmem:[%s0 + $0x1a0] sm:$0xff]
  %v68 = vld [vmem:[%s0 + $0x1a8] sm:$0xff]
  %v69 = vld [vmem:[%s0 + $0x1b0] sm:$0xff]
  %v70 = vld [vmem:[%s0 + $0x1b8] sm:$0xff]
  %v71 = vld [vmem:[%s0 + $0x1c0] sm:$0xff]
  %v72 = vld [vmem:[%s0 + $0x1c8] sm:$0xff]
  %v73 = vld [vmem:[%s0 + $0x1d0] sm:$0xff]
  %v74 = vld [vmem:[%s0 + $0x1d8] sm:$0xff]
  %v75 = vld [vmem:[%s0 + $0x1e0] sm:$0xff]
  %v76 = vld [vmem:[%s0 + $0x1e8] sm:$0xff]
  %v77 = vld [vmem:[%s0 + $0x1f0] sm:$0xff]
  %v78 = vld [vmem:[%s0 + $0x1f8] sm:$0xff]
  %v79 = vld [vmem:[%s1] sm:$0xf]
  %v80 = vld [vmem:[%s1 + $0x4] sm:$0xf]
  %v81 = vld [vmem:[%s1 + $0x8] sm:$0xf]
  %v82 = vld [vmem:[%s1 + $0xc] sm:$0xf]
  %v83 = vld [vmem:[%s1 + $0x10] sm:$0xf]
  %v84 = vld [vmem:[%s1 + $0x14] sm:$0xf]
  %v85 = vld [vmem:[%s1 + $0x18] sm:$0xf]
  %v86 = vld [vmem:[%s1 + $0x1c] sm:$0xf]
  %v87 = vld [vmem:[%s1 + $0x20] sm:$0xf]
  %v88 = vld [vmem:[%s1 + $0x24] sm:$0xf]
  %v89 = vld [vmem:[%s1 + $0x28] sm:$0xf]
  %v90 = vld [vmem:[%s1 + $0x2c] sm:$0xf]
  %v91 = vld [vmem:[%s1 + $0x30] sm:$0xf]
  %v92 = vld [vmem:[%s1 + $0x34] sm:$0xf]
  %v93 = vld [vmem:[%s1 + $0x38] sm:$0xf]
  %v94 = vld [vmem:[%s1 + $0x3c] sm:$0xf]
  %v95 = vld [vmem:[%s1 + $0x40] sm:$0xf]
  %v96 = vld [vmem:[%s1 + $0x44] sm:$0xf]
  %v97 = vld [vmem:[%s2] sm:$0x1]
  %v99 = vperm.slane %v97, 0
  %v165 = vunpack.c.l.b16 %v15
  %v166 = vunpack.c.h.b16 %v15
  %v167 = vunpack.c.l.b16 %v16
  %v168 = vunpack.c.h.b16 %v16
  %v169 = vunpack.c.l.b16 %v17
  %v170 = vunpack.c.h.b16 %v17
  %v171 = vunpack.c.l.b16 %v18
  %v172 = vunpack.c.h.b16 %v18
  %v173 = vunpack.c.l.b16 %v19
  %v174 = vunpack.c.h.b16 %v19
  %v175 = vunpack.c.l.b16 %v20
  %v176 = vunpack.c.h.b16 %v20
  %v177 = vunpack.c.l.b16 %v21
  %v178 = vunpack.c.h.b16 %v21
  %v179 = vunpack.c.l.b16 %v22
  %v180 = vunpack.c.h.b16 %v22
  %v181 = vunpack.c.l.b16 %v23
  %v182 = vunpack.c.h.b16 %v23
  %v183 = vunpack.c.l.b16 %v24
  %v184 = vunpack.c.h.b16 %v24
  %v185 = vunpack.c.l.b16 %v25
  %v186 = vunpack.c.h.b16 %v25
  %v187 = vunpack.c.l.b16 %v26
  %v188 = vunpack.c.h.b16 %v26
  %v189 = vunpack.c.l.b16 %v27
  %v190 = vunpack.c.h.b16 %v27
  %v191 = vunpack.c.l.b16 %v28
  %v192 = vunpack.c.h.b16 %v28
  %v193 = vunpack.c.l.b16 %v29
  %v194 = vunpack.c.h.b16 %v29
  %v195 = vunpack.c.l.b16 %v30
  %v196 = vunpack.c.h.b16 %v30
  %v197 = vunpack.c.l.b16 %v31
  %v198 = vunpack.c.h.b16 %v31
  %v199 = vunpack.c.l.b16 %v32
  %v200 = vunpack.c.h.b16 %v32
  %v201 = vunpack.c.l.b16 %v33
  %v202 = vunpack.c.h.b16 %v33
  %v203 = vunpack.c.l.b16 %v34
  %v204 = vunpack.c.h.b16 %v34
  %v205 = vunpack.c.l.b16 %v35
  %v206 = vunpack.c.h.b16 %v35
  %v207 = vunpack.c.l.b16 %v36
  %v208 = vunpack.c.h.b16 %v36
  %v209 = vunpack.c.l.b16 %v37
  %v210 = vunpack.c.h.b16 %v37
  %v211 = vunpack.c.l.b16 %v38
  %v212 = vunpack.c.h.b16 %v38
  %v213 = vunpack.c.l.b16 %v39
  %v214 = vunpack.c.h.b16 %v39
  %v215 = vunpack.c.l.b16 %v40
  %v216 = vunpack.c.h.b16 %v40
  %v217 = vunpack.c.l.b16 %v41
  %v218 = vunpack.c.h.b16 %v41
  %v219 = vunpack.c.l.b16 %v42
  %v220 = vunpack.c.h.b16 %v42
  %v221 = vunpack.c.l.b16 %v43
  %v222 = vunpack.c.h.b16 %v43
  %v223 = vunpack.c.l.b16 %v44
  %v224 = vunpack.c.h.b16 %v44
  %v225 = vunpack.c.l.b16 %v45
  %v226 = vunpack.c.h.b16 %v45
  %v227 = vunpack.c.l.b16 %v46
  %v228 = vunpack.c.h.b16 %v46
  %v229 = vunpack.c.l.b16 %v47
  %v230 = vunpack.c.h.b16 %v47
  %v231 = vunpack.c.l.b16 %v48
  %v232 = vunpack.c.h.b16 %v48
  %v233 = vunpack.c.l.b16 %v49
  %v234 = vunpack.c.h.b16 %v49
  %v235 = vunpack.c.l.b16 %v50
  %v236 = vunpack.c.h.b16 %v50
  %v237 = vunpack.c.l.b16 %v51
  %v238 = vunpack.c.h.b16 %v51
  %v239 = vunpack.c.l.b16 %v52
  %v240 = vunpack.c.h.b16 %v52
  %v241 = vunpack.c.l.b16 %v53
  %v242 = vunpack.c.h.b16 %v53
  %v243 = vunpack.c.l.b16 %v54
  %v244 = vunpack.c.h.b16 %v54
  %v245 = vunpack.c.l.b16 %v55
  %v246 = vunpack.c.h.b16 %v55
  %v247 = vunpack.c.l.b16 %v56
  %v248 = vunpack.c.h.b16 %v56
  %v249 = vunpack.c.l.b16 %v57
  %v250 = vunpack.c.h.b16 %v57
  %v251 = vunpack.c.l.b16 %v58
  %v252 = vunpack.c.h.b16 %v58
  %v253 = vunpack.c.l.b16 %v59
  %v254 = vunpack.c.h.b16 %v59
  %v255 = vunpack.c.l.b16 %v60
  %v256 = vunpack.c.h.b16 %v60
  %v257 = vunpack.c.l.b16 %v61
  %v258 = vunpack.c.h.b16 %v61
  %v259 = vunpack.c.l.b16 %v62
  %v260 = vunpack.c.h.b16 %v62
  %v261 = vunpack.c.l.b16 %v63
  %v262 = vunpack.c.h.b16 %v63
  %v263 = vunpack.c.l.b16 %v64
  %v264 = vunpack.c.h.b16 %v64
  %v265 = vunpack.c.l.b16 %v65
  %v266 = vunpack.c.h.b16 %v65
  %v267 = vunpack.c.l.b16 %v66
  %v268 = vunpack.c.h.b16 %v66
  %v269 = vunpack.c.l.b16 %v67
  %v270 = vunpack.c.h.b16 %v67
  %v271 = vunpack.c.l.b16 %v68
  %v272 = vunpack.c.h.b16 %v68
  %v273 = vunpack.c.l.b16 %v69
  %v274 = vunpack.c.h.b16 %v69
  %v275 = vunpack.c.l.b16 %v70
  %v276 = vunpack.c.h.b16 %v70
  %v277 = vunpack.c.l.b16 %v71
  %v278 = vunpack.c.h.b16 %v71
  %v279 = vunpack.c.l.b16 %v72
  %v280 = vunpack.c.h.b16 %v72
  %v281 = vunpack.c.l.b16 %v73
  %v282 = vunpack.c.h.b16 %v73
  %v283 = vunpack.c.l.b16 %v74
  %v284 = vunpack.c.h.b16 %v74
  %v285 = vunpack.c.l.b16 %v75
  %v286 = vunpack.c.h.b16 %v75
  %v287 = vunpack.c.l.b16 %v76
  %v288 = vunpack.c.h.b16 %v76
  %v289 = vunpack.c.l.b16 %v77
  %v290 = vunpack.c.h.b16 %v77
  %v291 = vunpack.c.l.b16 %v78
  %v292 = vunpack.c.h.b16 %v78
  %v293 = vpack.c.b16 %v167, %v165
  %v294 = vpack.c.b16 %v168, %v166
  %v295 = vpack.c.b16 %v171, %v169
  %v296 = vpack.c.b16 %v172, %v170
  %v297 = vpack.c.b16 %v175, %v173
  %v298 = vpack.c.b16 %v176, %v174
  %v299 = vpack.c.b16 %v179, %v177
  %v300 = vpack.c.b16 %v180, %v178
  %v301 = vpack.c.b16 %v183, %v181
  %v302 = vpack.c.b16 %v184, %v182
  %v303 = vpack.c.b16 %v187, %v185
  %v304 = vpack.c.b16 %v188, %v186
  %v305 = vpack.c.b16 %v191, %v189
  %v306 = vpack.c.b16 %v192, %v190
  %v307 = vpack.c.b16 %v195, %v193
  %v308 = vpack.c.b16 %v196, %v194
  %v309 = vpack.c.b16 %v199, %v197
  %v310 = vpack.c.b16 %v200, %v198
  %v311 = vpack.c.b16 %v203, %v201
  %v312 = vpack.c.b16 %v204, %v202
  %v313 = vpack.c.b16 %v207, %v205
  %v314 = vpack.c.b16 %v208, %v206
  %v315 = vpack.c.b16 %v211, %v209
  %v316 = vpack.c.b16 %v212, %v210
  %v317 = vpack.c.b16 %v215, %v213
  %v318 = vpack.c.b16 %v216, %v214
  %v319 = vpack.c.b16 %v219, %v217
  %v320 = vpack.c.b16 %v220, %v218
  %v321 = vpack.c.b16 %v223, %v221
  %v322 = vpack.c.b16 %v224, %v222
  %v323 = vpack.c.b16 %v227, %v225
  %v324 = vpack.c.b16 %v228, %v226
  %v325 = vpack.c.b16 %v231, %v229
  %v326 = vpack.c.b16 %v232, %v230
  %v327 = vpack.c.b16 %v235, %v233
  %v328 = vpack.c.b16 %v236, %v234
  %v329 = vpack.c.b16 %v239, %v237
  %v330 = vpack.c.b16 %v240, %v238
  %v331 = vpack.c.b16 %v243, %v241
  %v332 = vpack.c.b16 %v244, %v242
  %v333 = vpack.c.b16 %v247, %v245
  %v334 = vpack.c.b16 %v248, %v246
  %v335 = vpack.c.b16 %v251, %v249
  %v336 = vpack.c.b16 %v252, %v250
  %v337 = vpack.c.b16 %v255, %v253
  %v338 = vpack.c.b16 %v256, %v254
  %v339 = vpack.c.b16 %v259, %v257
  %v340 = vpack.c.b16 %v260, %v258
  %v341 = vpack.c.b16 %v263, %v261
  %v342 = vpack.c.b16 %v264, %v262
  %v343 = vpack.c.b16 %v267, %v265
  %v344 = vpack.c.b16 %v268, %v266
  %v345 = vpack.c.b16 %v271, %v269
  %v346 = vpack.c.b16 %v272, %v270
  %v347 = vpack.c.b16 %v275, %v273
  %v348 = vpack.c.b16 %v276, %v274
  %v349 = vpack.c.b16 %v279, %v277
  %v350 = vpack.c.b16 %v280, %v278
  %v351 = vpack.c.b16 %v283, %v281
  %v352 = vpack.c.b16 %v284, %v282
  %v353 = vpack.c.b16 %v287, %v285
  %v354 = vpack.c.b16 %v288, %v286
  %v355 = vpack.c.b16 %v291, %v289
  %v356 = vpack.c.b16 %v292, %v290
  %v407 = vunpack.c.l.b16 %v79
  %v408 = vunpack.c.l.b16 %v80
  %v409 = vunpack.c.l.b16 %v81
  %v410 = vunpack.c.l.b16 %v82
  %v411 = vunpack.c.l.b16 %v83
  %v412 = vunpack.c.l.b16 %v84
  %v413 = vunpack.c.l.b16 %v85
  %v414 = vunpack.c.l.b16 %v86
  %v415 = vunpack.c.l.b16 %v87
  %v416 = vunpack.c.l.b16 %v88
  %v417 = vunpack.c.l.b16 %v89
  %v418 = vunpack.c.l.b16 %v90
  %v419 = vunpack.c.l.b16 %v91
  %v420 = vunpack.c.l.b16 %v92
  %v421 = vunpack.c.l.b16 %v93
  %v422 = vunpack.c.l.b16 %v94
  %v423 = vunpack.c.l.b16 %v95
  %v424 = vunpack.c.l.b16 %v96
  %v425 = vpack.c.b16 %v408, %v407
  %v426 = vpack.c.b16 %v410, %v409
  %v427 = vpack.c.b16 %v412, %v411
  %v428 = vpack.c.b16 %v414, %v413
  %v429 = vpack.c.b16 %v416, %v415
  %v430 = vpack.c.b16 %v418, %v417
  %v431 = vpack.c.b16 %v420, %v419
  %v432 = vpack.c.b16 %v422, %v421
  %v433 = vpack.c.b16 %v424, %v423
  %vm443 = vcmask 130048
  %v445 = vsel %vm443, %v294, 0
  %v448 = vsel %vm443, %v296, 0
  %v451 = vsel %vm443, %v298, 0
  %v454 = vsel %vm443, %v300, 0
  %v457 = vsel %vm443, %v302, 0
  %v460 = vsel %vm443, %v304, 0
  %v463 = vsel %vm443, %v306, 0
  %v466 = vsel %vm443, %v308, 0
  %v469 = vsel %vm443, %v310, 0
  %v472 = vsel %vm443, %v312, 0
  %v475 = vsel %vm443, %v314, 0
  %v478 = vsel %vm443, %v316, 0
  %v481 = vsel %vm443, %v318, 0
  %v484 = vsel %vm443, %v320, 0
  %v487 = vsel %vm443, %v322, 0
  %v490 = vsel %vm443, %v324, 0
  %v493 = vsel %vm443, %v326, 0
  %v496 = vsel %vm443, %v328, 0
  %v499 = vsel %vm443, %v330, 0
  %v502 = vsel %vm443, %v332, 0
  %v505 = vsel %vm443, %v334, 0
  %v508 = vsel %vm443, %v336, 0
  %v511 = vsel %vm443, %v338, 0
  %v514 = vsel %vm443, %v340, 0
  %v517 = vsel %vm443, %v342, 0
  %v520 = vsel %vm443, %v344, 0
  %v523 = vsel %vm443, %v346, 0
  %v526 = vsel %vm443, %v348, 0
  %v529 = vsel %vm443, %v350, 0
  %v532 = vsel %vm443, %v352, 0
  %v535 = vsel %vm443, %v354, 0
  %v538 = vsel %vm443, %v356, 0
  %540 = vmatpush.bf16.msra.mxu0 %v432
  %541 = vmatpush.bf16.msra.mxu0 %v431
  %542 = vmatpush.bf16.msra.mxu0 %v430
  %543 = vmatpush.bf16.msra.mxu0 %v429
  %544 = vmatpush.bf16.msra.mxu0 %v428
  %545 = vmatpush.bf16.msra.mxu0 %v427
  %546 = vmatpush.bf16.msra.mxu0 %v426
  %547 = vmatpush.bf16.msra.mxu0 %v425
  %548 = vmatmul.bf16.gmra.mxu0 %v293
  %v549 = vpop.f32.mrf.mxu0
  %v550 = vadd.f32 %v99, %v549
  %v551 = vpop.f32.mrf.mxu0
  %v552 = vadd.f32 %v99, %v551
  %553 = vmatmul.bf16.gmra.mxu0 %v295
  %v554 = vpop.f32.mrf.mxu0
  %v555 = vadd.f32 %v99, %v554
  %v556 = vpop.f32.mrf.mxu0
  %v557 = vadd.f32 %v99, %v556
  %558 = vmatmul.bf16.gmra.mxu0 %v297
  %v559 = vpop.f32.mrf.mxu0
  %v560 = vadd.f32 %v99, %v559
  %v561 = vpop.f32.mrf.mxu0
  %v562 = vadd.f32 %v99, %v561
  %563 = vmatmul.bf16.gmra.mxu0 %v299
  %v564 = vpop.f32.mrf.mxu0
  %v565 = vadd.f32 %v99, %v564
  %v566 = vpop.f32.mrf.mxu0
  %v567 = vadd.f32 %v99, %v566
  %568 = vmatmul.bf16.gmra.mxu0 %v301
  %v569 = vpop.f32.mrf.mxu0
  %v570 = vadd.f32 %v99, %v569
  %v571 = vpop.f32.mrf.mxu0
  %v572 = vadd.f32 %v99, %v571
  %573 = vmatmul.bf16.gmra.mxu0 %v303
  %v574 = vpop.f32.mrf.mxu0
  %v575 = vadd.f32 %v99, %v574
  %v576 = vpop.f32.mrf.mxu0
  %v577 = vadd.f32 %v99, %v576
  %578 = vmatmul.bf16.gmra.mxu0 %v305
  %v579 = vpop.f32.mrf.mxu0
  %v580 = vadd.f32 %v99, %v579
  %v581 = vpop.f32.mrf.mxu0
  %v582 = vadd.f32 %v99, %v581
  %583 = vmatmul.bf16.gmra.mxu0 %v307
  %v584 = vpop.f32.mrf.mxu0
  %v585 = vadd.f32 %v99, %v584
  %v586 = vpop.f32.mrf.mxu0
  %v587 = vadd.f32 %v99, %v586
  %588 = vmatmul.bf16.gmra.mxu0 %v309
  %v589 = vpop.f32.mrf.mxu0
  %v590 = vadd.f32 %v99, %v589
  %v591 = vpop.f32.mrf.mxu0
  %v592 = vadd.f32 %v99, %v591
  %593 = vmatmul.bf16.gmra.mxu0 %v311
  %v594 = vpop.f32.mrf.mxu0
  %v595 = vadd.f32 %v99, %v594
  %v596 = vpop.f32.mrf.mxu0
  %v597 = vadd.f32 %v99, %v596
  %598 = vmatmul.bf16.gmra.mxu0 %v313
  %v599 = vpop.f32.mrf.mxu0
  %v600 = vadd.f32 %v99, %v599
  %v601 = vpop.f32.mrf.mxu0
  %v602 = vadd.f32 %v99, %v601
  %603 = vmatmul.bf16.gmra.mxu0 %v315
  %v604 = vpop.f32.mrf.mxu0
  %v605 = vadd.f32 %v99, %v604
  %v606 = vpop.f32.mrf.mxu0
  %v607 = vadd.f32 %v99, %v606
  %608 = vmatmul.bf16.gmra.mxu0 %v317
  %v609 = vpop.f32.mrf.mxu0
  %v610 = vadd.f32 %v99, %v609
  %v611 = vpop.f32.mrf.mxu0
  %v612 = vadd.f32 %v99, %v611
  %613 = vmatmul.bf16.gmra.mxu0 %v319
  %v614 = vpop.f32.mrf.mxu0
  %v615 = vadd.f32 %v99, %v614
  %v616 = vpop.f32.mrf.mxu0
  %v617 = vadd.f32 %v99, %v616
  %618 = vmatmul.bf16.gmra.mxu0 %v321
  %v619 = vpop.f32.mrf.mxu0
  %v620 = vadd.f32 %v99, %v619
  %v621 = vpop.f32.mrf.mxu0
  %v622 = vadd.f32 %v99, %v621
  %623 = vmatmul.bf16.gmra.mxu0 %v323
  %v624 = vpop.f32.mrf.mxu0
  %v625 = vadd.f32 %v99, %v624
  %v626 = vpop.f32.mrf.mxu0
  %v627 = vadd.f32 %v99, %v626
  %628 = vmatmul.bf16.gmra.mxu0 %v325
  %v629 = vpop.f32.mrf.mxu0
  %v630 = vadd.f32 %v99, %v629
  %v631 = vpop.f32.mrf.mxu0
  %v632 = vadd.f32 %v99, %v631
  %633 = vmatmul.bf16.gmra.mxu0 %v327
  %v634 = vpop.f32.mrf.mxu0
  %v635 = vadd.f32 %v99, %v634
  %v636 = vpop.f32.mrf.mxu0
  %v637 = vadd.f32 %v99, %v636
  %638 = vmatmul.bf16.gmra.mxu0 %v329
  %v639 = vpop.f32.mrf.mxu0
  %v640 = vadd.f32 %v99, %v639
  %v641 = vpop.f32.mrf.mxu0
  %v642 = vadd.f32 %v99, %v641
  %643 = vmatmul.bf16.gmra.mxu0 %v331
  %v644 = vpop.f32.mrf.mxu0
  %v645 = vadd.f32 %v99, %v644
  %v646 = vpop.f32.mrf.mxu0
  %v647 = vadd.f32 %v99, %v646
  %648 = vmatmul.bf16.gmra.mxu0 %v333
  %v649 = vpop.f32.mrf.mxu0
  %v650 = vadd.f32 %v99, %v649
  %v651 = vpop.f32.mrf.mxu0
  %v652 = vadd.f32 %v99, %v651
  %653 = vmatmul.bf16.gmra.mxu0 %v335
  %v654 = vpop.f32.mrf.mxu0
  %v655 = vadd.f32 %v99, %v654
  %v656 = vpop.f32.mrf.mxu0
  %v657 = vadd.f32 %v99, %v656
  %658 = vmatmul.bf16.gmra.mxu0 %v337
  %v659 = vpop.f32.mrf.mxu0
  %v660 = vadd.f32 %v99, %v659
  %v661 = vpop.f32.mrf.mxu0
  %v662 = vadd.f32 %v99, %v661
  %663 = vmatmul.bf16.gmra.mxu0 %v339
  %v664 = vpop.f32.mrf.mxu0
  %v665 = vadd.f32 %v99, %v664
  %v666 = vpop.f32.mrf.mxu0
  %v667 = vadd.f32 %v99, %v666
  %668 = vmatmul.bf16.gmra.mxu0 %v341
  %v669 = vpop.f32.mrf.mxu0
  %v670 = vadd.f32 %v99, %v669
  %v671 = vpop.f32.mrf.mxu0
  %v672 = vadd.f32 %v99, %v671
  %673 = vmatmul.bf16.gmra.mxu0 %v343
  %v674 = vpop.f32.mrf.mxu0
  %v675 = vadd.f32 %v99, %v674
  %v676 = vpop.f32.mrf.mxu0
  %v677 = vadd.f32 %v99, %v676
  %678 = vmatmul.bf16.gmra.mxu0 %v345
  %v679 = vpop.f32.mrf.mxu0
  %v680 = vadd.f32 %v99, %v679
  %v681 = vpop.f32.mrf.mxu0
  %v682 = vadd.f32 %v99, %v681
  %683 = vmatmul.bf16.gmra.mxu0 %v347
  %v684 = vpop.f32.mrf.mxu0
  %v685 = vadd.f32 %v99, %v684
  %v686 = vpop.f32.mrf.mxu0
  %v687 = vadd.f32 %v99, %v686
  %688 = vmatmul.bf16.gmra.mxu0 %v349
  %v689 = vpop.f32.mrf.mxu0
  %v690 = vadd.f32 %v99, %v689
  %v691 = vpop.f32.mrf.mxu0
  %v692 = vadd.f32 %v99, %v691
  %693 = vmatmul.bf16.gmra.mxu0 %v351
  %v694 = vpop.f32.mrf.mxu0
  %v695 = vadd.f32 %v99, %v694
  %v696 = vpop.f32.mrf.mxu0
  %v697 = vadd.f32 %v99, %v696
  %698 = vmatmul.bf16.gmra.mxu0 %v353
  %v699 = vpop.f32.mrf.mxu0
  %v700 = vadd.f32 %v99, %v699
  %v701 = vpop.f32.mrf.mxu0
  %v702 = vadd.f32 %v99, %v701
  %703 = vmatmul.bf16.gmra.mxu0 %v355
  %v704 = vpop.f32.mrf.mxu0
  %v705 = vadd.f32 %v99, %v704
  %v706 = vpop.f32.mrf.mxu0
  %v707 = vadd.f32 %v99, %v706
  %708 = vdwg.mxu0
  %709 = vmatpush.bf16.msra.mxu0 0
  %710 = vmatpush.bf16.msra.mxu0 0
  %711 = vmatpush.bf16.msra.mxu0 0
  %712 = vmatpush.bf16.msra.mxu0 0
  %713 = vmatpush.bf16.msra.mxu0 0
  %714 = vmatpush.bf16.msra.mxu0 0
  %715 = vmatpush.bf16.msra.mxu0 0
  %716 = vmatpush.bf16.msra.mxu0 %v433
  %717 = vmatmul.bf16.gmra.mxu0 %v445
  %v718 = vpop.f32.mrf.mxu0
  %v719 = vadd.f32 %v550, %v718
  %v720 = vpop.f32.mrf.mxu0
  %v721 = vadd.f32 %v552, %v720
  %722 = vmatmul.bf16.gmra.mxu0 %v448
  %v723 = vpop.f32.mrf.mxu0
  %v724 = vadd.f32 %v555, %v723
  %v725 = vpop.f32.mrf.mxu0
  %v726 = vadd.f32 %v557, %v725
  %727 = vmatmul.bf16.gmra.mxu0 %v451
  %v728 = vpop.f32.mrf.mxu0
  %v729 = vadd.f32 %v560, %v728
  %v730 = vpop.f32.mrf.mxu0
  %v731 = vadd.f32 %v562, %v730
  %732 = vmatmul.bf16.gmra.mxu0 %v454
  %v733 = vpop.f32.mrf.mxu0
  %v734 = vadd.f32 %v565, %v733
  %v735 = vpop.f32.mrf.mxu0
  %v736 = vadd.f32 %v567, %v735
  %737 = vmatmul.bf16.gmra.mxu0 %v457
  %v738 = vpop.f32.mrf.mxu0
  %v739 = vadd.f32 %v570, %v738
  %v740 = vpop.f32.mrf.mxu0
  %v741 = vadd.f32 %v572, %v740
  %742 = vmatmul.bf16.gmra.mxu0 %v460
  %v743 = vpop.f32.mrf.mxu0
  %v744 = vadd.f32 %v575, %v743
  %v745 = vpop.f32.mrf.mxu0
  %v746 = vadd.f32 %v577, %v745
  %747 = vmatmul.bf16.gmra.mxu0 %v463
  %v748 = vpop.f32.mrf.mxu0
  %v749 = vadd.f32 %v580, %v748
  %v750 = vpop.f32.mrf.mxu0
  %v751 = vadd.f32 %v582, %v750
  %752 = vmatmul.bf16.gmra.mxu0 %v466
  %v753 = vpop.f32.mrf.mxu0
  %v754 = vadd.f32 %v585, %v753
  %v755 = vpop.f32.mrf.mxu0
  %v756 = vadd.f32 %v587, %v755
  %757 = vmatmul.bf16.gmra.mxu0 %v469
  %v758 = vpop.f32.mrf.mxu0
  %v759 = vadd.f32 %v590, %v758
  %v760 = vpop.f32.mrf.mxu0
  %v761 = vadd.f32 %v592, %v760
  %762 = vmatmul.bf16.gmra.mxu0 %v472
  %v763 = vpop.f32.mrf.mxu0
  %v764 = vadd.f32 %v595, %v763
  %v765 = vpop.f32.mrf.mxu0
  %v766 = vadd.f32 %v597, %v765
  %767 = vmatmul.bf16.gmra.mxu0 %v475
  %v768 = vpop.f32.mrf.mxu0
  %v769 = vadd.f32 %v600, %v768
  %v770 = vpop.f32.mrf.mxu0
  %v771 = vadd.f32 %v602, %v770
  %772 = vmatmul.bf16.gmra.mxu0 %v478
  %v773 = vpop.f32.mrf.mxu0
  %v774 = vadd.f32 %v605, %v773
  %v775 = vpop.f32.mrf.mxu0
  %v776 = vadd.f32 %v607, %v775
  %777 = vmatmul.bf16.gmra.mxu0 %v481
  %v778 = vpop.f32.mrf.mxu0
  %v779 = vadd.f32 %v610, %v778
  %v780 = vpop.f32.mrf.mxu0
  %v781 = vadd.f32 %v612, %v780
  %782 = vmatmul.bf16.gmra.mxu0 %v484
  %v783 = vpop.f32.mrf.mxu0
  %v784 = vadd.f32 %v615, %v783
  %v785 = vpop.f32.mrf.mxu0
  %v786 = vadd.f32 %v617, %v785
  %787 = vmatmul.bf16.gmra.mxu0 %v487
  %v788 = vpop.f32.mrf.mxu0
  %v789 = vadd.f32 %v620, %v788
  %v790 = vpop.f32.mrf.mxu0
  %v791 = vadd.f32 %v622, %v790
  %792 = vmatmul.bf16.gmra.mxu0 %v490
  %v793 = vpop.f32.mrf.mxu0
  %v794 = vadd.f32 %v625, %v793
  %v795 = vpop.f32.mrf.mxu0
  %v796 = vadd.f32 %v627, %v795
  %797 = vmatmul.bf16.gmra.mxu0 %v493
  %v798 = vpop.f32.mrf.mxu0
  %v799 = vadd.f32 %v630, %v798
  %v800 = vpop.f32.mrf.mxu0
  %v801 = vadd.f32 %v632, %v800
  %802 = vmatmul.bf16.gmra.mxu0 %v496
  %v803 = vpop.f32.mrf.mxu0
  %v804 = vadd.f32 %v635, %v803
  %v805 = vpop.f32.mrf.mxu0
  %v806 = vadd.f32 %v637, %v805
  %807 = vmatmul.bf16.gmra.mxu0 %v499
  %v808 = vpop.f32.mrf.mxu0
  %v809 = vadd.f32 %v640, %v808
  %v810 = vpop.f32.mrf.mxu0
  %v811 = vadd.f32 %v642, %v810
  %812 = vmatmul.bf16.gmra.mxu0 %v502
  %v813 = vpop.f32.mrf.mxu0
  %v814 = vadd.f32 %v645, %v813
  %v815 = vpop.f32.mrf.mxu0
  %v816 = vadd.f32 %v647, %v815
  %817 = vmatmul.bf16.gmra.mxu0 %v505
  %v818 = vpop.f32.mrf.mxu0
  %v819 = vadd.f32 %v650, %v818
  %v820 = vpop.f32.mrf.mxu0
  %v821 = vadd.f32 %v652, %v820
  %822 = vmatmul.bf16.gmra.mxu0 %v508
  %v823 = vpop.f32.mrf.mxu0
  %v824 = vadd.f32 %v655, %v823
  %v825 = vpop.f32.mrf.mxu0
  %v826 = vadd.f32 %v657, %v825
  %827 = vmatmul.bf16.gmra.mxu0 %v511
  %v828 = vpop.f32.mrf.mxu0
  %v829 = vadd.f32 %v660, %v828
  %v830 = vpop.f32.mrf.mxu0
  %v831 = vadd.f32 %v662, %v830
  %832 = vmatmul.bf16.gmra.mxu0 %v514
  %v833 = vpop.f32.mrf.mxu0
  %v834 = vadd.f32 %v665, %v833
  %v835 = vpop.f32.mrf.mxu0
  %v836 = vadd.f32 %v667, %v835
  %837 = vmatmul.bf16.gmra.mxu0 %v517
  %v838 = vpop.f32.mrf.mxu0
  %v839 = vadd.f32 %v670, %v838
  %v840 = vpop.f32.mrf.mxu0
  %v841 = vadd.f32 %v672, %v840
  %842 = vmatmul.bf16.gmra.mxu0 %v520
  %v843 = vpop.f32.mrf.mxu0
  %v844 = vadd.f32 %v675, %v843
  %v845 = vpop.f32.mrf.mxu0
  %v846 = vadd.f32 %v677, %v845
  %847 = vmatmul.bf16.gmra.mxu0 %v523
  %v848 = vpop.f32.mrf.mxu0
  %v849 = vadd.f32 %v680, %v848
  %v850 = vpop.f32.mrf.mxu0
  %v851 = vadd.f32 %v682, %v850
  %852 = vmatmul.bf16.gmra.mxu0 %v526
  %v853 = vpop.f32.mrf.mxu0
  %v854 = vadd.f32 %v685, %v853
  %v855 = vpop.f32.mrf.mxu0
  %v856 = vadd.f32 %v687, %v855
  %857 = vmatmul.bf16.gmra.mxu0 %v529
  %v858 = vpop.f32.mrf.mxu0
  %v859 = vadd.f32 %v690, %v858
  %v860 = vpop.f32.mrf.mxu0
  %v861 = vadd.f32 %v692, %v860
  %862 = vmatmul.bf16.gmra.mxu0 %v532
  %v863 = vpop.f32.mrf.mxu0
  %v864 = vadd.f32 %v695, %v863
  %v865 = vpop.f32.mrf.mxu0
  %v866 = vadd.f32 %v697, %v865
  %867 = vmatmul.bf16.gmra.mxu0 %v535
  %v868 = vpop.f32.mrf.mxu0
  %v869 = vadd.f32 %v700, %v868
  %v870 = vpop.f32.mrf.mxu0
  %v871 = vadd.f32 %v702, %v870
  %872 = vmatmul.bf16.gmra.mxu0 %v538
  %v873 = vpop.f32.mrf.mxu0
  %v874 = vadd.f32 %v705, %v873
  %v875 = vpop.f32.mrf.mxu0
  %v876 = vadd.f32 %v707, %v875
  %877 = vdwg.mxu0
  %v878 = vmax.f32 %v719, 0.0
  %v879 = vmax.f32 %v721, 0.0
  %v880 = vmax.f32 %v724, 0.0
  %v881 = vmax.f32 %v726, 0.0
  %v882 = vmax.f32 %v729, 0.0
  %v883 = vmax.f32 %v731, 0.0
  %v884 = vmax.f32 %v734, 0.0
  %v885 = vmax.f32 %v736, 0.0
  %v886 = vmax.f32 %v739, 0.0
  %v887 = vmax.f32 %v741, 0.0
  %v888 = vmax.f32 %v744, 0.0
  %v889 = vmax.f32 %v746, 0.0
  %v890 = vmax.f32 %v749, 0.0
  %v891 = vmax.f32 %v751, 0.0
  %v892 = vmax.f32 %v754, 0.0
  %v893 = vmax.f32 %v756, 0.0
  %v894 = vmax.f32 %v759, 0.0
  %v895 = vmax.f32 %v761, 0.0
  %v896 = vmax.f32 %v764, 0.0
  %v897 = vmax.f32 %v766, 0.0
  %v898 = vmax.f32 %v769, 0.0
  %v899 = vmax.f32 %v771, 0.0
  %v900 = vmax.f32 %v774, 0.0
  %v901 = vmax.f32 %v776, 0.0
  %v902 = vmax.f32 %v779, 0.0
  %v903 = vmax.f32 %v781, 0.0
  %v904 = vmax.f32 %v784, 0.0
  %v905 = vmax.f32 %v786, 0.0
  %v906 = vmax.f32 %v789, 0.0
  %v907 = vmax.f32 %v791, 0.0
  %v908 = vmax.f32 %v794, 0.0
  %v909 = vmax.f32 %v796, 0.0
  %v910 = vmax.f32 %v799, 0.0
  %v911 = vmax.f32 %v801, 0.0
  %v912 = vmax.f32 %v804, 0.0
  %v913 = vmax.f32 %v806, 0.0
  %v914 = vmax.f32 %v809, 0.0
  %v915 = vmax.f32 %v811, 0.0
  %v916 = vmax.f32 %v814, 0.0
  %v917 = vmax.f32 %v816, 0.0
  %v918 = vmax.f32 %v819, 0.0
  %v919 = vmax.f32 %v821, 0.0
  %v920 = vmax.f32 %v824, 0.0
  %v921 = vmax.f32 %v826, 0.0
  %v922 = vmax.f32 %v829, 0.0
  %v923 = vmax.f32 %v831, 0.0
  %v924 = vmax.f32 %v834, 0.0
  %v925 = vmax.f32 %v836, 0.0
  %v926 = vmax.f32 %v839, 0.0
  %v927 = vmax.f32 %v841, 0.0
  %v928 = vmax.f32 %v844, 0.0
  %v929 = vmax.f32 %v846, 0.0
  %v930 = vmax.f32 %v849, 0.0
  %v931 = vmax.f32 %v851, 0.0
  %v932 = vmax.f32 %v854, 0.0
  %v933 = vmax.f32 %v856, 0.0
  %v934 = vmax.f32 %v859, 0.0
  %v935 = vmax.f32 %v861, 0.0
  %v936 = vmax.f32 %v864, 0.0
  %v937 = vmax.f32 %v866, 0.0
  %v938 = vmax.f32 %v869, 0.0
  %v939 = vmax.f32 %v871, 0.0
  %v940 = vmax.f32 %v874, 0.0
  %v941 = vmax.f32 %v876, 0.0
  %942 = vst.msk [vmem:[%s3] sm:$0xff] %vm443, %v878
  %943 = vst.msk [vmem:[%s3 + $0x8] sm:$0xff] %vm443, %v879
  %944 = vst.msk [vmem:[%s3 + $0x10] sm:$0xff] %vm443, %v880
  %945 = vst.msk [vmem:[%s3 + $0x18] sm:$0xff] %vm443, %v881
  %946 = vst.msk [vmem:[%s3 + $0x20] sm:$0xff] %vm443, %v882
  %947 = vst.msk [vmem:[%s3 + $0x28] sm:$0xff] %vm443, %v883
  %948 = vst.msk [vmem:[%s3 + $0x30] sm:$0xff] %vm443, %v884
  %949 = vst.msk [vmem:[%s3 + $0x38] sm:$0xff] %vm443, %v885
  %950 = vst.msk [vmem:[%s3 + $0x40] sm:$0xff] %vm443, %v886
  %951 = vst.msk [vmem:[%s3 + $0x48] sm:$0xff] %vm443, %v887
  %952 = vst.msk [vmem:[%s3 + $0x50] sm:$0xff] %vm443, %v888
  %953 = vst.msk [vmem:[%s3 + $0x58] sm:$0xff] %vm443, %v889
  %954 = vst.msk [vmem:[%s3 + $0x60] sm:$0xff] %vm443, %v890
  %955 = vst.msk [vmem:[%s3 + $0x68] sm:$0xff] %vm443, %v891
  %956 = vst.msk [vmem:[%s3 + $0x70] sm:$0xff] %vm443, %v892
  %957 = vst.msk [vmem:[%s3 + $0x78] sm:$0xff] %vm443, %v893
  %958 = vst.msk [vmem:[%s3 + $0x80] sm:$0xff] %vm443, %v894
  %959 = vst.msk [vmem:[%s3 + $0x88] sm:$0xff] %vm443, %v895
  %960 = vst.msk [vmem:[%s3 + $0x90] sm:$0xff] %vm443, %v896
  %961 = vst.msk [vmem:[%s3 + $0x98] sm:$0xff] %vm443, %v897
  %962 = vst.msk [vmem:[%s3 + $0xa0] sm:$0xff] %vm443, %v898
  %963 = vst.msk [vmem:[%s3 + $0xa8] sm:$0xff] %vm443, %v899
  %964 = vst.msk [vmem:[%s3 + $0xb0] sm:$0xff] %vm443, %v900
  %965 = vst.msk [vmem:[%s3 + $0xb8] sm:$0xff] %vm443, %v901
  %966 = vst.msk [vmem:[%s3 + $0xc0] sm:$0xff] %vm443, %v902
  %967 = vst.msk [vmem:[%s3 + $0xc8] sm:$0xff] %vm443, %v903
  %968 = vst.msk [vmem:[%s3 + $0xd0] sm:$0xff] %vm443, %v904
  %969 = vst.msk [vmem:[%s3 + $0xd8] sm:$0xff] %vm443, %v905
  %970 = vst.msk [vmem:[%s3 + $0xe0] sm:$0xff] %vm443, %v906
  %971 = vst.msk [vmem:[%s3 + $0xe8] sm:$0xff] %vm443, %v907
  %972 = vst.msk [vmem:[%s3 + $0xf0] sm:$0xff] %vm443, %v908
  %973 = vst.msk [vmem:[%s3 + $0xf8] sm:$0xff] %vm443, %v909
  %974 = vst.msk [vmem:[%s3 + $0x100] sm:$0xff] %vm443, %v910
  %975 = vst.msk [vmem:[%s3 + $0x108] sm:$0xff] %vm443, %v911
  %976 = vst.msk [vmem:[%s3 + $0x110] sm:$0xff] %vm443, %v912
  %977 = vst.msk [vmem:[%s3 + $0x118] sm:$0xff] %vm443, %v913
  %978 = vst.msk [vmem:[%s3 + $0x120] sm:$0xff] %vm443, %v914
  %979 = vst.msk [vmem:[%s3 + $0x128] sm:$0xff] %vm443, %v915
  %980 = vst.msk [vmem:[%s3 + $0x130] sm:$0xff] %vm443, %v916
  %981 = vst.msk [vmem:[%s3 + $0x138] sm:$0xff] %vm443, %v917
  %982 = vst.msk [vmem:[%s3 + $0x140] sm:$0xff] %vm443, %v918
  %983 = vst.msk [vmem:[%s3 + $0x148] sm:$0xff] %vm443, %v919
  %984 = vst.msk [vmem:[%s3 + $0x150] sm:$0xff] %vm443, %v920
  %985 = vst.msk [vmem:[%s3 + $0x158] sm:$0xff] %vm443, %v921
  %986 = vst.msk [vmem:[%s3 + $0x160] sm:$0xff] %vm443, %v922
  %987 = vst.msk [vmem:[%s3 + $0x168] sm:$0xff] %vm443, %v923
  %988 = vst.msk [vmem:[%s3 + $0x170] sm:$0xff] %vm443, %v924
  %989 = vst.msk [vmem:[%s3 + $0x178] sm:$0xff] %vm443, %v925
  %990 = vst.msk [vmem:[%s3 + $0x180] sm:$0xff] %vm443, %v926
  %991 = vst.msk [vmem:[%s3 + $0x188] sm:$0xff] %vm443, %v927
  %992 = vst.msk [vmem:[%s3 + $0x190] sm:$0xff] %vm443, %v928
  %993 = vst.msk [vmem:[%s3 + $0x198] sm:$0xff] %vm443, %v929
  %994 = vst.msk [vmem:[%s3 + $0x1a0] sm:$0xff] %vm443, %v930
  %995 = vst.msk [vmem:[%s3 + $0x1a8] sm:$0xff] %vm443, %v931
  %996 = vst.msk [vmem:[%s3 + $0x1b0] sm:$0xff] %vm443, %v932
  %997 = vst.msk [vmem:[%s3 + $0x1b8] sm:$0xff] %vm443, %v933
  %998 = vst.msk [vmem:[%s3 + $0x1c0] sm:$0xff] %vm443, %v934
  %999 = vst.msk [vmem:[%s3 + $0x1c8] sm:$0xff] %vm443, %v935
  %1000 = vst.msk [vmem:[%s3 + $0x1d0] sm:$0xff] %vm443, %v936
  %1001 = vst.msk [vmem:[%s3 + $0x1d8] sm:$0xff] %vm443, %v937
  %1002 = vst.msk [vmem:[%s3 + $0x1e0] sm:$0xff] %vm443, %v938
  %1003 = vst.msk [vmem:[%s3 + $0x1e8] sm:$0xff] %vm443, %v939
  %1004 = vst.msk [vmem:[%s3 + $0x1f0] sm:$0xff] %vm443, %v940
  %1005 = vst.msk [vmem:[%s3 + $0x1f8] sm:$0xff] %vm443, %v941
  // Predicated region
  $region14: #{unet2d_forward.28} parent=0 // pred_check
    _
  $region15: #{unet2d_forward.28} parent=0 // pred_check_branch
    %1007 = sbr.rel (0) target = $region17
  $region16: #{unet2d_forward.28} parent=0 // pred_region
    _
  $region17: #{unet2d_forward.28} parent=0 // pred_fallthru
    _
  // Predicated region
  $region18: #{unet2d_forward.28} parent=0 // pred_check
    _
  $region19: #{unet2d_forward.28} parent=0 // pred_check_branch
    %1009 = sbr.rel (0) target = $region21
  $region20: #{unet2d_forward.28} parent=0 // pred_region
    _
  $region21: #{unet2d_forward.28} parent=0 // pred_fallthru
    _

// kernel: unet2d_forward.29
$region0: #{unet2d_forward.29}
  #allocation0 [shape = 'u32[]', space=smem, size = 0x4, offset = 0x4, fixed_abs, tag = 'smem constant byte address 0x4 - core index']
  #allocation1 [shape = 'u32[72,128]{1,0:T(1,128)}', space=vmem, size = 0x9000, scoped, tag = 'internal scratch']
  %s0 = inlined_call_operand.vmem [shape: bf16[128,144], index: 0, kind: input, shape index: {}]
  %s1 = inlined_call_operand.vmem [shape: bf16[144,32], index: 1, kind: input, shape index: {}]
  %s2 = inlined_call_operand.vmem [shape: f32[1,32], index: 2, kind: input, shape index: {}]
  %s3 = inlined_call_operand.vmem [shape: f32[128,32], index: 3, kind: output, shape index: {}]
  %s4 = sld [smem:[#allocation0]]
  $region22: #{unet2d_forward.29} parent=0
    _
  %s6 = ssub.s32 1, %s4
  %s7 = scalar_select 0, %s6, %s4
  // Predicated region
  $region2: #{unet2d_forward.29} parent=0 // pred_check
    _
  $region3: #{unet2d_forward.29} parent=0 // pred_check_branch
    %9 = sbr.rel (0) target = $region5
  $region4: #{unet2d_forward.29} parent=0 // pred_region
    _
  $region5: #{unet2d_forward.29} parent=0 // pred_fallthru
    _
  // Predicated region
  $region6: #{unet2d_forward.29} parent=0 // pred_check
    _
  $region7: #{unet2d_forward.29} parent=0 // pred_check_branch
    %11 = sbr.rel (0) target = $region9
  $region8: #{unet2d_forward.29} parent=0 // pred_region
    _
  $region9: #{unet2d_forward.29} parent=0 // pred_fallthru
    _
  // Predicated region
  $region10: #{unet2d_forward.29} parent=0 // pred_check
    _
  $region11: #{unet2d_forward.29} parent=0 // pred_check_branch
    %13 = sbr.rel (0) target = $region13
  $region12: #{unet2d_forward.29} parent=0 // pred_region
    _
  $region13: #{unet2d_forward.29} parent=0 // pred_fallthru
    _
  %v15 = vld [vmem:[%s0] sm:$0xff]
  %v16 = vld [vmem:[%s0 + $0x8] sm:$0xff]
  %v17 = vld [vmem:[%s0 + $0x10] sm:$0xff]
  %v18 = vld [vmem:[%s0 + $0x18] sm:$0xff]
  %v19 = vld [vmem:[%s0 + $0x20] sm:$0xff]
  %v20 = vld [vmem:[%s0 + $0x28] sm:$0xff]
  %v21 = vld [vmem:[%s0 + $0x30] sm:$0xff]
  %v22 = vld [vmem:[%s0 + $0x38] sm:$0xff]
  %v23 = vld [vmem:[%s0 + $0x40] sm:$0xff]
  %v24 = vld [vmem:[%s0 + $0x48] sm:$0xff]
  %v25 = vld [vmem:[%s0 + $0x50] sm:$0xff]
  %v26 = vld [vmem:[%s0 + $0x58] sm:$0xff]
  %v27 = vld [vmem:[%s0 + $0x60] sm:$0xff]
  %v28 = vld [vmem:[%s0 + $0x68] sm:$0xff]
  %v29 = vld [vmem:[%s0 + $0x70] sm:$0xff]
  %v30 = vld [vmem:[%s0 + $0x78] sm:$0xff]
  %v31 = vld [vmem:[%s1] sm:$0xf]
  %v32 = vld [vmem:[%s1 + $0x4] sm:$0xf]
  %v33 = vld [vmem:[%s1 + $0x8] sm:$0xf]
  %v34 = vld [vmem:[%s1 + $0xc] sm:$0xf]
  %v35 = vld [vmem:[%s1 + $0x10] sm:$0xf]
  %v36 = vld [vmem:[%s1 + $0x14] sm:$0xf]
  %v37 = vld [vmem:[%s1 + $0x18] sm:$0xf]
  %v38 = vld [vmem:[%s1 + $0x1c] sm:$0xf]
  %v39 = vld [vmem:[%s1 + $0x20] sm:$0xf]
  %v40 = vld [vmem:[%s1 + $0x24] sm:$0xf]
  %v41 = vld [vmem:[%s1 + $0x28] sm:$0xf]
  %v42 = vld [vmem:[%s1 + $0x2c] sm:$0xf]
  %v43 = vld [vmem:[%s1 + $0x30] sm:$0xf]
  %v44 = vld [vmem:[%s1 + $0x34] sm:$0xf]
  %v45 = vld [vmem:[%s1 + $0x38] sm:$0xf]
  %v46 = vld [vmem:[%s1 + $0x3c] sm:$0xf]
  %v47 = vld [vmem:[%s1 + $0x40] sm:$0xf]
  %v48 = vld [vmem:[%s1 + $0x44] sm:$0xf]
  %v49 = vld [vmem:[%s2] sm:$0x1]
  %v51 = vperm.slane %v49, 0
  %v69 = vunpack.c.l.b16 %v15
  %v70 = vunpack.c.h.b16 %v15
  %v71 = vunpack.c.l.b16 %v16
  %v72 = vunpack.c.h.b16 %v16
  %v73 = vunpack.c.l.b16 %v17
  %v74 = vunpack.c.h.b16 %v17
  %v75 = vunpack.c.l.b16 %v18
  %v76 = vunpack.c.h.b16 %v18
  %v77 = vunpack.c.l.b16 %v19
  %v78 = vunpack.c.h.b16 %v19
  %v79 = vunpack.c.l.b16 %v20
  %v80 = vunpack.c.h.b16 %v20
  %v81 = vunpack.c.l.b16 %v21
  %v82 = vunpack.c.h.b16 %v21
  %v83 = vunpack.c.l.b16 %v22
  %v84 = vunpack.c.h.b16 %v22
  %v85 = vunpack.c.l.b16 %v23
  %v86 = vunpack.c.h.b16 %v23
  %v87 = vunpack.c.l.b16 %v24
  %v88 = vunpack.c.h.b16 %v24
  %v89 = vunpack.c.l.b16 %v25
  %v90 = vunpack.c.h.b16 %v25
  %v91 = vunpack.c.l.b16 %v26
  %v92 = vunpack.c.h.b16 %v26
  %v93 = vunpack.c.l.b16 %v27
  %v94 = vunpack.c.h.b16 %v27
  %v95 = vunpack.c.l.b16 %v28
  %v96 = vunpack.c.h.b16 %v28
  %v97 = vunpack.c.l.b16 %v29
  %v98 = vunpack.c.h.b16 %v29
  %v99 = vunpack.c.l.b16 %v30
  %v100 = vunpack.c.h.b16 %v30
  %v101 = vpack.c.b16 %v71, %v69
  %v102 = vpack.c.b16 %v72, %v70
  %v103 = vpack.c.b16 %v75, %v73
  %v104 = vpack.c.b16 %v76, %v74
  %v105 = vpack.c.b16 %v79, %v77
  %v106 = vpack.c.b16 %v80, %v78
  %v107 = vpack.c.b16 %v83, %v81
  %v108 = vpack.c.b16 %v84, %v82
  %v109 = vpack.c.b16 %v87, %v85
  %v110 = vpack.c.b16 %v88, %v86
  %v111 = vpack.c.b16 %v91, %v89
  %v112 = vpack.c.b16 %v92, %v90
  %v113 = vpack.c.b16 %v95, %v93
  %v114 = vpack.c.b16 %v96, %v94
  %v115 = vpack.c.b16 %v99, %v97
  %v116 = vpack.c.b16 %v100, %v98
  %v143 = vunpack.c.l.b16 %v31
  %v144 = vunpack.c.l.b16 %v32
  %v145 = vunpack.c.l.b16 %v33
  %v146 = vunpack.c.l.b16 %v34
  %v147 = vunpack.c.l.b16 %v35
  %v148 = vunpack.c.l.b16 %v36
  %v149 = vunpack.c.l.b16 %v37
  %v150 = vunpack.c.l.b16 %v38
  %v151 = vunpack.c.l.b16 %v39
  %v152 = vunpack.c.l.b16 %v40
  %v153 = vunpack.c.l.b16 %v41
  %v154 = vunpack.c.l.b16 %v42
  %v155 = vunpack.c.l.b16 %v43
  %v156 = vunpack.c.l.b16 %v44
  %v157 = vunpack.c.l.b16 %v45
  %v158 = vunpack.c.l.b16 %v46
  %v159 = vunpack.c.l.b16 %v47
  %v160 = vunpack.c.l.b16 %v48
  %v161 = vpack.c.b16 %v144, %v143
  %v162 = vpack.c.b16 %v146, %v145
  %v163 = vpack.c.b16 %v148, %v147
  %v164 = vpack.c.b16 %v150, %v149
  %v165 = vpack.c.b16 %v152, %v151
  %v166 = vpack.c.b16 %v154, %v153
  %v167 = vpack.c.b16 %v156, %v155
  %v168 = vpack.c.b16 %v158, %v157
  %v169 = vpack.c.b16 %v160, %v159
  %vm179 = vcmask 130048
  %v181 = vsel %vm179, %v102, 0
  %v184 = vsel %vm179, %v104, 0
  %v187 = vsel %vm179, %v106, 0
  %v190 = vsel %vm179, %v108, 0
  %v193 = vsel %vm179, %v110, 0
  %v196 = vsel %vm179, %v112, 0
  %v199 = vsel %vm179, %v114, 0
  %v202 = vsel %vm179, %v116, 0
  %204 = vmatpush.bf16.msra.mxu0 %v168
  %205 = vmatpush.bf16.msra.mxu0 %v167
  %206 = vmatpush.bf16.msra.mxu0 %v166
  %207 = vmatpush.bf16.msra.mxu0 %v165
  %208 = vmatpush.bf16.msra.mxu0 %v164
  %209 = vmatpush.bf16.msra.mxu0 %v163
  %210 = vmatpush.bf16.msra.mxu0 %v162
  %211 = vmatpush.bf16.msra.mxu0 %v161
  %212 = vmatmul.bf16.gmra.mxu0 %v101
  %v213 = vpop.f32.mrf.mxu0
  %v214 = vadd.f32 %v51, %v213
  %v215 = vpop.f32.mrf.mxu0
  %v216 = vadd.f32 %v51, %v215
  %217 = vmatmul.bf16.gmra.mxu0 %v103
  %v218 = vpop.f32.mrf.mxu0
  %v219 = vadd.f32 %v51, %v218
  %v220 = vpop.f32.mrf.mxu0
  %v221 = vadd.f32 %v51, %v220
  %222 = vmatmul.bf16.gmra.mxu0 %v105
  %v223 = vpop.f32.mrf.mxu0
  %v224 = vadd.f32 %v51, %v223
  %v225 = vpop.f32.mrf.mxu0
  %v226 = vadd.f32 %v51, %v225
  %227 = vmatmul.bf16.gmra.mxu0 %v107
  %v228 = vpop.f32.mrf.mxu0
  %v229 = vadd.f32 %v51, %v228
  %v230 = vpop.f32.mrf.mxu0
  %v231 = vadd.f32 %v51, %v230
  %232 = vmatmul.bf16.gmra.mxu0 %v109
  %v233 = vpop.f32.mrf.mxu0
  %v234 = vadd.f32 %v51, %v233
  %v235 = vpop.f32.mrf.mxu0
  %v236 = vadd.f32 %v51, %v235
  %237 = vmatmul.bf16.gmra.mxu0 %v111
  %v238 = vpop.f32.mrf.mxu0
  %v239 = vadd.f32 %v51, %v238
  %v240 = vpop.f32.mrf.mxu0
  %v241 = vadd.f32 %v51, %v240
  %242 = vmatmul.bf16.gmra.mxu0 %v113
  %v243 = vpop.f32.mrf.mxu0
  %v244 = vadd.f32 %v51, %v243
  %v245 = vpop.f32.mrf.mxu0
  %v246 = vadd.f32 %v51, %v245
  %247 = vmatmul.bf16.gmra.mxu0 %v115
  %v248 = vpop.f32.mrf.mxu0
  %v249 = vadd.f32 %v51, %v248
  %v250 = vpop.f32.mrf.mxu0
  %v251 = vadd.f32 %v51, %v250
  %252 = vdwg.mxu0
  %253 = vmatpush.bf16.msra.mxu0 0
  %254 = vmatpush.bf16.msra.mxu0 0
  %255 = vmatpush.bf16.msra.mxu0 0
  %256 = vmatpush.bf16.msra.mxu0 0
  %257 = vmatpush.bf16.msra.mxu0 0
  %258 = vmatpush.bf16.msra.mxu0 0
  %259 = vmatpush.bf16.msra.mxu0 0
  %260 = vmatpush.bf16.msra.mxu0 %v169
  %261 = vmatmul.bf16.gmra.mxu0 %v181
  %v262 = vpop.f32.mrf.mxu0
  %v263 = vadd.f32 %v214, %v262
  %v264 = vpop.f32.mrf.mxu0
  %v265 = vadd.f32 %v216, %v264
  %266 = vmatmul.bf16.gmra.mxu0 %v184
  %v267 = vpop.f32.mrf.mxu0
  %v268 = vadd.f32 %v219, %v267
  %v269 = vpop.f32.mrf.mxu0
  %v270 = vadd.f32 %v221, %v269
  %271 = vmatmul.bf16.gmra.mxu0 %v187
  %v272 = vpop.f32.mrf.mxu0
  %v273 = vadd.f32 %v224, %v272
  %v274 = vpop.f32.mrf.mxu0
  %v275 = vadd.f32 %v226, %v274
  %276 = vmatmul.bf16.gmra.mxu0 %v190
  %v277 = vpop.f32.mrf.mxu0
  %v278 = vadd.f32 %v229, %v277
  %v279 = vpop.f32.mrf.mxu0
  %v280 = vadd.f32 %v231, %v279
  %281 = vmatmul.bf16.gmra.mxu0 %v193
  %v282 = vpop.f32.mrf.mxu0
  %v283 = vadd.f32 %v234, %v282
  %v284 = vpop.f32.mrf.mxu0
  %v285 = vadd.f32 %v236, %v284
  %286 = vmatmul.bf16.gmra.mxu0 %v196
  %v287 = vpop.f32.mrf.mxu0
  %v288 = vadd.f32 %v239, %v287
  %v289 = vpop.f32.mrf.mxu0
  %v290 = vadd.f32 %v241, %v289
  %291 = vmatmul.bf16.gmra.mxu0 %v199
  %v292 = vpop.f32.mrf.mxu0
  %v293 = vadd.f32 %v244, %v292
  %v294 = vpop.f32.mrf.mxu0
  %v295 = vadd.f32 %v246, %v294
  %296 = vmatmul.bf16.gmra.mxu0 %v202
  %v297 = vpop.f32.mrf.mxu0
  %v298 = vadd.f32 %v249, %v297
  %v299 = vpop.f32.mrf.mxu0
  %v300 = vadd.f32 %v251, %v299
  %301 = vdwg.mxu0
  %v302 = vmax.f32 %v263, 0.0
  %v303 = vmax.f32 %v265, 0.0
  %v304 = vmax.f32 %v268, 0.0
  %v305 = vmax.f32 %v270, 0.0
  %v306 = vmax.f32 %v273, 0.0
  %v307 = vmax.f32 %v275, 0.0
  %v308 = vmax.f32 %v278, 0.0
  %v309 = vmax.f32 %v280, 0.0
  %v310 = vmax.f32 %v283, 0.0
  %v311 = vmax.f32 %v285, 0.0
  %v312 = vmax.f32 %v288, 0.0
  %v313 = vmax.f32 %v290, 0.0
  %v314 = vmax.f32 %v293, 0.0
  %v315 = vmax.f32 %v295, 0.0
  %v316 = vmax.f32 %v298, 0.0
  %v317 = vmax.f32 %v300, 0.0
  %vm318 = vcmask 261120
  %319 = vst.msk [vmem:[%s3] sm:$0xff] %vm318, %v302
  %320 = vst.msk [vmem:[%s3 + $0x8] sm:$0xff] %vm318, %v303
  %321 = vst.msk [vmem:[%s3 + $0x10] sm:$0xff] %vm318, %v304
  %322 = vst.msk [vmem:[%s3 + $0x18] sm:$0xff] %vm318, %v305
  %323 = vst.msk [vmem:[%s3 + $0x20] sm:$0xff] %vm318, %v306
  %324 = vst.msk [vmem:[%s3 + $0x28] sm:$0xff] %vm318, %v307
  %325 = vst.msk [vmem:[%s3 + $0x30] sm:$0xff] %vm318, %v308
  %326 = vst.msk [vmem:[%s3 + $0x38] sm:$0xff] %vm318, %v309
  %327 = vst.msk [vmem:[%s3 + $0x40] sm:$0xff] %vm318, %v310
  %328 = vst.msk [vmem:[%s3 + $0x48] sm:$0xff] %vm318, %v311
  %329 = vst.msk [vmem:[%s3 + $0x50] sm:$0xff] %vm318, %v312
  %330 = vst.msk [vmem:[%s3 + $0x58] sm:$0xff] %vm318, %v313
  %331 = vst.msk [vmem:[%s3 + $0x60] sm:$0xff] %vm318, %v314
  %332 = vst.msk [vmem:[%s3 + $0x68] sm:$0xff] %vm318, %v315
  %333 = vst.msk [vmem:[%s3 + $0x70] sm:$0xff] %vm318, %v316
  %334 = vst.msk [vmem:[%s3 + $0x78] sm:$0xff] %vm318, %v317
  // Predicated region
  $region14: #{unet2d_forward.29} parent=0 // pred_check
    _
  $region15: #{unet2d_forward.29} parent=0 // pred_check_branch
    %336 = sbr.rel (0) target = $region17
  $region16: #{unet2d_forward.29} parent=0 // pred_region
    _
  $region17: #{unet2d_forward.29} parent=0 // pred_fallthru
    _
  // Predicated region
  $region18: #{unet2d_forward.29} parent=0 // pred_check
    _
  $region19: #{unet2d_forward.29} parent=0 // pred_check_branch
    %338 = sbr.rel (0) target = $region21
  $region20: #{unet2d_forward.29} parent=0 // pred_region
    _
  $region21: #{unet2d_forward.29} parent=0 // pred_fallthru
    _

// kernel: unet2d_forward.30
$region0: #{unet2d_forward.30}
  #allocation0 [shape = 'u32[]', space=smem, size = 0x4, offset = 0x4, fixed_abs, tag = 'smem constant byte address 0x4 - core index']
  #allocation1 [shape = 'u32[72,128]{1,0:T(1,128)}', space=vmem, size = 0x9000, scoped, tag = 'internal scratch']
  %s0 = inlined_call_operand.vmem [shape: bf16[128,288], index: 0, kind: input, shape index: {}]
  %s1 = inlined_call_operand.vmem [shape: bf16[288,32], index: 1, kind: input, shape index: {}]
  %s2 = inlined_call_operand.vmem [shape: f32[1,32], index: 2, kind: input, shape index: {}]
  %s3 = inlined_call_operand.vmem [shape: f32[128,32], index: 3, kind: output, shape index: {}]
  %s4 = sld [smem:[#allocation0]]
  $region22: #{unet2d_forward.30} parent=0
    _
  %s6 = ssub.s32 1, %s4
  %s7 = scalar_select 0, %s6, %s4
  // Predicated region
  $region2: #{unet2d_forward.30} parent=0 // pred_check
    _
  $region3: #{unet2d_forward.30} parent=0 // pred_check_branch
    %9 = sbr.rel (0) target = $region5
  $region4: #{unet2d_forward.30} parent=0 // pred_region
    _
  $region5: #{unet2d_forward.30} parent=0 // pred_fallthru
    _
  // Predicated region
  $region6: #{unet2d_forward.30} parent=0 // pred_check
    _
  $region7: #{unet2d_forward.30} parent=0 // pred_check_branch
    %11 = sbr.rel (0) target = $region9
  $region8: #{unet2d_forward.30} parent=0 // pred_region
    _
  $region9: #{unet2d_forward.30} parent=0 // pred_fallthru
    _
  // Predicated region
  $region10: #{unet2d_forward.30} parent=0 // pred_check
    _
  $region11: #{unet2d_forward.30} parent=0 // pred_check_branch
    %13 = sbr.rel (0) target = $region13
  $region12: #{unet2d_forward.30} parent=0 // pred_region
    _
  $region13: #{unet2d_forward.30} parent=0 // pred_fallthru
    _
  %v15 = vld [vmem:[%s0] sm:$0xff]
  %v16 = vld [vmem:[%s0 + $0x8] sm:$0xf]
  %v17 = vld [vmem:[%s0 + $0xc] sm:$0xff]
  %v18 = vld [vmem:[%s0 + $0x14] sm:$0xf]
  %v19 = vld [vmem:[%s0 + $0x18] sm:$0xff]
  %v20 = vld [vmem:[%s0 + $0x20] sm:$0xf]
  %v21 = vld [vmem:[%s0 + $0x24] sm:$0xff]
  %v22 = vld [vmem:[%s0 + $0x2c] sm:$0xf]
  %v23 = vld [vmem:[%s0 + $0x30] sm:$0xff]
  %v24 = vld [vmem:[%s0 + $0x38] sm:$0xf]
  %v25 = vld [vmem:[%s0 + $0x3c] sm:$0xff]
  %v26 = vld [vmem:[%s0 + $0x44] sm:$0xf]
  %v27 = vld [vmem:[%s0 + $0x48] sm:$0xff]
  %v28 = vld [vmem:[%s0 + $0x50] sm:$0xf]
  %v29 = vld [vmem:[%s0 + $0x54] sm:$0xff]
  %v30 = vld [vmem:[%s0 + $0x5c] sm:$0xf]
  %v31 = vld [vmem:[%s0 + $0x60] sm:$0xff]
  %v32 = vld [vmem:[%s0 + $0x68] sm:$0xf]
  %v33 = vld [vmem:[%s0 + $0x6c] sm:$0xff]
  %v34 = vld [vmem:[%s0 + $0x74] sm:$0xf]
  %v35 = vld [vmem:[%s0 + $0x78] sm:$0xff]
  %v36 = vld [vmem:[%s0 + $0x80] sm:$0xf]
  %v37 = vld [vmem:[%s0 + $0x84] sm:$0xff]
  %v38 = vld [vmem:[%s0 + $0x8c] sm:$0xf]
  %v39 = vld [vmem:[%s0 + $0x90] sm:$0xff]
  %v40 = vld [vmem:[%s0 + $0x98] sm:$0xf]
  %v41 = vld [vmem:[%s0 + $0x9c] sm:$0xff]
  %v42 = vld [vmem:[%s0 + $0xa4] sm:$0xf]
  %v43 = vld [vmem:[%s0 + $0xa8] sm:$0xff]
  %v44 = vld [vmem:[%s0 + $0xb0] sm:$0xf]
  %v45 = vld [vmem:[%s0 + $0xb4] sm:$0xff]
  %v46 = vld [vmem:[%s0 + $0xbc] sm:$0xf]
  %v47 = vld [vmem:[%s1] sm:$0xf]
  %v48 = vld [vmem:[%s1 + $0x4] sm:$0xf]
  %v49 = vld [vmem:[%s1 + $0x8] sm:$0xf]
  %v50 = vld [vmem:[%s1 + $0xc] sm:$0xf]
  %v51 = vld [vmem:[%s1 + $0x10] sm:$0xf]
  %v52 = vld [vmem:[%s1 + $0x14] sm:$0xf]
  %v53 = vld [vmem:[%s1 + $0x18] sm:$0xf]
  %v54 = vld [vmem:[%s1 + $0x1c] sm:$0xf]
  %v55 = vld [vmem:[%s1 + $0x20] sm:$0xf]
  %v56 = vld [vmem:[%s1 + $0x24] sm:$0xf]
  %v57 = vld [vmem:[%s1 + $0x28] sm:$0xf]
  %v58 = vld [vmem:[%s1 + $0x2c] sm:$0xf]
  %v59 = vld [vmem:[%s1 + $0x30] sm:$0xf]
  %v60 = vld [vmem:[%s1 + $0x34] sm:$0xf]
  %v61 = vld [vmem:[%s1 + $0x38] sm:$0xf]
  %v62 = vld [vmem:[%s1 + $0x3c] sm:$0xf]
  %v63 = vld [vmem:[%s1 + $0x40] sm:$0xf]
  %v64 = vld [vmem:[%s1 + $0x44] sm:$0xf]
  %v65 = vld [vmem:[%s1 + $0x48] sm:$0xf]
  %v66 = vld [vmem:[%s1 + $0x4c] sm:$0xf]
  %v67 = vld [vmem:[%s1 + $0x50] sm:$0xf]
  %v68 = vld [vmem:[%s1 + $0x54] sm:$0xf]
  %v69 = vld [vmem:[%s1 + $0x58] sm:$0xf]
  %v70 = vld [vmem:[%s1 + $0x5c] sm:$0xf]
  %v71 = vld [vmem:[%s1 + $0x60] sm:$0xf]
  %v72 = vld [vmem:[%s1 + $0x64] sm:$0xf]
  %v73 = vld [vmem:[%s1 + $0x68] sm:$0xf]
  %v74 = vld [vmem:[%s1 + $0x6c] sm:$0xf]
  %v75 = vld [vmem:[%s1 + $0x70] sm:$0xf]
  %v76 = vld [vmem:[%s1 + $0x74] sm:$0xf]
  %v77 = vld [vmem:[%s1 + $0x78] sm:$0xf]
  %v78 = vld [vmem:[%s1 + $0x7c] sm:$0xf]
  %v79 = vld [vmem:[%s1 + $0x80] sm:$0xf]
  %v80 = vld [vmem:[%s1 + $0x84] sm:$0xf]
  %v81 = vld [vmem:[%s1 + $0x88] sm:$0xf]
  %v82 = vld [vmem:[%s1 + $0x8c] sm:$0xf]
  %v83 = vld [vmem:[%s2] sm:$0x1]
  %v85 = vperm.slane %v83, 0
  %v119 = vunpack.c.l.b16 %v15
  %v120 = vunpack.c.h.b16 %v15
  %v121 = vunpack.c.l.b16 %v16
  %v122 = vunpack.c.l.b16 %v17
  %v123 = vunpack.c.h.b16 %v17
  %v124 = vunpack.c.l.b16 %v18
  %v125 = vunpack.c.l.b16 %v19
  %v126 = vunpack.c.h.b16 %v19
  %v127 = vunpack.c.l.b16 %v20
  %v128 = vunpack.c.l.b16 %v21
  %v129 = vunpack.c.h.b16 %v21
  %v130 = vunpack.c.l.b16 %v22
  %v131 = vunpack.c.l.b16 %v23
  %v132 = vunpack.c.h.b16 %v23
  %v133 = vunpack.c.l.b16 %v24
  %v134 = vunpack.c.l.b16 %v25
  %v135 = vunpack.c.h.b16 %v25
  %v136 = vunpack.c.l.b16 %v26
  %v137 = vunpack.c.l.b16 %v27
  %v138 = vunpack.c.h.b16 %v27
  %v139 = vunpack.c.l.b16 %v28
  %v140 = vunpack.c.l.b16 %v29
  %v141 = vunpack.c.h.b16 %v29
  %v142 = vunpack.c.l.b16 %v30
  %v143 = vunpack.c.l.b16 %v31
  %v144 = vunpack.c.h.b16 %v31
  %v145 = vunpack.c.l.b16 %v32
  %v146 = vunpack.c.l.b16 %v33
  %v147 = vunpack.c.h.b16 %v33
  %v148 = vunpack.c.l.b16 %v34
  %v149 = vunpack.c.l.b16 %v35
  %v150 = vunpack.c.h.b16 %v35
  %v151 = vunpack.c.l.b16 %v36
  %v152 = vunpack.c.l.b16 %v37
  %v153 = vunpack.c.h.b16 %v37
  %v154 = vunpack.c.l.b16 %v38
  %v155 = vunpack.c.l.b16 %v39
  %v156 = vunpack.c.h.b16 %v39
  %v157 = vunpack.c.l.b16 %v40
  %v158 = vunpack.c.l.b16 %v41
  %v159 = vunpack.c.h.b16 %v41
  %v160 = vunpack.c.l.b16 %v42
  %v161 = vunpack.c.l.b16 %v43
  %v162 = vunpack.c.h.b16 %v43
  %v163 = vunpack.c.l.b16 %v44
  %v164 = vunpack.c.l.b16 %v45
  %v165 = vunpack.c.h.b16 %v45
  %v166 = vunpack.c.l.b16 %v46
  %v167 = vpack.c.b16 %v122, %v119
  %v168 = vpack.c.b16 %v123, %v120
  %v169 = vpack.c.b16 %v124, %v121
  %v170 = vpack.c.b16 %v128, %v125
  %v171 = vpack.c.b16 %v129, %v126
  %v172 = vpack.c.b16 %v130, %v127
  %v173 = vpack.c.b16 %v134, %v131
  %v174 = vpack.c.b16 %v135, %v132
  %v175 = vpack.c.b16 %v136, %v133
  %v176 = vpack.c.b16 %v140, %v137
  %v177 = vpack.c.b16 %v141, %v138
  %v178 = vpack.c.b16 %v142, %v139
  %v179 = vpack.c.b16 %v146, %v143
  %v180 = vpack.c.b16 %v147, %v144
  %v181 = vpack.c.b16 %v148, %v145
  %v182 = vpack.c.b16 %v152, %v149
  %v183 = vpack.c.b16 %v153, %v150
  %v184 = vpack.c.b16 %v154, %v151
  %v185 = vpack.c.b16 %v158, %v155
  %v186 = vpack.c.b16 %v159, %v156
  %v187 = vpack.c.b16 %v160, %v157
  %v188 = vpack.c.b16 %v164, %v161
  %v189 = vpack.c.b16 %v165, %v162
  %v190 = vpack.c.b16 %v166, %v163
  %v243 = vunpack.c.l.b16 %v47
  %v244 = vunpack.c.l.b16 %v48
  %v245 = vunpack.c.l.b16 %v49
  %v246 = vunpack.c.l.b16 %v50
  %v247 = vunpack.c.l.b16 %v51
  %v248 = vunpack.c.l.b16 %v52
  %v249 = vunpack.c.l.b16 %v53
  %v250 = vunpack.c.l.b16 %v54
  %v251 = vunpack.c.l.b16 %v55
  %v252 = vunpack.c.l.b16 %v56
  %v253 = vunpack.c.l.b16 %v57
  %v254 = vunpack.c.l.b16 %v58
  %v255 = vunpack.c.l.b16 %v59
  %v256 = vunpack.c.l.b16 %v60
  %v257 = vunpack.c.l.b16 %v61
  %v258 = vunpack.c.l.b16 %v62
  %v259 = vunpack.c.l.b16 %v63
  %v260 = vunpack.c.l.b16 %v64
  %v261 = vunpack.c.l.b16 %v65
  %v262 = vunpack.c.l.b16 %v66
  %v263 = vunpack.c.l.b16 %v67
  %v264 = vunpack.c.l.b16 %v68
  %v265 = vunpack.c.l.b16 %v69
  %v266 = vunpack.c.l.b16 %v70
  %v267 = vunpack.c.l.b16 %v71
  %v268 = vunpack.c.l.b16 %v72
  %v269 = vunpack.c.l.b16 %v73
  %v270 = vunpack.c.l.b16 %v74
  %v271 = vunpack.c.l.b16 %v75
  %v272 = vunpack.c.l.b16 %v76
  %v273 = vunpack.c.l.b16 %v77
  %v274 = vunpack.c.l.b16 %v78
  %v275 = vunpack.c.l.b16 %v79
  %v276 = vunpack.c.l.b16 %v80
  %v277 = vunpack.c.l.b16 %v81
  %v278 = vunpack.c.l.b16 %v82
  %v279 = vpack.c.b16 %v244, %v243
  %v280 = vpack.c.b16 %v246, %v245
  %v281 = vpack.c.b16 %v248, %v247
  %v282 = vpack.c.b16 %v250, %v249
  %v283 = vpack.c.b16 %v252, %v251
  %v284 = vpack.c.b16 %v254, %v253
  %v285 = vpack.c.b16 %v256, %v255
  %v286 = vpack.c.b16 %v258, %v257
  %v287 = vpack.c.b16 %v260, %v259
  %v288 = vpack.c.b16 %v262, %v261
  %v289 = vpack.c.b16 %v264, %v263
  %v290 = vpack.c.b16 %v266, %v265
  %v291 = vpack.c.b16 %v268, %v267
  %v292 = vpack.c.b16 %v270, %v269
  %v293 = vpack.c.b16 %v272, %v271
  %v294 = vpack.c.b16 %v274, %v273
  %v295 = vpack.c.b16 %v276, %v275
  %v296 = vpack.c.b16 %v278, %v277
  %vm315 = vcmask 261120
  %v317 = vsel %vm315, %v169, 0
  %v320 = vsel %vm315, %v172, 0
  %v323 = vsel %vm315, %v175, 0
  %v326 = vsel %vm315, %v178, 0
  %v329 = vsel %vm315, %v181, 0
  %v332 = vsel %vm315, %v184, 0
  %v335 = vsel %vm315, %v187, 0
  %v338 = vsel %vm315, %v190, 0
  %340 = vmatpush.bf16.msra.mxu0 %v286
  %341 = vmatpush.bf16.msra.mxu0 %v285
  %342 = vmatpush.bf16.msra.mxu0 %v284
  %343 = vmatpush.bf16.msra.mxu0 %v283
  %344 = vmatpush.bf16.msra.mxu0 %v282
  %345 = vmatpush.bf16.msra.mxu0 %v281
  %346 = vmatpush.bf16.msra.mxu0 %v280
  %347 = vmatpush.bf16.msra.mxu0 %v279
  %348 = vmatmul.bf16.gmra.mxu0 %v167
  %v349 = vpop.f32.mrf.mxu0
  %v350 = vadd.f32 %v85, %v349
  %v351 = vpop.f32.mrf.mxu0
  %v352 = vadd.f32 %v85, %v351
  %353 = vmatmul.bf16.gmra.mxu0 %v170
  %v354 = vpop.f32.mrf.mxu0
  %v355 = vadd.f32 %v85, %v354
  %v356 = vpop.f32.mrf.mxu0
  %v357 = vadd.f32 %v85, %v356
  %358 = vmatmul.bf16.gmra.mxu0 %v173
  %v359 = vpop.f32.mrf.mxu0
  %v360 = vadd.f32 %v85, %v359
  %v361 = vpop.f32.mrf.mxu0
  %v362 = vadd.f32 %v85, %v361
  %363 = vmatmul.bf16.gmra.mxu0 %v176
  %v364 = vpop.f32.mrf.mxu0
  %v365 = vadd.f32 %v85, %v364
  %v366 = vpop.f32.mrf.mxu0
  %v367 = vadd.f32 %v85, %v366
  %368 = vmatmul.bf16.gmra.mxu0 %v179
  %v369 = vpop.f32.mrf.mxu0
  %v370 = vadd.f32 %v85, %v369
  %v371 = vpop.f32.mrf.mxu0
  %v372 = vadd.f32 %v85, %v371
  %373 = vmatmul.bf16.gmra.mxu0 %v182
  %v374 = vpop.f32.mrf.mxu0
  %v375 = vadd.f32 %v85, %v374
  %v376 = vpop.f32.mrf.mxu0
  %v377 = vadd.f32 %v85, %v376
  %378 = vmatmul.bf16.gmra.mxu0 %v185
  %v379 = vpop.f32.mrf.mxu0
  %v380 = vadd.f32 %v85, %v379
  %v381 = vpop.f32.mrf.mxu0
  %v382 = vadd.f32 %v85, %v381
  %383 = vmatmul.bf16.gmra.mxu0 %v188
  %v384 = vpop.f32.mrf.mxu0
  %v385 = vadd.f32 %v85, %v384
  %v386 = vpop.f32.mrf.mxu0
  %v387 = vadd.f32 %v85, %v386
  %388 = vdwg.mxu0
  %389 = vmatpush.bf16.msra.mxu0 %v294
  %390 = vmatpush.bf16.msra.mxu0 %v293
  %391 = vmatpush.bf16.msra.mxu0 %v292
  %392 = vmatpush.bf16.msra.mxu0 %v291
  %393 = vmatpush.bf16.msra.mxu0 %v290
  %394 = vmatpush.bf16.msra.mxu0 %v289
  %395 = vmatpush.bf16.msra.mxu0 %v288
  %396 = vmatpush.bf16.msra.mxu0 %v287
  %397 = vmatmul.bf16.gmra.mxu0 %v168
  %v398 = vpop.f32.mrf.mxu0
  %v399 = vadd.f32 %v350, %v398
  %v400 = vpop.f32.mrf.mxu0
  %v401 = vadd.f32 %v352, %v400
  %402 = vmatmul.bf16.gmra.mxu0 %v171
  %v403 = vpop.f32.mrf.mxu0
  %v404 = vadd.f32 %v355, %v403
  %v405 = vpop.f32.mrf.mxu0
  %v406 = vadd.f32 %v357, %v405
  %407 = vmatmul.bf16.gmra.mxu0 %v174
  %v408 = vpop.f32.mrf.mxu0
  %v409 = vadd.f32 %v360, %v408
  %v410 = vpop.f32.mrf.mxu0
  %v411 = vadd.f32 %v362, %v410
  %412 = vmatmul.bf16.gmra.mxu0 %v177
  %v413 = vpop.f32.mrf.mxu0
  %v414 = vadd.f32 %v365, %v413
  %v415 = vpop.f32.mrf.mxu0
  %v416 = vadd.f32 %v367, %v415
  %417 = vmatmul.bf16.gmra.mxu0 %v180
  %v418 = vpop.f32.mrf.mxu0
  %v419 = vadd.f32 %v370, %v418
  %v420 = vpop.f32.mrf.mxu0
  %v421 = vadd.f32 %v372, %v420
  %422 = vmatmul.bf16.gmra.mxu0 %v183
  %v423 = vpop.f32.mrf.mxu0
  %v424 = vadd.f32 %v375, %v423
  %v425 = vpop.f32.mrf.mxu0
  %v426 = vadd.f32 %v377, %v425
  %427 = vmatmul.bf16.gmra.mxu0 %v186
  %v428 = vpop.f32.mrf.mxu0
  %v429 = vadd.f32 %v380, %v428
  %v430 = vpop.f32.mrf.mxu0
  %v431 = vadd.f32 %v382, %v430
  %432 = vmatmul.bf16.gmra.mxu0 %v189
  %v433 = vpop.f32.mrf.mxu0
  %v434 = vadd.f32 %v385, %v433
  %v435 = vpop.f32.mrf.mxu0
  %v436 = vadd.f32 %v387, %v435
  %437 = vdwg.mxu0
  %438 = vmatpush.bf16.msra.mxu0 0
  %439 = vmatpush.bf16.msra.mxu0 0
  %440 = vmatpush.bf16.msra.mxu0 0
  %441 = vmatpush.bf16.msra.mxu0 0
  %442 = vmatpush.bf16.msra.mxu0 0
  %443 = vmatpush.bf16.msra.mxu0 0
  %444 = vmatpush.bf16.msra.mxu0 %v296
  %445 = vmatpush.bf16.msra.mxu0 %v295
  %446 = vmatmul.bf16.gmra.mxu0 %v317
  %v447 = vpop.f32.mrf.mxu0
  %v448 = vadd.f32 %v399, %v447
  %v449 = vpop.f32.mrf.mxu0
  %v450 = vadd.f32 %v401, %v449
  %451 = vmatmul.bf16.gmra.mxu0 %v320
  %v452 = vpop.f32.mrf.mxu0
  %v453 = vadd.f32 %v404, %v452
  %v454 = vpop.f32.mrf.mxu0
  %v455 = vadd.f32 %v406, %v454
  %456 = vmatmul.bf16.gmra.mxu0 %v323
  %v457 = vpop.f32.mrf.mxu0
  %v458 = vadd.f32 %v409, %v457
  %v459 = vpop.f32.mrf.mxu0
  %v460 = vadd.f32 %v411, %v459
  %461 = vmatmul.bf16.gmra.mxu0 %v326
  %v462 = vpop.f32.mrf.mxu0
  %v463 = vadd.f32 %v414, %v462
  %v464 = vpop.f32.mrf.mxu0
  %v465 = vadd.f32 %v416, %v464
  %466 = vmatmul.bf16.gmra.mxu0 %v329
  %v467 = vpop.f32.mrf.mxu0
  %v468 = vadd.f32 %v419, %v467
  %v469 = vpop.f32.mrf.mxu0
  %v470 = vadd.f32 %v421, %v469
  %471 = vmatmul.bf16.gmra.mxu0 %v332
  %v472 = vpop.f32.mrf.mxu0
  %v473 = vadd.f32 %v424, %v472
  %v474 = vpop.f32.mrf.mxu0
  %v475 = vadd.f32 %v426, %v474
  %476 = vmatmul.bf16.gmra.mxu0 %v335
  %v477 = vpop.f32.mrf.mxu0
  %v478 = vadd.f32 %v429, %v477
  %v479 = vpop.f32.mrf.mxu0
  %v480 = vadd.f32 %v431, %v479
  %481 = vmatmul.bf16.gmra.mxu0 %v338
  %v482 = vpop.f32.mrf.mxu0
  %v483 = vadd.f32 %v434, %v482
  %v484 = vpop.f32.mrf.mxu0
  %v485 = vadd.f32 %v436, %v484
  %486 = vdwg.mxu0
  %v487 = vmax.f32 %v448, 0.0
  %v488 = vmax.f32 %v450, 0.0
  %v489 = vmax.f32 %v453, 0.0
  %v490 = vmax.f32 %v455, 0.0
  %v491 = vmax.f32 %v458, 0.0
  %v492 = vmax.f32 %v460, 0.0
  %v493 = vmax.f32 %v463, 0.0
  %v494 = vmax.f32 %v465, 0.0
  %v495 = vmax.f32 %v468, 0.0
  %v496 = vmax.f32 %v470, 0.0
  %v497 = vmax.f32 %v473, 0.0
  %v498 = vmax.f32 %v475, 0.0
  %v499 = vmax.f32 %v478, 0.0
  %v500 = vmax.f32 %v480, 0.0
  %v501 = vmax.f32 %v483, 0.0
  %v502 = vmax.f32 %v485, 0.0
  %503 = vst.msk [vmem:[%s3] sm:$0xff] %vm315, %v487
  %504 = vst.msk [vmem:[%s3 + $0x8] sm:$0xff] %vm315, %v488
  %505 = vst.msk [vmem:[%s3 + $0x10] sm:$0xff] %vm315, %v489
  %506 = vst.msk [vmem:[%s3 + $0x18] sm:$0xff] %vm315, %v490
  %507 = vst.msk [vmem:[%s3 + $0x20] sm:$0xff] %vm315, %v491
  %508 = vst.msk [vmem:[%s3 + $0x28] sm:$0xff] %vm315, %v492
  %509 = vst.msk [vmem:[%s3 + $0x30] sm:$0xff] %vm315, %v493
  %510 = vst.msk [vmem:[%s3 + $0x38] sm:$0xff] %vm315, %v494
  %511 = vst.msk [vmem:[%s3 + $0x40] sm:$0xff] %vm315, %v495
  %512 = vst.msk [vmem:[%s3 + $0x48] sm:$0xff] %vm315, %v496
  %513 = vst.msk [vmem:[%s3 + $0x50] sm:$0xff] %vm315, %v497
  %514 = vst.msk [vmem:[%s3 + $0x58] sm:$0xff] %vm315, %v498
  %515 = vst.msk [vmem:[%s3 + $0x60] sm:$0xff] %vm315, %v499
  %516 = vst.msk [vmem:[%s3 + $0x68] sm:$0xff] %vm315, %v500
  %517 = vst.msk [vmem:[%s3 + $0x70] sm:$0xff] %vm315, %v501
  %518 = vst.msk [vmem:[%s3 + $0x78] sm:$0xff] %vm315, %v502
  // Predicated region
  $region14: #{unet2d_forward.30} parent=0 // pred_check
    _
  $region15: #{unet2d_forward.30} parent=0 // pred_check_branch
    %520 = sbr.rel (0) target = $region17
  $region16: #{unet2d_forward.30} parent=0 // pred_region
    _
  $region17: #{unet2d_forward.30} parent=0 // pred_fallthru
    _
  // Predicated region
  $region18: #{unet2d_forward.30} parent=0 // pred_check
    _
  $region19: #{unet2d_forward.30} parent=0 // pred_check_branch
    %522 = sbr.rel (0) target = $region21
  $region20: #{unet2d_forward.30} parent=0 // pred_region
    _
  $region21: #{unet2d_forward.30} parent=0 // pred_fallthru
    _

// kernel: unet2d_forward.31
$region0: #{unet2d_forward.31}
  #allocation0 [shape = 'u32[]', space=smem, size = 0x4, offset = 0x4, fixed_abs, tag = 'smem constant byte address 0x4 - core index']
  #allocation1 [shape = 'u32[72,128]{1,0:T(1,128)}', space=vmem, size = 0x9000, scoped, tag = 'internal scratch']
  %s0 = inlined_call_operand.vmem [shape: bf16[32,288], index: 0, kind: input, shape index: {}]
  %s1 = inlined_call_operand.vmem [shape: bf16[288,64], index: 1, kind: input, shape index: {}]
  %s2 = inlined_call_operand.vmem [shape: f32[1,64], index: 2, kind: input, shape index: {}]
  %s3 = inlined_call_operand.vmem [shape: f32[32,64], index: 3, kind: output, shape index: {}]
  %s4 = sld [smem:[#allocation0]]
  $region22: #{unet2d_forward.31} parent=0
    _
  %s6 = ssub.s32 1, %s4
  %s7 = scalar_select 0, %s6, %s4
  // Predicated region
  $region2: #{unet2d_forward.31} parent=0 // pred_check
    _
  $region3: #{unet2d_forward.31} parent=0 // pred_check_branch
    %9 = sbr.rel (0) target = $region5
  $region4: #{unet2d_forward.31} parent=0 // pred_region
    _
  $region5: #{unet2d_forward.31} parent=0 // pred_fallthru
    _
  // Predicated region
  $region6: #{unet2d_forward.31} parent=0 // pred_check
    _
  $region7: #{unet2d_forward.31} parent=0 // pred_check_branch
    %11 = sbr.rel (0) target = $region9
  $region8: #{unet2d_forward.31} parent=0 // pred_region
    _
  $region9: #{unet2d_forward.31} parent=0 // pred_fallthru
    _
  // Predicated region
  $region10: #{unet2d_forward.31} parent=0 // pred_check
    _
  $region11: #{unet2d_forward.31} parent=0 // pred_check_branch
    %13 = sbr.rel (0) target = $region13
  $region12: #{unet2d_forward.31} parent=0 // pred_region
    _
  $region13: #{unet2d_forward.31} parent=0 // pred_fallthru
    _
  %v15 = vld [vmem:[%s0] sm:$0xff]
  %v16 = vld [vmem:[%s0 + $0x8] sm:$0xf]
  %v17 = vld [vmem:[%s0 + $0xc] sm:$0xff]
  %v18 = vld [vmem:[%s0 + $0x14] sm:$0xf]
  %v19 = vld [vmem:[%s0 + $0x18] sm:$0xff]
  %v20 = vld [vmem:[%s0 + $0x20] sm:$0xf]
  %v21 = vld [vmem:[%s0 + $0x24] sm:$0xff]
  %v22 = vld [vmem:[%s0 + $0x2c] sm:$0xf]
  %v23 = vld [vmem:[%s1] sm:$0xf]
  %v24 = vld [vmem:[%s1 + $0x4] sm:$0xf]
  %v25 = vld [vmem:[%s1 + $0x8] sm:$0xf]
  %v26 = vld [vmem:[%s1 + $0xc] sm:$0xf]
  %v27 = vld [vmem:[%s1 + $0x10] sm:$0xf]
  %v28 = vld [vmem:[%s1 + $0x14] sm:$0xf]
  %v29 = vld [vmem:[%s1 + $0x18] sm:$0xf]
  %v30 = vld [vmem:[%s1 + $0x1c] sm:$0xf]
  %v31 = vld [vmem:[%s1 + $0x20] sm:$0xf]
  %v32 = vld [vmem:[%s1 + $0x24] sm:$0xf]
  %v33 = vld [vmem:[%s1 + $0x28] sm:$0xf]
  %v34 = vld [vmem:[%s1 + $0x2c] sm:$0xf]
  %v35 = vld [vmem:[%s1 + $0x30] sm:$0xf]
  %v36 = vld [vmem:[%s1 + $0x34] sm:$0xf]
  %v37 = vld [vmem:[%s1 + $0x38] sm:$0xf]
  %v38 = vld [vmem:[%s1 + $0x3c] sm:$0xf]
  %v39 = vld [vmem:[%s1 + $0x40] sm:$0xf]
  %v40 = vld [vmem:[%s1 + $0x44] sm:$0xf]
  %v41 = vld [vmem:[%s1 + $0x48] sm:$0xf]
  %v42 = vld [vmem:[%s1 + $0x4c] sm:$0xf]
  %v43 = vld [vmem:[%s1 + $0x50] sm:$0xf]
  %v44 = vld [vmem:[%s1 + $0x54] sm:$0xf]
  %v45 = vld [vmem:[%s1 + $0x58] sm:$0xf]
  %v46 = vld [vmem:[%s1 + $0x5c] sm:$0xf]
  %v47 = vld [vmem:[%s1 + $0x60] sm:$0xf]
  %v48 = vld [vmem:[%s1 + $0x64] sm:$0xf]
  %v49 = vld [vmem:[%s1 + $0x68] sm:$0xf]
  %v50 = vld [vmem:[%s1 + $0x6c] sm:$0xf]
  %v51 = vld [vmem:[%s1 + $0x70] sm:$0xf]
  %v52 = vld [vmem:[%s1 + $0x74] sm:$0xf]
  %v53 = vld [vmem:[%s1 + $0x78] sm:$0xf]
  %v54 = vld [vmem:[%s1 + $0x7c] sm:$0xf]
  %v55 = vld [vmem:[%s1 + $0x80] sm:$0xf]
  %v56 = vld [vmem:[%s1 + $0x84] sm:$0xf]
  %v57 = vld [vmem:[%s1 + $0x88] sm:$0xf]
  %v58 = vld [vmem:[%s1 + $0x8c] sm:$0xf]
  %v59 = vld [vmem:[%s2] sm:$0x1]
  %v61 = vperm.slane %v59, 0
  %v71 = vunpack.c.l.b16 %v15
  %v72 = vunpack.c.h.b16 %v15
  %v73 = vunpack.c.l.b16 %v16
  %v74 = vunpack.c.l.b16 %v17
  %v75 = vunpack.c.h.b16 %v17
  %v76 = vunpack.c.l.b16 %v18
  %v77 = vunpack.c.l.b16 %v19
  %v78 = vunpack.c.h.b16 %v19
  %v79 = vunpack.c.l.b16 %v20
  %v80 = vunpack.c.l.b16 %v21
  %v81 = vunpack.c.h.b16 %v21
  %v82 = vunpack.c.l.b16 %v22
  %v83 = vpack.c.b16 %v74, %v71
  %v84 = vpack.c.b16 %v75, %v72
  %v85 = vpack.c.b16 %v76, %v73
  %v86 = vpack.c.b16 %v80, %v77
  %v87 = vpack.c.b16 %v81, %v78
  %v88 = vpack.c.b16 %v82, %v79
  %v129 = vunpack.c.l.b16 %v23
  %v130 = vunpack.c.l.b16 %v24
  %v131 = vunpack.c.l.b16 %v25
  %v132 = vunpack.c.l.b16 %v26
  %v133 = vunpack.c.l.b16 %v27
  %v134 = vunpack.c.l.b16 %v28
  %v135 = vunpack.c.l.b16 %v29
  %v136 = vunpack.c.l.b16 %v30
  %v137 = vunpack.c.l.b16 %v31
  %v138 = vunpack.c.l.b16 %v32
  %v139 = vunpack.c.l.b16 %v33
  %v140 = vunpack.c.l.b16 %v34
  %v141 = vunpack.c.l.b16 %v35
  %v142 = vunpack.c.l.b16 %v36
  %v143 = vunpack.c.l.b16 %v37
  %v144 = vunpack.c.l.b16 %v38
  %v145 = vunpack.c.l.b16 %v39
  %v146 = vunpack.c.l.b16 %v40
  %v147 = vunpack.c.l.b16 %v41
  %v148 = vunpack.c.l.b16 %v42
  %v149 = vunpack.c.l.b16 %v43
  %v150 = vunpack.c.l.b16 %v44
  %v151 = vunpack.c.l.b16 %v45
  %v152 = vunpack.c.l.b16 %v46
  %v153 = vunpack.c.l.b16 %v47
  %v154 = vunpack.c.l.b16 %v48
  %v155 = vunpack.c.l.b16 %v49
  %v156 = vunpack.c.l.b16 %v50
  %v157 = vunpack.c.l.b16 %v51
  %v158 = vunpack.c.l.b16 %v52
  %v159 = vunpack.c.l.b16 %v53
  %v160 = vunpack.c.l.b16 %v54
  %v161 = vunpack.c.l.b16 %v55
  %v162 = vunpack.c.l.b16 %v56
  %v163 = vunpack.c.l.b16 %v57
  %v164 = vunpack.c.l.b16 %v58
  %v165 = vpack.c.b16 %v130, %v129
  %v166 = vpack.c.b16 %v132, %v131
  %v167 = vpack.c.b16 %v134, %v133
  %v168 = vpack.c.b16 %v136, %v135
  %v169 = vpack.c.b16 %v138, %v137
  %v170 = vpack.c.b16 %v140, %v139
  %v171 = vpack.c.b16 %v142, %v141
  %v172 = vpack.c.b16 %v144, %v143
  %v173 = vpack.c.b16 %v146, %v145
  %v174 = vpack.c.b16 %v148, %v147
  %v175 = vpack.c.b16 %v150, %v149
  %v176 = vpack.c.b16 %v152, %v151
  %v177 = vpack.c.b16 %v154, %v153
  %v178 = vpack.c.b16 %v156, %v155
  %v179 = vpack.c.b16 %v158, %v157
  %v180 = vpack.c.b16 %v160, %v159
  %v181 = vpack.c.b16 %v162, %v161
  %v182 = vpack.c.b16 %v164, %v163
  %vm201 = vcmask 261120
  %v203 = vsel %vm201, %v85, 0
  %v206 = vsel %vm201, %v88, 0
  %208 = vmatpush.bf16.msra.mxu0 %v172
  %209 = vmatpush.bf16.msra.mxu0 %v171
  %210 = vmatpush.bf16.msra.mxu0 %v170
  %211 = vmatpush.bf16.msra.mxu0 %v169
  %212 = vmatpush.bf16.msra.mxu0 %v168
  %213 = vmatpush.bf16.msra.mxu0 %v167
  %214 = vmatpush.bf16.msra.mxu0 %v166
  %215 = vmatpush.bf16.msra.mxu0 %v165
  %216 = vmatmul.bf16.gmra.mxu0 %v83
  %v217 = vpop.f32.mrf.mxu0
  %v218 = vadd.f32 %v61, %v217
  %v219 = vpop.f32.mrf.mxu0
  %v220 = vadd.f32 %v61, %v219
  %221 = vmatmul.bf16.gmra.mxu0 %v86
  %v222 = vpop.f32.mrf.mxu0
  %v223 = vadd.f32 %v61, %v222
  %v224 = vpop.f32.mrf.mxu0
  %v225 = vadd.f32 %v61, %v224
  %226 = vdwg.mxu0
  %227 = vmatpush.bf16.msra.mxu0 %v180
  %228 = vmatpush.bf16.msra.mxu0 %v179
  %229 = vmatpush.bf16.msra.mxu0 %v178
  %230 = vmatpush.bf16.msra.mxu0 %v177
  %231 = vmatpush.bf16.msra.mxu0 %v176
  %232 = vmatpush.bf16.msra.mxu0 %v175
  %233 = vmatpush.bf16.msra.mxu0 %v174
  %234 = vmatpush.bf16.msra.mxu0 %v173
  %235 = vmatmul.bf16.gmra.mxu0 %v84
  %v236 = vpop.f32.mrf.mxu0
  %v237 = vadd.f32 %v218, %v236
  %v238 = vpop.f32.mrf.mxu0
  %v239 = vadd.f32 %v220, %v238
  %240 = vmatmul.bf16.gmra.mxu0 %v87
  %v241 = vpop.f32.mrf.mxu0
  %v242 = vadd.f32 %v223, %v241
  %v243 = vpop.f32.mrf.mxu0
  %v244 = vadd.f32 %v225, %v243
  %245 = vdwg.mxu0
  %246 = vmatpush.bf16.msra.mxu0 0
  %247 = vmatpush.bf16.msra.mxu0 0
  %248 = vmatpush.bf16.msra.mxu0 0
  %249 = vmatpush.bf16.msra.mxu0 0
  %250 = vmatpush.bf16.msra.mxu0 0
  %251 = vmatpush.bf16.msra.mxu0 0
  %252 = vmatpush.bf16.msra.mxu0 %v182
  %253 = vmatpush.bf16.msra.mxu0 %v181
  %254 = vmatmul.bf16.gmra.mxu0 %v203
  %v255 = vpop.f32.mrf.mxu0
  %v256 = vadd.f32 %v237, %v255
  %v257 = vpop.f32.mrf.mxu0
  %v258 = vadd.f32 %v239, %v257
  %259 = vmatmul.bf16.gmra.mxu0 %v206
  %v260 = vpop.f32.mrf.mxu0
  %v261 = vadd.f32 %v242, %v260
  %v262 = vpop.f32.mrf.mxu0
  %v263 = vadd.f32 %v244, %v262
  %264 = vdwg.mxu0
  %v265 = vmax.f32 %v256, 0.0
  %v266 = vmax.f32 %v258, 0.0
  %v267 = vmax.f32 %v261, 0.0
  %v268 = vmax.f32 %v263, 0.0
  %vm269 = vcmask 523264
  %270 = vst.msk [vmem:[%s3] sm:$0xff] %vm269, %v265
  %271 = vst.msk [vmem:[%s3 + $0x8] sm:$0xff] %vm269, %v266
  %272 = vst.msk [vmem:[%s3 + $0x10] sm:$0xff] %vm269, %v267
  %273 = vst.msk [vmem:[%s3 + $0x18] sm:$0xff] %vm269, %v268
  // Predicated region
  $region14: #{unet2d_forward.31} parent=0 // pred_check
    _
  $region15: #{unet2d_forward.31} parent=0 // pred_check_branch
    %275 = sbr.rel (0) target = $region17
  $region16: #{unet2d_forward.31} parent=0 // pred_region
    _
  $region17: #{unet2d_forward.31} parent=0 // pred_fallthru
    _
  // Predicated region
  $region18: #{unet2d_forward.31} parent=0 // pred_check
    _
  $region19: #{unet2d_forward.31} parent=0 // pred_check_branch
    %277 = sbr.rel (0) target = $region21
  $region20: #{unet2d_forward.31} parent=0 // pred_region
    _
  $region21: #{unet2d_forward.31} parent=0 // pred_fallthru
    _

// kernel: unet2d_forward.32
$region0: #{unet2d_forward.32}
  #allocation0 [shape = 'u32[]', space=smem, size = 0x4, offset = 0x4, fixed_abs, tag = 'smem constant byte address 0x4 - core index']
  #allocation1 [shape = 'u32[72,128]{1,0:T(1,128)}', space=vmem, size = 0x9000, scoped, tag = 'internal scratch']
  %s0 = inlined_call_operand.vmem [shape: bf16[32,576], index: 0, kind: input, shape index: {}]
  %s1 = inlined_call_operand.vmem [shape: bf16[576,64], index: 1, kind: input, shape index: {}]
  %s2 = inlined_call_operand.vmem [shape: f32[1,64], index: 2, kind: input, shape index: {}]
  %s3 = inlined_call_operand.vmem [shape: f32[32,64], index: 3, kind: output, shape index: {}]
  %s4 = sld [smem:[#allocation0]]
  $region22: #{unet2d_forward.32} parent=0
    _
  %s6 = ssub.s32 1, %s4
  %s7 = scalar_select 0, %s6, %s4
  // Predicated region
  $region2: #{unet2d_forward.32} parent=0 // pred_check
    _
  $region3: #{unet2d_forward.32} parent=0 // pred_check_branch
    %9 = sbr.rel (0) target = $region5
  $region4: #{unet2d_forward.32} parent=0 // pred_region
    _
  $region5: #{unet2d_forward.32} parent=0 // pred_fallthru
    _
  // Predicated region
  $region6: #{unet2d_forward.32} parent=0 // pred_check
    _
  $region7: #{unet2d_forward.32} parent=0 // pred_check_branch
    %11 = sbr.rel (0) target = $region9
  $region8: #{unet2d_forward.32} parent=0 // pred_region
    _
  $region9: #{unet2d_forward.32} parent=0 // pred_fallthru
    _
  // Predicated region
  $region10: #{unet2d_forward.32} parent=0 // pred_check
    _
  $region11: #{unet2d_forward.32} parent=0 // pred_check_branch
    %13 = sbr.rel (0) target = $region13
  $region12: #{unet2d_forward.32} parent=0 // pred_region
    _
  $region13: #{unet2d_forward.32} parent=0 // pred_fallthru
    _
  %v15 = vld [vmem:[%s0] sm:$0xff]
  %v16 = vld [vmem:[%s0 + $0x8] sm:$0xff]
  %v17 = vld [vmem:[%s0 + $0x10] sm:$0xf]
  %v18 = vld [vmem:[%s0 + $0x14] sm:$0xff]
  %v19 = vld [vmem:[%s0 + $0x1c] sm:$0xff]
  %v20 = vld [vmem:[%s0 + $0x24] sm:$0xf]
  %v21 = vld [vmem:[%s0 + $0x28] sm:$0xff]
  %v22 = vld [vmem:[%s0 + $0x30] sm:$0xff]
  %v23 = vld [vmem:[%s0 + $0x38] sm:$0xf]
  %v24 = vld [vmem:[%s0 + $0x3c] sm:$0xff]
  %v25 = vld [vmem:[%s0 + $0x44] sm:$0xff]
  %v26 = vld [vmem:[%s0 + $0x4c] sm:$0xf]
  %v27 = vld [vmem:[%s1] sm:$0xf]
  %v28 = vld [vmem:[%s1 + $0x4] sm:$0xf]
  %v29 = vld [vmem:[%s1 + $0x8] sm:$0xf]
  %v30 = vld [vmem:[%s1 + $0xc] sm:$0xf]
  %v31 = vld [vmem:[%s1 + $0x10] sm:$0xf]
  %v32 = vld [vmem:[%s1 + $0x14] sm:$0xf]
  %v33 = vld [vmem:[%s1 + $0x18] sm:$0xf]
  %v34 = vld [vmem:[%s1 + $0x1c] sm:$0xf]
  %v35 = vld [vmem:[%s1 + $0x20] sm:$0xf]
  %v36 = vld [vmem:[%s1 + $0x24] sm:$0xf]
  %v37 = vld [vmem:[%s1 + $0x28] sm:$0xf]
  %v38 = vld [vmem:[%s1 + $0x2c] sm:$0xf]
  %v39 = vld [vmem:[%s1 + $0x30] sm:$0xf]
  %v40 = vld [vmem:[%s1 + $0x34] sm:$0xf]
  %v41 = vld [vmem:[%s1 + $0x38] sm:$0xf]
  %v42 = vld [vmem:[%s1 + $0x3c] sm:$0xf]
  %v43 = vld [vmem:[%s1 + $0x40] sm:$0xf]
  %v44 = vld [vmem:[%s1 + $0x44] sm:$0xf]
  %v45 = vld [vmem:[%s1 + $0x48] sm:$0xf]
  %v46 = vld [vmem:[%s1 + $0x4c] sm:$0xf]
  %v47 = vld [vmem:[%s1 + $0x50] sm:$0xf]
  %v48 = vld [vmem:[%s1 + $0x54] sm:$0xf]
  %v49 = vld [vmem:[%s1 + $0x58] sm:$0xf]
  %v50 = vld [vmem:[%s1 + $0x5c] sm:$0xf]
  %v51 = vld [vmem:[%s1 + $0x60] sm:$0xf]
  %v52 = vld [vmem:[%s1 + $0x64] sm:$0xf]
  %v53 = vld [vmem:[%s1 + $0x68] sm:$0xf]
  %v54 = vld [vmem:[%s1 + $0x6c] sm:$0xf]
  %v55 = vld [vmem:[%s1 + $0x70] sm:$0xf]
  %v56 = vld [vmem:[%s1 + $0x74] sm:$0xf]
  %v57 = vld [vmem:[%s1 + $0x78] sm:$0xf]
  %v58 = vld [vmem:[%s1 + $0x7c] sm:$0xf]
  %v59 = vld [vmem:[%s1 + $0x80] sm:$0xf]
  %v60 = vld [vmem:[%s1 + $0x84] sm:$0xf]
  %v61 = vld [vmem:[%s1 + $0x88] sm:$0xf]
  %v62 = vld [vmem:[%s1 + $0x8c] sm:$0xf]
  %v63 = vld [vmem:[%s1 + $0x90] sm:$0xf]
  %v64 = vld [vmem:[%s1 + $0x94] sm:$0xf]
  %v65 = vld [vmem:[%s1 + $0x98] sm:$0xf]
  %v66 = vld [vmem:[%s1 + $0x9c] sm:$0xf]
  %v67 = vld [vmem:[%s1 + $0xa0] sm:$0xf]
  %v68 = vld [vmem:[%s1 + $0xa4] sm:$0xf]
  %v69 = vld [vmem:[%s1 + $0xa8] sm:$0xf]
  %v70 = vld [vmem:[%s1 + $0xac] sm:$0xf]
  %v71 = vld [vmem:[%s1 + $0xb0] sm:$0xf]
  %v72 = vld [vmem:[%s1 + $0xb4] sm:$0xf]
  %v73 = vld [vmem:[%s1 + $0xb8] sm:$0xf]
  %v74 = vld [vmem:[%s1 + $0xbc] sm:$0xf]
  %v75 = vld [vmem:[%s1 + $0xc0] sm:$0xf]
  %v76 = vld [vmem:[%s1 + $0xc4] sm:$0xf]
  %v77 = vld [vmem:[%s1 + $0xc8] sm:$0xf]
  %v78 = vld [vmem:[%s1 + $0xcc] sm:$0xf]
  %v79 = vld [vmem:[%s1 + $0xd0] sm:$0xf]
  %v80 = vld [vmem:[%s1 + $0xd4] sm:$0xf]
  %v81 = vld [vmem:[%s1 + $0xd8] sm:$0xf]
  %v82 = vld [vmem:[%s1 + $0xdc] sm:$0xf]
  %v83 = vld [vmem:[%s1 + $0xe0] sm:$0xf]
  %v84 = vld [vmem:[%s1 + $0xe4] sm:$0xf]
  %v85 = vld [vmem:[%s1 + $0xe8] sm:$0xf]
  %v86 = vld [vmem:[%s1 + $0xec] sm:$0xf]
  %v87 = vld [vmem:[%s1 + $0xf0] sm:$0xf]
  %v88 = vld [vmem:[%s1 + $0xf4] sm:$0xf]
  %v89 = vld [vmem:[%s1 + $0xf8] sm:$0xf]
  %v90 = vld [vmem:[%s1 + $0xfc] sm:$0xf]
  %v91 = vld [vmem:[%s1 + $0x100] sm:$0xf]
  %v92 = vld [vmem:[%s1 + $0x104] sm:$0xf]
  %v93 = vld [vmem:[%s1 + $0x108] sm:$0xf]
  %v94 = vld [vmem:[%s1 + $0x10c] sm:$0xf]
  %v95 = vld [vmem:[%s1 + $0x110] sm:$0xf]
  %v96 = vld [vmem:[%s1 + $0x114] sm:$0xf]
  %v97 = vld [vmem:[%s1 + $0x118] sm:$0xf]
  %v98 = vld [vmem:[%s1 + $0x11c] sm:$0xf]
  %v99 = vld [vmem:[%s2] sm:$0x1]
  %v101 = vperm.slane %v99, 0
  %v115 = vunpack.c.l.b16 %v15
  %v116 = vunpack.c.h.b16 %v15
  %v117 = vunpack.c.l.b16 %v16
  %v118 = vunpack.c.h.b16 %v16
  %v119 = vunpack.c.l.b16 %v17
  %v120 = vunpack.c.l.b16 %v18
  %v121 = vunpack.c.h.b16 %v18
  %v122 = vunpack.c.l.b16 %v19
  %v123 = vunpack.c.h.b16 %v19
  %v124 = vunpack.c.l.b16 %v20
  %v125 = vunpack.c.l.b16 %v21
  %v126 = vunpack.c.h.b16 %v21
  %v127 = vunpack.c.l.b16 %v22
  %v128 = vunpack.c.h.b16 %v22
  %v129 = vunpack.c.l.b16 %v23
  %v130 = vunpack.c.l.b16 %v24
  %v131 = vunpack.c.h.b16 %v24
  %v132 = vunpack.c.l.b16 %v25
  %v133 = vunpack.c.h.b16 %v25
  %v134 = vunpack.c.l.b16 %v26
  %v135 = vpack.c.b16 %v120, %v115
  %v136 = vpack.c.b16 %v121, %v116
  %v137 = vpack.c.b16 %v122, %v117
  %v138 = vpack.c.b16 %v123, %v118
  %v139 = vpack.c.b16 %v124, %v119
  %v140 = vpack.c.b16 %v130, %v125
  %v141 = vpack.c.b16 %v131, %v126
  %v142 = vpack.c.b16 %v132, %v127
  %v143 = vpack.c.b16 %v133, %v128
  %v144 = vpack.c.b16 %v134, %v129
  %v225 = vunpack.c.l.b16 %v27
  %v226 = vunpack.c.l.b16 %v28
  %v227 = vunpack.c.l.b16 %v29
  %v228 = vunpack.c.l.b16 %v30
  %v229 = vunpack.c.l.b16 %v31
  %v230 = vunpack.c.l.b16 %v32
  %v231 = vunpack.c.l.b16 %v33
  %v232 = vunpack.c.l.b16 %v34
  %v233 = vunpack.c.l.b16 %v35
  %v234 = vunpack.c.l.b16 %v36
  %v235 = vunpack.c.l.b16 %v37
  %v236 = vunpack.c.l.b16 %v38
  %v237 = vunpack.c.l.b16 %v39
  %v238 = vunpack.c.l.b16 %v40
  %v239 = vunpack.c.l.b16 %v41
  %v240 = vunpack.c.l.b16 %v42
  %v241 = vunpack.c.l.b16 %v43
  %v242 = vunpack.c.l.b16 %v44
  %v243 = vunpack.c.l.b16 %v45
  %v244 = vunpack.c.l.b16 %v46
  %v245 = vunpack.c.l.b16 %v47
  %v246 = vunpack.c.l.b16 %v48
  %v247 = vunpack.c.l.b16 %v49
  %v248 = vunpack.c.l.b16 %v50
  %v249 = vunpack.c.l.b16 %v51
  %v250 = vunpack.c.l.b16 %v52
  %v251 = vunpack.c.l.b16 %v53
  %v252 = vunpack.c.l.b16 %v54
  %v253 = vunpack.c.l.b16 %v55
  %v254 = vunpack.c.l.b16 %v56
  %v255 = vunpack.c.l.b16 %v57
  %v256 = vunpack.c.l.b16 %v58
  %v257 = vunpack.c.l.b16 %v59
  %v258 = vunpack.c.l.b16 %v60
  %v259 = vunpack.c.l.b16 %v61
  %v260 = vunpack.c.l.b16 %v62
  %v261 = vunpack.c.l.b16 %v63
  %v262 = vunpack.c.l.b16 %v64
  %v263 = vunpack.c.l.b16 %v65
  %v264 = vunpack.c.l.b16 %v66
  %v265 = vunpack.c.l.b16 %v67
  %v266 = vunpack.c.l.b16 %v68
  %v267 = vunpack.c.l.b16 %v69
  %v268 = vunpack.c.l.b16 %v70
  %v269 = vunpack.c.l.b16 %v71
  %v270 = vunpack.c.l.b16 %v72
  %v271 = vunpack.c.l.b16 %v73
  %v272 = vunpack.c.l.b16 %v74
  %v273 = vunpack.c.l.b16 %v75
  %v274 = vunpack.c.l.b16 %v76
  %v275 = vunpack.c.l.b16 %v77
  %v276 = vunpack.c.l.b16 %v78
  %v277 = vunpack.c.l.b16 %v79
  %v278 = vunpack.c.l.b16 %v80
  %v279 = vunpack.c.l.b16 %v81
  %v280 = vunpack.c.l.b16 %v82
  %v281 = vunpack.c.l.b16 %v83
  %v282 = vunpack.c.l.b16 %v84
  %v283 = vunpack.c.l.b16 %v85
  %v284 = vunpack.c.l.b16 %v86
  %v285 = vunpack.c.l.b16 %v87
  %v286 = vunpack.c.l.b16 %v88
  %v287 = vunpack.c.l.b16 %v89
  %v288 = vunpack.c.l.b16 %v90
  %v289 = vunpack.c.l.b16 %v91
  %v290 = vunpack.c.l.b16 %v92
  %v291 = vunpack.c.l.b16 %v93
  %v292 = vunpack.c.l.b16 %v94
  %v293 = vunpack.c.l.b16 %v95
  %v294 = vunpack.c.l.b16 %v96
  %v295 = vunpack.c.l.b16 %v97
  %v296 = vunpack.c.l.b16 %v98
  %v297 = vpack.c.b16 %v226, %v225
  %v298 = vpack.c.b16 %v228, %v227
  %v299 = vpack.c.b16 %v230, %v229
  %v300 = vpack.c.b16 %v232, %v231
  %v301 = vpack.c.b16 %v234, %v233
  %v302 = vpack.c.b16 %v236, %v235
  %v303 = vpack.c.b16 %v238, %v237
  %v304 = vpack.c.b16 %v240, %v239
  %v305 = vpack.c.b16 %v242, %v241
  %v306 = vpack.c.b16 %v244, %v243
  %v307 = vpack.c.b16 %v246, %v245
  %v308 = vpack.c.b16 %v248, %v247
  %v309 = vpack.c.b16 %v250, %v249
  %v310 = vpack.c.b16 %v252, %v251
  %v311 = vpack.c.b16 %v254, %v253
  %v312 = vpack.c.b16 %v256, %v255
  %v313 = vpack.c.b16 %v258, %v257
  %v314 = vpack.c.b16 %v260, %v259
  %v315 = vpack.c.b16 %v262, %v261
  %v316 = vpack.c.b16 %v264, %v263
  %v317 = vpack.c.b16 %v266, %v265
  %v318 = vpack.c.b16 %v268, %v267
  %v319 = vpack.c.b16 %v270, %v269
  %v320 = vpack.c.b16 %v272, %v271
  %v321 = vpack.c.b16 %v274, %v273
  %v322 = vpack.c.b16 %v276, %v275
  %v323 = vpack.c.b16 %v278, %v277
  %v324 = vpack.c.b16 %v280, %v279
  %v325 = vpack.c.b16 %v282, %v281
  %v326 = vpack.c.b16 %v284, %v283
  %v327 = vpack.c.b16 %v286, %v285
  %v328 = vpack.c.b16 %v288, %v287
  %v329 = vpack.c.b16 %v290, %v289
  %v330 = vpack.c.b16 %v292, %v291
  %v331 = vpack.c.b16 %v294, %v293
  %v332 = vpack.c.b16 %v296, %v295
  %vm369 = vcmask 523264
  %v371 = vsel %vm369, %v139, 0
  %v374 = vsel %vm369, %v144, 0
  %376 = vmatpush.bf16.msra.mxu0 %v304
  %377 = vmatpush.bf16.msra.mxu0 %v303
  %378 = vmatpush.bf16.msra.mxu0 %v302
  %379 = vmatpush.bf16.msra.mxu0 %v301
  %380 = vmatpush.bf16.msra.mxu0 %v300
  %381 = vmatpush.bf16.msra.mxu0 %v299
  %382 = vmatpush.bf16.msra.mxu0 %v298
  %383 = vmatpush.bf16.msra.mxu0 %v297
  %384 = vmatmul.bf16.gmra.mxu0 %v135
  %v385 = vpop.f32.mrf.mxu0
  %v386 = vadd.f32 %v101, %v385
  %v387 = vpop.f32.mrf.mxu0
  %v388 = vadd.f32 %v101, %v387
  %389 = vmatmul.bf16.gmra.mxu0 %v140
  %v390 = vpop.f32.mrf.mxu0
  %v391 = vadd.f32 %v101, %v390
  %v392 = vpop.f32.mrf.mxu0
  %v393 = vadd.f32 %v101, %v392
  %394 = vdwg.mxu0
  %395 = vmatpush.bf16.msra.mxu0 %v312
  %396 = vmatpush.bf16.msra.mxu0 %v311
  %397 = vmatpush.bf16.msra.mxu0 %v310
  %398 = vmatpush.bf16.msra.mxu0 %v309
  %399 = vmatpush.bf16.msra.mxu0 %v308
  %400 = vmatpush.bf16.msra.mxu0 %v307
  %401 = vmatpush.bf16.msra.mxu0 %v306
  %402 = vmatpush.bf16.msra.mxu0 %v305
  %403 = vmatmul.bf16.gmra.mxu0 %v136
  %v404 = vpop.f32.mrf.mxu0
  %v405 = vadd.f32 %v386, %v404
  %v406 = vpop.f32.mrf.mxu0
  %v407 = vadd.f32 %v388, %v406
  %408 = vmatmul.bf16.gmra.mxu0 %v141
  %v409 = vpop.f32.mrf.mxu0
  %v410 = vadd.f32 %v391, %v409
  %v411 = vpop.f32.mrf.mxu0
  %v412 = vadd.f32 %v393, %v411
  %413 = vdwg.mxu0
  %414 = vmatpush.bf16.msra.mxu0 %v320
  %415 = vmatpush.bf16.msra.mxu0 %v319
  %416 = vmatpush.bf16.msra.mxu0 %v318
  %417 = vmatpush.bf16.msra.mxu0 %v317
  %418 = vmatpush.bf16.msra.mxu0 %v316
  %419 = vmatpush.bf16.msra.mxu0 %v315
  %420 = vmatpush.bf16.msra.mxu0 %v314
  %421 = vmatpush.bf16.msra.mxu0 %v313
  %422 = vmatmul.bf16.gmra.mxu0 %v137
  %v423 = vpop.f32.mrf.mxu0
  %v424 = vadd.f32 %v405, %v423
  %v425 = vpop.f32.mrf.mxu0
  %v426 = vadd.f32 %v407, %v425
  %427 = vmatmul.bf16.gmra.mxu0 %v142
  %v428 = vpop.f32.mrf.mxu0
  %v429 = vadd.f32 %v410, %v428
  %v430 = vpop.f32.mrf.mxu0
  %v431 = vadd.f32 %v412, %v430
  %432 = vdwg.mxu0
  %433 = vmatpush.bf16.msra.mxu0 %v328
  %434 = vmatpush.bf16.msra.mxu0 %v327
  %435 = vmatpush.bf16.msra.mxu0 %v326
  %436 = vmatpush.bf16.msra.mxu0 %v325
  %437 = vmatpush.bf16.msra.mxu0 %v324
  %438 = vmatpush.bf16.msra.mxu0 %v323
  %439 = vmatpush.bf16.msra.mxu0 %v322
  %440 = vmatpush.bf16.msra.mxu0 %v321
  %441 = vmatmul.bf16.gmra.mxu0 %v138
  %v442 = vpop.f32.mrf.mxu0
  %v443 = vadd.f32 %v424, %v442
  %v444 = vpop.f32.mrf.mxu0
  %v445 = vadd.f32 %v426, %v444
  %446 = vmatmul.bf16.gmra.mxu0 %v143
  %v447 = vpop.f32.mrf.mxu0
  %v448 = vadd.f32 %v429, %v447
  %v449 = vpop.f32.mrf.mxu0
  %v450 = vadd.f32 %v431, %v449
  %451 = vdwg.mxu0
  %452 = vmatpush.bf16.msra.mxu0 0
  %453 = vmatpush.bf16.msra.mxu0 0
  %454 = vmatpush.bf16.msra.mxu0 0
  %455 = vmatpush.bf16.msra.mxu0 0
  %456 = vmatpush.bf16.msra.mxu0 %v332
  %457 = vmatpush.bf16.msra.mxu0 %v331
  %458 = vmatpush.bf16.msra.mxu0 %v330
  %459 = vmatpush.bf16.msra.mxu0 %v329
  %460 = vmatmul.bf16.gmra.mxu0 %v371
  %v461 = vpop.f32.mrf.mxu0
  %v462 = vadd.f32 %v443, %v461
  %v463 = vpop.f32.mrf.mxu0
  %v464 = vadd.f32 %v445, %v463
  %465 = vmatmul.bf16.gmra.mxu0 %v374
  %v466 = vpop.f32.mrf.mxu0
  %v467 = vadd.f32 %v448, %v466
  %v468 = vpop.f32.mrf.mxu0
  %v469 = vadd.f32 %v450, %v468
  %470 = vdwg.mxu0
  %v471 = vmax.f32 %v462, 0.0
  %v472 = vmax.f32 %v464, 0.0
  %v473 = vmax.f32 %v467, 0.0
  %v474 = vmax.f32 %v469, 0.0
  %475 = vst.msk [vmem:[%s3] sm:$0xff] %vm369, %v471
  %476 = vst.msk [vmem:[%s3 + $0x8] sm:$0xff] %vm369, %v472
  %477 = vst.msk [vmem:[%s3 + $0x10] sm:$0xff] %vm369, %v473
  %478 = vst.msk [vmem:[%s3 + $0x18] sm:$0xff] %vm369, %v474
  // Predicated region
  $region14: #{unet2d_forward.32} parent=0 // pred_check
    _
  $region15: #{unet2d_forward.32} parent=0 // pred_check_branch
    %480 = sbr.rel (0) target = $region17
  $region16: #{unet2d_forward.32} parent=0 // pred_region
    _
  $region17: #{unet2d_forward.32} parent=0 // pred_fallthru
    _
  // Predicated region
  $region18: #{unet2d_forward.32} parent=0 // pred_check
    _
  $region19: #{unet2d_forward.32} parent=0 // pred_check_branch
    %482 = sbr.rel (0) target = $region21
  $region20: #{unet2d_forward.32} parent=0 // pred_region
    _
  $region21: #{unet2d_forward.32} parent=0 // pred_fallthru
    _

// kernel: unet2d_forward.33
$region0: #{unet2d_forward.33}
  #allocation0 [shape = 'u32[]', space=smem, size = 0x4, offset = 0x4, fixed_abs, tag = 'smem constant byte address 0x4 - core index']
  #allocation1 [shape = 'u32[72,128]{1,0:T(1,128)}', space=vmem, size = 0x9000, scoped, tag = 'internal scratch']
  %s0 = inlined_call_operand.vmem [shape: bf16[16,576], index: 0, kind: input, shape index: {}]
  %s1 = inlined_call_operand.vmem [shape: bf16[576,128], index: 1, kind: input, shape index: {}]
  %s2 = inlined_call_operand.vmem [shape: f32[1,128], index: 2, kind: input, shape index: {}]
  %s3 = inlined_call_operand.vmem [shape: f32[16,128], index: 3, kind: output, shape index: {}]
  %s4 = sld [smem:[#allocation0]]
  $region22: #{unet2d_forward.33} parent=0
    _
  %s6 = ssub.s32 1, %s4
  %s7 = scalar_select 0, %s6, %s4
  // Predicated region
  $region2: #{unet2d_forward.33} parent=0 // pred_check
    _
  $region3: #{unet2d_forward.33} parent=0 // pred_check_branch
    %9 = sbr.rel (0) target = $region5
  $region4: #{unet2d_forward.33} parent=0 // pred_region
    _
  $region5: #{unet2d_forward.33} parent=0 // pred_fallthru
    _
  // Predicated region
  $region6: #{unet2d_forward.33} parent=0 // pred_check
    _
  $region7: #{unet2d_forward.33} parent=0 // pred_check_branch
    %11 = sbr.rel (0) target = $region9
  $region8: #{unet2d_forward.33} parent=0 // pred_region
    _
  $region9: #{unet2d_forward.33} parent=0 // pred_fallthru
    _
  // Predicated region
  $region10: #{unet2d_forward.33} parent=0 // pred_check
    _
  $region11: #{unet2d_forward.33} parent=0 // pred_check_branch
    %13 = sbr.rel (0) target = $region13
  $region12: #{unet2d_forward.33} parent=0 // pred_region
    _
  $region13: #{unet2d_forward.33} parent=0 // pred_fallthru
    _
  %v15 = vld [vmem:[%s0] sm:$0xff]
  %v16 = vld [vmem:[%s0 + $0x8] sm:$0xff]
  %v17 = vld [vmem:[%s0 + $0x10] sm:$0xf]
  %v18 = vld [vmem:[%s0 + $0x14] sm:$0xff]
  %v19 = vld [vmem:[%s0 + $0x1c] sm:$0xff]
  %v20 = vld [vmem:[%s0 + $0x24] sm:$0xf]
  %v21 = vld [vmem:[%s1] sm:$0xf]
  %v22 = vld [vmem:[%s1 + $0x4] sm:$0xf]
  %v23 = vld [vmem:[%s1 + $0x8] sm:$0xf]
  %v24 = vld [vmem:[%s1 + $0xc] sm:$0xf]
  %v25 = vld [vmem:[%s1 + $0x10] sm:$0xf]
  %v26 = vld [vmem:[%s1 + $0x14] sm:$0xf]
  %v27 = vld [vmem:[%s1 + $0x18] sm:$0xf]
  %v28 = vld [vmem:[%s1 + $0x1c] sm:$0xf]
  %v29 = vld [vmem:[%s1 + $0x20] sm:$0xf]
  %v30 = vld [vmem:[%s1 + $0x24] sm:$0xf]
  %v31 = vld [vmem:[%s1 + $0x28] sm:$0xf]
  %v32 = vld [vmem:[%s1 + $0x2c] sm:$0xf]
  %v33 = vld [vmem:[%s1 + $0x30] sm:$0xf]
  %v34 = vld [vmem:[%s1 + $0x34] sm:$0xf]
  %v35 = vld [vmem:[%s1 + $0x38] sm:$0xf]
  %v36 = vld [vmem:[%s1 + $0x3c] sm:$0xf]
  %v37 = vld [vmem:[%s1 + $0x40] sm:$0xf]
  %v38 = vld [vmem:[%s1 + $0x44] sm:$0xf]
  %v39 = vld [vmem:[%s1 + $0x48] sm:$0xf]
  %v40 = vld [vmem:[%s1 + $0x4c] sm:$0xf]
  %v41 = vld [vmem:[%s1 + $0x50] sm:$0xf]
  %v42 = vld [vmem:[%s1 + $0x54] sm:$0xf]
  %v43 = vld [vmem:[%s1 + $0x58] sm:$0xf]
  %v44 = vld [vmem:[%s1 + $0x5c] sm:$0xf]
  %v45 = vld [vmem:[%s1 + $0x60] sm:$0xf]
  %v46 = vld [vmem:[%s1 + $0x64] sm:$0xf]
  %v47 = vld [vmem:[%s1 + $0x68] sm:$0xf]
  %v48 = vld [vmem:[%s1 + $0x6c] sm:$0xf]
  %v49 = vld [vmem:[%s1 + $0x70] sm:$0xf]
  %v50 = vld [vmem:[%s1 + $0x74] sm:$0xf]
  %v51 = vld [vmem:[%s1 + $0x78] sm:$0xf]
  %v52 = vld [vmem:[%s1 + $0x7c] sm:$0xf]
  %v53 = vld [vmem:[%s1 + $0x80] sm:$0xf]
  %v54 = vld [vmem:[%s1 + $0x84] sm:$0xf]
  %v55 = vld [vmem:[%s1 + $0x88] sm:$0xf]
  %v56 = vld [vmem:[%s1 + $0x8c] sm:$0xf]
  %v57 = vld [vmem:[%s1 + $0x90] sm:$0xf]
  %v58 = vld [vmem:[%s1 + $0x94] sm:$0xf]
  %v59 = vld [vmem:[%s1 + $0x98] sm:$0xf]
  %v60 = vld [vmem:[%s1 + $0x9c] sm:$0xf]
  %v61 = vld [vmem:[%s1 + $0xa0] sm:$0xf]
  %v62 = vld [vmem:[%s1 + $0xa4] sm:$0xf]
  %v63 = vld [vmem:[%s1 + $0xa8] sm:$0xf]
  %v64 = vld [vmem:[%s1 + $0xac] sm:$0xf]
  %v65 = vld [vmem:[%s1 + $0xb0] sm:$0xf]
  %v66 = vld [vmem:[%s1 + $0xb4] sm:$0xf]
  %v67 = vld [vmem:[%s1 + $0xb8] sm:$0xf]
  %v68 = vld [vmem:[%s1 + $0xbc] sm:$0xf]
  %v69 = vld [vmem:[%s1 + $0xc0] sm:$0xf]
  %v70 = vld [vmem:[%s1 + $0xc4] sm:$0xf]
  %v71 = vld [vmem:[%s1 + $0xc8] sm:$0xf]
  %v72 = vld [vmem:[%s1 + $0xcc] sm:$0xf]
  %v73 = vld [vmem:[%s1 + $0xd0] sm:$0xf]
  %v74 = vld [vmem:[%s1 + $0xd4] sm:$0xf]
  %v75 = vld [vmem:[%s1 + $0xd8] sm:$0xf]
  %v76 = vld [vmem:[%s1 + $0xdc] sm:$0xf]
  %v77 = vld [vmem:[%s1 + $0xe0] sm:$0xf]
  %v78 = vld [vmem:[%s1 + $0xe4] sm:$0xf]
  %v79 = vld [vmem:[%s1 + $0xe8] sm:$0xf]
  %v80 = vld [vmem:[%s1 + $0xec] sm:$0xf]
  %v81 = vld [vmem:[%s1 + $0xf0] sm:$0xf]
  %v82 = vld [vmem:[%s1 + $0xf4] sm:$0xf]
  %v83 = vld [vmem:[%s1 + $0xf8] sm:$0xf]
  %v84 = vld [vmem:[%s1 + $0xfc] sm:$0xf]
  %v85 = vld [vmem:[%s1 + $0x100] sm:$0xf]
  %v86 = vld [vmem:[%s1 + $0x104] sm:$0xf]
  %v87 = vld [vmem:[%s1 + $0x108] sm:$0xf]
  %v88 = vld [vmem:[%s1 + $0x10c] sm:$0xf]
  %v89 = vld [vmem:[%s1 + $0x110] sm:$0xf]
  %v90 = vld [vmem:[%s1 + $0x114] sm:$0xf]
  %v91 = vld [vmem:[%s1 + $0x118] sm:$0xf]
  %v92 = vld [vmem:[%s1 + $0x11c] sm:$0xf]
  %v93 = vld [vmem:[%s2] sm:$0x1]
  %v95 = vperm.slane %v93, 0
  %v103 = vunpack.c.l.b16 %v15
  %v104 = vunpack.c.h.b16 %v15
  %v105 = vunpack.c.l.b16 %v16
  %v106 = vunpack.c.h.b16 %v16
  %v107 = vunpack.c.l.b16 %v17
  %v108 = vunpack.c.l.b16 %v18
  %v109 = vunpack.c.h.b16 %v18
  %v110 = vunpack.c.l.b16 %v19
  %v111 = vunpack.c.h.b16 %v19
  %v112 = vunpack.c.l.b16 %v20
  %v113 = vpack.c.b16 %v108, %v103
  %v114 = vpack.c.b16 %v109, %v104
  %v115 = vpack.c.b16 %v110, %v105
  %v116 = vpack.c.b16 %v111, %v106
  %v117 = vpack.c.b16 %v112, %v107
  %v194 = vunpack.c.l.b16 %v21
  %v195 = vunpack.c.l.b16 %v22
  %v196 = vunpack.c.l.b16 %v23
  %v197 = vunpack.c.l.b16 %v24
  %v198 = vunpack.c.l.b16 %v25
  %v199 = vunpack.c.l.b16 %v26
  %v200 = vunpack.c.l.b16 %v27
  %v201 = vunpack.c.l.b16 %v28
  %v202 = vunpack.c.l.b16 %v29
  %v203 = vunpack.c.l.b16 %v30
  %v204 = vunpack.c.l.b16 %v31
  %v205 = vunpack.c.l.b16 %v32
  %v206 = vunpack.c.l.b16 %v33
  %v207 = vunpack.c.l.b16 %v34
  %v208 = vunpack.c.l.b16 %v35
  %v209 = vunpack.c.l.b16 %v36
  %v210 = vunpack.c.l.b16 %v37
  %v211 = vunpack.c.l.b16 %v38
  %v212 = vunpack.c.l.b16 %v39
  %v213 = vunpack.c.l.b16 %v40
  %v214 = vunpack.c.l.b16 %v41
  %v215 = vunpack.c.l.b16 %v42
  %v216 = vunpack.c.l.b16 %v43
  %v217 = vunpack.c.l.b16 %v44
  %v218 = vunpack.c.l.b16 %v45
  %v219 = vunpack.c.l.b16 %v46
  %v220 = vunpack.c.l.b16 %v47
  %v221 = vunpack.c.l.b16 %v48
  %v222 = vunpack.c.l.b16 %v49
  %v223 = vunpack.c.l.b16 %v50
  %v224 = vunpack.c.l.b16 %v51
  %v225 = vunpack.c.l.b16 %v52
  %v226 = vunpack.c.l.b16 %v53
  %v227 = vunpack.c.l.b16 %v54
  %v228 = vunpack.c.l.b16 %v55
  %v229 = vunpack.c.l.b16 %v56
  %v230 = vunpack.c.l.b16 %v57
  %v231 = vunpack.c.l.b16 %v58
  %v232 = vunpack.c.l.b16 %v59
  %v233 = vunpack.c.l.b16 %v60
  %v234 = vunpack.c.l.b16 %v61
  %v235 = vunpack.c.l.b16 %v62
  %v236 = vunpack.c.l.b16 %v63
  %v237 = vunpack.c.l.b16 %v64
  %v238 = vunpack.c.l.b16 %v65
  %v239 = vunpack.c.l.b16 %v66
  %v240 = vunpack.c.l.b16 %v67
  %v241 = vunpack.c.l.b16 %v68
  %v242 = vunpack.c.l.b16 %v69
  %v243 = vunpack.c.l.b16 %v70
  %v244 = vunpack.c.l.b16 %v71
  %v245 = vunpack.c.l.b16 %v72
  %v246 = vunpack.c.l.b16 %v73
  %v247 = vunpack.c.l.b16 %v74
  %v248 = vunpack.c.l.b16 %v75
  %v249 = vunpack.c.l.b16 %v76
  %v250 = vunpack.c.l.b16 %v77
  %v251 = vunpack.c.l.b16 %v78
  %v252 = vunpack.c.l.b16 %v79
  %v253 = vunpack.c.l.b16 %v80
  %v254 = vunpack.c.l.b16 %v81
  %v255 = vunpack.c.l.b16 %v82
  %v256 = vunpack.c.l.b16 %v83
  %v257 = vunpack.c.l.b16 %v84
  %v258 = vunpack.c.l.b16 %v85
  %v259 = vunpack.c.l.b16 %v86
  %v260 = vunpack.c.l.b16 %v87
  %v261 = vunpack.c.l.b16 %v88
  %v262 = vunpack.c.l.b16 %v89
  %v263 = vunpack.c.l.b16 %v90
  %v264 = vunpack.c.l.b16 %v91
  %v265 = vunpack.c.l.b16 %v92
  %v266 = vpack.c.b16 %v195, %v194
  %v267 = vpack.c.b16 %v197, %v196
  %v268 = vpack.c.b16 %v199, %v198
  %v269 = vpack.c.b16 %v201, %v200
  %v270 = vpack.c.b16 %v203, %v202
  %v271 = vpack.c.b16 %v205, %v204
  %v272 = vpack.c.b16 %v207, %v206
  %v273 = vpack.c.b16 %v209, %v208
  %v274 = vpack.c.b16 %v211, %v210
  %v275 = vpack.c.b16 %v213, %v212
  %v276 = vpack.c.b16 %v215, %v214
  %v277 = vpack.c.b16 %v217, %v216
  %v278 = vpack.c.b16 %v219, %v218
  %v279 = vpack.c.b16 %v221, %v220
  %v280 = vpack.c.b16 %v223, %v222
  %v281 = vpack.c.b16 %v225, %v224
  %v282 = vpack.c.b16 %v227, %v226
  %v283 = vpack.c.b16 %v229, %v228
  %v284 = vpack.c.b16 %v231, %v230
  %v285 = vpack.c.b16 %v233, %v232
  %v286 = vpack.c.b16 %v235, %v234
  %v287 = vpack.c.b16 %v237, %v236
  %v288 = vpack.c.b16 %v239, %v238
  %v289 = vpack.c.b16 %v241, %v240
  %v290 = vpack.c.b16 %v243, %v242
  %v291 = vpack.c.b16 %v245, %v244
  %v292 = vpack.c.b16 %v247, %v246
  %v293 = vpack.c.b16 %v249, %v248
  %v294 = vpack.c.b16 %v251, %v250
  %v295 = vpack.c.b16 %v253, %v252
  %v296 = vpack.c.b16 %v255, %v254
  %v297 = vpack.c.b16 %v257, %v256
  %v298 = vpack.c.b16 %v259, %v258
  %v299 = vpack.c.b16 %v261, %v260
  %v300 = vpack.c.b16 %v263, %v262
  %v301 = vpack.c.b16 %v265, %v264
  %vm338 = vcmask 523264
  %v340 = vsel %vm338, %v117, 0
  %342 = vmatpush.bf16.msra.mxu0 %v273
  %343 = vmatpush.bf16.msra.mxu0 %v272
  %344 = vmatpush.bf16.msra.mxu0 %v271
  %345 = vmatpush.bf16.msra.mxu0 %v270
  %346 = vmatpush.bf16.msra.mxu0 %v269
  %347 = vmatpush.bf16.msra.mxu0 %v268
  %348 = vmatpush.bf16.msra.mxu0 %v267
  %349 = vmatpush.bf16.msra.mxu0 %v266
  %350 = vmatmul.bf16.gmra.mxu0 %v113
  %v351 = vpop.f32.mrf.mxu0
  %v352 = vadd.f32 %v95, %v351
  %v353 = vpop.f32.mrf.mxu0
  %v354 = vadd.f32 %v95, %v353
  %355 = vdwg.mxu0
  %356 = vmatpush.bf16.msra.mxu0 %v281
  %357 = vmatpush.bf16.msra.mxu0 %v280
  %358 = vmatpush.bf16.msra.mxu0 %v279
  %359 = vmatpush.bf16.msra.mxu0 %v278
  %360 = vmatpush.bf16.msra.mxu0 %v277
  %361 = vmatpush.bf16.msra.mxu0 %v276
  %362 = vmatpush.bf16.msra.mxu0 %v275
  %363 = vmatpush.bf16.msra.mxu0 %v274
  %364 = vmatmul.bf16.gmra.mxu0 %v114
  %v365 = vpop.f32.mrf.mxu0
  %v366 = vadd.f32 %v352, %v365
  %v367 = vpop.f32.mrf.mxu0
  %v368 = vadd.f32 %v354, %v367
  %369 = vdwg.mxu0
  %370 = vmatpush.bf16.msra.mxu0 %v289
  %371 = vmatpush.bf16.msra.mxu0 %v288
  %372 = vmatpush.bf16.msra.mxu0 %v287
  %373 = vmatpush.bf16.msra.mxu0 %v286
  %374 = vmatpush.bf16.msra.mxu0 %v285
  %375 = vmatpush.bf16.msra.mxu0 %v284
  %376 = vmatpush.bf16.msra.mxu0 %v283
  %377 = vmatpush.bf16.msra.mxu0 %v282
  %378 = vmatmul.bf16.gmra.mxu0 %v115
  %v379 = vpop.f32.mrf.mxu0
  %v380 = vadd.f32 %v366, %v379
  %v381 = vpop.f32.mrf.mxu0
  %v382 = vadd.f32 %v368, %v381
  %383 = vdwg.mxu0
  %384 = vmatpush.bf16.msra.mxu0 %v297
  %385 = vmatpush.bf16.msra.mxu0 %v296
  %386 = vmatpush.bf16.msra.mxu0 %v295
  %387 = vmatpush.bf16.msra.mxu0 %v294
  %388 = vmatpush.bf16.msra.mxu0 %v293
  %389 = vmatpush.bf16.msra.mxu0 %v292
  %390 = vmatpush.bf16.msra.mxu0 %v291
  %391 = vmatpush.bf16.msra.mxu0 %v290
  %392 = vmatmul.bf16.gmra.mxu0 %v116
  %v393 = vpop.f32.mrf.mxu0
  %v394 = vadd.f32 %v380, %v393
  %v395 = vpop.f32.mrf.mxu0
  %v396 = vadd.f32 %v382, %v395
  %397 = vdwg.mxu0
  %398 = vmatpush.bf16.msra.mxu0 0
  %399 = vmatpush.bf16.msra.mxu0 0
  %400 = vmatpush.bf16.msra.mxu0 0
  %401 = vmatpush.bf16.msra.mxu0 0
  %402 = vmatpush.bf16.msra.mxu0 %v301
  %403 = vmatpush.bf16.msra.mxu0 %v300
  %404 = vmatpush.bf16.msra.mxu0 %v299
  %405 = vmatpush.bf16.msra.mxu0 %v298
  %406 = vmatmul.bf16.gmra.mxu0 %v340
  %v407 = vpop.f32.mrf.mxu0
  %v408 = vadd.f32 %v394, %v407
  %v409 = vpop.f32.mrf.mxu0
  %v410 = vadd.f32 %v396, %v409
  %411 = vdwg.mxu0
  %v412 = vmax.f32 %v408, 0.0
  %v413 = vmax.f32 %v410, 0.0
  %414 = vst [vmem:[%s3] sm:$0xff] %v412
  %415 = vst [vmem:[%s3 + $0x8] sm:$0xff] %v413
  // Predicated region
  $region14: #{unet2d_forward.33} parent=0 // pred_check
    _
  $region15: #{unet2d_forward.33} parent=0 // pred_check_branch
    %417 = sbr.rel (0) target = $region17
  $region16: #{unet2d_forward.33} parent=0 // pred_region
    _
  $region17: #{unet2d_forward.33} parent=0 // pred_fallthru
    _
  // Predicated region
  $region18: #{unet2d_forward.33} parent=0 // pred_check
    _
  $region19: #{unet2d_forward.33} parent=0 // pred_check_branch
    %419 = sbr.rel (0) target = $region21
  $region20: #{unet2d_forward.33} parent=0 // pred_region
    _
  $region21: #{unet2d_forward.33} parent=0 // pred_fallthru
    _

// kernel: unet2d_forward.34
$region0: #{unet2d_forward.34}
  #allocation0 [shape = 'u32[]', space=smem, size = 0x4, offset = 0x4, fixed_abs, tag = 'smem constant byte address 0x4 - core index']
  #allocation1 [shape = 'u32[72,128]{1,0:T(1,128)}', space=vmem, size = 0x9000, scoped, tag = 'internal scratch']
  %s0 = inlined_call_operand.vmem [shape: bf16[16,1152], index: 0, kind: input, shape index: {}]
  %s1 = inlined_call_operand.vmem [shape: bf16[1152,128], index: 1, kind: input, shape index: {}]
  %s2 = inlined_call_operand.vmem [shape: f32[1,128], index: 2, kind: input, shape index: {}]
  %s3 = inlined_call_operand.vmem [shape: f32[16,128], index: 3, kind: output, shape index: {}]
  %s4 = sld [smem:[#allocation0]]
  $region22: #{unet2d_forward.34} parent=0
    _
  %s6 = ssub.s32 1, %s4
  %s7 = scalar_select 0, %s6, %s4
  // Predicated region
  $region2: #{unet2d_forward.34} parent=0 // pred_check
    _
  $region3: #{unet2d_forward.34} parent=0 // pred_check_branch
    %9 = sbr.rel (0) target = $region5
  $region4: #{unet2d_forward.34} parent=0 // pred_region
    _
  $region5: #{unet2d_forward.34} parent=0 // pred_fallthru
    _
  // Predicated region
  $region6: #{unet2d_forward.34} parent=0 // pred_check
    _
  $region7: #{unet2d_forward.34} parent=0 // pred_check_branch
    %11 = sbr.rel (0) target = $region9
  $region8: #{unet2d_forward.34} parent=0 // pred_region
    _
  $region9: #{unet2d_forward.34} parent=0 // pred_fallthru
    _
  // Predicated region
  $region10: #{unet2d_forward.34} parent=0 // pred_check
    _
  $region11: #{unet2d_forward.34} parent=0 // pred_check_branch
    %13 = sbr.rel (0) target = $region13
  $region12: #{unet2d_forward.34} parent=0 // pred_region
    _
  $region13: #{unet2d_forward.34} parent=0 // pred_fallthru
    _
  %v14 = vld [vmem:[%s0] sm:$0xff]
  %v15 = vld [vmem:[%s0 + $0x8] sm:$0xff]
  %v16 = vld [vmem:[%s0 + $0x10] sm:$0xff]
  %v17 = vld [vmem:[%s0 + $0x18] sm:$0xff]
  %v18 = vld [vmem:[%s0 + $0x20] sm:$0xf]
  %v19 = vld [vmem:[%s0 + $0x24] sm:$0xff]
  %v20 = vld [vmem:[%s0 + $0x2c] sm:$0xff]
  %v21 = vld [vmem:[%s0 + $0x34] sm:$0xff]
  %v22 = vld [vmem:[%s0 + $0x3c] sm:$0xff]
  %v23 = vld [vmem:[%s0 + $0x44] sm:$0xf]
  %v24 = vld [vmem:[%s1] sm:$0xf]
  %v25 = vld [vmem:[%s1 + $0x4] sm:$0xf]
  %v26 = vld [vmem:[%s1 + $0x8] sm:$0xf]
  %v27 = vld [vmem:[%s1 + $0xc] sm:$0xf]
  %v28 = vld [vmem:[%s1 + $0x10] sm:$0xf]
  %v29 = vld [vmem:[%s1 + $0x14] sm:$0xf]
  %v30 = vld [vmem:[%s1 + $0x18] sm:$0xf]
  %v31 = vld [vmem:[%s1 + $0x1c] sm:$0xf]
  %v32 = vld [vmem:[%s1 + $0x20] sm:$0xf]
  %v33 = vld [vmem:[%s1 + $0x24] sm:$0xf]
  %v34 = vld [vmem:[%s1 + $0x28] sm:$0xf]
  %v35 = vld [vmem:[%s1 + $0x2c] sm:$0xf]
  %v36 = vld [vmem:[%s1 + $0x30] sm:$0xf]
  %v37 = vld [vmem:[%s1 + $0x34] sm:$0xf]
  %v38 = vld [vmem:[%s1 + $0x38] sm:$0xf]
  %v39 = vld [vmem:[%s1 + $0x3c] sm:$0xf]
  %v40 = vld [vmem:[%s1 + $0x40] sm:$0xf]
  %v41 = vld [vmem:[%s1 + $0x44] sm:$0xf]
  %v42 = vld [vmem:[%s1 + $0x48] sm:$0xf]
  %v43 = vld [vmem:[%s1 + $0x4c] sm:$0xf]
  %v44 = vld [vmem:[%s1 + $0x50] sm:$0xf]
  %v45 = vld [vmem:[%s1 + $0x54] sm:$0xf]
  %v46 = vld [vmem:[%s1 + $0x58] sm:$0xf]
  %v47 = vld [vmem:[%s1 + $0x5c] sm:$0xf]
  %v48 = vld [vmem:[%s1 + $0x60] sm:$0xf]
  %v49 = vld [vmem:[%s1 + $0x64] sm:$0xf]
  %v50 = vld [vmem:[%s1 + $0x68] sm:$0xf]
  %v51 = vld [vmem:[%s1 + $0x6c] sm:$0xf]
  %v52 = vld [vmem:[%s1 + $0x70] sm:$0xf]
  %v53 = vld [vmem:[%s1 + $0x74] sm:$0xf]
  %v54 = vld [vmem:[%s1 + $0x78] sm:$0xf]
  %v55 = vld [vmem:[%s1 + $0x7c] sm:$0xf]
  %v56 = vld [vmem:[%s1 + $0x80] sm:$0xf]
  %v57 = vld [vmem:[%s1 + $0x84] sm:$0xf]
  %v58 = vld [vmem:[%s1 + $0x88] sm:$0xf]
  %v59 = vld [vmem:[%s1 + $0x8c] sm:$0xf]
  %v60 = vld [vmem:[%s1 + $0x90] sm:$0xf]
  %v61 = vld [vmem:[%s1 + $0x94] sm:$0xf]
  %v62 = vld [vmem:[%s1 + $0x98] sm:$0xf]
  %v63 = vld [vmem:[%s1 + $0x9c] sm:$0xf]
  %v64 = vld [vmem:[%s1 + $0xa0] sm:$0xf]
  %v65 = vld [vmem:[%s1 + $0xa4] sm:$0xf]
  %v66 = vld [vmem:[%s1 + $0xa8] sm:$0xf]
  %v67 = vld [vmem:[%s1 + $0xac] sm:$0xf]
  %v68 = vld [vmem:[%s1 + $0xb0] sm:$0xf]
  %v69 = vld [vmem:[%s1 + $0xb4] sm:$0xf]
  %v70 = vld [vmem:[%s1 + $0xb8] sm:$0xf]
  %v71 = vld [vmem:[%s1 + $0xbc] sm:$0xf]
  %v72 = vld [vmem:[%s1 + $0xc0] sm:$0xf]
  %v73 = vld [vmem:[%s1 + $0xc4] sm:$0xf]
  %v74 = vld [vmem:[%s1 + $0xc8] sm:$0xf]
  %v75 = vld [vmem:[%s1 + $0xcc] sm:$0xf]
  %v76 = vld [vmem:[%s1 + $0xd0] sm:$0xf]
  %v77 = vld [vmem:[%s1 + $0xd4] sm:$0xf]
  %v78 = vld [vmem:[%s1 + $0xd8] sm:$0xf]
  %v79 = vld [vmem:[%s1 + $0xdc] sm:$0xf]
  %v80 = vld [vmem:[%s1 + $0xe0] sm:$0xf]
  %v81 = vld [vmem:[%s1 + $0xe4] sm:$0xf]
  %v82 = vld [vmem:[%s1 + $0xe8] sm:$0xf]
  %v83 = vld [vmem:[%s1 + $0xec] sm:$0xf]
  %v84 = vld [vmem:[%s1 + $0xf0] sm:$0xf]
  %v85 = vld [vmem:[%s1 + $0xf4] sm:$0xf]
  %v86 = vld [vmem:[%s1 + $0xf8] sm:$0xf]
  %v87 = vld [vmem:[%s1 + $0xfc] sm:$0xf]
  %v88 = vld [vmem:[%s1 + $0x100] sm:$0xf]
  %v89 = vld [vmem:[%s1 + $0x104] sm:$0xf]
  %v90 = vld [vmem:[%s1 + $0x108] sm:$0xf]
  %v91 = vld [vmem:[%s1 + $0x10c] sm:$0xf]
  %v92 = vld [vmem:[%s1 + $0x110] sm:$0xf]
  %v93 = vld [vmem:[%s1 + $0x114] sm:$0xf]
  %v94 = vld [vmem:[%s1 + $0x118] sm:$0xf]
  %v95 = vld [vmem:[%s1 + $0x11c] sm:$0xf]
  %v96 = vld [vmem:[%s1 + $0x120] sm:$0xf]
  %v97 = vld [vmem:[%s1 + $0x124] sm:$0xf]
  %v98 = vld [vmem:[%s1 + $0x128] sm:$0xf]
  %v99 = vld [vmem:[%s1 + $0x12c] sm:$0xf]
  %v100 = vld [vmem:[%s1 + $0x130] sm:$0xf]
  %v101 = vld [vmem:[%s1 + $0x134] sm:$0xf]
  %v102 = vld [vmem:[%s1 + $0x138] sm:$0xf]
  %v103 = vld [vmem:[%s1 + $0x13c] sm:$0xf]
  %v104 = vld [vmem:[%s1 + $0x140] sm:$0xf]
  %v105 = vld [vmem:[%s1 + $0x144] sm:$0xf]
  %v106 = vld [vmem:[%s1 + $0x148] sm:$0xf]
  %v107 = vld [vmem:[%s1 + $0x14c] sm:$0xf]
  %v108 = vld [vmem:[%s1 + $0x150] sm:$0xf]
  %v109 = vld [vmem:[%s1 + $0x154] sm:$0xf]
  %v110 = vld [vmem:[%s1 + $0x158] sm:$0xf]
  %v111 = vld [vmem:[%s1 + $0x15c] sm:$0xf]
  %v112 = vld [vmem:[%s1 + $0x160] sm:$0xf]
  %v113 = vld [vmem:[%s1 + $0x164] sm:$0xf]
  %v114 = vld [vmem:[%s1 + $0x168] sm:$0xf]
  %v115 = vld [vmem:[%s1 + $0x16c] sm:$0xf]
  %v116 = vld [vmem:[%s1 + $0x170] sm:$0xf]
  %v117 = vld [vmem:[%s1 + $0x174] sm:$0xf]
  %v118 = vld [vmem:[%s1 + $0x178] sm:$0xf]
  %v119 = vld [vmem:[%s1 + $0x17c] sm:$0xf]
  %v120 = vld [vmem:[%s1 + $0x180] sm:$0xf]
  %v121 = vld [vmem:[%s1 + $0x184] sm:$0xf]
  %v122 = vld [vmem:[%s1 + $0x188] sm:$0xf]
  %v123 = vld [vmem:[%s1 + $0x18c] sm:$0xf]
  %v124 = vld [vmem:[%s1 + $0x190] sm:$0xf]
  %v125 = vld [vmem:[%s1 + $0x194] sm:$0xf]
  %v126 = vld [vmem:[%s1 + $0x198] sm:$0xf]
  %v127 = vld [vmem:[%s1 + $0x19c] sm:$0xf]
  %v128 = vld [vmem:[%s1 + $0x1a0] sm:$0xf]
  %v129 = vld [vmem:[%s1 + $0x1a4] sm:$0xf]
  %v130 = vld [vmem:[%s1 + $0x1a8] sm:$0xf]
  %v131 = vld [vmem:[%s1 + $0x1ac] sm:$0xf]
  %v132 = vld [vmem:[%s1 + $0x1b0] sm:$0xf]
  %v133 = vld [vmem:[%s1 + $0x1b4] sm:$0xf]
  %v134 = vld [vmem:[%s1 + $0x1b8] sm:$0xf]
  %v135 = vld [vmem:[%s1 + $0x1bc] sm:$0xf]
  %v136 = vld [vmem:[%s1 + $0x1c0] sm:$0xf]
  %v137 = vld [vmem:[%s1 + $0x1c4] sm:$0xf]
  %v138 = vld [vmem:[%s1 + $0x1c8] sm:$0xf]
  %v139 = vld [vmem:[%s1 + $0x1cc] sm:$0xf]
  %v140 = vld [vmem:[%s1 + $0x1d0] sm:$0xf]
  %v141 = vld [vmem:[%s1 + $0x1d4] sm:$0xf]
  %v142 = vld [vmem:[%s1 + $0x1d8] sm:$0xf]
  %v143 = vld [vmem:[%s1 + $0x1dc] sm:$0xf]
  %v144 = vld [vmem:[%s1 + $0x1e0] sm:$0xf]
  %v145 = vld [vmem:[%s1 + $0x1e4] sm:$0xf]
  %v146 = vld [vmem:[%s1 + $0x1e8] sm:$0xf]
  %v147 = vld [vmem:[%s1 + $0x1ec] sm:$0xf]
  %v148 = vld [vmem:[%s1 + $0x1f0] sm:$0xf]
  %v149 = vld [vmem:[%s1 + $0x1f4] sm:$0xf]
  %v150 = vld [vmem:[%s1 + $0x1f8] sm:$0xf]
  %v151 = vld [vmem:[%s1 + $0x1fc] sm:$0xf]
  %v152 = vld [vmem:[%s1 + $0x200] sm:$0xf]
  %v153 = vld [vmem:[%s1 + $0x204] sm:$0xf]
  %v154 = vld [vmem:[%s1 + $0x208] sm:$0xf]
  %v155 = vld [vmem:[%s1 + $0x20c] sm:$0xf]
  %v156 = vld [vmem:[%s1 + $0x210] sm:$0xf]
  %v157 = vld [vmem:[%s1 + $0x214] sm:$0xf]
  %v158 = vld [vmem:[%s1 + $0x218] sm:$0xf]
  %v159 = vld [vmem:[%s1 + $0x21c] sm:$0xf]
  %v160 = vld [vmem:[%s1 + $0x220] sm:$0xf]
  %v161 = vld [vmem:[%s1 + $0x224] sm:$0xf]
  %v162 = vld [vmem:[%s1 + $0x228] sm:$0xf]
  %v163 = vld [vmem:[%s1 + $0x22c] sm:$0xf]
  %v164 = vld [vmem:[%s1 + $0x230] sm:$0xf]
  %v165 = vld [vmem:[%s1 + $0x234] sm:$0xf]
  %v166 = vld [vmem:[%s1 + $0x238] sm:$0xf]
  %v167 = vld [vmem:[%s1 + $0x23c] sm:$0xf]
  %v168 = vld [vmem:[%s2] sm:$0x1]
  %v170 = vperm.slane %v168, 0
  %v182 = vunpack.c.l.b16 %v14
  %v183 = vunpack.c.h.b16 %v14
  %v184 = vunpack.c.l.b16 %v15
  %v185 = vunpack.c.h.b16 %v15
  %v186 = vunpack.c.l.b16 %v16
  %v187 = vunpack.c.h.b16 %v16
  %v188 = vunpack.c.l.b16 %v17
  %v189 = vunpack.c.h.b16 %v17
  %v190 = vunpack.c.l.b16 %v18
  %v191 = vunpack.c.l.b16 %v19
  %v192 = vunpack.c.h.b16 %v19
  %v193 = vunpack.c.l.b16 %v20
  %v194 = vunpack.c.h.b16 %v20
  %v195 = vunpack.c.l.b16 %v21
  %v196 = vunpack.c.h.b16 %v21
  %v197 = vunpack.c.l.b16 %v22
  %v198 = vunpack.c.h.b16 %v22
  %v199 = vunpack.c.l.b16 %v23
  %v200 = vpack.c.b16 %v191, %v182
  %v201 = vpack.c.b16 %v192, %v183
  %v202 = vpack.c.b16 %v193, %v184
  %v203 = vpack.c.b16 %v194, %v185
  %v204 = vpack.c.b16 %v195, %v186
  %v205 = vpack.c.b16 %v196, %v187
  %v206 = vpack.c.b16 %v197, %v188
  %v207 = vpack.c.b16 %v198, %v189
  %v208 = vpack.c.b16 %v199, %v190
  %v362 = vunpack.c.l.b16 %v24
  %v363 = vunpack.c.l.b16 %v25
  %v364 = vunpack.c.l.b16 %v26
  %v365 = vunpack.c.l.b16 %v27
  %v366 = vunpack.c.l.b16 %v28
  %v367 = vunpack.c.l.b16 %v29
  %v368 = vunpack.c.l.b16 %v30
  %v369 = vunpack.c.l.b16 %v31
  %v370 = vunpack.c.l.b16 %v32
  %v371 = vunpack.c.l.b16 %v33
  %v372 = vunpack.c.l.b16 %v34
  %v373 = vunpack.c.l.b16 %v35
  %v374 = vunpack.c.l.b16 %v36
  %v375 = vunpack.c.l.b16 %v37
  %v376 = vunpack.c.l.b16 %v38
  %v377 = vunpack.c.l.b16 %v39
  %v378 = vunpack.c.l.b16 %v40
  %v379 = vunpack.c.l.b16 %v41
  %v380 = vunpack.c.l.b16 %v42
  %v381 = vunpack.c.l.b16 %v43
  %v382 = vunpack.c.l.b16 %v44
  %v383 = vunpack.c.l.b16 %v45
  %v384 = vunpack.c.l.b16 %v46
  %v385 = vunpack.c.l.b16 %v47
  %v386 = vunpack.c.l.b16 %v48
  %v387 = vunpack.c.l.b16 %v49
  %v388 = vunpack.c.l.b16 %v50
  %v389 = vunpack.c.l.b16 %v51
  %v390 = vunpack.c.l.b16 %v52
  %v391 = vunpack.c.l.b16 %v53
  %v392 = vunpack.c.l.b16 %v54
  %v393 = vunpack.c.l.b16 %v55
  %v394 = vunpack.c.l.b16 %v56
  %v395 = vunpack.c.l.b16 %v57
  %v396 = vunpack.c.l.b16 %v58
  %v397 = vunpack.c.l.b16 %v59
  %v398 = vunpack.c.l.b16 %v60
  %v399 = vunpack.c.l.b16 %v61
  %v400 = vunpack.c.l.b16 %v62
  %v401 = vunpack.c.l.b16 %v63
  %v402 = vunpack.c.l.b16 %v64
  %v403 = vunpack.c.l.b16 %v65
  %v404 = vunpack.c.l.b16 %v66
  %v405 = vunpack.c.l.b16 %v67
  %v406 = vunpack.c.l.b16 %v68
  %v407 = vunpack.c.l.b16 %v69
  %v408 = vunpack.c.l.b16 %v70
  %v409 = vunpack.c.l.b16 %v71
  %v410 = vunpack.c.l.b16 %v72
  %v411 = vunpack.c.l.b16 %v73
  %v412 = vunpack.c.l.b16 %v74
  %v413 = vunpack.c.l.b16 %v75
  %v414 = vunpack.c.l.b16 %v76
  %v415 = vunpack.c.l.b16 %v77
  %v416 = vunpack.c.l.b16 %v78
  %v417 = vunpack.c.l.b16 %v79
  %v418 = vunpack.c.l.b16 %v80
  %v419 = vunpack.c.l.b16 %v81
  %v420 = vunpack.c.l.b16 %v82
  %v421 = vunpack.c.l.b16 %v83
  %v422 = vunpack.c.l.b16 %v84
  %v423 = vunpack.c.l.b16 %v85
  %v424 = vunpack.c.l.b16 %v86
  %v425 = vunpack.c.l.b16 %v87
  %v426 = vunpack.c.l.b16 %v88
  %v427 = vunpack.c.l.b16 %v89
  %v428 = vunpack.c.l.b16 %v90
  %v429 = vunpack.c.l.b16 %v91
  %v430 = vunpack.c.l.b16 %v92
  %v431 = vunpack.c.l.b16 %v93
  %v432 = vunpack.c.l.b16 %v94
  %v433 = vunpack.c.l.b16 %v95
  %v434 = vunpack.c.l.b16 %v96
  %v435 = vunpack.c.l.b16 %v97
  %v436 = vunpack.c.l.b16 %v98
  %v437 = vunpack.c.l.b16 %v99
  %v438 = vunpack.c.l.b16 %v100
  %v439 = vunpack.c.l.b16 %v101
  %v440 = vunpack.c.l.b16 %v102
  %v441 = vunpack.c.l.b16 %v103
  %v442 = vunpack.c.l.b16 %v104
  %v443 = vunpack.c.l.b16 %v105
  %v444 = vunpack.c.l.b16 %v106
  %v445 = vunpack.c.l.b16 %v107
  %v446 = vunpack.c.l.b16 %v108
  %v447 = vunpack.c.l.b16 %v109
  %v448 = vunpack.c.l.b16 %v110
  %v449 = vunpack.c.l.b16 %v111
  %v450 = vunpack.c.l.b16 %v112
  %v451 = vunpack.c.l.b16 %v113
  %v452 = vunpack.c.l.b16 %v114
  %v453 = vunpack.c.l.b16 %v115
  %v454 = vunpack.c.l.b16 %v116
  %v455 = vunpack.c.l.b16 %v117
  %v456 = vunpack.c.l.b16 %v118
  %v457 = vunpack.c.l.b16 %v119
  %v458 = vunpack.c.l.b16 %v120
  %v459 = vunpack.c.l.b16 %v121
  %v460 = vunpack.c.l.b16 %v122
  %v461 = vunpack.c.l.b16 %v123
  %v462 = vunpack.c.l.b16 %v124
  %v463 = vunpack.c.l.b16 %v125
  %v464 = vunpack.c.l.b16 %v126
  %v465 = vunpack.c.l.b16 %v127
  %v466 = vunpack.c.l.b16 %v128
  %v467 = vunpack.c.l.b16 %v129
  %v468 = vunpack.c.l.b16 %v130
  %v469 = vunpack.c.l.b16 %v131
  %v470 = vunpack.c.l.b16 %v132
  %v471 = vunpack.c.l.b16 %v133
  %v472 = vunpack.c.l.b16 %v134
  %v473 = vunpack.c.l.b16 %v135
  %v474 = vunpack.c.l.b16 %v136
  %v475 = vunpack.c.l.b16 %v137
  %v476 = vunpack.c.l.b16 %v138
  %v477 = vunpack.c.l.b16 %v139
  %v478 = vunpack.c.l.b16 %v140
  %v479 = vunpack.c.l.b16 %v141
  %v480 = vunpack.c.l.b16 %v142
  %v481 = vunpack.c.l.b16 %v143
  %v482 = vunpack.c.l.b16 %v144
  %v483 = vunpack.c.l.b16 %v145
  %v484 = vunpack.c.l.b16 %v146
  %v485 = vunpack.c.l.b16 %v147
  %v486 = vunpack.c.l.b16 %v148
  %v487 = vunpack.c.l.b16 %v149
  %v488 = vunpack.c.l.b16 %v150
  %v489 = vunpack.c.l.b16 %v151
  %v490 = vunpack.c.l.b16 %v152
  %v491 = vunpack.c.l.b16 %v153
  %v492 = vunpack.c.l.b16 %v154
  %v493 = vunpack.c.l.b16 %v155
  %v494 = vunpack.c.l.b16 %v156
  %v495 = vunpack.c.l.b16 %v157
  %v496 = vunpack.c.l.b16 %v158
  %v497 = vunpack.c.l.b16 %v159
  %v498 = vunpack.c.l.b16 %v160
  %v499 = vunpack.c.l.b16 %v161
  %v500 = vunpack.c.l.b16 %v162
  %v501 = vunpack.c.l.b16 %v163
  %v502 = vunpack.c.l.b16 %v164
  %v503 = vunpack.c.l.b16 %v165
  %v504 = vunpack.c.l.b16 %v166
  %v505 = vunpack.c.l.b16 %v167
  %v506 = vpack.c.b16 %v363, %v362
  %v507 = vpack.c.b16 %v365, %v364
  %v508 = vpack.c.b16 %v367, %v366
  %v509 = vpack.c.b16 %v369, %v368
  %v510 = vpack.c.b16 %v371, %v370
  %v511 = vpack.c.b16 %v373, %v372
  %v512 = vpack.c.b16 %v375, %v374
  %v513 = vpack.c.b16 %v377, %v376
  %v514 = vpack.c.b16 %v379, %v378
  %v515 = vpack.c.b16 %v381, %v380
  %v516 = vpack.c.b16 %v383, %v382
  %v517 = vpack.c.b16 %v385, %v384
  %v518 = vpack.c.b16 %v387, %v386
  %v519 = vpack.c.b16 %v389, %v388
  %v520 = vpack.c.b16 %v391, %v390
  %v521 = vpack.c.b16 %v393, %v392
  %v522 = vpack.c.b16 %v395, %v394
  %v523 = vpack.c.b16 %v397, %v396
  %v524 = vpack.c.b16 %v399, %v398
  %v525 = vpack.c.b16 %v401, %v400
  %v526 = vpack.c.b16 %v403, %v402
  %v527 = vpack.c.b16 %v405, %v404
  %v528 = vpack.c.b16 %v407, %v406
  %v529 = vpack.c.b16 %v409, %v408
  %v530 = vpack.c.b16 %v411, %v410
  %v531 = vpack.c.b16 %v413, %v412
  %v532 = vpack.c.b16 %v415, %v414
  %v533 = vpack.c.b16 %v417, %v416
  %v534 = vpack.c.b16 %v419, %v418
  %v535 = vpack.c.b16 %v421, %v420
  %v536 = vpack.c.b16 %v423, %v422
  %v537 = vpack.c.b16 %v425, %v424
  %v538 = vpack.c.b16 %v427, %v426
  %v539 = vpack.c.b16 %v429, %v428
  %v540 = vpack.c.b16 %v431, %v430
  %v541 = vpack.c.b16 %v433, %v432
  %v542 = vpack.c.b16 %v435, %v434
  %v543 = vpack.c.b16 %v437, %v436
  %v544 = vpack.c.b16 %v439, %v438
  %v545 = vpack.c.b16 %v441, %v440
  %v546 = vpack.c.b16 %v443, %v442
  %v547 = vpack.c.b16 %v445, %v444
  %v548 = vpack.c.b16 %v447, %v446
  %v549 = vpack.c.b16 %v449, %v448
  %v550 = vpack.c.b16 %v451, %v450
  %v551 = vpack.c.b16 %v453, %v452
  %v552 = vpack.c.b16 %v455, %v454
  %v553 = vpack.c.b16 %v457, %v456
  %v554 = vpack.c.b16 %v459, %v458
  %v555 = vpack.c.b16 %v461, %v460
  %v556 = vpack.c.b16 %v463, %v462
  %v557 = vpack.c.b16 %v465, %v464
  %v558 = vpack.c.b16 %v467, %v466
  %v559 = vpack.c.b16 %v469, %v468
  %v560 = vpack.c.b16 %v471, %v470
  %v561 = vpack.c.b16 %v473, %v472
  %v562 = vpack.c.b16 %v475, %v474
  %v563 = vpack.c.b16 %v477, %v476
  %v564 = vpack.c.b16 %v479, %v478
  %v565 = vpack.c.b16 %v481, %v480
  %v566 = vpack.c.b16 %v483, %v482
  %v567 = vpack.c.b16 %v485, %v484
  %v568 = vpack.c.b16 %v487, %v486
  %v569 = vpack.c.b16 %v489, %v488
  %v570 = vpack.c.b16 %v491, %v490
  %v571 = vpack.c.b16 %v493, %v492
  %v572 = vpack.c.b16 %v495, %v494
  %v573 = vpack.c.b16 %v497, %v496
  %v574 = vpack.c.b16 %v499, %v498
  %v575 = vpack.c.b16 %v501, %v500
  %v576 = vpack.c.b16 %v503, %v502
  %v577 = vpack.c.b16 %v505, %v504
  %650 = vmatpush.bf16.msra.mxu0 %v513
  %651 = vmatpush.bf16.msra.mxu0 %v512
  %652 = vmatpush.bf16.msra.mxu0 %v511
  %653 = vmatpush.bf16.msra.mxu0 %v510
  %654 = vmatpush.bf16.msra.mxu0 %v509
  %655 = vmatpush.bf16.msra.mxu0 %v508
  %656 = vmatpush.bf16.msra.mxu0 %v507
  %657 = vmatpush.bf16.msra.mxu0 %v506
  %658 = vmatmul.bf16.gmra.mxu0 %v200
  %v659 = vpop.f32.mrf.mxu0
  %v660 = vadd.f32 %v170, %v659
  %v661 = vpop.f32.mrf.mxu0
  %v662 = vadd.f32 %v170, %v661
  %663 = vdwg.mxu0
  %664 = vmatpush.bf16.msra.mxu0 %v521
  %665 = vmatpush.bf16.msra.mxu0 %v520
  %666 = vmatpush.bf16.msra.mxu0 %v519
  %667 = vmatpush.bf16.msra.mxu0 %v518
  %668 = vmatpush.bf16.msra.mxu0 %v517
  %669 = vmatpush.bf16.msra.mxu0 %v516
  %670 = vmatpush.bf16.msra.mxu0 %v515
  %671 = vmatpush.bf16.msra.mxu0 %v514
  %672 = vmatmul.bf16.gmra.mxu0 %v201
  %v673 = vpop.f32.mrf.mxu0
  %v674 = vadd.f32 %v660, %v673
  %v675 = vpop.f32.mrf.mxu0
  %v676 = vadd.f32 %v662, %v675
  %677 = vdwg.mxu0
  %678 = vmatpush.bf16.msra.mxu0 %v529
  %679 = vmatpush.bf16.msra.mxu0 %v528
  %680 = vmatpush.bf16.msra.mxu0 %v527
  %681 = vmatpush.bf16.msra.mxu0 %v526
  %682 = vmatpush.bf16.msra.mxu0 %v525
  %683 = vmatpush.bf16.msra.mxu0 %v524
  %684 = vmatpush.bf16.msra.mxu0 %v523
  %685 = vmatpush.bf16.msra.mxu0 %v522
  %686 = vmatmul.bf16.gmra.mxu0 %v202
  %v687 = vpop.f32.mrf.mxu0
  %v688 = vadd.f32 %v674, %v687
  %v689 = vpop.f32.mrf.mxu0
  %v690 = vadd.f32 %v676, %v689
  %691 = vdwg.mxu0
  %692 = vmatpush.bf16.msra.mxu0 %v537
  %693 = vmatpush.bf16.msra.mxu0 %v536
  %694 = vmatpush.bf16.msra.mxu0 %v535
  %695 = vmatpush.bf16.msra.mxu0 %v534
  %696 = vmatpush.bf16.msra.mxu0 %v533
  %697 = vmatpush.bf16.msra.mxu0 %v532
  %698 = vmatpush.bf16.msra.mxu0 %v531
  %699 = vmatpush.bf16.msra.mxu0 %v530
  %700 = vmatmul.bf16.gmra.mxu0 %v203
  %v701 = vpop.f32.mrf.mxu0
  %v702 = vadd.f32 %v688, %v701
  %v703 = vpop.f32.mrf.mxu0
  %v704 = vadd.f32 %v690, %v703
  %705 = vdwg.mxu0
  %706 = vmatpush.bf16.msra.mxu0 %v545
  %707 = vmatpush.bf16.msra.mxu0 %v544
  %708 = vmatpush.bf16.msra.mxu0 %v543
  %709 = vmatpush.bf16.msra.mxu0 %v542
  %710 = vmatpush.bf16.msra.mxu0 %v541
  %711 = vmatpush.bf16.msra.mxu0 %v540
  %712 = vmatpush.bf16.msra.mxu0 %v539
  %713 = vmatpush.bf16.msra.mxu0 %v538
  %714 = vmatmul.bf16.gmra.mxu0 %v204
  %v715 = vpop.f32.mrf.mxu0
  %v716 = vadd.f32 %v702, %v715
  %v717 = vpop.f32.mrf.mxu0
  %v718 = vadd.f32 %v704, %v717
  %719 = vdwg.mxu0
  %720 = vmatpush.bf16.msra.mxu0 %v553
  %721 = vmatpush.bf16.msra.mxu0 %v552
  %722 = vmatpush.bf16.msra.mxu0 %v551
  %723 = vmatpush.bf16.msra.mxu0 %v550
  %724 = vmatpush.bf16.msra.mxu0 %v549
  %725 = vmatpush.bf16.msra.mxu0 %v548
  %726 = vmatpush.bf16.msra.mxu0 %v547
  %727 = vmatpush.bf16.msra.mxu0 %v546
  %728 = vmatmul.bf16.gmra.mxu0 %v205
  %v729 = vpop.f32.mrf.mxu0
  %v730 = vadd.f32 %v716, %v729
  %v731 = vpop.f32.mrf.mxu0
  %v732 = vadd.f32 %v718, %v731
  %733 = vdwg.mxu0
  %734 = vmatpush.bf16.msra.mxu0 %v561
  %735 = vmatpush.bf16.msra.mxu0 %v560
  %736 = vmatpush.bf16.msra.mxu0 %v559
  %737 = vmatpush.bf16.msra.mxu0 %v558
  %738 = vmatpush.bf16.msra.mxu0 %v557
  %739 = vmatpush.bf16.msra.mxu0 %v556
  %740 = vmatpush.bf16.msra.mxu0 %v555
  %741 = vmatpush.bf16.msra.mxu0 %v554
  %742 = vmatmul.bf16.gmra.mxu0 %v206
  %v743 = vpop.f32.mrf.mxu0
  %v744 = vadd.f32 %v730, %v743
  %v745 = vpop.f32.mrf.mxu0
  %v746 = vadd.f32 %v732, %v745
  %747 = vdwg.mxu0
  %748 = vmatpush.bf16.msra.mxu0 %v569
  %749 = vmatpush.bf16.msra.mxu0 %v568
  %750 = vmatpush.bf16.msra.mxu0 %v567
  %751 = vmatpush.bf16.msra.mxu0 %v566
  %752 = vmatpush.bf16.msra.mxu0 %v565
  %753 = vmatpush.bf16.msra.mxu0 %v564
  %754 = vmatpush.bf16.msra.mxu0 %v563
  %755 = vmatpush.bf16.msra.mxu0 %v562
  %756 = vmatmul.bf16.gmra.mxu0 %v207
  %v757 = vpop.f32.mrf.mxu0
  %v758 = vadd.f32 %v744, %v757
  %v759 = vpop.f32.mrf.mxu0
  %v760 = vadd.f32 %v746, %v759
  %761 = vdwg.mxu0
  %762 = vmatpush.bf16.msra.mxu0 %v577
  %763 = vmatpush.bf16.msra.mxu0 %v576
  %764 = vmatpush.bf16.msra.mxu0 %v575
  %765 = vmatpush.bf16.msra.mxu0 %v574
  %766 = vmatpush.bf16.msra.mxu0 %v573
  %767 = vmatpush.bf16.msra.mxu0 %v572
  %768 = vmatpush.bf16.msra.mxu0 %v571
  %769 = vmatpush.bf16.msra.mxu0 %v570
  %770 = vmatmul.bf16.gmra.mxu0 %v208
  %v771 = vpop.f32.mrf.mxu0
  %v772 = vadd.f32 %v758, %v771
  %v773 = vpop.f32.mrf.mxu0
  %v774 = vadd.f32 %v760, %v773
  %775 = vdwg.mxu0
  %v776 = vmax.f32 %v772, 0.0
  %v777 = vmax.f32 %v774, 0.0
  %778 = vst [vmem:[%s3] sm:$0xff] %v776
  %779 = vst [vmem:[%s3 + $0x8] sm:$0xff] %v777
  // Predicated region
  $region14: #{unet2d_forward.34} parent=0 // pred_check
    _
  $region15: #{unet2d_forward.34} parent=0 // pred_check_branch
    %781 = sbr.rel (0) target = $region17
  $region16: #{unet2d_forward.34} parent=0 // pred_region
    _
  $region17: #{unet2d_forward.34} parent=0 // pred_fallthru
    _
  // Predicated region
  $region18: #{unet2d_forward.34} parent=0 // pred_check
    _
  $region19: #{unet2d_forward.34} parent=0 // pred_check_branch
    %783 = sbr.rel (0) target = $region21
  $region20: #{unet2d_forward.34} parent=0 // pred_region
    _
  $region21: #{unet2d_forward.34} parent=0 // pred_fallthru
    _

// kernel: unet2d_forward.36
$region0: #{unet2d_forward.36}
  #allocation0 [shape = 'u32[]', space=smem, size = 0x4, offset = 0x4, fixed_abs, tag = 'smem constant byte address 0x4 - core index']
  #allocation1 [shape = 'u32[72,128]{1,0:T(1,128)}', space=vmem, size = 0x9000, scoped, tag = 'internal scratch']
  %s0 = inlined_call_operand.vmem [shape: bf16[16,256], index: 0, kind: input, shape index: {}]
  %s1 = inlined_call_operand.vmem [shape: bf16[256,64], index: 1, kind: input, shape index: {}]
  %s2 = inlined_call_operand.vmem [shape: f32[1,64], index: 2, kind: input, shape index: {}]
  %s3 = inlined_call_operand.vmem [shape: f32[16,64], index: 3, kind: output, shape index: {}]
  %s4 = sld [smem:[#allocation0]]
  $region22: #{unet2d_forward.36} parent=0
    _
  %s6 = ssub.s32 1, %s4
  %s7 = scalar_select 0, %s6, %s4
  // Predicated region
  $region2: #{unet2d_forward.36} parent=0 // pred_check
    _
  $region3: #{unet2d_forward.36} parent=0 // pred_check_branch
    %9 = sbr.rel (0) target = $region5
  $region4: #{unet2d_forward.36} parent=0 // pred_region
    _
  $region5: #{unet2d_forward.36} parent=0 // pred_fallthru
    _
  // Predicated region
  $region6: #{unet2d_forward.36} parent=0 // pred_check
    _
  $region7: #{unet2d_forward.36} parent=0 // pred_check_branch
    %11 = sbr.rel (0) target = $region9
  $region8: #{unet2d_forward.36} parent=0 // pred_region
    _
  $region9: #{unet2d_forward.36} parent=0 // pred_fallthru
    _
  // Predicated region
  $region10: #{unet2d_forward.36} parent=0 // pred_check
    _
  $region11: #{unet2d_forward.36} parent=0 // pred_check_branch
    %13 = sbr.rel (0) target = $region13
  $region12: #{unet2d_forward.36} parent=0 // pred_region
    _
  $region13: #{unet2d_forward.36} parent=0 // pred_fallthru
    _
  %v14 = vld [vmem:[%s0] sm:$0xff]
  %v15 = vld [vmem:[%s0 + $0x8] sm:$0xff]
  %v16 = vld [vmem:[%s1] sm:$0xf]
  %v17 = vld [vmem:[%s1 + $0x4] sm:$0xf]
  %v18 = vld [vmem:[%s1 + $0x8] sm:$0xf]
  %v19 = vld [vmem:[%s1 + $0xc] sm:$0xf]
  %v20 = vld [vmem:[%s1 + $0x10] sm:$0xf]
  %v21 = vld [vmem:[%s1 + $0x14] sm:$0xf]
  %v22 = vld [vmem:[%s1 + $0x18] sm:$0xf]
  %v23 = vld [vmem:[%s1 + $0x1c] sm:$0xf]
  %v24 = vld [vmem:[%s1 + $0x20] sm:$0xf]
  %v25 = vld [vmem:[%s1 + $0x24] sm:$0xf]
  %v26 = vld [vmem:[%s1 + $0x28] sm:$0xf]
  %v27 = vld [vmem:[%s1 + $0x2c] sm:$0xf]
  %v28 = vld [vmem:[%s1 + $0x30] sm:$0xf]
  %v29 = vld [vmem:[%s1 + $0x34] sm:$0xf]
  %v30 = vld [vmem:[%s1 + $0x38] sm:$0xf]
  %v31 = vld [vmem:[%s1 + $0x3c] sm:$0xf]
  %v32 = vld [vmem:[%s1 + $0x40] sm:$0xf]
  %v33 = vld [vmem:[%s1 + $0x44] sm:$0xf]
  %v34 = vld [vmem:[%s1 + $0x48] sm:$0xf]
  %v35 = vld [vmem:[%s1 + $0x4c] sm:$0xf]
  %v36 = vld [vmem:[%s1 + $0x50] sm:$0xf]
  %v37 = vld [vmem:[%s1 + $0x54] sm:$0xf]
  %v38 = vld [vmem:[%s1 + $0x58] sm:$0xf]
  %v39 = vld [vmem:[%s1 + $0x5c] sm:$0xf]
  %v40 = vld [vmem:[%s1 + $0x60] sm:$0xf]
  %v41 = vld [vmem:[%s1 + $0x64] sm:$0xf]
  %v42 = vld [vmem:[%s1 + $0x68] sm:$0xf]
  %v43 = vld [vmem:[%s1 + $0x6c] sm:$0xf]
  %v44 = vld [vmem:[%s1 + $0x70] sm:$0xf]
  %v45 = vld [vmem:[%s1 + $0x74] sm:$0xf]
  %v46 = vld [vmem:[%s1 + $0x78] sm:$0xf]
  %v47 = vld [vmem:[%s1 + $0x7c] sm:$0xf]
  %v48 = vld [vmem:[%s2] sm:$0x1]
  %v50 = vperm.slane %v48, 0
  %v54 = vunpack.c.l.b16 %v14
  %v55 = vunpack.c.h.b16 %v14
  %v56 = vunpack.c.l.b16 %v15
  %v57 = vunpack.c.h.b16 %v15
  %v58 = vpack.c.b16 %v56, %v54
  %v59 = vpack.c.b16 %v57, %v55
  %v94 = vunpack.c.l.b16 %v16
  %v95 = vunpack.c.l.b16 %v17
  %v96 = vunpack.c.l.b16 %v18
  %v97 = vunpack.c.l.b16 %v19
  %v98 = vunpack.c.l.b16 %v20
  %v99 = vunpack.c.l.b16 %v21
  %v100 = vunpack.c.l.b16 %v22
  %v101 = vunpack.c.l.b16 %v23
  %v102 = vunpack.c.l.b16 %v24
  %v103 = vunpack.c.l.b16 %v25
  %v104 = vunpack.c.l.b16 %v26
  %v105 = vunpack.c.l.b16 %v27
  %v106 = vunpack.c.l.b16 %v28
  %v107 = vunpack.c.l.b16 %v29
  %v108 = vunpack.c.l.b16 %v30
  %v109 = vunpack.c.l.b16 %v31
  %v110 = vunpack.c.l.b16 %v32
  %v111 = vunpack.c.l.b16 %v33
  %v112 = vunpack.c.l.b16 %v34
  %v113 = vunpack.c.l.b16 %v35
  %v114 = vunpack.c.l.b16 %v36
  %v115 = vunpack.c.l.b16 %v37
  %v116 = vunpack.c.l.b16 %v38
  %v117 = vunpack.c.l.b16 %v39
  %v118 = vunpack.c.l.b16 %v40
  %v119 = vunpack.c.l.b16 %v41
  %v120 = vunpack.c.l.b16 %v42
  %v121 = vunpack.c.l.b16 %v43
  %v122 = vunpack.c.l.b16 %v44
  %v123 = vunpack.c.l.b16 %v45
  %v124 = vunpack.c.l.b16 %v46
  %v125 = vunpack.c.l.b16 %v47
  %v126 = vpack.c.b16 %v95, %v94
  %v127 = vpack.c.b16 %v97, %v96
  %v128 = vpack.c.b16 %v99, %v98
  %v129 = vpack.c.b16 %v101, %v100
  %v130 = vpack.c.b16 %v103, %v102
  %v131 = vpack.c.b16 %v105, %v104
  %v132 = vpack.c.b16 %v107, %v106
  %v133 = vpack.c.b16 %v109, %v108
  %v134 = vpack.c.b16 %v111, %v110
  %v135 = vpack.c.b16 %v113, %v112
  %v136 = vpack.c.b16 %v115, %v114
  %v137 = vpack.c.b16 %v117, %v116
  %v138 = vpack.c.b16 %v119, %v118
  %v139 = vpack.c.b16 %v121, %v120
  %v140 = vpack.c.b16 %v123, %v122
  %v141 = vpack.c.b16 %v125, %v124
  %158 = vmatpush.bf16.msra.mxu0 %v133
  %159 = vmatpush.bf16.msra.mxu0 %v132
  %160 = vmatpush.bf16.msra.mxu0 %v131
  %161 = vmatpush.bf16.msra.mxu0 %v130
  %162 = vmatpush.bf16.msra.mxu0 %v129
  %163 = vmatpush.bf16.msra.mxu0 %v128
  %164 = vmatpush.bf16.msra.mxu0 %v127
  %165 = vmatpush.bf16.msra.mxu0 %v126
  %166 = vmatmul.bf16.gmra.mxu0 %v58
  %v167 = vpop.f32.mrf.mxu0
  %v168 = vadd.f32 %v50, %v167
  %v169 = vpop.f32.mrf.mxu0
  %v170 = vadd.f32 %v50, %v169
  %171 = vdwg.mxu0
  %172 = vmatpush.bf16.msra.mxu0 %v141
  %173 = vmatpush.bf16.msra.mxu0 %v140
  %174 = vmatpush.bf16.msra.mxu0 %v139
  %175 = vmatpush.bf16.msra.mxu0 %v138
  %176 = vmatpush.bf16.msra.mxu0 %v137
  %177 = vmatpush.bf16.msra.mxu0 %v136
  %178 = vmatpush.bf16.msra.mxu0 %v135
  %179 = vmatpush.bf16.msra.mxu0 %v134
  %180 = vmatmul.bf16.gmra.mxu0 %v59
  %v181 = vpop.f32.mrf.mxu0
  %v182 = vadd.f32 %v168, %v181
  %v183 = vpop.f32.mrf.mxu0
  %v184 = vadd.f32 %v170, %v183
  %185 = vdwg.mxu0
  %vm186 = vcmask 523264
  %187 = vst.msk [vmem:[%s3] sm:$0xff] %vm186, %v182
  %188 = vst.msk [vmem:[%s3 + $0x8] sm:$0xff] %vm186, %v184
  // Predicated region
  $region14: #{unet2d_forward.36} parent=0 // pred_check
    _
  $region15: #{unet2d_forward.36} parent=0 // pred_check_branch
    %190 = sbr.rel (0) target = $region17
  $region16: #{unet2d_forward.36} parent=0 // pred_region
    _
  $region17: #{unet2d_forward.36} parent=0 // pred_fallthru
    _
  // Predicated region
  $region18: #{unet2d_forward.36} parent=0 // pred_check
    _
  $region19: #{unet2d_forward.36} parent=0 // pred_check_branch
    %192 = sbr.rel (0) target = $region21
  $region20: #{unet2d_forward.36} parent=0 // pred_region
    _
  $region21: #{unet2d_forward.36} parent=0 // pred_fallthru
    _

// kernel: unet2d_forward.38
$region0: #{unet2d_forward.38}
  #allocation0 [shape = 'u32[]', space=smem, size = 0x4, offset = 0x4, fixed_abs, tag = 'smem constant byte address 0x4 - core index']
  #allocation1 [shape = 'u32[72,128]{1,0:T(1,128)}', space=vmem, size = 0x9000, scoped, tag = 'internal scratch']
  %s0 = inlined_call_operand.vmem [shape: bf16[16,512], index: 0, kind: input, shape index: {}]
  %s1 = inlined_call_operand.vmem [shape: bf16[512,64], index: 1, kind: input, shape index: {}]
  %s2 = inlined_call_operand.vmem [shape: f32[1,64], index: 2, kind: input, shape index: {}]
  %s3 = inlined_call_operand.vmem [shape: f32[16,64], index: 3, kind: output, shape index: {}]
  %s4 = sld [smem:[#allocation0]]
  $region22: #{unet2d_forward.38} parent=0
    _
  %s6 = ssub.s32 1, %s4
  %s7 = scalar_select 0, %s6, %s4
  // Predicated region
  $region2: #{unet2d_forward.38} parent=0 // pred_check
    _
  $region3: #{unet2d_forward.38} parent=0 // pred_check_branch
    %9 = sbr.rel (0) target = $region5
  $region4: #{unet2d_forward.38} parent=0 // pred_region
    _
  $region5: #{unet2d_forward.38} parent=0 // pred_fallthru
    _
  // Predicated region
  $region6: #{unet2d_forward.38} parent=0 // pred_check
    _
  $region7: #{unet2d_forward.38} parent=0 // pred_check_branch
    %11 = sbr.rel (0) target = $region9
  $region8: #{unet2d_forward.38} parent=0 // pred_region
    _
  $region9: #{unet2d_forward.38} parent=0 // pred_fallthru
    _
  // Predicated region
  $region10: #{unet2d_forward.38} parent=0 // pred_check
    _
  $region11: #{unet2d_forward.38} parent=0 // pred_check_branch
    %13 = sbr.rel (0) target = $region13
  $region12: #{unet2d_forward.38} parent=0 // pred_region
    _
  $region13: #{unet2d_forward.38} parent=0 // pred_fallthru
    _
  %v14 = vld [vmem:[%s0] sm:$0xff]
  %v15 = vld [vmem:[%s0 + $0x8] sm:$0xff]
  %v16 = vld [vmem:[%s0 + $0x10] sm:$0xff]
  %v17 = vld [vmem:[%s0 + $0x18] sm:$0xff]
  %v18 = vld [vmem:[%s1] sm:$0xf]
  %v19 = vld [vmem:[%s1 + $0x4] sm:$0xf]
  %v20 = vld [vmem:[%s1 + $0x8] sm:$0xf]
  %v21 = vld [vmem:[%s1 + $0xc] sm:$0xf]
  %v22 = vld [vmem:[%s1 + $0x10] sm:$0xf]
  %v23 = vld [vmem:[%s1 + $0x14] sm:$0xf]
  %v24 = vld [vmem:[%s1 + $0x18] sm:$0xf]
  %v25 = vld [vmem:[%s1 + $0x1c] sm:$0xf]
  %v26 = vld [vmem:[%s1 + $0x20] sm:$0xf]
  %v27 = vld [vmem:[%s1 + $0x24] sm:$0xf]
  %v28 = vld [vmem:[%s1 + $0x28] sm:$0xf]
  %v29 = vld [vmem:[%s1 + $0x2c] sm:$0xf]
  %v30 = vld [vmem:[%s1 + $0x30] sm:$0xf]
  %v31 = vld [vmem:[%s1 + $0x34] sm:$0xf]
  %v32 = vld [vmem:[%s1 + $0x38] sm:$0xf]
  %v33 = vld [vmem:[%s1 + $0x3c] sm:$0xf]
  %v34 = vld [vmem:[%s1 + $0x40] sm:$0xf]
  %v35 = vld [vmem:[%s1 + $0x44] sm:$0xf]
  %v36 = vld [vmem:[%s1 + $0x48] sm:$0xf]
  %v37 = vld [vmem:[%s1 + $0x4c] sm:$0xf]
  %v38 = vld [vmem:[%s1 + $0x50] sm:$0xf]
  %v39 = vld [vmem:[%s1 + $0x54] sm:$0xf]
  %v40 = vld [vmem:[%s1 + $0x58] sm:$0xf]
  %v41 = vld [vmem:[%s1 + $0x5c] sm:$0xf]
  %v42 = vld [vmem:[%s1 + $0x60] sm:$0xf]
  %v43 = vld [vmem:[%s1 + $0x64] sm:$0xf]
  %v44 = vld [vmem:[%s1 + $0x68] sm:$0xf]
  %v45 = vld [vmem:[%s1 + $0x6c] sm:$0xf]
  %v46 = vld [vmem:[%s1 + $0x70] sm:$0xf]
  %v47 = vld [vmem:[%s1 + $0x74] sm:$0xf]
  %v48 = vld [vmem:[%s1 + $0x78] sm:$0xf]
  %v49 = vld [vmem:[%s1 + $0x7c] sm:$0xf]
  %v50 = vld [vmem:[%s1 + $0x80] sm:$0xf]
  %v51 = vld [vmem:[%s1 + $0x84] sm:$0xf]
  %v52 = vld [vmem:[%s1 + $0x88] sm:$0xf]
  %v53 = vld [vmem:[%s1 + $0x8c] sm:$0xf]
  %v54 = vld [vmem:[%s1 + $0x90] sm:$0xf]
  %v55 = vld [vmem:[%s1 + $0x94] sm:$0xf]
  %v56 = vld [vmem:[%s1 + $0x98] sm:$0xf]
  %v57 = vld [vmem:[%s1 + $0x9c] sm:$0xf]
  %v58 = vld [vmem:[%s1 + $0xa0] sm:$0xf]
  %v59 = vld [vmem:[%s1 + $0xa4] sm:$0xf]
  %v60 = vld [vmem:[%s1 + $0xa8] sm:$0xf]
  %v61 = vld [vmem:[%s1 + $0xac] sm:$0xf]
  %v62 = vld [vmem:[%s1 + $0xb0] sm:$0xf]
  %v63 = vld [vmem:[%s1 + $0xb4] sm:$0xf]
  %v64 = vld [vmem:[%s1 + $0xb8] sm:$0xf]
  %v65 = vld [vmem:[%s1 + $0xbc] sm:$0xf]
  %v66 = vld [vmem:[%s1 + $0xc0] sm:$0xf]
  %v67 = vld [vmem:[%s1 + $0xc4] sm:$0xf]
  %v68 = vld [vmem:[%s1 + $0xc8] sm:$0xf]
  %v69 = vld [vmem:[%s1 + $0xcc] sm:$0xf]
  %v70 = vld [vmem:[%s1 + $0xd0] sm:$0xf]
  %v71 = vld [vmem:[%s1 + $0xd4] sm:$0xf]
  %v72 = vld [vmem:[%s1 + $0xd8] sm:$0xf]
  %v73 = vld [vmem:[%s1 + $0xdc] sm:$0xf]
  %v74 = vld [vmem:[%s1 + $0xe0] sm:$0xf]
  %v75 = vld [vmem:[%s1 + $0xe4] sm:$0xf]
  %v76 = vld [vmem:[%s1 + $0xe8] sm:$0xf]
  %v77 = vld [vmem:[%s1 + $0xec] sm:$0xf]
  %v78 = vld [vmem:[%s1 + $0xf0] sm:$0xf]
  %v79 = vld [vmem:[%s1 + $0xf4] sm:$0xf]
  %v80 = vld [vmem:[%s1 + $0xf8] sm:$0xf]
  %v81 = vld [vmem:[%s1 + $0xfc] sm:$0xf]
  %v82 = vld [vmem:[%s2] sm:$0x1]
  %v84 = vperm.slane %v82, 0
  %v90 = vunpack.c.l.b16 %v14
  %v91 = vunpack.c.h.b16 %v14
  %v92 = vunpack.c.l.b16 %v15
  %v93 = vunpack.c.h.b16 %v15
  %v94 = vunpack.c.l.b16 %v16
  %v95 = vunpack.c.h.b16 %v16
  %v96 = vunpack.c.l.b16 %v17
  %v97 = vunpack.c.h.b16 %v17
  %v98 = vpack.c.b16 %v94, %v90
  %v99 = vpack.c.b16 %v95, %v91
  %v100 = vpack.c.b16 %v96, %v92
  %v101 = vpack.c.b16 %v97, %v93
  %v170 = vunpack.c.l.b16 %v18
  %v171 = vunpack.c.l.b16 %v19
  %v172 = vunpack.c.l.b16 %v20
  %v173 = vunpack.c.l.b16 %v21
  %v174 = vunpack.c.l.b16 %v22
  %v175 = vunpack.c.l.b16 %v23
  %v176 = vunpack.c.l.b16 %v24
  %v177 = vunpack.c.l.b16 %v25
  %v178 = vunpack.c.l.b16 %v26
  %v179 = vunpack.c.l.b16 %v27
  %v180 = vunpack.c.l.b16 %v28
  %v181 = vunpack.c.l.b16 %v29
  %v182 = vunpack.c.l.b16 %v30
  %v183 = vunpack.c.l.b16 %v31
  %v184 = vunpack.c.l.b16 %v32
  %v185 = vunpack.c.l.b16 %v33
  %v186 = vunpack.c.l.b16 %v34
  %v187 = vunpack.c.l.b16 %v35
  %v188 = vunpack.c.l.b16 %v36
  %v189 = vunpack.c.l.b16 %v37
  %v190 = vunpack.c.l.b16 %v38
  %v191 = vunpack.c.l.b16 %v39
  %v192 = vunpack.c.l.b16 %v40
  %v193 = vunpack.c.l.b16 %v41
  %v194 = vunpack.c.l.b16 %v42
  %v195 = vunpack.c.l.b16 %v43
  %v196 = vunpack.c.l.b16 %v44
  %v197 = vunpack.c.l.b16 %v45
  %v198 = vunpack.c.l.b16 %v46
  %v199 = vunpack.c.l.b16 %v47
  %v200 = vunpack.c.l.b16 %v48
  %v201 = vunpack.c.l.b16 %v49
  %v202 = vunpack.c.l.b16 %v50
  %v203 = vunpack.c.l.b16 %v51
  %v204 = vunpack.c.l.b16 %v52
  %v205 = vunpack.c.l.b16 %v53
  %v206 = vunpack.c.l.b16 %v54
  %v207 = vunpack.c.l.b16 %v55
  %v208 = vunpack.c.l.b16 %v56
  %v209 = vunpack.c.l.b16 %v57
  %v210 = vunpack.c.l.b16 %v58
  %v211 = vunpack.c.l.b16 %v59
  %v212 = vunpack.c.l.b16 %v60
  %v213 = vunpack.c.l.b16 %v61
  %v214 = vunpack.c.l.b16 %v62
  %v215 = vunpack.c.l.b16 %v63
  %v216 = vunpack.c.l.b16 %v64
  %v217 = vunpack.c.l.b16 %v65
  %v218 = vunpack.c.l.b16 %v66
  %v219 = vunpack.c.l.b16 %v67
  %v220 = vunpack.c.l.b16 %v68
  %v221 = vunpack.c.l.b16 %v69
  %v222 = vunpack.c.l.b16 %v70
  %v223 = vunpack.c.l.b16 %v71
  %v224 = vunpack.c.l.b16 %v72
  %v225 = vunpack.c.l.b16 %v73
  %v226 = vunpack.c.l.b16 %v74
  %v227 = vunpack.c.l.b16 %v75
  %v228 = vunpack.c.l.b16 %v76
  %v229 = vunpack.c.l.b16 %v77
  %v230 = vunpack.c.l.b16 %v78
  %v231 = vunpack.c.l.b16 %v79
  %v232 = vunpack.c.l.b16 %v80
  %v233 = vunpack.c.l.b16 %v81
  %v234 = vpack.c.b16 %v171, %v170
  %v235 = vpack.c.b16 %v173, %v172
  %v236 = vpack.c.b16 %v175, %v174
  %v237 = vpack.c.b16 %v177, %v176
  %v238 = vpack.c.b16 %v179, %v178
  %v239 = vpack.c.b16 %v181, %v180
  %v240 = vpack.c.b16 %v183, %v182
  %v241 = vpack.c.b16 %v185, %v184
  %v242 = vpack.c.b16 %v187, %v186
  %v243 = vpack.c.b16 %v189, %v188
  %v244 = vpack.c.b16 %v191, %v190
  %v245 = vpack.c.b16 %v193, %v192
  %v246 = vpack.c.b16 %v195, %v194
  %v247 = vpack.c.b16 %v197, %v196
  %v248 = vpack.c.b16 %v199, %v198
  %v249 = vpack.c.b16 %v201, %v200
  %v250 = vpack.c.b16 %v203, %v202
  %v251 = vpack.c.b16 %v205, %v204
  %v252 = vpack.c.b16 %v207, %v206
  %v253 = vpack.c.b16 %v209, %v208
  %v254 = vpack.c.b16 %v211, %v210
  %v255 = vpack.c.b16 %v213, %v212
  %v256 = vpack.c.b16 %v215, %v214
  %v257 = vpack.c.b16 %v217, %v216
  %v258 = vpack.c.b16 %v219, %v218
  %v259 = vpack.c.b16 %v221, %v220
  %v260 = vpack.c.b16 %v223, %v222
  %v261 = vpack.c.b16 %v225, %v224
  %v262 = vpack.c.b16 %v227, %v226
  %v263 = vpack.c.b16 %v229, %v228
  %v264 = vpack.c.b16 %v231, %v230
  %v265 = vpack.c.b16 %v233, %v232
  %298 = vmatpush.bf16.msra.mxu0 %v241
  %299 = vmatpush.bf16.msra.mxu0 %v240
  %300 = vmatpush.bf16.msra.mxu0 %v239
  %301 = vmatpush.bf16.msra.mxu0 %v238
  %302 = vmatpush.bf16.msra.mxu0 %v237
  %303 = vmatpush.bf16.msra.mxu0 %v236
  %304 = vmatpush.bf16.msra.mxu0 %v235
  %305 = vmatpush.bf16.msra.mxu0 %v234
  %306 = vmatmul.bf16.gmra.mxu0 %v98
  %v307 = vpop.f32.mrf.mxu0
  %v308 = vadd.f32 %v84, %v307
  %v309 = vpop.f32.mrf.mxu0
  %v310 = vadd.f32 %v84, %v309
  %311 = vdwg.mxu0
  %312 = vmatpush.bf16.msra.mxu0 %v249
  %313 = vmatpush.bf16.msra.mxu0 %v248
  %314 = vmatpush.bf16.msra.mxu0 %v247
  %315 = vmatpush.bf16.msra.mxu0 %v246
  %316 = vmatpush.bf16.msra.mxu0 %v245
  %317 = vmatpush.bf16.msra.mxu0 %v244
  %318 = vmatpush.bf16.msra.mxu0 %v243
  %319 = vmatpush.bf16.msra.mxu0 %v242
  %320 = vmatmul.bf16.gmra.mxu0 %v99
  %v321 = vpop.f32.mrf.mxu0
  %v322 = vadd.f32 %v308, %v321
  %v323 = vpop.f32.mrf.mxu0
  %v324 = vadd.f32 %v310, %v323
  %325 = vdwg.mxu0
  %326 = vmatpush.bf16.msra.mxu0 %v257
  %327 = vmatpush.bf16.msra.mxu0 %v256
  %328 = vmatpush.bf16.msra.mxu0 %v255
  %329 = vmatpush.bf16.msra.mxu0 %v254
  %330 = vmatpush.bf16.msra.mxu0 %v253
  %331 = vmatpush.bf16.msra.mxu0 %v252
  %332 = vmatpush.bf16.msra.mxu0 %v251
  %333 = vmatpush.bf16.msra.mxu0 %v250
  %334 = vmatmul.bf16.gmra.mxu0 %v100
  %v335 = vpop.f32.mrf.mxu0
  %v336 = vadd.f32 %v322, %v335
  %v337 = vpop.f32.mrf.mxu0
  %v338 = vadd.f32 %v324, %v337
  %339 = vdwg.mxu0
  %340 = vmatpush.bf16.msra.mxu0 %v265
  %341 = vmatpush.bf16.msra.mxu0 %v264
  %342 = vmatpush.bf16.msra.mxu0 %v263
  %343 = vmatpush.bf16.msra.mxu0 %v262
  %344 = vmatpush.bf16.msra.mxu0 %v261
  %345 = vmatpush.bf16.msra.mxu0 %v260
  %346 = vmatpush.bf16.msra.mxu0 %v259
  %347 = vmatpush.bf16.msra.mxu0 %v258
  %348 = vmatmul.bf16.gmra.mxu0 %v101
  %v349 = vpop.f32.mrf.mxu0
  %v350 = vadd.f32 %v336, %v349
  %v351 = vpop.f32.mrf.mxu0
  %v352 = vadd.f32 %v338, %v351
  %353 = vdwg.mxu0
  %vm354 = vcmask 523264
  %355 = vst.msk [vmem:[%s3] sm:$0xff] %vm354, %v350
  %356 = vst.msk [vmem:[%s3 + $0x8] sm:$0xff] %vm354, %v352
  // Predicated region
  $region14: #{unet2d_forward.38} parent=0 // pred_check
    _
  $region15: #{unet2d_forward.38} parent=0 // pred_check_branch
    %358 = sbr.rel (0) target = $region17
  $region16: #{unet2d_forward.38} parent=0 // pred_region
    _
  $region17: #{unet2d_forward.38} parent=0 // pred_fallthru
    _
  // Predicated region
  $region18: #{unet2d_forward.38} parent=0 // pred_check
    _
  $region19: #{unet2d_forward.38} parent=0 // pred_check_branch
    %360 = sbr.rel (0) target = $region21
  $region20: #{unet2d_forward.38} parent=0 // pred_region
    _
  $region21: #{unet2d_forward.38} parent=0 // pred_fallthru
    _

// kernel: unet2d_forward.35
$region0: #{unet2d_forward.35}
  #allocation0 [shape = 'u32[]', space=smem, size = 0x4, offset = 0x4, fixed_abs, tag = 'smem constant byte address 0x4 - core index']
  #allocation1 [shape = 'u32[72,128]{1,0:T(1,128)}', space=vmem, size = 0x9000, scoped, tag = 'internal scratch']
  %s0 = inlined_call_operand.vmem [shape: bf16[16,128], index: 0, kind: input, shape index: {}]
  %s1 = inlined_call_operand.vmem [shape: bf16[128,64], index: 1, kind: input, shape index: {}]
  %s2 = inlined_call_operand.vmem [shape: f32[1,64], index: 2, kind: input, shape index: {}]
  %s3 = inlined_call_operand.vmem [shape: f32[16,64], index: 3, kind: output, shape index: {}]
  %s4 = sld [smem:[#allocation0]]
  $region22: #{unet2d_forward.35} parent=0
    _
  %s6 = ssub.s32 1, %s4
  %s7 = scalar_select 0, %s6, %s4
  // Predicated region
  $region2: #{unet2d_forward.35} parent=0 // pred_check
    _
  $region3: #{unet2d_forward.35} parent=0 // pred_check_branch
    %9 = sbr.rel (0) target = $region5
  $region4: #{unet2d_forward.35} parent=0 // pred_region
    _
  $region5: #{unet2d_forward.35} parent=0 // pred_fallthru
    _
  // Predicated region
  $region6: #{unet2d_forward.35} parent=0 // pred_check
    _
  $region7: #{unet2d_forward.35} parent=0 // pred_check_branch
    %11 = sbr.rel (0) target = $region9
  $region8: #{unet2d_forward.35} parent=0 // pred_region
    _
  $region9: #{unet2d_forward.35} parent=0 // pred_fallthru
    _
  // Predicated region
  $region10: #{unet2d_forward.35} parent=0 // pred_check
    _
  $region11: #{unet2d_forward.35} parent=0 // pred_check_branch
    %13 = sbr.rel (0) target = $region13
  $region12: #{unet2d_forward.35} parent=0 // pred_region
    _
  $region13: #{unet2d_forward.35} parent=0 // pred_fallthru
    _
  %v14 = vld [vmem:[%s0] sm:$0xf]
  %v15 = vld [vmem:[%s0 + $0x4] sm:$0xf]
  %v16 = vld [vmem:[%s1] sm:$0xf]
  %v17 = vld [vmem:[%s1 + $0x4] sm:$0xf]
  %v18 = vld [vmem:[%s1 + $0x8] sm:$0xf]
  %v19 = vld [vmem:[%s1 + $0xc] sm:$0xf]
  %v20 = vld [vmem:[%s1 + $0x10] sm:$0xf]
  %v21 = vld [vmem:[%s1 + $0x14] sm:$0xf]
  %v22 = vld [vmem:[%s1 + $0x18] sm:$0xf]
  %v23 = vld [vmem:[%s1 + $0x1c] sm:$0xf]
  %v24 = vld [vmem:[%s1 + $0x20] sm:$0xf]
  %v25 = vld [vmem:[%s1 + $0x24] sm:$0xf]
  %v26 = vld [vmem:[%s1 + $0x28] sm:$0xf]
  %v27 = vld [vmem:[%s1 + $0x2c] sm:$0xf]
  %v28 = vld [vmem:[%s1 + $0x30] sm:$0xf]
  %v29 = vld [vmem:[%s1 + $0x34] sm:$0xf]
  %v30 = vld [vmem:[%s1 + $0x38] sm:$0xf]
  %v31 = vld [vmem:[%s1 + $0x3c] sm:$0xf]
  %v32 = vld [vmem:[%s2] sm:$0x1]
  %v34 = vperm.slane %v32, 0
  %v38 = vunpack.c.l.b16 %v14
  %v39 = vunpack.c.l.b16 %v15
  %v40 = vpack.c.b16 %v39, %v38
  %v58 = vunpack.c.l.b16 %v16
  %v59 = vunpack.c.l.b16 %v17
  %v60 = vunpack.c.l.b16 %v18
  %v61 = vunpack.c.l.b16 %v19
  %v62 = vunpack.c.l.b16 %v20
  %v63 = vunpack.c.l.b16 %v21
  %v64 = vunpack.c.l.b16 %v22
  %v65 = vunpack.c.l.b16 %v23
  %v66 = vunpack.c.l.b16 %v24
  %v67 = vunpack.c.l.b16 %v25
  %v68 = vunpack.c.l.b16 %v26
  %v69 = vunpack.c.l.b16 %v27
  %v70 = vunpack.c.l.b16 %v28
  %v71 = vunpack.c.l.b16 %v29
  %v72 = vunpack.c.l.b16 %v30
  %v73 = vunpack.c.l.b16 %v31
  %v74 = vpack.c.b16 %v59, %v58
  %v75 = vpack.c.b16 %v61, %v60
  %v76 = vpack.c.b16 %v63, %v62
  %v77 = vpack.c.b16 %v65, %v64
  %v78 = vpack.c.b16 %v67, %v66
  %v79 = vpack.c.b16 %v69, %v68
  %v80 = vpack.c.b16 %v71, %v70
  %v81 = vpack.c.b16 %v73, %v72
  %90 = vmatpush.bf16.msra.mxu0 %v81
  %91 = vmatpush.bf16.msra.mxu0 %v80
  %92 = vmatpush.bf16.msra.mxu0 %v79
  %93 = vmatpush.bf16.msra.mxu0 %v78
  %94 = vmatpush.bf16.msra.mxu0 %v77
  %95 = vmatpush.bf16.msra.mxu0 %v76
  %96 = vmatpush.bf16.msra.mxu0 %v75
  %97 = vmatpush.bf16.msra.mxu0 %v74
  %98 = vmatmul.bf16.gmra.mxu0 %v40
  %v99 = vpop.f32.mrf.mxu0
  %v100 = vadd.f32 %v34, %v99
  %v101 = vpop.f32.mrf.mxu0
  %v102 = vadd.f32 %v34, %v101
  %103 = vdwg.mxu0
  %vm104 = vcmask 523264
  %105 = vst.msk [vmem:[%s3] sm:$0xff] %vm104, %v100
  %106 = vst.msk [vmem:[%s3 + $0x8] sm:$0xff] %vm104, %v102
  // Predicated region
  $region14: #{unet2d_forward.35} parent=0 // pred_check
    _
  $region15: #{unet2d_forward.35} parent=0 // pred_check_branch
    %108 = sbr.rel (0) target = $region17
  $region16: #{unet2d_forward.35} parent=0 // pred_region
    _
  $region17: #{unet2d_forward.35} parent=0 // pred_fallthru
    _
  // Predicated region
  $region18: #{unet2d_forward.35} parent=0 // pred_check
    _
  $region19: #{unet2d_forward.35} parent=0 // pred_check_branch
    %110 = sbr.rel (0) target = $region21
  $region20: #{unet2d_forward.35} parent=0 // pred_region
    _
  $region21: #{unet2d_forward.35} parent=0 // pred_fallthru
    _

// kernel: unet2d_forward.42
$region0: #{unet2d_forward.42}
  #allocation0 [shape = 'u32[]', space=smem, size = 0x4, offset = 0x4, fixed_abs, tag = 'smem constant byte address 0x4 - core index']
  #allocation1 [shape = 'u32[72,128]{1,0:T(1,128)}', space=vmem, size = 0x9000, scoped, tag = 'internal scratch']
  %s0 = inlined_call_operand.vmem [shape: bf16[32,128], index: 0, kind: input, shape index: {}]
  %s1 = inlined_call_operand.vmem [shape: bf16[128,32], index: 1, kind: input, shape index: {}]
  %s2 = inlined_call_operand.vmem [shape: f32[1,32], index: 2, kind: input, shape index: {}]
  %s3 = inlined_call_operand.vmem [shape: f32[32,32], index: 3, kind: output, shape index: {}]
  %s4 = sld [smem:[#allocation0]]
  $region22: #{unet2d_forward.42} parent=0
    _
  %s6 = ssub.s32 1, %s4
  %s7 = scalar_select 0, %s6, %s4
  // Predicated region
  $region2: #{unet2d_forward.42} parent=0 // pred_check
    _
  $region3: #{unet2d_forward.42} parent=0 // pred_check_branch
    %9 = sbr.rel (0) target = $region5
  $region4: #{unet2d_forward.42} parent=0 // pred_region
    _
  $region5: #{unet2d_forward.42} parent=0 // pred_fallthru
    _
  // Predicated region
  $region6: #{unet2d_forward.42} parent=0 // pred_check
    _
  $region7: #{unet2d_forward.42} parent=0 // pred_check_branch
    %11 = sbr.rel (0) target = $region9
  $region8: #{unet2d_forward.42} parent=0 // pred_region
    _
  $region9: #{unet2d_forward.42} parent=0 // pred_fallthru
    _
  // Predicated region
  $region10: #{unet2d_forward.42} parent=0 // pred_check
    _
  $region11: #{unet2d_forward.42} parent=0 // pred_check_branch
    %13 = sbr.rel (0) target = $region13
  $region12: #{unet2d_forward.42} parent=0 // pred_region
    _
  $region13: #{unet2d_forward.42} parent=0 // pred_fallthru
    _
  %v14 = vld [vmem:[%s0] sm:$0xf]
  %v15 = vld [vmem:[%s0 + $0x4] sm:$0xf]
  %v16 = vld [vmem:[%s0 + $0x8] sm:$0xf]
  %v17 = vld [vmem:[%s0 + $0xc] sm:$0xf]
  %v18 = vld [vmem:[%s1] sm:$0xf]
  %v19 = vld [vmem:[%s1 + $0x4] sm:$0xf]
  %v20 = vld [vmem:[%s1 + $0x8] sm:$0xf]
  %v21 = vld [vmem:[%s1 + $0xc] sm:$0xf]
  %v22 = vld [vmem:[%s1 + $0x10] sm:$0xf]
  %v23 = vld [vmem:[%s1 + $0x14] sm:$0xf]
  %v24 = vld [vmem:[%s1 + $0x18] sm:$0xf]
  %v25 = vld [vmem:[%s1 + $0x1c] sm:$0xf]
  %v26 = vld [vmem:[%s1 + $0x20] sm:$0xf]
  %v27 = vld [vmem:[%s1 + $0x24] sm:$0xf]
  %v28 = vld [vmem:[%s1 + $0x28] sm:$0xf]
  %v29 = vld [vmem:[%s1 + $0x2c] sm:$0xf]
  %v30 = vld [vmem:[%s1 + $0x30] sm:$0xf]
  %v31 = vld [vmem:[%s1 + $0x34] sm:$0xf]
  %v32 = vld [vmem:[%s1 + $0x38] sm:$0xf]
  %v33 = vld [vmem:[%s1 + $0x3c] sm:$0xf]
  %v34 = vld [vmem:[%s2] sm:$0x1]
  %v36 = vperm.slane %v34, 0
  %v42 = vunpack.c.l.b16 %v14
  %v43 = vunpack.c.l.b16 %v15
  %v44 = vunpack.c.l.b16 %v16
  %v45 = vunpack.c.l.b16 %v17
  %v46 = vpack.c.b16 %v43, %v42
  %v47 = vpack.c.b16 %v45, %v44
  %v66 = vunpack.c.l.b16 %v18
  %v67 = vunpack.c.l.b16 %v19
  %v68 = vunpack.c.l.b16 %v20
  %v69 = vunpack.c.l.b16 %v21
  %v70 = vunpack.c.l.b16 %v22
  %v71 = vunpack.c.l.b16 %v23
  %v72 = vunpack.c.l.b16 %v24
  %v73 = vunpack.c.l.b16 %v25
  %v74 = vunpack.c.l.b16 %v26
  %v75 = vunpack.c.l.b16 %v27
  %v76 = vunpack.c.l.b16 %v28
  %v77 = vunpack.c.l.b16 %v29
  %v78 = vunpack.c.l.b16 %v30
  %v79 = vunpack.c.l.b16 %v31
  %v80 = vunpack.c.l.b16 %v32
  %v81 = vunpack.c.l.b16 %v33
  %v82 = vpack.c.b16 %v67, %v66
  %v83 = vpack.c.b16 %v69, %v68
  %v84 = vpack.c.b16 %v71, %v70
  %v85 = vpack.c.b16 %v73, %v72
  %v86 = vpack.c.b16 %v75, %v74
  %v87 = vpack.c.b16 %v77, %v76
  %v88 = vpack.c.b16 %v79, %v78
  %v89 = vpack.c.b16 %v81, %v80
  %98 = vmatpush.bf16.msra.mxu0 %v89
  %99 = vmatpush.bf16.msra.mxu0 %v88
  %100 = vmatpush.bf16.msra.mxu0 %v87
  %101 = vmatpush.bf16.msra.mxu0 %v86
  %102 = vmatpush.bf16.msra.mxu0 %v85
  %103 = vmatpush.bf16.msra.mxu0 %v84
  %104 = vmatpush.bf16.msra.mxu0 %v83
  %105 = vmatpush.bf16.msra.mxu0 %v82
  %106 = vmatmul.bf16.gmra.mxu0 %v46
  %v107 = vpop.f32.mrf.mxu0
  %v108 = vadd.f32 %v36, %v107
  %v109 = vpop.f32.mrf.mxu0
  %v110 = vadd.f32 %v36, %v109
  %111 = vmatmul.bf16.gmra.mxu0 %v47
  %v112 = vpop.f32.mrf.mxu0
  %v113 = vadd.f32 %v36, %v112
  %v114 = vpop.f32.mrf.mxu0
  %v115 = vadd.f32 %v36, %v114
  %116 = vdwg.mxu0
  %vm117 = vcmask 261120
  %118 = vst.msk [vmem:[%s3] sm:$0xff] %vm117, %v108
  %119 = vst.msk [vmem:[%s3 + $0x8] sm:$0xff] %vm117, %v110
  %120 = vst.msk [vmem:[%s3 + $0x10] sm:$0xff] %vm117, %v113
  %121 = vst.msk [vmem:[%s3 + $0x18] sm:$0xff] %vm117, %v115
  // Predicated region
  $region14: #{unet2d_forward.42} parent=0 // pred_check
    _
  $region15: #{unet2d_forward.42} parent=0 // pred_check_branch
    %123 = sbr.rel (0) target = $region17
  $region16: #{unet2d_forward.42} parent=0 // pred_region
    _
  $region17: #{unet2d_forward.42} parent=0 // pred_fallthru
    _
  // Predicated region
  $region18: #{unet2d_forward.42} parent=0 // pred_check
    _
  $region19: #{unet2d_forward.42} parent=0 // pred_check_branch
    %125 = sbr.rel (0) target = $region21
  $region20: #{unet2d_forward.42} parent=0 // pred_region
    _
  $region21: #{unet2d_forward.42} parent=0 // pred_fallthru
    _

// kernel: unet2d_forward.41
$region0: #{unet2d_forward.41}
  #allocation0 [shape = 'u32[]', space=smem, size = 0x4, offset = 0x4, fixed_abs, tag = 'smem constant byte address 0x4 - core index']
  #allocation1 [shape = 'u32[72,128]{1,0:T(1,128)}', space=vmem, size = 0x9000, scoped, tag = 'internal scratch']
  %s0 = inlined_call_operand.vmem [shape: bf16[32,64], index: 0, kind: input, shape index: {}]
  %s1 = inlined_call_operand.vmem [shape: bf16[64,32], index: 1, kind: input, shape index: {}]
  %s2 = inlined_call_operand.vmem [shape: f32[1,32], index: 2, kind: input, shape index: {}]
  %s3 = inlined_call_operand.vmem [shape: f32[32,32], index: 3, kind: output, shape index: {}]
  %s4 = sld [smem:[#allocation0]]
  $region22: #{unet2d_forward.41} parent=0
    _
  %s6 = ssub.s32 1, %s4
  %s7 = scalar_select 0, %s6, %s4
  // Predicated region
  $region2: #{unet2d_forward.41} parent=0 // pred_check
    _
  $region3: #{unet2d_forward.41} parent=0 // pred_check_branch
    %9 = sbr.rel (0) target = $region5
  $region4: #{unet2d_forward.41} parent=0 // pred_region
    _
  $region5: #{unet2d_forward.41} parent=0 // pred_fallthru
    _
  // Predicated region
  $region6: #{unet2d_forward.41} parent=0 // pred_check
    _
  $region7: #{unet2d_forward.41} parent=0 // pred_check_branch
    %11 = sbr.rel (0) target = $region9
  $region8: #{unet2d_forward.41} parent=0 // pred_region
    _
  $region9: #{unet2d_forward.41} parent=0 // pred_fallthru
    _
  // Predicated region
  $region10: #{unet2d_forward.41} parent=0 // pred_check
    _
  $region11: #{unet2d_forward.41} parent=0 // pred_check_branch
    %13 = sbr.rel (0) target = $region13
  $region12: #{unet2d_forward.41} parent=0 // pred_region
    _
  $region13: #{unet2d_forward.41} parent=0 // pred_fallthru
    _
  %v15 = vld [vmem:[%s0] sm:$0xf]
  %v16 = vld [vmem:[%s0 + $0x4] sm:$0xf]
  %v17 = vld [vmem:[%s0 + $0x8] sm:$0xf]
  %v18 = vld [vmem:[%s0 + $0xc] sm:$0xf]
  %v19 = vld [vmem:[%s1] sm:$0xf]
  %v20 = vld [vmem:[%s1 + $0x4] sm:$0xf]
  %v21 = vld [vmem:[%s1 + $0x8] sm:$0xf]
  %v22 = vld [vmem:[%s1 + $0xc] sm:$0xf]
  %v23 = vld [vmem:[%s1 + $0x10] sm:$0xf]
  %v24 = vld [vmem:[%s1 + $0x14] sm:$0xf]
  %v25 = vld [vmem:[%s1 + $0x18] sm:$0xf]
  %v26 = vld [vmem:[%s1 + $0x1c] sm:$0xf]
  %v27 = vld [vmem:[%s2] sm:$0x1]
  %v29 = vperm.slane %v27, 0
  %v35 = vunpack.c.l.b16 %v15
  %v36 = vunpack.c.l.b16 %v16
  %v37 = vunpack.c.l.b16 %v17
  %v38 = vunpack.c.l.b16 %v18
  %v39 = vpack.c.b16 %v36, %v35
  %v40 = vpack.c.b16 %v38, %v37
  %v49 = vunpack.c.l.b16 %v19
  %v50 = vunpack.c.l.b16 %v20
  %v51 = vunpack.c.l.b16 %v21
  %v52 = vunpack.c.l.b16 %v22
  %v53 = vunpack.c.l.b16 %v23
  %v54 = vunpack.c.l.b16 %v24
  %v55 = vunpack.c.l.b16 %v25
  %v56 = vunpack.c.l.b16 %v26
  %v57 = vpack.c.b16 %v50, %v49
  %v58 = vpack.c.b16 %v52, %v51
  %v59 = vpack.c.b16 %v54, %v53
  %v60 = vpack.c.b16 %v56, %v55
  %vm65 = vcmask 523264
  %v67 = vsel %vm65, %v39, 0
  %v70 = vsel %vm65, %v40, 0
  %72 = vmatpush.bf16.msra.mxu0 0
  %73 = vmatpush.bf16.msra.mxu0 0
  %74 = vmatpush.bf16.msra.mxu0 0
  %75 = vmatpush.bf16.msra.mxu0 0
  %76 = vmatpush.bf16.msra.mxu0 %v60
  %77 = vmatpush.bf16.msra.mxu0 %v59
  %78 = vmatpush.bf16.msra.mxu0 %v58
  %79 = vmatpush.bf16.msra.mxu0 %v57
  %80 = vmatmul.bf16.gmra.mxu0 %v67
  %v81 = vpop.f32.mrf.mxu0
  %v82 = vadd.f32 %v29, %v81
  %v83 = vpop.f32.mrf.mxu0
  %v84 = vadd.f32 %v29, %v83
  %85 = vmatmul.bf16.gmra.mxu0 %v70
  %v86 = vpop.f32.mrf.mxu0
  %v87 = vadd.f32 %v29, %v86
  %v88 = vpop.f32.mrf.mxu0
  %v89 = vadd.f32 %v29, %v88
  %90 = vdwg.mxu0
  %vm91 = vcmask 261120
  %92 = vst.msk [vmem:[%s3] sm:$0xff] %vm91, %v82
  %93 = vst.msk [vmem:[%s3 + $0x8] sm:$0xff] %vm91, %v84
  %94 = vst.msk [vmem:[%s3 + $0x10] sm:$0xff] %vm91, %v87
  %95 = vst.msk [vmem:[%s3 + $0x18] sm:$0xff] %vm91, %v89
  // Predicated region
  $region14: #{unet2d_forward.41} parent=0 // pred_check
    _
  $region15: #{unet2d_forward.41} parent=0 // pred_check_branch
    %97 = sbr.rel (0) target = $region17
  $region16: #{unet2d_forward.41} parent=0 // pred_region
    _
  $region17: #{unet2d_forward.41} parent=0 // pred_fallthru
    _
  // Predicated region
  $region18: #{unet2d_forward.41} parent=0 // pred_check
    _
  $region19: #{unet2d_forward.41} parent=0 // pred_check_branch
    %99 = sbr.rel (0) target = $region21
  $region20: #{unet2d_forward.41} parent=0 // pred_region
    _
  $region21: #{unet2d_forward.41} parent=0 // pred_fallthru
    _

// kernel: unet2d_forward.39
$region0: #{unet2d_forward.39}
  #allocation0 [shape = 'u32[]', space=smem, size = 0x4, offset = 0x4, fixed_abs, tag = 'smem constant byte address 0x4 - core index']
  #allocation1 [shape = 'u32[72,128]{1,0:T(1,128)}', space=vmem, size = 0x9000, scoped, tag = 'internal scratch']
  %s0 = inlined_call_operand.vmem [shape: bf16[32,576], index: 0, kind: input, shape index: {}]
  %s1 = inlined_call_operand.vmem [shape: bf16[32,576], index: 1, kind: input, shape index: {}]
  %s2 = inlined_call_operand.vmem [shape: bf16[576,64], index: 2, kind: input, shape index: {}]
  %s3 = inlined_call_operand.vmem [shape: bf16[576,64], index: 3, kind: input, shape index: {}]
  %s4 = inlined_call_operand.vmem [shape: f32[1,64], index: 4, kind: input, shape index: {}]
  %s5 = inlined_call_operand.vmem [shape: f32[32,64], index: 5, kind: output, shape index: {}]
  %s6 = sld [smem:[#allocation0]]
  $region30: #{unet2d_forward.39} parent=0
    _
  %s8 = ssub.s32 1, %s6
  %s9 = scalar_select 0, %s8, %s6
  // Predicated region
  $region2: #{unet2d_forward.39} parent=0 // pred_check
    _
  $region3: #{unet2d_forward.39} parent=0 // pred_check_branch
    %11 = sbr.rel (0) target = $region5
  $region4: #{unet2d_forward.39} parent=0 // pred_region
    _
  $region5: #{unet2d_forward.39} parent=0 // pred_fallthru
    _
  // Predicated region
  $region6: #{unet2d_forward.39} parent=0 // pred_check
    _
  $region7: #{unet2d_forward.39} parent=0 // pred_check_branch
    %13 = sbr.rel (0) target = $region9
  $region8: #{unet2d_forward.39} parent=0 // pred_region
    _
  $region9: #{unet2d_forward.39} parent=0 // pred_fallthru
    _
  // Predicated region
  $region10: #{unet2d_forward.39} parent=0 // pred_check
    _
  $region11: #{unet2d_forward.39} parent=0 // pred_check_branch
    %15 = sbr.rel (0) target = $region13
  $region12: #{unet2d_forward.39} parent=0 // pred_region
    _
  $region13: #{unet2d_forward.39} parent=0 // pred_fallthru
    _
  // Predicated region
  $region14: #{unet2d_forward.39} parent=0 // pred_check
    _
  $region15: #{unet2d_forward.39} parent=0 // pred_check_branch
    %17 = sbr.rel (0) target = $region17
  $region16: #{unet2d_forward.39} parent=0 // pred_region
    _
  $region17: #{unet2d_forward.39} parent=0 // pred_fallthru
    _
  // Predicated region
  $region18: #{unet2d_forward.39} parent=0 // pred_check
    _
  $region19: #{unet2d_forward.39} parent=0 // pred_check_branch
    %19 = sbr.rel (0) target = $region21
  $region20: #{unet2d_forward.39} parent=0 // pred_region
    _
  $region21: #{unet2d_forward.39} parent=0 // pred_fallthru
    _
  %v21 = vld [vmem:[%s0] sm:$0xff]
  %v22 = vld [vmem:[%s0 + $0x8] sm:$0xff]
  %v23 = vld [vmem:[%s0 + $0x10] sm:$0xf]
  %v24 = vld [vmem:[%s0 + $0x14] sm:$0xff]
  %v25 = vld [vmem:[%s0 + $0x1c] sm:$0xff]
  %v26 = vld [vmem:[%s0 + $0x24] sm:$0xf]
  %v27 = vld [vmem:[%s0 + $0x28] sm:$0xff]
  %v28 = vld [vmem:[%s0 + $0x30] sm:$0xff]
  %v29 = vld [vmem:[%s0 + $0x38] sm:$0xf]
  %v30 = vld [vmem:[%s0 + $0x3c] sm:$0xff]
  %v31 = vld [vmem:[%s0 + $0x44] sm:$0xff]
  %v32 = vld [vmem:[%s0 + $0x4c] sm:$0xf]
  %v33 = vld [vmem:[%s2] sm:$0xf]
  %v34 = vld [vmem:[%s2 + $0x4] sm:$0xf]
  %v35 = vld [vmem:[%s2 + $0x8] sm:$0xf]
  %v36 = vld [vmem:[%s2 + $0xc] sm:$0xf]
  %v37 = vld [vmem:[%s2 + $0x10] sm:$0xf]
  %v38 = vld [vmem:[%s2 + $0x14] sm:$0xf]
  %v39 = vld [vmem:[%s2 + $0x18] sm:$0xf]
  %v40 = vld [vmem:[%s2 + $0x1c] sm:$0xf]
  %v41 = vld [vmem:[%s2 + $0x20] sm:$0xf]
  %v42 = vld [vmem:[%s2 + $0x24] sm:$0xf]
  %v43 = vld [vmem:[%s2 + $0x28] sm:$0xf]
  %v44 = vld [vmem:[%s2 + $0x2c] sm:$0xf]
  %v45 = vld [vmem:[%s2 + $0x30] sm:$0xf]
  %v46 = vld [vmem:[%s2 + $0x34] sm:$0xf]
  %v47 = vld [vmem:[%s2 + $0x38] sm:$0xf]
  %v48 = vld [vmem:[%s2 + $0x3c] sm:$0xf]
  %v49 = vld [vmem:[%s2 + $0x40] sm:$0xf]
  %v50 = vld [vmem:[%s2 + $0x44] sm:$0xf]
  %v51 = vld [vmem:[%s2 + $0x48] sm:$0xf]
  %v52 = vld [vmem:[%s2 + $0x4c] sm:$0xf]
  %v53 = vld [vmem:[%s2 + $0x50] sm:$0xf]
  %v54 = vld [vmem:[%s2 + $0x54] sm:$0xf]
  %v55 = vld [vmem:[%s2 + $0x58] sm:$0xf]
  %v56 = vld [vmem:[%s2 + $0x5c] sm:$0xf]
  %v57 = vld [vmem:[%s2 + $0x60] sm:$0xf]
  %v58 = vld [vmem:[%s2 + $0x64] sm:$0xf]
  %v59 = vld [vmem:[%s2 + $0x68] sm:$0xf]
  %v60 = vld [vmem:[%s2 + $0x6c] sm:$0xf]
  %v61 = vld [vmem:[%s2 + $0x70] sm:$0xf]
  %v62 = vld [vmem:[%s2 + $0x74] sm:$0xf]
  %v63 = vld [vmem:[%s2 + $0x78] sm:$0xf]
  %v64 = vld [vmem:[%s2 + $0x7c] sm:$0xf]
  %v65 = vld [vmem:[%s2 + $0x80] sm:$0xf]
  %v66 = vld [vmem:[%s2 + $0x84] sm:$0xf]
  %v67 = vld [vmem:[%s2 + $0x88] sm:$0xf]
  %v68 = vld [vmem:[%s2 + $0x8c] sm:$0xf]
  %v69 = vld [vmem:[%s2 + $0x90] sm:$0xf]
  %v70 = vld [vmem:[%s2 + $0x94] sm:$0xf]
  %v71 = vld [vmem:[%s2 + $0x98] sm:$0xf]
  %v72 = vld [vmem:[%s2 + $0x9c] sm:$0xf]
  %v73 = vld [vmem:[%s2 + $0xa0] sm:$0xf]
  %v74 = vld [vmem:[%s2 + $0xa4] sm:$0xf]
  %v75 = vld [vmem:[%s2 + $0xa8] sm:$0xf]
  %v76 = vld [vmem:[%s2 + $0xac] sm:$0xf]
  %v77 = vld [vmem:[%s2 + $0xb0] sm:$0xf]
  %v78 = vld [vmem:[%s2 + $0xb4] sm:$0xf]
  %v79 = vld [vmem:[%s2 + $0xb8] sm:$0xf]
  %v80 = vld [vmem:[%s2 + $0xbc] sm:$0xf]
  %v81 = vld [vmem:[%s2 + $0xc0] sm:$0xf]
  %v82 = vld [vmem:[%s2 + $0xc4] sm:$0xf]
  %v83 = vld [vmem:[%s2 + $0xc8] sm:$0xf]
  %v84 = vld [vmem:[%s2 + $0xcc] sm:$0xf]
  %v85 = vld [vmem:[%s2 + $0xd0] sm:$0xf]
  %v86 = vld [vmem:[%s2 + $0xd4] sm:$0xf]
  %v87 = vld [vmem:[%s2 + $0xd8] sm:$0xf]
  %v88 = vld [vmem:[%s2 + $0xdc] sm:$0xf]
  %v89 = vld [vmem:[%s2 + $0xe0] sm:$0xf]
  %v90 = vld [vmem:[%s2 + $0xe4] sm:$0xf]
  %v91 = vld [vmem:[%s2 + $0xe8] sm:$0xf]
  %v92 = vld [vmem:[%s2 + $0xec] sm:$0xf]
  %v93 = vld [vmem:[%s2 + $0xf0] sm:$0xf]
  %v94 = vld [vmem:[%s2 + $0xf4] sm:$0xf]
  %v95 = vld [vmem:[%s2 + $0xf8] sm:$0xf]
  %v96 = vld [vmem:[%s2 + $0xfc] sm:$0xf]
  %v97 = vld [vmem:[%s2 + $0x100] sm:$0xf]
  %v98 = vld [vmem:[%s2 + $0x104] sm:$0xf]
  %v99 = vld [vmem:[%s2 + $0x108] sm:$0xf]
  %v100 = vld [vmem:[%s2 + $0x10c] sm:$0xf]
  %v101 = vld [vmem:[%s2 + $0x110] sm:$0xf]
  %v102 = vld [vmem:[%s2 + $0x114] sm:$0xf]
  %v103 = vld [vmem:[%s2 + $0x118] sm:$0xf]
  %v104 = vld [vmem:[%s2 + $0x11c] sm:$0xf]
  %v105 = vld [vmem:[%s1] sm:$0xff]
  %v106 = vld [vmem:[%s1 + $0x8] sm:$0xff]
  %v107 = vld [vmem:[%s1 + $0x10] sm:$0xf]
  %v108 = vld [vmem:[%s1 + $0x14] sm:$0xff]
  %v109 = vld [vmem:[%s1 + $0x1c] sm:$0xff]
  %v110 = vld [vmem:[%s1 + $0x24] sm:$0xf]
  %v111 = vld [vmem:[%s1 + $0x28] sm:$0xff]
  %v112 = vld [vmem:[%s1 + $0x30] sm:$0xff]
  %v113 = vld [vmem:[%s1 + $0x38] sm:$0xf]
  %v114 = vld [vmem:[%s1 + $0x3c] sm:$0xff]
  %v115 = vld [vmem:[%s1 + $0x44] sm:$0xff]
  %v116 = vld [vmem:[%s1 + $0x4c] sm:$0xf]
  %v117 = vld [vmem:[%s3] sm:$0xf]
  %v118 = vld [vmem:[%s3 + $0x4] sm:$0xf]
  %v119 = vld [vmem:[%s3 + $0x8] sm:$0xf]
  %v120 = vld [vmem:[%s3 + $0xc] sm:$0xf]
  %v121 = vld [vmem:[%s3 + $0x10] sm:$0xf]
  %v122 = vld [vmem:[%s3 + $0x14] sm:$0xf]
  %v123 = vld [vmem:[%s3 + $0x18] sm:$0xf]
  %v124 = vld [vmem:[%s3 + $0x1c] sm:$0xf]
  %v125 = vld [vmem:[%s3 + $0x20] sm:$0xf]
  %v126 = vld [vmem:[%s3 + $0x24] sm:$0xf]
  %v127 = vld [vmem:[%s3 + $0x28] sm:$0xf]
  %v128 = vld [vmem:[%s3 + $0x2c] sm:$0xf]
  %v129 = vld [vmem:[%s3 + $0x30] sm:$0xf]
  %v130 = vld [vmem:[%s3 + $0x34] sm:$0xf]
  %v131 = vld [vmem:[%s3 + $0x38] sm:$0xf]
  %v132 = vld [vmem:[%s3 + $0x3c] sm:$0xf]
  %v133 = vld [vmem:[%s3 + $0x40] sm:$0xf]
  %v134 = vld [vmem:[%s3 + $0x44] sm:$0xf]
  %v135 = vld [vmem:[%s3 + $0x48] sm:$0xf]
  %v136 = vld [vmem:[%s3 + $0x4c] sm:$0xf]
  %v137 = vld [vmem:[%s3 + $0x50] sm:$0xf]
  %v138 = vld [vmem:[%s3 + $0x54] sm:$0xf]
  %v139 = vld [vmem:[%s3 + $0x58] sm:$0xf]
  %v140 = vld [vmem:[%s3 + $0x5c] sm:$0xf]
  %v141 = vld [vmem:[%s3 + $0x60] sm:$0xf]
  %v142 = vld [vmem:[%s3 + $0x64] sm:$0xf]
  %v143 = vld [vmem:[%s3 + $0x68] sm:$0xf]
  %v144 = vld [vmem:[%s3 + $0x6c] sm:$0xf]
  %v145 = vld [vmem:[%s3 + $0x70] sm:$0xf]
  %v146 = vld [vmem:[%s3 + $0x74] sm:$0xf]
  %v147 = vld [vmem:[%s3 + $0x78] sm:$0xf]
  %v148 = vld [vmem:[%s3 + $0x7c] sm:$0xf]
  %v149 = vld [vmem:[%s3 + $0x80] sm:$0xf]
  %v150 = vld [vmem:[%s3 + $0x84] sm:$0xf]
  %v151 = vld [vmem:[%s3 + $0x88] sm:$0xf]
  %v152 = vld [vmem:[%s3 + $0x8c] sm:$0xf]
  %v153 = vld [vmem:[%s3 + $0x90] sm:$0xf]
  %v154 = vld [vmem:[%s3 + $0x94] sm:$0xf]
  %v155 = vld [vmem:[%s3 + $0x98] sm:$0xf]
  %v156 = vld [vmem:[%s3 + $0x9c] sm:$0xf]
  %v157 = vld [vmem:[%s3 + $0xa0] sm:$0xf]
  %v158 = vld [vmem:[%s3 + $0xa4] sm:$0xf]
  %v159 = vld [vmem:[%s3 + $0xa8] sm:$0xf]
  %v160 = vld [vmem:[%s3 + $0xac] sm:$0xf]
  %v161 = vld [vmem:[%s3 + $0xb0] sm:$0xf]
  %v162 = vld [vmem:[%s3 + $0xb4] sm:$0xf]
  %v163 = vld [vmem:[%s3 + $0xb8] sm:$0xf]
  %v164 = vld [vmem:[%s3 + $0xbc] sm:$0xf]
  %v165 = vld [vmem:[%s3 + $0xc0] sm:$0xf]
  %v166 = vld [vmem:[%s3 + $0xc4] sm:$0xf]
  %v167 = vld [vmem:[%s3 + $0xc8] sm:$0xf]
  %v168 = vld [vmem:[%s3 + $0xcc] sm:$0xf]
  %v169 = vld [vmem:[%s3 + $0xd0] sm:$0xf]
  %v170 = vld [vmem:[%s3 + $0xd4] sm:$0xf]
  %v171 = vld [vmem:[%s3 + $0xd8] sm:$0xf]
  %v172 = vld [vmem:[%s3 + $0xdc] sm:$0xf]
  %v173 = vld [vmem:[%s3 + $0xe0] sm:$0xf]
  %v174 = vld [vmem:[%s3 + $0xe4] sm:$0xf]
  %v175 = vld [vmem:[%s3 + $0xe8] sm:$0xf]
  %v176 = vld [vmem:[%s3 + $0xec] sm:$0xf]
  %v177 = vld [vmem:[%s3 + $0xf0] sm:$0xf]
  %v178 = vld [vmem:[%s3 + $0xf4] sm:$0xf]
  %v179 = vld [vmem:[%s3 + $0xf8] sm:$0xf]
  %v180 = vld [vmem:[%s3 + $0xfc] sm:$0xf]
  %v181 = vld [vmem:[%s3 + $0x100] sm:$0xf]
  %v182 = vld [vmem:[%s3 + $0x104] sm:$0xf]
  %v183 = vld [vmem:[%s3 + $0x108] sm:$0xf]
  %v184 = vld [vmem:[%s3 + $0x10c] sm:$0xf]
  %v185 = vld [vmem:[%s3 + $0x110] sm:$0xf]
  %v186 = vld [vmem:[%s3 + $0x114] sm:$0xf]
  %v187 = vld [vmem:[%s3 + $0x118] sm:$0xf]
  %v188 = vld [vmem:[%s3 + $0x11c] sm:$0xf]
  %v201 = vunpack.c.l.b16 %v105
  %v202 = vunpack.c.h.b16 %v105
  %v203 = vunpack.c.l.b16 %v106
  %v204 = vunpack.c.h.b16 %v106
  %v205 = vunpack.c.l.b16 %v107
  %v206 = vunpack.c.l.b16 %v108
  %v207 = vunpack.c.h.b16 %v108
  %v208 = vunpack.c.l.b16 %v109
  %v209 = vunpack.c.h.b16 %v109
  %v210 = vunpack.c.l.b16 %v110
  %v211 = vunpack.c.l.b16 %v111
  %v212 = vunpack.c.h.b16 %v111
  %v213 = vunpack.c.l.b16 %v112
  %v214 = vunpack.c.h.b16 %v112
  %v215 = vunpack.c.l.b16 %v113
  %v216 = vunpack.c.l.b16 %v114
  %v217 = vunpack.c.h.b16 %v114
  %v218 = vunpack.c.l.b16 %v115
  %v219 = vunpack.c.h.b16 %v115
  %v220 = vunpack.c.l.b16 %v116
  %v221 = vpack.c.b16 %v206, %v201
  %v222 = vpack.c.b16 %v207, %v202
  %v223 = vpack.c.b16 %v208, %v203
  %v224 = vpack.c.b16 %v209, %v204
  %v225 = vpack.c.b16 %v210, %v205
  %v226 = vpack.c.b16 %v216, %v211
  %v227 = vpack.c.b16 %v217, %v212
  %v228 = vpack.c.b16 %v218, %v213
  %v229 = vpack.c.b16 %v219, %v214
  %v230 = vpack.c.b16 %v220, %v215
  %v311 = vunpack.c.l.b16 %v117
  %v312 = vunpack.c.l.b16 %v118
  %v313 = vunpack.c.l.b16 %v119
  %v314 = vunpack.c.l.b16 %v120
  %v315 = vunpack.c.l.b16 %v121
  %v316 = vunpack.c.l.b16 %v122
  %v317 = vunpack.c.l.b16 %v123
  %v318 = vunpack.c.l.b16 %v124
  %v319 = vunpack.c.l.b16 %v125
  %v320 = vunpack.c.l.b16 %v126
  %v321 = vunpack.c.l.b16 %v127
  %v322 = vunpack.c.l.b16 %v128
  %v323 = vunpack.c.l.b16 %v129
  %v324 = vunpack.c.l.b16 %v130
  %v325 = vunpack.c.l.b16 %v131
  %v326 = vunpack.c.l.b16 %v132
  %v327 = vunpack.c.l.b16 %v133
  %v328 = vunpack.c.l.b16 %v134
  %v329 = vunpack.c.l.b16 %v135
  %v330 = vunpack.c.l.b16 %v136
  %v331 = vunpack.c.l.b16 %v137
  %v332 = vunpack.c.l.b16 %v138
  %v333 = vunpack.c.l.b16 %v139
  %v334 = vunpack.c.l.b16 %v140
  %v335 = vunpack.c.l.b16 %v141
  %v336 = vunpack.c.l.b16 %v142
  %v337 = vunpack.c.l.b16 %v143
  %v338 = vunpack.c.l.b16 %v144
  %v339 = vunpack.c.l.b16 %v145
  %v340 = vunpack.c.l.b16 %v146
  %v341 = vunpack.c.l.b16 %v147
  %v342 = vunpack.c.l.b16 %v148
  %v343 = vunpack.c.l.b16 %v149
  %v344 = vunpack.c.l.b16 %v150
  %v345 = vunpack.c.l.b16 %v151
  %v346 = vunpack.c.l.b16 %v152
  %v347 = vunpack.c.l.b16 %v153
  %v348 = vunpack.c.l.b16 %v154
  %v349 = vunpack.c.l.b16 %v155
  %v350 = vunpack.c.l.b16 %v156
  %v351 = vunpack.c.l.b16 %v157
  %v352 = vunpack.c.l.b16 %v158
  %v353 = vunpack.c.l.b16 %v159
  %v354 = vunpack.c.l.b16 %v160
  %v355 = vunpack.c.l.b16 %v161
  %v356 = vunpack.c.l.b16 %v162
  %v357 = vunpack.c.l.b16 %v163
  %v358 = vunpack.c.l.b16 %v164
  %v359 = vunpack.c.l.b16 %v165
  %v360 = vunpack.c.l.b16 %v166
  %v361 = vunpack.c.l.b16 %v167
  %v362 = vunpack.c.l.b16 %v168
  %v363 = vunpack.c.l.b16 %v169
  %v364 = vunpack.c.l.b16 %v170
  %v365 = vunpack.c.l.b16 %v171
  %v366 = vunpack.c.l.b16 %v172
  %v367 = vunpack.c.l.b16 %v173
  %v368 = vunpack.c.l.b16 %v174
  %v369 = vunpack.c.l.b16 %v175
  %v370 = vunpack.c.l.b16 %v176
  %v371 = vunpack.c.l.b16 %v177
  %v372 = vunpack.c.l.b16 %v178
  %v373 = vunpack.c.l.b16 %v179
  %v374 = vunpack.c.l.b16 %v180
  %v375 = vunpack.c.l.b16 %v181
  %v376 = vunpack.c.l.b16 %v182
  %v377 = vunpack.c.l.b16 %v183
  %v378 = vunpack.c.l.b16 %v184
  %v379 = vunpack.c.l.b16 %v185
  %v380 = vunpack.c.l.b16 %v186
  %v381 = vunpack.c.l.b16 %v187
  %v382 = vunpack.c.l.b16 %v188
  %v383 = vpack.c.b16 %v312, %v311
  %v384 = vpack.c.b16 %v314, %v313
  %v385 = vpack.c.b16 %v316, %v315
  %v386 = vpack.c.b16 %v318, %v317
  %v387 = vpack.c.b16 %v320, %v319
  %v388 = vpack.c.b16 %v322, %v321
  %v389 = vpack.c.b16 %v324, %v323
  %v390 = vpack.c.b16 %v326, %v325
  %v391 = vpack.c.b16 %v328, %v327
  %v392 = vpack.c.b16 %v330, %v329
  %v393 = vpack.c.b16 %v332, %v331
  %v394 = vpack.c.b16 %v334, %v333
  %v395 = vpack.c.b16 %v336, %v335
  %v396 = vpack.c.b16 %v338, %v337
  %v397 = vpack.c.b16 %v340, %v339
  %v398 = vpack.c.b16 %v342, %v341
  %v399 = vpack.c.b16 %v344, %v343
  %v400 = vpack.c.b16 %v346, %v345
  %v401 = vpack.c.b16 %v348, %v347
  %v402 = vpack.c.b16 %v350, %v349
  %v403 = vpack.c.b16 %v352, %v351
  %v404 = vpack.c.b16 %v354, %v353
  %v405 = vpack.c.b16 %v356, %v355
  %v406 = vpack.c.b16 %v358, %v357
  %v407 = vpack.c.b16 %v360, %v359
  %v408 = vpack.c.b16 %v362, %v361
  %v409 = vpack.c.b16 %v364, %v363
  %v410 = vpack.c.b16 %v366, %v365
  %v411 = vpack.c.b16 %v368, %v367
  %v412 = vpack.c.b16 %v370, %v369
  %v413 = vpack.c.b16 %v372, %v371
  %v414 = vpack.c.b16 %v374, %v373
  %v415 = vpack.c.b16 %v376, %v375
  %v416 = vpack.c.b16 %v378, %v377
  %v417 = vpack.c.b16 %v380, %v379
  %v418 = vpack.c.b16 %v382, %v381
  %vm455 = vcmask 523264
  %v457 = vsel %vm455, %v225, 0
  %v460 = vsel %vm455, %v230, 0
  %462 = vmatpush.bf16.msra.mxu0 %v390
  %463 = vmatpush.bf16.msra.mxu0 %v389
  %464 = vmatpush.bf16.msra.mxu0 %v388
  %465 = vmatpush.bf16.msra.mxu0 %v387
  %466 = vmatpush.bf16.msra.mxu0 %v386
  %467 = vmatpush.bf16.msra.mxu0 %v385
  %468 = vmatpush.bf16.msra.mxu0 %v384
  %469 = vmatpush.bf16.msra.mxu0 %v383
  %470 = vmatmul.bf16.gmra.mxu0 %v221
  %v471 = vpop.f32.mrf.mxu0
  %v472 = vadd.f32 0.0, %v471
  %v473 = vpop.f32.mrf.mxu0
  %v474 = vadd.f32 0.0, %v473
  %475 = vmatmul.bf16.gmra.mxu0 %v226
  %v476 = vpop.f32.mrf.mxu0
  %v477 = vadd.f32 0.0, %v476
  %v478 = vpop.f32.mrf.mxu0
  %v479 = vadd.f32 0.0, %v478
  %480 = vdwg.mxu0
  %481 = vmatpush.bf16.msra.mxu0 %v398
  %482 = vmatpush.bf16.msra.mxu0 %v397
  %483 = vmatpush.bf16.msra.mxu0 %v396
  %484 = vmatpush.bf16.msra.mxu0 %v395
  %485 = vmatpush.bf16.msra.mxu0 %v394
  %486 = vmatpush.bf16.msra.mxu0 %v393
  %487 = vmatpush.bf16.msra.mxu0 %v392
  %488 = vmatpush.bf16.msra.mxu0 %v391
  %489 = vmatmul.bf16.gmra.mxu0 %v222
  %v490 = vpop.f32.mrf.mxu0
  %v491 = vadd.f32 %v472, %v490
  %v492 = vpop.f32.mrf.mxu0
  %v493 = vadd.f32 %v474, %v492
  %494 = vmatmul.bf16.gmra.mxu0 %v227
  %v495 = vpop.f32.mrf.mxu0
  %v496 = vadd.f32 %v477, %v495
  %v497 = vpop.f32.mrf.mxu0
  %v498 = vadd.f32 %v479, %v497
  %499 = vdwg.mxu0
  %500 = vmatpush.bf16.msra.mxu0 %v406
  %501 = vmatpush.bf16.msra.mxu0 %v405
  %502 = vmatpush.bf16.msra.mxu0 %v404
  %503 = vmatpush.bf16.msra.mxu0 %v403
  %504 = vmatpush.bf16.msra.mxu0 %v402
  %505 = vmatpush.bf16.msra.mxu0 %v401
  %506 = vmatpush.bf16.msra.mxu0 %v400
  %507 = vmatpush.bf16.msra.mxu0 %v399
  %508 = vmatmul.bf16.gmra.mxu0 %v223
  %v509 = vpop.f32.mrf.mxu0
  %v510 = vadd.f32 %v491, %v509
  %v511 = vpop.f32.mrf.mxu0
  %v512 = vadd.f32 %v493, %v511
  %513 = vmatmul.bf16.gmra.mxu0 %v228
  %v514 = vpop.f32.mrf.mxu0
  %v515 = vadd.f32 %v496, %v514
  %v516 = vpop.f32.mrf.mxu0
  %v517 = vadd.f32 %v498, %v516
  %518 = vdwg.mxu0
  %519 = vmatpush.bf16.msra.mxu0 %v414
  %520 = vmatpush.bf16.msra.mxu0 %v413
  %521 = vmatpush.bf16.msra.mxu0 %v412
  %522 = vmatpush.bf16.msra.mxu0 %v411
  %523 = vmatpush.bf16.msra.mxu0 %v410
  %524 = vmatpush.bf16.msra.mxu0 %v409
  %525 = vmatpush.bf16.msra.mxu0 %v408
  %526 = vmatpush.bf16.msra.mxu0 %v407
  %527 = vmatmul.bf16.gmra.mxu0 %v224
  %v528 = vpop.f32.mrf.mxu0
  %v529 = vadd.f32 %v510, %v528
  %v530 = vpop.f32.mrf.mxu0
  %v531 = vadd.f32 %v512, %v530
  %532 = vmatmul.bf16.gmra.mxu0 %v229
  %v533 = vpop.f32.mrf.mxu0
  %v534 = vadd.f32 %v515, %v533
  %v535 = vpop.f32.mrf.mxu0
  %v536 = vadd.f32 %v517, %v535
  %537 = vdwg.mxu0
  %538 = vmatpush.bf16.msra.mxu0 0
  %539 = vmatpush.bf16.msra.mxu0 0
  %540 = vmatpush.bf16.msra.mxu0 0
  %541 = vmatpush.bf16.msra.mxu0 0
  %542 = vmatpush.bf16.msra.mxu0 %v418
  %543 = vmatpush.bf16.msra.mxu0 %v417
  %544 = vmatpush.bf16.msra.mxu0 %v416
  %545 = vmatpush.bf16.msra.mxu0 %v415
  %546 = vmatmul.bf16.gmra.mxu0 %v457
  %v547 = vpop.f32.mrf.mxu0
  %v548 = vadd.f32 %v529, %v547
  %v549 = vpop.f32.mrf.mxu0
  %v550 = vadd.f32 %v531, %v549
  %551 = vmatmul.bf16.gmra.mxu0 %v460
  %v552 = vpop.f32.mrf.mxu0
  %v553 = vadd.f32 %v534, %v552
  %v554 = vpop.f32.mrf.mxu0
  %v555 = vadd.f32 %v536, %v554
  %556 = vdwg.mxu0
  %v569 = vunpack.c.l.b16 %v21
  %v570 = vunpack.c.h.b16 %v21
  %v571 = vunpack.c.l.b16 %v22
  %v572 = vunpack.c.h.b16 %v22
  %v573 = vunpack.c.l.b16 %v23
  %v574 = vunpack.c.l.b16 %v24
  %v575 = vunpack.c.h.b16 %v24
  %v576 = vunpack.c.l.b16 %v25
  %v577 = vunpack.c.h.b16 %v25
  %v578 = vunpack.c.l.b16 %v26
  %v579 = vunpack.c.l.b16 %v27
  %v580 = vunpack.c.h.b16 %v27
  %v581 = vunpack.c.l.b16 %v28
  %v582 = vunpack.c.h.b16 %v28
  %v583 = vunpack.c.l.b16 %v29
  %v584 = vunpack.c.l.b16 %v30
  %v585 = vunpack.c.h.b16 %v30
  %v586 = vunpack.c.l.b16 %v31
  %v587 = vunpack.c.h.b16 %v31
  %v588 = vunpack.c.l.b16 %v32
  %v589 = vpack.c.b16 %v574, %v569
  %v590 = vpack.c.b16 %v575, %v570
  %v591 = vpack.c.b16 %v576, %v571
  %v592 = vpack.c.b16 %v577, %v572
  %v593 = vpack.c.b16 %v578, %v573
  %v594 = vpack.c.b16 %v584, %v579
  %v595 = vpack.c.b16 %v585, %v580
  %v596 = vpack.c.b16 %v586, %v581
  %v597 = vpack.c.b16 %v587, %v582
  %v598 = vpack.c.b16 %v588, %v583
  %v679 = vunpack.c.l.b16 %v33
  %v680 = vunpack.c.l.b16 %v34
  %v681 = vunpack.c.l.b16 %v35
  %v682 = vunpack.c.l.b16 %v36
  %v683 = vunpack.c.l.b16 %v37
  %v684 = vunpack.c.l.b16 %v38
  %v685 = vunpack.c.l.b16 %v39
  %v686 = vunpack.c.l.b16 %v40
  %v687 = vunpack.c.l.b16 %v41
  %v688 = vunpack.c.l.b16 %v42
  %v689 = vunpack.c.l.b16 %v43
  %v690 = vunpack.c.l.b16 %v44
  %v691 = vunpack.c.l.b16 %v45
  %v692 = vunpack.c.l.b16 %v46
  %v693 = vunpack.c.l.b16 %v47
  %v694 = vunpack.c.l.b16 %v48
  %v695 = vunpack.c.l.b16 %v49
  %v696 = vunpack.c.l.b16 %v50
  %v697 = vunpack.c.l.b16 %v51
  %v698 = vunpack.c.l.b16 %v52
  %v699 = vunpack.c.l.b16 %v53
  %v700 = vunpack.c.l.b16 %v54
  %v701 = vunpack.c.l.b16 %v55
  %v702 = vunpack.c.l.b16 %v56
  %v703 = vunpack.c.l.b16 %v57
  %v704 = vunpack.c.l.b16 %v58
  %v705 = vunpack.c.l.b16 %v59
  %v706 = vunpack.c.l.b16 %v60
  %v707 = vunpack.c.l.b16 %v61
  %v708 = vunpack.c.l.b16 %v62
  %v709 = vunpack.c.l.b16 %v63
  %v710 = vunpack.c.l.b16 %v64
  %v711 = vunpack.c.l.b16 %v65
  %v712 = vunpack.c.l.b16 %v66
  %v713 = vunpack.c.l.b16 %v67
  %v714 = vunpack.c.l.b16 %v68
  %v715 = vunpack.c.l.b16 %v69
  %v716 = vunpack.c.l.b16 %v70
  %v717 = vunpack.c.l.b16 %v71
  %v718 = vunpack.c.l.b16 %v72
  %v719 = vunpack.c.l.b16 %v73
  %v720 = vunpack.c.l.b16 %v74
  %v721 = vunpack.c.l.b16 %v75
  %v722 = vunpack.c.l.b16 %v76
  %v723 = vunpack.c.l.b16 %v77
  %v724 = vunpack.c.l.b16 %v78
  %v725 = vunpack.c.l.b16 %v79
  %v726 = vunpack.c.l.b16 %v80
  %v727 = vunpack.c.l.b16 %v81
  %v728 = vunpack.c.l.b16 %v82
  %v729 = vunpack.c.l.b16 %v83
  %v730 = vunpack.c.l.b16 %v84
  %v731 = vunpack.c.l.b16 %v85
  %v732 = vunpack.c.l.b16 %v86
  %v733 = vunpack.c.l.b16 %v87
  %v734 = vunpack.c.l.b16 %v88
  %v735 = vunpack.c.l.b16 %v89
  %v736 = vunpack.c.l.b16 %v90
  %v737 = vunpack.c.l.b16 %v91
  %v738 = vunpack.c.l.b16 %v92
  %v739 = vunpack.c.l.b16 %v93
  %v740 = vunpack.c.l.b16 %v94
  %v741 = vunpack.c.l.b16 %v95
  %v742 = vunpack.c.l.b16 %v96
  %v743 = vunpack.c.l.b16 %v97
  %v744 = vunpack.c.l.b16 %v98
  %v745 = vunpack.c.l.b16 %v99
  %v746 = vunpack.c.l.b16 %v100
  %v747 = vunpack.c.l.b16 %v101
  %v748 = vunpack.c.l.b16 %v102
  %v749 = vunpack.c.l.b16 %v103
  %v750 = vunpack.c.l.b16 %v104
  %v751 = vpack.c.b16 %v680, %v679
  %v752 = vpack.c.b16 %v682, %v681
  %v753 = vpack.c.b16 %v684, %v683
  %v754 = vpack.c.b16 %v686, %v685
  %v755 = vpack.c.b16 %v688, %v687
  %v756 = vpack.c.b16 %v690, %v689
  %v757 = vpack.c.b16 %v692, %v691
  %v758 = vpack.c.b16 %v694, %v693
  %v759 = vpack.c.b16 %v696, %v695
  %v760 = vpack.c.b16 %v698, %v697
  %v761 = vpack.c.b16 %v700, %v699
  %v762 = vpack.c.b16 %v702, %v701
  %v763 = vpack.c.b16 %v704, %v703
  %v764 = vpack.c.b16 %v706, %v705
  %v765 = vpack.c.b16 %v708, %v707
  %v766 = vpack.c.b16 %v710, %v709
  %v767 = vpack.c.b16 %v712, %v711
  %v768 = vpack.c.b16 %v714, %v713
  %v769 = vpack.c.b16 %v716, %v715
  %v770 = vpack.c.b16 %v718, %v717
  %v771 = vpack.c.b16 %v720, %v719
  %v772 = vpack.c.b16 %v722, %v721
  %v773 = vpack.c.b16 %v724, %v723
  %v774 = vpack.c.b16 %v726, %v725
  %v775 = vpack.c.b16 %v728, %v727
  %v776 = vpack.c.b16 %v730, %v729
  %v777 = vpack.c.b16 %v732, %v731
  %v778 = vpack.c.b16 %v734, %v733
  %v779 = vpack.c.b16 %v736, %v735
  %v780 = vpack.c.b16 %v738, %v737
  %v781 = vpack.c.b16 %v740, %v739
  %v782 = vpack.c.b16 %v742, %v741
  %v783 = vpack.c.b16 %v744, %v743
  %v784 = vpack.c.b16 %v746, %v745
  %v785 = vpack.c.b16 %v748, %v747
  %v786 = vpack.c.b16 %v750, %v749
  %v824 = vsel %vm455, %v593, 0
  %v827 = vsel %vm455, %v598, 0
  %829 = vmatpush.bf16.msra.mxu0 %v758
  %830 = vmatpush.bf16.msra.mxu0 %v757
  %831 = vmatpush.bf16.msra.mxu0 %v756
  %832 = vmatpush.bf16.msra.mxu0 %v755
  %833 = vmatpush.bf16.msra.mxu0 %v754
  %834 = vmatpush.bf16.msra.mxu0 %v753
  %835 = vmatpush.bf16.msra.mxu0 %v752
  %836 = vmatpush.bf16.msra.mxu0 %v751
  %837 = vmatmul.bf16.gmra.mxu0 %v589
  %v838 = vpop.f32.mrf.mxu0
  %v839 = vadd.f32 %v548, %v838
  %v840 = vpop.f32.mrf.mxu0
  %v841 = vadd.f32 %v550, %v840
  %842 = vmatmul.bf16.gmra.mxu0 %v594
  %v843 = vpop.f32.mrf.mxu0
  %v844 = vadd.f32 %v553, %v843
  %v845 = vpop.f32.mrf.mxu0
  %v846 = vadd.f32 %v555, %v845
  %847 = vdwg.mxu0
  %848 = vmatpush.bf16.msra.mxu0 %v766
  %849 = vmatpush.bf16.msra.mxu0 %v765
  %850 = vmatpush.bf16.msra.mxu0 %v764
  %851 = vmatpush.bf16.msra.mxu0 %v763
  %852 = vmatpush.bf16.msra.mxu0 %v762
  %853 = vmatpush.bf16.msra.mxu0 %v761
  %854 = vmatpush.bf16.msra.mxu0 %v760
  %855 = vmatpush.bf16.msra.mxu0 %v759
  %856 = vmatmul.bf16.gmra.mxu0 %v590
  %v857 = vpop.f32.mrf.mxu0
  %v858 = vadd.f32 %v839, %v857
  %v859 = vpop.f32.mrf.mxu0
  %v860 = vadd.f32 %v841, %v859
  %861 = vmatmul.bf16.gmra.mxu0 %v595
  %v862 = vpop.f32.mrf.mxu0
  %v863 = vadd.f32 %v844, %v862
  %v864 = vpop.f32.mrf.mxu0
  %v865 = vadd.f32 %v846, %v864
  %866 = vdwg.mxu0
  %867 = vmatpush.bf16.msra.mxu0 %v774
  %868 = vmatpush.bf16.msra.mxu0 %v773
  %869 = vmatpush.bf16.msra.mxu0 %v772
  %870 = vmatpush.bf16.msra.mxu0 %v771
  %871 = vmatpush.bf16.msra.mxu0 %v770
  %872 = vmatpush.bf16.msra.mxu0 %v769
  %873 = vmatpush.bf16.msra.mxu0 %v768
  %874 = vmatpush.bf16.msra.mxu0 %v767
  %875 = vmatmul.bf16.gmra.mxu0 %v591
  %v876 = vpop.f32.mrf.mxu0
  %v877 = vadd.f32 %v858, %v876
  %v878 = vpop.f32.mrf.mxu0
  %v879 = vadd.f32 %v860, %v878
  %880 = vmatmul.bf16.gmra.mxu0 %v596
  %v881 = vpop.f32.mrf.mxu0
  %v882 = vadd.f32 %v863, %v881
  %v883 = vpop.f32.mrf.mxu0
  %v884 = vadd.f32 %v865, %v883
  %885 = vdwg.mxu0
  %886 = vmatpush.bf16.msra.mxu0 %v782
  %887 = vmatpush.bf16.msra.mxu0 %v781
  %888 = vmatpush.bf16.msra.mxu0 %v780
  %889 = vmatpush.bf16.msra.mxu0 %v779
  %890 = vmatpush.bf16.msra.mxu0 %v778
  %891 = vmatpush.bf16.msra.mxu0 %v777
  %892 = vmatpush.bf16.msra.mxu0 %v776
  %893 = vmatpush.bf16.msra.mxu0 %v775
  %894 = vmatmul.bf16.gmra.mxu0 %v592
  %v895 = vpop.f32.mrf.mxu0
  %v896 = vadd.f32 %v877, %v895
  %v897 = vpop.f32.mrf.mxu0
  %v898 = vadd.f32 %v879, %v897
  %899 = vmatmul.bf16.gmra.mxu0 %v597
  %v900 = vpop.f32.mrf.mxu0
  %v901 = vadd.f32 %v882, %v900
  %v902 = vpop.f32.mrf.mxu0
  %v903 = vadd.f32 %v884, %v902
  %904 = vdwg.mxu0
  %905 = vmatpush.bf16.msra.mxu0 0
  %906 = vmatpush.bf16.msra.mxu0 0
  %907 = vmatpush.bf16.msra.mxu0 0
  %908 = vmatpush.bf16.msra.mxu0 0
  %909 = vmatpush.bf16.msra.mxu0 %v786
  %910 = vmatpush.bf16.msra.mxu0 %v785
  %911 = vmatpush.bf16.msra.mxu0 %v784
  %912 = vmatpush.bf16.msra.mxu0 %v783
  %913 = vmatmul.bf16.gmra.mxu0 %v824
  %v914 = vpop.f32.mrf.mxu0
  %v915 = vadd.f32 %v896, %v914
  %v916 = vpop.f32.mrf.mxu0
  %v917 = vadd.f32 %v898, %v916
  %918 = vmatmul.bf16.gmra.mxu0 %v827
  %v919 = vpop.f32.mrf.mxu0
  %v920 = vadd.f32 %v901, %v919
  %v921 = vpop.f32.mrf.mxu0
  %v922 = vadd.f32 %v903, %v921
  %923 = vdwg.mxu0
  %v924 = vld [vmem:[%s4] sm:$0x1]
  %v926 = vperm.slane %v924, 0
  %v928 = vadd.f32 %v915, %v926
  %v929 = vadd.f32 %v917, %v926
  %v930 = vadd.f32 %v920, %v926
  %v931 = vadd.f32 %v922, %v926
  %v932 = vmax.f32 %v928, 0.0
  %v933 = vmax.f32 %v929, 0.0
  %v934 = vmax.f32 %v930, 0.0
  %v935 = vmax.f32 %v931, 0.0
  %936 = vst.msk [vmem:[%s5] sm:$0xff] %vm455, %v932
  %937 = vst.msk [vmem:[%s5 + $0x8] sm:$0xff] %vm455, %v933
  %938 = vst.msk [vmem:[%s5 + $0x10] sm:$0xff] %vm455, %v934
  %939 = vst.msk [vmem:[%s5 + $0x18] sm:$0xff] %vm455, %v935
  // Predicated region
  $region22: #{unet2d_forward.39} parent=0 // pred_check
    _
  $region23: #{unet2d_forward.39} parent=0 // pred_check_branch
    %941 = sbr.rel (0) target = $region25
  $region24: #{unet2d_forward.39} parent=0 // pred_region
    _
  $region25: #{unet2d_forward.39} parent=0 // pred_fallthru
    _
  // Predicated region
  $region26: #{unet2d_forward.39} parent=0 // pred_check
    _
  $region27: #{unet2d_forward.39} parent=0 // pred_check_branch
    %943 = sbr.rel (0) target = $region29
  $region28: #{unet2d_forward.39} parent=0 // pred_region
    _
  $region29: #{unet2d_forward.39} parent=0 // pred_fallthru
    _

// kernel: unet2d_forward.44
$region0: #{unet2d_forward.44}
  #allocation0 [shape = 'u32[]', space=smem, size = 0x4, offset = 0x4, fixed_abs, tag = 'smem constant byte address 0x4 - core index']
  #allocation1 [shape = 'u32[72,128]{1,0:T(1,128)}', space=vmem, size = 0x9000, scoped, tag = 'internal scratch']
  %s0 = inlined_call_operand.vmem [shape: bf16[32,256], index: 0, kind: input, shape index: {}]
  %s1 = inlined_call_operand.vmem [shape: bf16[256,32], index: 1, kind: input, shape index: {}]
  %s2 = inlined_call_operand.vmem [shape: f32[1,32], index: 2, kind: input, shape index: {}]
  %s3 = inlined_call_operand.vmem [shape: f32[32,32], index: 3, kind: output, shape index: {}]
  %s4 = sld [smem:[#allocation0]]
  $region22: #{unet2d_forward.44} parent=0
    _
  %s6 = ssub.s32 1, %s4
  %s7 = scalar_select 0, %s6, %s4
  // Predicated region
  $region2: #{unet2d_forward.44} parent=0 // pred_check
    _
  $region3: #{unet2d_forward.44} parent=0 // pred_check_branch
    %9 = sbr.rel (0) target = $region5
  $region4: #{unet2d_forward.44} parent=0 // pred_region
    _
  $region5: #{unet2d_forward.44} parent=0 // pred_fallthru
    _
  // Predicated region
  $region6: #{unet2d_forward.44} parent=0 // pred_check
    _
  $region7: #{unet2d_forward.44} parent=0 // pred_check_branch
    %11 = sbr.rel (0) target = $region9
  $region8: #{unet2d_forward.44} parent=0 // pred_region
    _
  $region9: #{unet2d_forward.44} parent=0 // pred_fallthru
    _
  // Predicated region
  $region10: #{unet2d_forward.44} parent=0 // pred_check
    _
  $region11: #{unet2d_forward.44} parent=0 // pred_check_branch
    %13 = sbr.rel (0) target = $region13
  $region12: #{unet2d_forward.44} parent=0 // pred_region
    _
  $region13: #{unet2d_forward.44} parent=0 // pred_fallthru
    _
  %v14 = vld [vmem:[%s0] sm:$0xff]
  %v15 = vld [vmem:[%s0 + $0x8] sm:$0xff]
  %v16 = vld [vmem:[%s0 + $0x10] sm:$0xff]
  %v17 = vld [vmem:[%s0 + $0x18] sm:$0xff]
  %v18 = vld [vmem:[%s1] sm:$0xf]
  %v19 = vld [vmem:[%s1 + $0x4] sm:$0xf]
  %v20 = vld [vmem:[%s1 + $0x8] sm:$0xf]
  %v21 = vld [vmem:[%s1 + $0xc] sm:$0xf]
  %v22 = vld [vmem:[%s1 + $0x10] sm:$0xf]
  %v23 = vld [vmem:[%s1 + $0x14] sm:$0xf]
  %v24 = vld [vmem:[%s1 + $0x18] sm:$0xf]
  %v25 = vld [vmem:[%s1 + $0x1c] sm:$0xf]
  %v26 = vld [vmem:[%s1 + $0x20] sm:$0xf]
  %v27 = vld [vmem:[%s1 + $0x24] sm:$0xf]
  %v28 = vld [vmem:[%s1 + $0x28] sm:$0xf]
  %v29 = vld [vmem:[%s1 + $0x2c] sm:$0xf]
  %v30 = vld [vmem:[%s1 + $0x30] sm:$0xf]
  %v31 = vld [vmem:[%s1 + $0x34] sm:$0xf]
  %v32 = vld [vmem:[%s1 + $0x38] sm:$0xf]
  %v33 = vld [vmem:[%s1 + $0x3c] sm:$0xf]
  %v34 = vld [vmem:[%s1 + $0x40] sm:$0xf]
  %v35 = vld [vmem:[%s1 + $0x44] sm:$0xf]
  %v36 = vld [vmem:[%s1 + $0x48] sm:$0xf]
  %v37 = vld [vmem:[%s1 + $0x4c] sm:$0xf]
  %v38 = vld [vmem:[%s1 + $0x50] sm:$0xf]
  %v39 = vld [vmem:[%s1 + $0x54] sm:$0xf]
  %v40 = vld [vmem:[%s1 + $0x58] sm:$0xf]
  %v41 = vld [vmem:[%s1 + $0x5c] sm:$0xf]
  %v42 = vld [vmem:[%s1 + $0x60] sm:$0xf]
  %v43 = vld [vmem:[%s1 + $0x64] sm:$0xf]
  %v44 = vld [vmem:[%s1 + $0x68] sm:$0xf]
  %v45 = vld [vmem:[%s1 + $0x6c] sm:$0xf]
  %v46 = vld [vmem:[%s1 + $0x70] sm:$0xf]
  %v47 = vld [vmem:[%s1 + $0x74] sm:$0xf]
  %v48 = vld [vmem:[%s1 + $0x78] sm:$0xf]
  %v49 = vld [vmem:[%s1 + $0x7c] sm:$0xf]
  %v50 = vld [vmem:[%s2] sm:$0x1]
  %v52 = vperm.slane %v50, 0
  %v58 = vunpack.c.l.b16 %v14
  %v59 = vunpack.c.h.b16 %v14
  %v60 = vunpack.c.l.b16 %v15
  %v61 = vunpack.c.h.b16 %v15
  %v62 = vunpack.c.l.b16 %v16
  %v63 = vunpack.c.h.b16 %v16
  %v64 = vunpack.c.l.b16 %v17
  %v65 = vunpack.c.h.b16 %v17
  %v66 = vpack.c.b16 %v60, %v58
  %v67 = vpack.c.b16 %v61, %v59
  %v68 = vpack.c.b16 %v64, %v62
  %v69 = vpack.c.b16 %v65, %v63
  %v106 = vunpack.c.l.b16 %v18
  %v107 = vunpack.c.l.b16 %v19
  %v108 = vunpack.c.l.b16 %v20
  %v109 = vunpack.c.l.b16 %v21
  %v110 = vunpack.c.l.b16 %v22
  %v111 = vunpack.c.l.b16 %v23
  %v112 = vunpack.c.l.b16 %v24
  %v113 = vunpack.c.l.b16 %v25
  %v114 = vunpack.c.l.b16 %v26
  %v115 = vunpack.c.l.b16 %v27
  %v116 = vunpack.c.l.b16 %v28
  %v117 = vunpack.c.l.b16 %v29
  %v118 = vunpack.c.l.b16 %v30
  %v119 = vunpack.c.l.b16 %v31
  %v120 = vunpack.c.l.b16 %v32
  %v121 = vunpack.c.l.b16 %v33
  %v122 = vunpack.c.l.b16 %v34
  %v123 = vunpack.c.l.b16 %v35
  %v124 = vunpack.c.l.b16 %v36
  %v125 = vunpack.c.l.b16 %v37
  %v126 = vunpack.c.l.b16 %v38
  %v127 = vunpack.c.l.b16 %v39
  %v128 = vunpack.c.l.b16 %v40
  %v129 = vunpack.c.l.b16 %v41
  %v130 = vunpack.c.l.b16 %v42
  %v131 = vunpack.c.l.b16 %v43
  %v132 = vunpack.c.l.b16 %v44
  %v133 = vunpack.c.l.b16 %v45
  %v134 = vunpack.c.l.b16 %v46
  %v135 = vunpack.c.l.b16 %v47
  %v136 = vunpack.c.l.b16 %v48
  %v137 = vunpack.c.l.b16 %v49
  %v138 = vpack.c.b16 %v107, %v106
  %v139 = vpack.c.b16 %v109, %v108
  %v140 = vpack.c.b16 %v111, %v110
  %v141 = vpack.c.b16 %v113, %v112
  %v142 = vpack.c.b16 %v115, %v114
  %v143 = vpack.c.b16 %v117, %v116
  %v144 = vpack.c.b16 %v119, %v118
  %v145 = vpack.c.b16 %v121, %v120
  %v146 = vpack.c.b16 %v123, %v122
  %v147 = vpack.c.b16 %v125, %v124
  %v148 = vpack.c.b16 %v127, %v126
  %v149 = vpack.c.b16 %v129, %v128
  %v150 = vpack.c.b16 %v131, %v130
  %v151 = vpack.c.b16 %v133, %v132
  %v152 = vpack.c.b16 %v135, %v134
  %v153 = vpack.c.b16 %v137, %v136
  %170 = vmatpush.bf16.msra.mxu0 %v145
  %171 = vmatpush.bf16.msra.mxu0 %v144
  %172 = vmatpush.bf16.msra.mxu0 %v143
  %173 = vmatpush.bf16.msra.mxu0 %v142
  %174 = vmatpush.bf16.msra.mxu0 %v141
  %175 = vmatpush.bf16.msra.mxu0 %v140
  %176 = vmatpush.bf16.msra.mxu0 %v139
  %177 = vmatpush.bf16.msra.mxu0 %v138
  %178 = vmatmul.bf16.gmra.mxu0 %v66
  %v179 = vpop.f32.mrf.mxu0
  %v180 = vadd.f32 %v52, %v179
  %v181 = vpop.f32.mrf.mxu0
  %v182 = vadd.f32 %v52, %v181
  %183 = vmatmul.bf16.gmra.mxu0 %v68
  %v184 = vpop.f32.mrf.mxu0
  %v185 = vadd.f32 %v52, %v184
  %v186 = vpop.f32.mrf.mxu0
  %v187 = vadd.f32 %v52, %v186
  %188 = vdwg.mxu0
  %189 = vmatpush.bf16.msra.mxu0 %v153
  %190 = vmatpush.bf16.msra.mxu0 %v152
  %191 = vmatpush.bf16.msra.mxu0 %v151
  %192 = vmatpush.bf16.msra.mxu0 %v150
  %193 = vmatpush.bf16.msra.mxu0 %v149
  %194 = vmatpush.bf16.msra.mxu0 %v148
  %195 = vmatpush.bf16.msra.mxu0 %v147
  %196 = vmatpush.bf16.msra.mxu0 %v146
  %197 = vmatmul.bf16.gmra.mxu0 %v67
  %v198 = vpop.f32.mrf.mxu0
  %v199 = vadd.f32 %v180, %v198
  %v200 = vpop.f32.mrf.mxu0
  %v201 = vadd.f32 %v182, %v200
  %202 = vmatmul.bf16.gmra.mxu0 %v69
  %v203 = vpop.f32.mrf.mxu0
  %v204 = vadd.f32 %v185, %v203
  %v205 = vpop.f32.mrf.mxu0
  %v206 = vadd.f32 %v187, %v205
  %207 = vdwg.mxu0
  %vm208 = vcmask 261120
  %209 = vst.msk [vmem:[%s3] sm:$0xff] %vm208, %v199
  %210 = vst.msk [vmem:[%s3 + $0x8] sm:$0xff] %vm208, %v201
  %211 = vst.msk [vmem:[%s3 + $0x10] sm:$0xff] %vm208, %v204
  %212 = vst.msk [vmem:[%s3 + $0x18] sm:$0xff] %vm208, %v206
  // Predicated region
  $region14: #{unet2d_forward.44} parent=0 // pred_check
    _
  $region15: #{unet2d_forward.44} parent=0 // pred_check_branch
    %214 = sbr.rel (0) target = $region17
  $region16: #{unet2d_forward.44} parent=0 // pred_region
    _
  $region17: #{unet2d_forward.44} parent=0 // pred_fallthru
    _
  // Predicated region
  $region18: #{unet2d_forward.44} parent=0 // pred_check
    _
  $region19: #{unet2d_forward.44} parent=0 // pred_check_branch
    %216 = sbr.rel (0) target = $region21
  $region20: #{unet2d_forward.44} parent=0 // pred_region
    _
  $region21: #{unet2d_forward.44} parent=0 // pred_fallthru
    _

// kernel: unet2d_forward.48
$region0: #{unet2d_forward.48}
  #allocation0 [shape = 'u32[]', space=smem, size = 0x4, offset = 0x4, fixed_abs, tag = 'smem constant byte address 0x4 - core index']
  #allocation1 [shape = 'u32[72,128]{1,0:T(1,128)}', space=vmem, size = 0x9000, scoped, tag = 'internal scratch']
  %s0 = inlined_call_operand.vmem [shape: bf16[128,64], index: 0, kind: input, shape index: {}]
  %s1 = inlined_call_operand.vmem [shape: bf16[64,16], index: 1, kind: input, shape index: {}]
  %s2 = inlined_call_operand.vmem [shape: f32[1,16], index: 2, kind: input, shape index: {}]
  %s3 = inlined_call_operand.vmem [shape: f32[128,16], index: 3, kind: output, shape index: {}]
  %s4 = sld [smem:[#allocation0]]
  $region22: #{unet2d_forward.48} parent=0
    _
  %s6 = ssub.s32 1, %s4
  %s7 = scalar_select 0, %s6, %s4
  // Predicated region
  $region2: #{unet2d_forward.48} parent=0 // pred_check
    _
  $region3: #{unet2d_forward.48} parent=0 // pred_check_branch
    %9 = sbr.rel (0) target = $region5
  $region4: #{unet2d_forward.48} parent=0 // pred_region
    _
  $region5: #{unet2d_forward.48} parent=0 // pred_fallthru
    _
  // Predicated region
  $region6: #{unet2d_forward.48} parent=0 // pred_check
    _
  $region7: #{unet2d_forward.48} parent=0 // pred_check_branch
    %11 = sbr.rel (0) target = $region9
  $region8: #{unet2d_forward.48} parent=0 // pred_region
    _
  $region9: #{unet2d_forward.48} parent=0 // pred_fallthru
    _
  // Predicated region
  $region10: #{unet2d_forward.48} parent=0 // pred_check
    _
  $region11: #{unet2d_forward.48} parent=0 // pred_check_branch
    %13 = sbr.rel (0) target = $region13
  $region12: #{unet2d_forward.48} parent=0 // pred_region
    _
  $region13: #{unet2d_forward.48} parent=0 // pred_fallthru
    _
  %v15 = vld [vmem:[%s0] sm:$0xf]
  %v16 = vld [vmem:[%s0 + $0x4] sm:$0xf]
  %v17 = vld [vmem:[%s0 + $0x8] sm:$0xf]
  %v18 = vld [vmem:[%s0 + $0xc] sm:$0xf]
  %v19 = vld [vmem:[%s0 + $0x10] sm:$0xf]
  %v20 = vld [vmem:[%s0 + $0x14] sm:$0xf]
  %v21 = vld [vmem:[%s0 + $0x18] sm:$0xf]
  %v22 = vld [vmem:[%s0 + $0x1c] sm:$0xf]
  %v23 = vld [vmem:[%s0 + $0x20] sm:$0xf]
  %v24 = vld [vmem:[%s0 + $0x24] sm:$0xf]
  %v25 = vld [vmem:[%s0 + $0x28] sm:$0xf]
  %v26 = vld [vmem:[%s0 + $0x2c] sm:$0xf]
  %v27 = vld [vmem:[%s0 + $0x30] sm:$0xf]
  %v28 = vld [vmem:[%s0 + $0x34] sm:$0xf]
  %v29 = vld [vmem:[%s0 + $0x38] sm:$0xf]
  %v30 = vld [vmem:[%s0 + $0x3c] sm:$0xf]
  %v31 = vld [vmem:[%s1] sm:$0xf]
  %v32 = vld [vmem:[%s1 + $0x4] sm:$0xf]
  %v33 = vld [vmem:[%s1 + $0x8] sm:$0xf]
  %v34 = vld [vmem:[%s1 + $0xc] sm:$0xf]
  %v35 = vld [vmem:[%s1 + $0x10] sm:$0xf]
  %v36 = vld [vmem:[%s1 + $0x14] sm:$0xf]
  %v37 = vld [vmem:[%s1 + $0x18] sm:$0xf]
  %v38 = vld [vmem:[%s1 + $0x1c] sm:$0xf]
  %v39 = vld [vmem:[%s2] sm:$0x1]
  %v41 = vperm.slane %v39, 0
  %v59 = vunpack.c.l.b16 %v15
  %v60 = vunpack.c.l.b16 %v16
  %v61 = vunpack.c.l.b16 %v17
  %v62 = vunpack.c.l.b16 %v18
  %v63 = vunpack.c.l.b16 %v19
  %v64 = vunpack.c.l.b16 %v20
  %v65 = vunpack.c.l.b16 %v21
  %v66 = vunpack.c.l.b16 %v22
  %v67 = vunpack.c.l.b16 %v23
  %v68 = vunpack.c.l.b16 %v24
  %v69 = vunpack.c.l.b16 %v25
  %v70 = vunpack.c.l.b16 %v26
  %v71 = vunpack.c.l.b16 %v27
  %v72 = vunpack.c.l.b16 %v28
  %v73 = vunpack.c.l.b16 %v29
  %v74 = vunpack.c.l.b16 %v30
  %v75 = vpack.c.b16 %v60, %v59
  %v76 = vpack.c.b16 %v62, %v61
  %v77 = vpack.c.b16 %v64, %v63
  %v78 = vpack.c.b16 %v66, %v65
  %v79 = vpack.c.b16 %v68, %v67
  %v80 = vpack.c.b16 %v70, %v69
  %v81 = vpack.c.b16 %v72, %v71
  %v82 = vpack.c.b16 %v74, %v73
  %v91 = vunpack.c.l.b16 %v31
  %v92 = vunpack.c.l.b16 %v32
  %v93 = vunpack.c.l.b16 %v33
  %v94 = vunpack.c.l.b16 %v34
  %v95 = vunpack.c.l.b16 %v35
  %v96 = vunpack.c.l.b16 %v36
  %v97 = vunpack.c.l.b16 %v37
  %v98 = vunpack.c.l.b16 %v38
  %v99 = vpack.c.b16 %v92, %v91
  %v100 = vpack.c.b16 %v94, %v93
  %v101 = vpack.c.b16 %v96, %v95
  %v102 = vpack.c.b16 %v98, %v97
  %vm107 = vcmask 523264
  %v109 = vsel %vm107, %v75, 0
  %v112 = vsel %vm107, %v76, 0
  %v115 = vsel %vm107, %v77, 0
  %v118 = vsel %vm107, %v78, 0
  %v121 = vsel %vm107, %v79, 0
  %v124 = vsel %vm107, %v80, 0
  %v127 = vsel %vm107, %v81, 0
  %v130 = vsel %vm107, %v82, 0
  %132 = vmatpush.bf16.msra.mxu0 0
  %133 = vmatpush.bf16.msra.mxu0 0
  %134 = vmatpush.bf16.msra.mxu0 0
  %135 = vmatpush.bf16.msra.mxu0 0
  %136 = vmatpush.bf16.msra.mxu0 %v102
  %137 = vmatpush.bf16.msra.mxu0 %v101
  %138 = vmatpush.bf16.msra.mxu0 %v100
  %139 = vmatpush.bf16.msra.mxu0 %v99
  %140 = vmatmul.bf16.gmra.mxu0 %v109
  %v141 = vpop.f32.mrf.mxu0
  %v142 = vadd.f32 %v41, %v141
  %v143 = vpop.f32.mrf.mxu0
  %v144 = vadd.f32 %v41, %v143
  %145 = vmatmul.bf16.gmra.mxu0 %v112
  %v146 = vpop.f32.mrf.mxu0
  %v147 = vadd.f32 %v41, %v146
  %v148 = vpop.f32.mrf.mxu0
  %v149 = vadd.f32 %v41, %v148
  %150 = vmatmul.bf16.gmra.mxu0 %v115
  %v151 = vpop.f32.mrf.mxu0
  %v152 = vadd.f32 %v41, %v151
  %v153 = vpop.f32.mrf.mxu0
  %v154 = vadd.f32 %v41, %v153
  %155 = vmatmul.bf16.gmra.mxu0 %v118
  %v156 = vpop.f32.mrf.mxu0
  %v157 = vadd.f32 %v41, %v156
  %v158 = vpop.f32.mrf.mxu0
  %v159 = vadd.f32 %v41, %v158
  %160 = vmatmul.bf16.gmra.mxu0 %v121
  %v161 = vpop.f32.mrf.mxu0
  %v162 = vadd.f32 %v41, %v161
  %v163 = vpop.f32.mrf.mxu0
  %v164 = vadd.f32 %v41, %v163
  %165 = vmatmul.bf16.gmra.mxu0 %v124
  %v166 = vpop.f32.mrf.mxu0
  %v167 = vadd.f32 %v41, %v166
  %v168 = vpop.f32.mrf.mxu0
  %v169 = vadd.f32 %v41, %v168
  %170 = vmatmul.bf16.gmra.mxu0 %v127
  %v171 = vpop.f32.mrf.mxu0
  %v172 = vadd.f32 %v41, %v171
  %v173 = vpop.f32.mrf.mxu0
  %v174 = vadd.f32 %v41, %v173
  %175 = vmatmul.bf16.gmra.mxu0 %v130
  %v176 = vpop.f32.mrf.mxu0
  %v177 = vadd.f32 %v41, %v176
  %v178 = vpop.f32.mrf.mxu0
  %v179 = vadd.f32 %v41, %v178
  %180 = vdwg.mxu0
  %vm181 = vcmask 130048
  %182 = vst.msk [vmem:[%s3] sm:$0xff] %vm181, %v142
  %183 = vst.msk [vmem:[%s3 + $0x8] sm:$0xff] %vm181, %v144
  %184 = vst.msk [vmem:[%s3 + $0x10] sm:$0xff] %vm181, %v147
  %185 = vst.msk [vmem:[%s3 + $0x18] sm:$0xff] %vm181, %v149
  %186 = vst.msk [vmem:[%s3 + $0x20] sm:$0xff] %vm181, %v152
  %187 = vst.msk [vmem:[%s3 + $0x28] sm:$0xff] %vm181, %v154
  %188 = vst.msk [vmem:[%s3 + $0x30] sm:$0xff] %vm181, %v157
  %189 = vst.msk [vmem:[%s3 + $0x38] sm:$0xff] %vm181, %v159
  %190 = vst.msk [vmem:[%s3 + $0x40] sm:$0xff] %vm181, %v162
  %191 = vst.msk [vmem:[%s3 + $0x48] sm:$0xff] %vm181, %v164
  %192 = vst.msk [vmem:[%s3 + $0x50] sm:$0xff] %vm181, %v167
  %193 = vst.msk [vmem:[%s3 + $0x58] sm:$0xff] %vm181, %v169
  %194 = vst.msk [vmem:[%s3 + $0x60] sm:$0xff] %vm181, %v172
  %195 = vst.msk [vmem:[%s3 + $0x68] sm:$0xff] %vm181, %v174
  %196 = vst.msk [vmem:[%s3 + $0x70] sm:$0xff] %vm181, %v177
  %197 = vst.msk [vmem:[%s3 + $0x78] sm:$0xff] %vm181, %v179
  // Predicated region
  $region14: #{unet2d_forward.48} parent=0 // pred_check
    _
  $region15: #{unet2d_forward.48} parent=0 // pred_check_branch
    %199 = sbr.rel (0) target = $region17
  $region16: #{unet2d_forward.48} parent=0 // pred_region
    _
  $region17: #{unet2d_forward.48} parent=0 // pred_fallthru
    _
  // Predicated region
  $region18: #{unet2d_forward.48} parent=0 // pred_check
    _
  $region19: #{unet2d_forward.48} parent=0 // pred_check_branch
    %201 = sbr.rel (0) target = $region21
  $region20: #{unet2d_forward.48} parent=0 // pred_region
    _
  $region21: #{unet2d_forward.48} parent=0 // pred_fallthru
    _

// kernel: unet2d_forward.45
$region0: #{unet2d_forward.45}
  #allocation0 [shape = 'u32[]', space=smem, size = 0x4, offset = 0x4, fixed_abs, tag = 'smem constant byte address 0x4 - core index']
  #allocation1 [shape = 'u32[72,128]{1,0:T(1,128)}', space=vmem, size = 0x9000, scoped, tag = 'internal scratch']
  %s0 = inlined_call_operand.vmem [shape: bf16[128,288], index: 0, kind: input, shape index: {}]
  %s1 = inlined_call_operand.vmem [shape: bf16[128,288], index: 1, kind: input, shape index: {}]
  %s2 = inlined_call_operand.vmem [shape: bf16[288,32], index: 2, kind: input, shape index: {}]
  %s3 = inlined_call_operand.vmem [shape: bf16[288,32], index: 3, kind: input, shape index: {}]
  %s4 = inlined_call_operand.vmem [shape: f32[1,32], index: 4, kind: input, shape index: {}]
  %s5 = inlined_call_operand.vmem [shape: f32[128,32], index: 5, kind: output, shape index: {}]
  %s6 = sld [smem:[#allocation0]]
  $region30: #{unet2d_forward.45} parent=0
    _
  %s8 = ssub.s32 1, %s6
  %s9 = scalar_select 0, %s8, %s6
  // Predicated region
  $region2: #{unet2d_forward.45} parent=0 // pred_check
    _
  $region3: #{unet2d_forward.45} parent=0 // pred_check_branch
    %11 = sbr.rel (0) target = $region5
  $region4: #{unet2d_forward.45} parent=0 // pred_region
    _
  $region5: #{unet2d_forward.45} parent=0 // pred_fallthru
    _
  // Predicated region
  $region6: #{unet2d_forward.45} parent=0 // pred_check
    _
  $region7: #{unet2d_forward.45} parent=0 // pred_check_branch
    %13 = sbr.rel (0) target = $region9
  $region8: #{unet2d_forward.45} parent=0 // pred_region
    _
  $region9: #{unet2d_forward.45} parent=0 // pred_fallthru
    _
  // Predicated region
  $region10: #{unet2d_forward.45} parent=0 // pred_check
    _
  $region11: #{unet2d_forward.45} parent=0 // pred_check_branch
    %15 = sbr.rel (0) target = $region13
  $region12: #{unet2d_forward.45} parent=0 // pred_region
    _
  $region13: #{unet2d_forward.45} parent=0 // pred_fallthru
    _
  // Predicated region
  $region14: #{unet2d_forward.45} parent=0 // pred_check
    _
  $region15: #{unet2d_forward.45} parent=0 // pred_check_branch
    %17 = sbr.rel (0) target = $region17
  $region16: #{unet2d_forward.45} parent=0 // pred_region
    _
  $region17: #{unet2d_forward.45} parent=0 // pred_fallthru
    _
  // Predicated region
  $region18: #{unet2d_forward.45} parent=0 // pred_check
    _
  $region19: #{unet2d_forward.45} parent=0 // pred_check_branch
    %19 = sbr.rel (0) target = $region21
  $region20: #{unet2d_forward.45} parent=0 // pred_region
    _
  $region21: #{unet2d_forward.45} parent=0 // pred_fallthru
    _
  %v21 = vld [vmem:[%s0] sm:$0xff]
  %v22 = vld [vmem:[%s0 + $0x8] sm:$0xf]
  %v23 = vld [vmem:[%s0 + $0xc] sm:$0xff]
  %v24 = vld [vmem:[%s0 + $0x14] sm:$0xf]
  %v25 = vld [vmem:[%s0 + $0x18] sm:$0xff]
  %v26 = vld [vmem:[%s0 + $0x20] sm:$0xf]
  %v27 = vld [vmem:[%s0 + $0x24] sm:$0xff]
  %v28 = vld [vmem:[%s0 + $0x2c] sm:$0xf]
  %v29 = vld [vmem:[%s0 + $0x30] sm:$0xff]
  %v30 = vld [vmem:[%s0 + $0x38] sm:$0xf]
  %v31 = vld [vmem:[%s0 + $0x3c] sm:$0xff]
  %v32 = vld [vmem:[%s0 + $0x44] sm:$0xf]
  %v33 = vld [vmem:[%s0 + $0x48] sm:$0xff]
  %v34 = vld [vmem:[%s0 + $0x50] sm:$0xf]
  %v35 = vld [vmem:[%s0 + $0x54] sm:$0xff]
  %v36 = vld [vmem:[%s0 + $0x5c] sm:$0xf]
  %v37 = vld [vmem:[%s0 + $0x60] sm:$0xff]
  %v38 = vld [vmem:[%s0 + $0x68] sm:$0xf]
  %v39 = vld [vmem:[%s0 + $0x6c] sm:$0xff]
  %v40 = vld [vmem:[%s0 + $0x74] sm:$0xf]
  %v41 = vld [vmem:[%s0 + $0x78] sm:$0xff]
  %v42 = vld [vmem:[%s0 + $0x80] sm:$0xf]
  %v43 = vld [vmem:[%s0 + $0x84] sm:$0xff]
  %v44 = vld [vmem:[%s0 + $0x8c] sm:$0xf]
  %v45 = vld [vmem:[%s0 + $0x90] sm:$0xff]
  %v46 = vld [vmem:[%s0 + $0x98] sm:$0xf]
  %v47 = vld [vmem:[%s0 + $0x9c] sm:$0xff]
  %v48 = vld [vmem:[%s0 + $0xa4] sm:$0xf]
  %v49 = vld [vmem:[%s0 + $0xa8] sm:$0xff]
  %v50 = vld [vmem:[%s0 + $0xb0] sm:$0xf]
  %v51 = vld [vmem:[%s0 + $0xb4] sm:$0xff]
  %v52 = vld [vmem:[%s0 + $0xbc] sm:$0xf]
  %v53 = vld [vmem:[%s2] sm:$0xf]
  %v54 = vld [vmem:[%s2 + $0x4] sm:$0xf]
  %v55 = vld [vmem:[%s2 + $0x8] sm:$0xf]
  %v56 = vld [vmem:[%s2 + $0xc] sm:$0xf]
  %v57 = vld [vmem:[%s2 + $0x10] sm:$0xf]
  %v58 = vld [vmem:[%s2 + $0x14] sm:$0xf]
  %v59 = vld [vmem:[%s2 + $0x18] sm:$0xf]
  %v60 = vld [vmem:[%s2 + $0x1c] sm:$0xf]
  %v61 = vld [vmem:[%s2 + $0x20] sm:$0xf]
  %v62 = vld [vmem:[%s2 + $0x24] sm:$0xf]
  %v63 = vld [vmem:[%s2 + $0x28] sm:$0xf]
  %v64 = vld [vmem:[%s2 + $0x2c] sm:$0xf]
  %v65 = vld [vmem:[%s2 + $0x30] sm:$0xf]
  %v66 = vld [vmem:[%s2 + $0x34] sm:$0xf]
  %v67 = vld [vmem:[%s2 + $0x38] sm:$0xf]
  %v68 = vld [vmem:[%s2 + $0x3c] sm:$0xf]
  %v69 = vld [vmem:[%s2 + $0x40] sm:$0xf]
  %v70 = vld [vmem:[%s2 + $0x44] sm:$0xf]
  %v71 = vld [vmem:[%s2 + $0x48] sm:$0xf]
  %v72 = vld [vmem:[%s2 + $0x4c] sm:$0xf]
  %v73 = vld [vmem:[%s2 + $0x50] sm:$0xf]
  %v74 = vld [vmem:[%s2 + $0x54] sm:$0xf]
  %v75 = vld [vmem:[%s2 + $0x58] sm:$0xf]
  %v76 = vld [vmem:[%s2 + $0x5c] sm:$0xf]
  %v77 = vld [vmem:[%s2 + $0x60] sm:$0xf]
  %v78 = vld [vmem:[%s2 + $0x64] sm:$0xf]
  %v79 = vld [vmem:[%s2 + $0x68] sm:$0xf]
  %v80 = vld [vmem:[%s2 + $0x6c] sm:$0xf]
  %v81 = vld [vmem:[%s2 + $0x70] sm:$0xf]
  %v82 = vld [vmem:[%s2 + $0x74] sm:$0xf]
  %v83 = vld [vmem:[%s2 + $0x78] sm:$0xf]
  %v84 = vld [vmem:[%s2 + $0x7c] sm:$0xf]
  %v85 = vld [vmem:[%s2 + $0x80] sm:$0xf]
  %v86 = vld [vmem:[%s2 + $0x84] sm:$0xf]
  %v87 = vld [vmem:[%s2 + $0x88] sm:$0xf]
  %v88 = vld [vmem:[%s2 + $0x8c] sm:$0xf]
  %v89 = vld [vmem:[%s1] sm:$0xff]
  %v90 = vld [vmem:[%s1 + $0x8] sm:$0xf]
  %v91 = vld [vmem:[%s1 + $0xc] sm:$0xff]
  %v92 = vld [vmem:[%s1 + $0x14] sm:$0xf]
  %v93 = vld [vmem:[%s1 + $0x18] sm:$0xff]
  %v94 = vld [vmem:[%s1 + $0x20] sm:$0xf]
  %v95 = vld [vmem:[%s1 + $0x24] sm:$0xff]
  %v96 = vld [vmem:[%s1 + $0x2c] sm:$0xf]
  %v97 = vld [vmem:[%s1 + $0x30] sm:$0xff]
  %v98 = vld [vmem:[%s1 + $0x38] sm:$0xf]
  %v99 = vld [vmem:[%s1 + $0x3c] sm:$0xff]
  %v100 = vld [vmem:[%s1 + $0x44] sm:$0xf]
  %v101 = vld [vmem:[%s1 + $0x48] sm:$0xff]
  %v102 = vld [vmem:[%s1 + $0x50] sm:$0xf]
  %v103 = vld [vmem:[%s1 + $0x54] sm:$0xff]
  %v104 = vld [vmem:[%s1 + $0x5c] sm:$0xf]
  %v105 = vld [vmem:[%s1 + $0x60] sm:$0xff]
  %v106 = vld [vmem:[%s1 + $0x68] sm:$0xf]
  %v107 = vld [vmem:[%s1 + $0x6c] sm:$0xff]
  %v108 = vld [vmem:[%s1 + $0x74] sm:$0xf]
  %v109 = vld [vmem:[%s1 + $0x78] sm:$0xff]
  %v110 = vld [vmem:[%s1 + $0x80] sm:$0xf]
  %v111 = vld [vmem:[%s1 + $0x84] sm:$0xff]
  %v112 = vld [vmem:[%s1 + $0x8c] sm:$0xf]
  %v113 = vld [vmem:[%s1 + $0x90] sm:$0xff]
  %v114 = vld [vmem:[%s1 + $0x98] sm:$0xf]
  %v115 = vld [vmem:[%s1 + $0x9c] sm:$0xff]
  %v116 = vld [vmem:[%s1 + $0xa4] sm:$0xf]
  %v117 = vld [vmem:[%s1 + $0xa8] sm:$0xff]
  %v118 = vld [vmem:[%s1 + $0xb0] sm:$0xf]
  %v119 = vld [vmem:[%s1 + $0xb4] sm:$0xff]
  %v120 = vld [vmem:[%s1 + $0xbc] sm:$0xf]
  %v121 = vld [vmem:[%s3] sm:$0xf]
  %v122 = vld [vmem:[%s3 + $0x4] sm:$0xf]
  %v123 = vld [vmem:[%s3 + $0x8] sm:$0xf]
  %v124 = vld [vmem:[%s3 + $0xc] sm:$0xf]
  %v125 = vld [vmem:[%s3 + $0x10] sm:$0xf]
  %v126 = vld [vmem:[%s3 + $0x14] sm:$0xf]
  %v127 = vld [vmem:[%s3 + $0x18] sm:$0xf]
  %v128 = vld [vmem:[%s3 + $0x1c] sm:$0xf]
  %v129 = vld [vmem:[%s3 + $0x20] sm:$0xf]
  %v130 = vld [vmem:[%s3 + $0x24] sm:$0xf]
  %v131 = vld [vmem:[%s3 + $0x28] sm:$0xf]
  %v132 = vld [vmem:[%s3 + $0x2c] sm:$0xf]
  %v133 = vld [vmem:[%s3 + $0x30] sm:$0xf]
  %v134 = vld [vmem:[%s3 + $0x34] sm:$0xf]
  %v135 = vld [vmem:[%s3 + $0x38] sm:$0xf]
  %v136 = vld [vmem:[%s3 + $0x3c] sm:$0xf]
  %v137 = vld [vmem:[%s3 + $0x40] sm:$0xf]
  %v138 = vld [vmem:[%s3 + $0x44] sm:$0xf]
  %v139 = vld [vmem:[%s3 + $0x48] sm:$0xf]
  %v140 = vld [vmem:[%s3 + $0x4c] sm:$0xf]
  %v141 = vld [vmem:[%s3 + $0x50] sm:$0xf]
  %v142 = vld [vmem:[%s3 + $0x54] sm:$0xf]
  %v143 = vld [vmem:[%s3 + $0x58] sm:$0xf]
  %v144 = vld [vmem:[%s3 + $0x5c] sm:$0xf]
  %v145 = vld [vmem:[%s3 + $0x60] sm:$0xf]
  %v146 = vld [vmem:[%s3 + $0x64] sm:$0xf]
  %v147 = vld [vmem:[%s3 + $0x68] sm:$0xf]
  %v148 = vld [vmem:[%s3 + $0x6c] sm:$0xf]
  %v149 = vld [vmem:[%s3 + $0x70] sm:$0xf]
  %v150 = vld [vmem:[%s3 + $0x74] sm:$0xf]
  %v151 = vld [vmem:[%s3 + $0x78] sm:$0xf]
  %v152 = vld [vmem:[%s3 + $0x7c] sm:$0xf]
  %v153 = vld [vmem:[%s3 + $0x80] sm:$0xf]
  %v154 = vld [vmem:[%s3 + $0x84] sm:$0xf]
  %v155 = vld [vmem:[%s3 + $0x88] sm:$0xf]
  %v156 = vld [vmem:[%s3 + $0x8c] sm:$0xf]
  %v189 = vunpack.c.l.b16 %v89
  %v190 = vunpack.c.h.b16 %v89
  %v191 = vunpack.c.l.b16 %v90
  %v192 = vunpack.c.l.b16 %v91
  %v193 = vunpack.c.h.b16 %v91
  %v194 = vunpack.c.l.b16 %v92
  %v195 = vunpack.c.l.b16 %v93
  %v196 = vunpack.c.h.b16 %v93
  %v197 = vunpack.c.l.b16 %v94
  %v198 = vunpack.c.l.b16 %v95
  %v199 = vunpack.c.h.b16 %v95
  %v200 = vunpack.c.l.b16 %v96
  %v201 = vunpack.c.l.b16 %v97
  %v202 = vunpack.c.h.b16 %v97
  %v203 = vunpack.c.l.b16 %v98
  %v204 = vunpack.c.l.b16 %v99
  %v205 = vunpack.c.h.b16 %v99
  %v206 = vunpack.c.l.b16 %v100
  %v207 = vunpack.c.l.b16 %v101
  %v208 = vunpack.c.h.b16 %v101
  %v209 = vunpack.c.l.b16 %v102
  %v210 = vunpack.c.l.b16 %v103
  %v211 = vunpack.c.h.b16 %v103
  %v212 = vunpack.c.l.b16 %v104
  %v213 = vunpack.c.l.b16 %v105
  %v214 = vunpack.c.h.b16 %v105
  %v215 = vunpack.c.l.b16 %v106
  %v216 = vunpack.c.l.b16 %v107
  %v217 = vunpack.c.h.b16 %v107
  %v218 = vunpack.c.l.b16 %v108
  %v219 = vunpack.c.l.b16 %v109
  %v220 = vunpack.c.h.b16 %v109
  %v221 = vunpack.c.l.b16 %v110
  %v222 = vunpack.c.l.b16 %v111
  %v223 = vunpack.c.h.b16 %v111
  %v224 = vunpack.c.l.b16 %v112
  %v225 = vunpack.c.l.b16 %v113
  %v226 = vunpack.c.h.b16 %v113
  %v227 = vunpack.c.l.b16 %v114
  %v228 = vunpack.c.l.b16 %v115
  %v229 = vunpack.c.h.b16 %v115
  %v230 = vunpack.c.l.b16 %v116
  %v231 = vunpack.c.l.b16 %v117
  %v232 = vunpack.c.h.b16 %v117
  %v233 = vunpack.c.l.b16 %v118
  %v234 = vunpack.c.l.b16 %v119
  %v235 = vunpack.c.h.b16 %v119
  %v236 = vunpack.c.l.b16 %v120
  %v237 = vpack.c.b16 %v192, %v189
  %v238 = vpack.c.b16 %v193, %v190
  %v239 = vpack.c.b16 %v194, %v191
  %v240 = vpack.c.b16 %v198, %v195
  %v241 = vpack.c.b16 %v199, %v196
  %v242 = vpack.c.b16 %v200, %v197
  %v243 = vpack.c.b16 %v204, %v201
  %v244 = vpack.c.b16 %v205, %v202
  %v245 = vpack.c.b16 %v206, %v203
  %v246 = vpack.c.b16 %v210, %v207
  %v247 = vpack.c.b16 %v211, %v208
  %v248 = vpack.c.b16 %v212, %v209
  %v249 = vpack.c.b16 %v216, %v213
  %v250 = vpack.c.b16 %v217, %v214
  %v251 = vpack.c.b16 %v218, %v215
  %v252 = vpack.c.b16 %v222, %v219
  %v253 = vpack.c.b16 %v223, %v220
  %v254 = vpack.c.b16 %v224, %v221
  %v255 = vpack.c.b16 %v228, %v225
  %v256 = vpack.c.b16 %v229, %v226
  %v257 = vpack.c.b16 %v230, %v227
  %v258 = vpack.c.b16 %v234, %v231
  %v259 = vpack.c.b16 %v235, %v232
  %v260 = vpack.c.b16 %v236, %v233
  %v313 = vunpack.c.l.b16 %v121
  %v314 = vunpack.c.l.b16 %v122
  %v315 = vunpack.c.l.b16 %v123
  %v316 = vunpack.c.l.b16 %v124
  %v317 = vunpack.c.l.b16 %v125
  %v318 = vunpack.c.l.b16 %v126
  %v319 = vunpack.c.l.b16 %v127
  %v320 = vunpack.c.l.b16 %v128
  %v321 = vunpack.c.l.b16 %v129
  %v322 = vunpack.c.l.b16 %v130
  %v323 = vunpack.c.l.b16 %v131
  %v324 = vunpack.c.l.b16 %v132
  %v325 = vunpack.c.l.b16 %v133
  %v326 = vunpack.c.l.b16 %v134
  %v327 = vunpack.c.l.b16 %v135
  %v328 = vunpack.c.l.b16 %v136
  %v329 = vunpack.c.l.b16 %v137
  %v330 = vunpack.c.l.b16 %v138
  %v331 = vunpack.c.l.b16 %v139
  %v332 = vunpack.c.l.b16 %v140
  %v333 = vunpack.c.l.b16 %v141
  %v334 = vunpack.c.l.b16 %v142
  %v335 = vunpack.c.l.b16 %v143
  %v336 = vunpack.c.l.b16 %v144
  %v337 = vunpack.c.l.b16 %v145
  %v338 = vunpack.c.l.b16 %v146
  %v339 = vunpack.c.l.b16 %v147
  %v340 = vunpack.c.l.b16 %v148
  %v341 = vunpack.c.l.b16 %v149
  %v342 = vunpack.c.l.b16 %v150
  %v343 = vunpack.c.l.b16 %v151
  %v344 = vunpack.c.l.b16 %v152
  %v345 = vunpack.c.l.b16 %v153
  %v346 = vunpack.c.l.b16 %v154
  %v347 = vunpack.c.l.b16 %v155
  %v348 = vunpack.c.l.b16 %v156
  %v349 = vpack.c.b16 %v314, %v313
  %v350 = vpack.c.b16 %v316, %v315
  %v351 = vpack.c.b16 %v318, %v317
  %v352 = vpack.c.b16 %v320, %v319
  %v353 = vpack.c.b16 %v322, %v321
  %v354 = vpack.c.b16 %v324, %v323
  %v355 = vpack.c.b16 %v326, %v325
  %v356 = vpack.c.b16 %v328, %v327
  %v357 = vpack.c.b16 %v330, %v329
  %v358 = vpack.c.b16 %v332, %v331
  %v359 = vpack.c.b16 %v334, %v333
  %v360 = vpack.c.b16 %v336, %v335
  %v361 = vpack.c.b16 %v338, %v337
  %v362 = vpack.c.b16 %v340, %v339
  %v363 = vpack.c.b16 %v342, %v341
  %v364 = vpack.c.b16 %v344, %v343
  %v365 = vpack.c.b16 %v346, %v345
  %v366 = vpack.c.b16 %v348, %v347
  %vm385 = vcmask 261120
  %v387 = vsel %vm385, %v239, 0
  %v390 = vsel %vm385, %v242, 0
  %v393 = vsel %vm385, %v245, 0
  %v396 = vsel %vm385, %v248, 0
  %v399 = vsel %vm385, %v251, 0
  %v402 = vsel %vm385, %v254, 0
  %v405 = vsel %vm385, %v257, 0
  %v408 = vsel %vm385, %v260, 0
  %410 = vmatpush.bf16.msra.mxu0 %v356
  %411 = vmatpush.bf16.msra.mxu0 %v355
  %412 = vmatpush.bf16.msra.mxu0 %v354
  %413 = vmatpush.bf16.msra.mxu0 %v353
  %414 = vmatpush.bf16.msra.mxu0 %v352
  %415 = vmatpush.bf16.msra.mxu0 %v351
  %416 = vmatpush.bf16.msra.mxu0 %v350
  %417 = vmatpush.bf16.msra.mxu0 %v349
  %418 = vmatmul.bf16.gmra.mxu0 %v237
  %v419 = vpop.f32.mrf.mxu0
  %v420 = vadd.f32 0.0, %v419
  %v421 = vpop.f32.mrf.mxu0
  %v422 = vadd.f32 0.0, %v421
  %423 = vmatmul.bf16.gmra.mxu0 %v240
  %v424 = vpop.f32.mrf.mxu0
  %v425 = vadd.f32 0.0, %v424
  %v426 = vpop.f32.mrf.mxu0
  %v427 = vadd.f32 0.0, %v426
  %428 = vmatmul.bf16.gmra.mxu0 %v243
  %v429 = vpop.f32.mrf.mxu0
  %v430 = vadd.f32 0.0, %v429
  %v431 = vpop.f32.mrf.mxu0
  %v432 = vadd.f32 0.0, %v431
  %433 = vmatmul.bf16.gmra.mxu0 %v246
  %v434 = vpop.f32.mrf.mxu0
  %v435 = vadd.f32 0.0, %v434
  %v436 = vpop.f32.mrf.mxu0
  %v437 = vadd.f32 0.0, %v436
  %438 = vmatmul.bf16.gmra.mxu0 %v249
  %v439 = vpop.f32.mrf.mxu0
  %v440 = vadd.f32 0.0, %v439
  %v441 = vpop.f32.mrf.mxu0
  %v442 = vadd.f32 0.0, %v441
  %443 = vmatmul.bf16.gmra.mxu0 %v252
  %v444 = vpop.f32.mrf.mxu0
  %v445 = vadd.f32 0.0, %v444
  %v446 = vpop.f32.mrf.mxu0
  %v447 = vadd.f32 0.0, %v446
  %448 = vmatmul.bf16.gmra.mxu0 %v255
  %v449 = vpop.f32.mrf.mxu0
  %v450 = vadd.f32 0.0, %v449
  %v451 = vpop.f32.mrf.mxu0
  %v452 = vadd.f32 0.0, %v451
  %453 = vmatmul.bf16.gmra.mxu0 %v258
  %v454 = vpop.f32.mrf.mxu0
  %v455 = vadd.f32 0.0, %v454
  %v456 = vpop.f32.mrf.mxu0
  %v457 = vadd.f32 0.0, %v456
  %458 = vdwg.mxu0
  %459 = vmatpush.bf16.msra.mxu0 %v364
  %460 = vmatpush.bf16.msra.mxu0 %v363
  %461 = vmatpush.bf16.msra.mxu0 %v362
  %462 = vmatpush.bf16.msra.mxu0 %v361
  %463 = vmatpush.bf16.msra.mxu0 %v360
  %464 = vmatpush.bf16.msra.mxu0 %v359
  %465 = vmatpush.bf16.msra.mxu0 %v358
  %466 = vmatpush.bf16.msra.mxu0 %v357
  %467 = vmatmul.bf16.gmra.mxu0 %v238
  %v468 = vpop.f32.mrf.mxu0
  %v469 = vadd.f32 %v420, %v468
  %v470 = vpop.f32.mrf.mxu0
  %v471 = vadd.f32 %v422, %v470
  %472 = vmatmul.bf16.gmra.mxu0 %v241
  %v473 = vpop.f32.mrf.mxu0
  %v474 = vadd.f32 %v425, %v473
  %v475 = vpop.f32.mrf.mxu0
  %v476 = vadd.f32 %v427, %v475
  %477 = vmatmul.bf16.gmra.mxu0 %v244
  %v478 = vpop.f32.mrf.mxu0
  %v479 = vadd.f32 %v430, %v478
  %v480 = vpop.f32.mrf.mxu0
  %v481 = vadd.f32 %v432, %v480
  %482 = vmatmul.bf16.gmra.mxu0 %v247
  %v483 = vpop.f32.mrf.mxu0
  %v484 = vadd.f32 %v435, %v483
  %v485 = vpop.f32.mrf.mxu0
  %v486 = vadd.f32 %v437, %v485
  %487 = vmatmul.bf16.gmra.mxu0 %v250
  %v488 = vpop.f32.mrf.mxu0
  %v489 = vadd.f32 %v440, %v488
  %v490 = vpop.f32.mrf.mxu0
  %v491 = vadd.f32 %v442, %v490
  %492 = vmatmul.bf16.gmra.mxu0 %v253
  %v493 = vpop.f32.mrf.mxu0
  %v494 = vadd.f32 %v445, %v493
  %v495 = vpop.f32.mrf.mxu0
  %v496 = vadd.f32 %v447, %v495
  %497 = vmatmul.bf16.gmra.mxu0 %v256
  %v498 = vpop.f32.mrf.mxu0
  %v499 = vadd.f32 %v450, %v498
  %v500 = vpop.f32.mrf.mxu0
  %v501 = vadd.f32 %v452, %v500
  %502 = vmatmul.bf16.gmra.mxu0 %v259
  %v503 = vpop.f32.mrf.mxu0
  %v504 = vadd.f32 %v455, %v503
  %v505 = vpop.f32.mrf.mxu0
  %v506 = vadd.f32 %v457, %v505
  %507 = vdwg.mxu0
  %508 = vmatpush.bf16.msra.mxu0 0
  %509 = vmatpush.bf16.msra.mxu0 0
  %510 = vmatpush.bf16.msra.mxu0 0
  %511 = vmatpush.bf16.msra.mxu0 0
  %512 = vmatpush.bf16.msra.mxu0 0
  %513 = vmatpush.bf16.msra.mxu0 0
  %514 = vmatpush.bf16.msra.mxu0 %v366
  %515 = vmatpush.bf16.msra.mxu0 %v365
  %516 = vmatmul.bf16.gmra.mxu0 %v387
  %v517 = vpop.f32.mrf.mxu0
  %v518 = vadd.f32 %v469, %v517
  %v519 = vpop.f32.mrf.mxu0
  %v520 = vadd.f32 %v471, %v519
  %521 = vmatmul.bf16.gmra.mxu0 %v390
  %v522 = vpop.f32.mrf.mxu0
  %v523 = vadd.f32 %v474, %v522
  %v524 = vpop.f32.mrf.mxu0
  %v525 = vadd.f32 %v476, %v524
  %526 = vmatmul.bf16.gmra.mxu0 %v393
  %v527 = vpop.f32.mrf.mxu0
  %v528 = vadd.f32 %v479, %v527
  %v529 = vpop.f32.mrf.mxu0
  %v530 = vadd.f32 %v481, %v529
  %531 = vmatmul.bf16.gmra.mxu0 %v396
  %v532 = vpop.f32.mrf.mxu0
  %v533 = vadd.f32 %v484, %v532
  %v534 = vpop.f32.mrf.mxu0
  %v535 = vadd.f32 %v486, %v534
  %536 = vmatmul.bf16.gmra.mxu0 %v399
  %v537 = vpop.f32.mrf.mxu0
  %v538 = vadd.f32 %v489, %v537
  %v539 = vpop.f32.mrf.mxu0
  %v540 = vadd.f32 %v491, %v539
  %541 = vmatmul.bf16.gmra.mxu0 %v402
  %v542 = vpop.f32.mrf.mxu0
  %v543 = vadd.f32 %v494, %v542
  %v544 = vpop.f32.mrf.mxu0
  %v545 = vadd.f32 %v496, %v544
  %546 = vmatmul.bf16.gmra.mxu0 %v405
  %v547 = vpop.f32.mrf.mxu0
  %v548 = vadd.f32 %v499, %v547
  %v549 = vpop.f32.mrf.mxu0
  %v550 = vadd.f32 %v501, %v549
  %551 = vmatmul.bf16.gmra.mxu0 %v408
  %v552 = vpop.f32.mrf.mxu0
  %v553 = vadd.f32 %v504, %v552
  %v554 = vpop.f32.mrf.mxu0
  %v555 = vadd.f32 %v506, %v554
  %556 = vdwg.mxu0
  %v589 = vunpack.c.l.b16 %v21
  %v590 = vunpack.c.h.b16 %v21
  %v591 = vunpack.c.l.b16 %v22
  %v592 = vunpack.c.l.b16 %v23
  %v593 = vunpack.c.h.b16 %v23
  %v594 = vunpack.c.l.b16 %v24
  %v595 = vunpack.c.l.b16 %v25
  %v596 = vunpack.c.h.b16 %v25
  %v597 = vunpack.c.l.b16 %v26
  %v598 = vunpack.c.l.b16 %v27
  %v599 = vunpack.c.h.b16 %v27
  %v600 = vunpack.c.l.b16 %v28
  %v601 = vunpack.c.l.b16 %v29
  %v602 = vunpack.c.h.b16 %v29
  %v603 = vunpack.c.l.b16 %v30
  %v604 = vunpack.c.l.b16 %v31
  %v605 = vunpack.c.h.b16 %v31
  %v606 = vunpack.c.l.b16 %v32
  %v607 = vunpack.c.l.b16 %v33
  %v608 = vunpack.c.h.b16 %v33
  %v609 = vunpack.c.l.b16 %v34
  %v610 = vunpack.c.l.b16 %v35
  %v611 = vunpack.c.h.b16 %v35
  %v612 = vunpack.c.l.b16 %v36
  %v613 = vunpack.c.l.b16 %v37
  %v614 = vunpack.c.h.b16 %v37
  %v615 = vunpack.c.l.b16 %v38
  %v616 = vunpack.c.l.b16 %v39
  %v617 = vunpack.c.h.b16 %v39
  %v618 = vunpack.c.l.b16 %v40
  %v619 = vunpack.c.l.b16 %v41
  %v620 = vunpack.c.h.b16 %v41
  %v621 = vunpack.c.l.b16 %v42
  %v622 = vunpack.c.l.b16 %v43
  %v623 = vunpack.c.h.b16 %v43
  %v624 = vunpack.c.l.b16 %v44
  %v625 = vunpack.c.l.b16 %v45
  %v626 = vunpack.c.h.b16 %v45
  %v627 = vunpack.c.l.b16 %v46
  %v628 = vunpack.c.l.b16 %v47
  %v629 = vunpack.c.h.b16 %v47
  %v630 = vunpack.c.l.b16 %v48
  %v631 = vunpack.c.l.b16 %v49
  %v632 = vunpack.c.h.b16 %v49
  %v633 = vunpack.c.l.b16 %v50
  %v634 = vunpack.c.l.b16 %v51
  %v635 = vunpack.c.h.b16 %v51
  %v636 = vunpack.c.l.b16 %v52
  %v637 = vpack.c.b16 %v592, %v589
  %v638 = vpack.c.b16 %v593, %v590
  %v639 = vpack.c.b16 %v594, %v591
  %v640 = vpack.c.b16 %v598, %v595
  %v641 = vpack.c.b16 %v599, %v596
  %v642 = vpack.c.b16 %v600, %v597
  %v643 = vpack.c.b16 %v604, %v601
  %v644 = vpack.c.b16 %v605, %v602
  %v645 = vpack.c.b16 %v606, %v603
  %v646 = vpack.c.b16 %v610, %v607
  %v647 = vpack.c.b16 %v611, %v608
  %v648 = vpack.c.b16 %v612, %v609
  %v649 = vpack.c.b16 %v616, %v613
  %v650 = vpack.c.b16 %v617, %v614
  %v651 = vpack.c.b16 %v618, %v615
  %v652 = vpack.c.b16 %v622, %v619
  %v653 = vpack.c.b16 %v623, %v620
  %v654 = vpack.c.b16 %v624, %v621
  %v655 = vpack.c.b16 %v628, %v625
  %v656 = vpack.c.b16 %v629, %v626
  %v657 = vpack.c.b16 %v630, %v627
  %v658 = vpack.c.b16 %v634, %v631
  %v659 = vpack.c.b16 %v635, %v632
  %v660 = vpack.c.b16 %v636, %v633
  %v713 = vunpack.c.l.b16 %v53
  %v714 = vunpack.c.l.b16 %v54
  %v715 = vunpack.c.l.b16 %v55
  %v716 = vunpack.c.l.b16 %v56
  %v717 = vunpack.c.l.b16 %v57
  %v718 = vunpack.c.l.b16 %v58
  %v719 = vunpack.c.l.b16 %v59
  %v720 = vunpack.c.l.b16 %v60
  %v721 = vunpack.c.l.b16 %v61
  %v722 = vunpack.c.l.b16 %v62
  %v723 = vunpack.c.l.b16 %v63
  %v724 = vunpack.c.l.b16 %v64
  %v725 = vunpack.c.l.b16 %v65
  %v726 = vunpack.c.l.b16 %v66
  %v727 = vunpack.c.l.b16 %v67
  %v728 = vunpack.c.l.b16 %v68
  %v729 = vunpack.c.l.b16 %v69
  %v730 = vunpack.c.l.b16 %v70
  %v731 = vunpack.c.l.b16 %v71
  %v732 = vunpack.c.l.b16 %v72
  %v733 = vunpack.c.l.b16 %v73
  %v734 = vunpack.c.l.b16 %v74
  %v735 = vunpack.c.l.b16 %v75
  %v736 = vunpack.c.l.b16 %v76
  %v737 = vunpack.c.l.b16 %v77
  %v738 = vunpack.c.l.b16 %v78
  %v739 = vunpack.c.l.b16 %v79
  %v740 = vunpack.c.l.b16 %v80
  %v741 = vunpack.c.l.b16 %v81
  %v742 = vunpack.c.l.b16 %v82
  %v743 = vunpack.c.l.b16 %v83
  %v744 = vunpack.c.l.b16 %v84
  %v745 = vunpack.c.l.b16 %v85
  %v746 = vunpack.c.l.b16 %v86
  %v747 = vunpack.c.l.b16 %v87
  %v748 = vunpack.c.l.b16 %v88
  %v749 = vpack.c.b16 %v714, %v713
  %v750 = vpack.c.b16 %v716, %v715
  %v751 = vpack.c.b16 %v718, %v717
  %v752 = vpack.c.b16 %v720, %v719
  %v753 = vpack.c.b16 %v722, %v721
  %v754 = vpack.c.b16 %v724, %v723
  %v755 = vpack.c.b16 %v726, %v725
  %v756 = vpack.c.b16 %v728, %v727
  %v757 = vpack.c.b16 %v730, %v729
  %v758 = vpack.c.b16 %v732, %v731
  %v759 = vpack.c.b16 %v734, %v733
  %v760 = vpack.c.b16 %v736, %v735
  %v761 = vpack.c.b16 %v738, %v737
  %v762 = vpack.c.b16 %v740, %v739
  %v763 = vpack.c.b16 %v742, %v741
  %v764 = vpack.c.b16 %v744, %v743
  %v765 = vpack.c.b16 %v746, %v745
  %v766 = vpack.c.b16 %v748, %v747
  %v786 = vsel %vm385, %v639, 0
  %v789 = vsel %vm385, %v642, 0
  %v792 = vsel %vm385, %v645, 0
  %v795 = vsel %vm385, %v648, 0
  %v798 = vsel %vm385, %v651, 0
  %v801 = vsel %vm385, %v654, 0
  %v804 = vsel %vm385, %v657, 0
  %v807 = vsel %vm385, %v660, 0
  %809 = vmatpush.bf16.msra.mxu0 %v756
  %810 = vmatpush.bf16.msra.mxu0 %v755
  %811 = vmatpush.bf16.msra.mxu0 %v754
  %812 = vmatpush.bf16.msra.mxu0 %v753
  %813 = vmatpush.bf16.msra.mxu0 %v752
  %814 = vmatpush.bf16.msra.mxu0 %v751
  %815 = vmatpush.bf16.msra.mxu0 %v750
  %816 = vmatpush.bf16.msra.mxu0 %v749
  %817 = vmatmul.bf16.gmra.mxu0 %v637
  %v818 = vpop.f32.mrf.mxu0
  %v819 = vadd.f32 %v518, %v818
  %v820 = vpop.f32.mrf.mxu0
  %v821 = vadd.f32 %v520, %v820
  %822 = vmatmul.bf16.gmra.mxu0 %v640
  %v823 = vpop.f32.mrf.mxu0
  %v824 = vadd.f32 %v523, %v823
  %v825 = vpop.f32.mrf.mxu0
  %v826 = vadd.f32 %v525, %v825
  %827 = vmatmul.bf16.gmra.mxu0 %v643
  %v828 = vpop.f32.mrf.mxu0
  %v829 = vadd.f32 %v528, %v828
  %v830 = vpop.f32.mrf.mxu0
  %v831 = vadd.f32 %v530, %v830
  %832 = vmatmul.bf16.gmra.mxu0 %v646
  %v833 = vpop.f32.mrf.mxu0
  %v834 = vadd.f32 %v533, %v833
  %v835 = vpop.f32.mrf.mxu0
  %v836 = vadd.f32 %v535, %v835
  %837 = vmatmul.bf16.gmra.mxu0 %v649
  %v838 = vpop.f32.mrf.mxu0
  %v839 = vadd.f32 %v538, %v838
  %v840 = vpop.f32.mrf.mxu0
  %v841 = vadd.f32 %v540, %v840
  %842 = vmatmul.bf16.gmra.mxu0 %v652
  %v843 = vpop.f32.mrf.mxu0
  %v844 = vadd.f32 %v543, %v843
  %v845 = vpop.f32.mrf.mxu0
  %v846 = vadd.f32 %v545, %v845
  %847 = vmatmul.bf16.gmra.mxu0 %v655
  %v848 = vpop.f32.mrf.mxu0
  %v849 = vadd.f32 %v548, %v848
  %v850 = vpop.f32.mrf.mxu0
  %v851 = vadd.f32 %v550, %v850
  %852 = vmatmul.bf16.gmra.mxu0 %v658
  %v853 = vpop.f32.mrf.mxu0
  %v854 = vadd.f32 %v553, %v853
  %v855 = vpop.f32.mrf.mxu0
  %v856 = vadd.f32 %v555, %v855
  %857 = vdwg.mxu0
  %858 = vmatpush.bf16.msra.mxu0 %v764
  %859 = vmatpush.bf16.msra.mxu0 %v763
  %860 = vmatpush.bf16.msra.mxu0 %v762
  %861 = vmatpush.bf16.msra.mxu0 %v761
  %862 = vmatpush.bf16.msra.mxu0 %v760
  %863 = vmatpush.bf16.msra.mxu0 %v759
  %864 = vmatpush.bf16.msra.mxu0 %v758
  %865 = vmatpush.bf16.msra.mxu0 %v757
  %866 = vmatmul.bf16.gmra.mxu0 %v638
  %v867 = vpop.f32.mrf.mxu0
  %v868 = vadd.f32 %v819, %v867
  %v869 = vpop.f32.mrf.mxu0
  %v870 = vadd.f32 %v821, %v869
  %871 = vmatmul.bf16.gmra.mxu0 %v641
  %v872 = vpop.f32.mrf.mxu0
  %v873 = vadd.f32 %v824, %v872
  %v874 = vpop.f32.mrf.mxu0
  %v875 = vadd.f32 %v826, %v874
  %876 = vmatmul.bf16.gmra.mxu0 %v644
  %v877 = vpop.f32.mrf.mxu0
  %v878 = vadd.f32 %v829, %v877
  %v879 = vpop.f32.mrf.mxu0
  %v880 = vadd.f32 %v831, %v879
  %881 = vmatmul.bf16.gmra.mxu0 %v647
  %v882 = vpop.f32.mrf.mxu0
  %v883 = vadd.f32 %v834, %v882
  %v884 = vpop.f32.mrf.mxu0
  %v885 = vadd.f32 %v836, %v884
  %886 = vmatmul.bf16.gmra.mxu0 %v650
  %v887 = vpop.f32.mrf.mxu0
  %v888 = vadd.f32 %v839, %v887
  %v889 = vpop.f32.mrf.mxu0
  %v890 = vadd.f32 %v841, %v889
  %891 = vmatmul.bf16.gmra.mxu0 %v653
  %v892 = vpop.f32.mrf.mxu0
  %v893 = vadd.f32 %v844, %v892
  %v894 = vpop.f32.mrf.mxu0
  %v895 = vadd.f32 %v846, %v894
  %896 = vmatmul.bf16.gmra.mxu0 %v656
  %v897 = vpop.f32.mrf.mxu0
  %v898 = vadd.f32 %v849, %v897
  %v899 = vpop.f32.mrf.mxu0
  %v900 = vadd.f32 %v851, %v899
  %901 = vmatmul.bf16.gmra.mxu0 %v659
  %v902 = vpop.f32.mrf.mxu0
  %v903 = vadd.f32 %v854, %v902
  %v904 = vpop.f32.mrf.mxu0
  %v905 = vadd.f32 %v856, %v904
  %906 = vdwg.mxu0
  %907 = vmatpush.bf16.msra.mxu0 0
  %908 = vmatpush.bf16.msra.mxu0 0
  %909 = vmatpush.bf16.msra.mxu0 0
  %910 = vmatpush.bf16.msra.mxu0 0
  %911 = vmatpush.bf16.msra.mxu0 0
  %912 = vmatpush.bf16.msra.mxu0 0
  %913 = vmatpush.bf16.msra.mxu0 %v766
  %914 = vmatpush.bf16.msra.mxu0 %v765
  %915 = vmatmul.bf16.gmra.mxu0 %v786
  %v916 = vpop.f32.mrf.mxu0
  %v917 = vadd.f32 %v868, %v916
  %v918 = vpop.f32.mrf.mxu0
  %v919 = vadd.f32 %v870, %v918
  %920 = vmatmul.bf16.gmra.mxu0 %v789
  %v921 = vpop.f32.mrf.mxu0
  %v922 = vadd.f32 %v873, %v921
  %v923 = vpop.f32.mrf.mxu0
  %v924 = vadd.f32 %v875, %v923
  %925 = vmatmul.bf16.gmra.mxu0 %v792
  %v926 = vpop.f32.mrf.mxu0
  %v927 = vadd.f32 %v878, %v926
  %v928 = vpop.f32.mrf.mxu0
  %v929 = vadd.f32 %v880, %v928
  %930 = vmatmul.bf16.gmra.mxu0 %v795
  %v931 = vpop.f32.mrf.mxu0
  %v932 = vadd.f32 %v883, %v931
  %v933 = vpop.f32.mrf.mxu0
  %v934 = vadd.f32 %v885, %v933
  %935 = vmatmul.bf16.gmra.mxu0 %v798
  %v936 = vpop.f32.mrf.mxu0
  %v937 = vadd.f32 %v888, %v936
  %v938 = vpop.f32.mrf.mxu0
  %v939 = vadd.f32 %v890, %v938
  %940 = vmatmul.bf16.gmra.mxu0 %v801
  %v941 = vpop.f32.mrf.mxu0
  %v942 = vadd.f32 %v893, %v941
  %v943 = vpop.f32.mrf.mxu0
  %v944 = vadd.f32 %v895, %v943
  %945 = vmatmul.bf16.gmra.mxu0 %v804
  %v946 = vpop.f32.mrf.mxu0
  %v947 = vadd.f32 %v898, %v946
  %v948 = vpop.f32.mrf.mxu0
  %v949 = vadd.f32 %v900, %v948
  %950 = vmatmul.bf16.gmra.mxu0 %v807
  %v951 = vpop.f32.mrf.mxu0
  %v952 = vadd.f32 %v903, %v951
  %v953 = vpop.f32.mrf.mxu0
  %v954 = vadd.f32 %v905, %v953
  %955 = vdwg.mxu0
  %v956 = vld [vmem:[%s4] sm:$0x1]
  %v958 = vperm.slane %v956, 0
  %v960 = vadd.f32 %v917, %v958
  %v961 = vadd.f32 %v919, %v958
  %v962 = vadd.f32 %v922, %v958
  %v963 = vadd.f32 %v924, %v958
  %v964 = vadd.f32 %v927, %v958
  %v965 = vadd.f32 %v929, %v958
  %v966 = vadd.f32 %v932, %v958
  %v967 = vadd.f32 %v934, %v958
  %v968 = vadd.f32 %v937, %v958
  %v969 = vadd.f32 %v939, %v958
  %v970 = vadd.f32 %v942, %v958
  %v971 = vadd.f32 %v944, %v958
  %v972 = vadd.f32 %v947, %v958
  %v973 = vadd.f32 %v949, %v958
  %v974 = vadd.f32 %v952, %v958
  %v975 = vadd.f32 %v954, %v958
  %v976 = vmax.f32 %v960, 0.0
  %v977 = vmax.f32 %v961, 0.0
  %v978 = vmax.f32 %v962, 0.0
  %v979 = vmax.f32 %v963, 0.0
  %v980 = vmax.f32 %v964, 0.0
  %v981 = vmax.f32 %v965, 0.0
  %v982 = vmax.f32 %v966, 0.0
  %v983 = vmax.f32 %v967, 0.0
  %v984 = vmax.f32 %v968, 0.0
  %v985 = vmax.f32 %v969, 0.0
  %v986 = vmax.f32 %v970, 0.0
  %v987 = vmax.f32 %v971, 0.0
  %v988 = vmax.f32 %v972, 0.0
  %v989 = vmax.f32 %v973, 0.0
  %v990 = vmax.f32 %v974, 0.0
  %v991 = vmax.f32 %v975, 0.0
  %992 = vst.msk [vmem:[%s5] sm:$0xff] %vm385, %v976
  %993 = vst.msk [vmem:[%s5 + $0x8] sm:$0xff] %vm385, %v977
  %994 = vst.msk [vmem:[%s5 + $0x10] sm:$0xff] %vm385, %v978
  %995 = vst.msk [vmem:[%s5 + $0x18] sm:$0xff] %vm385, %v979
  %996 = vst.msk [vmem:[%s5 + $0x20] sm:$0xff] %vm385, %v980
  %997 = vst.msk [vmem:[%s5 + $0x28] sm:$0xff] %vm385, %v981
  %998 = vst.msk [vmem:[%s5 + $0x30] sm:$0xff] %vm385, %v982
  %999 = vst.msk [vmem:[%s5 + $0x38] sm:$0xff] %vm385, %v983
  %1000 = vst.msk [vmem:[%s5 + $0x40] sm:$0xff] %vm385, %v984
  %1001 = vst.msk [vmem:[%s5 + $0x48] sm:$0xff] %vm385, %v985
  %1002 = vst.msk [vmem:[%s5 + $0x50] sm:$0xff] %vm385, %v986
  %1003 = vst.msk [vmem:[%s5 + $0x58] sm:$0xff] %vm385, %v987
  %1004 = vst.msk [vmem:[%s5 + $0x60] sm:$0xff] %vm385, %v988
  %1005 = vst.msk [vmem:[%s5 + $0x68] sm:$0xff] %vm385, %v989
  %1006 = vst.msk [vmem:[%s5 + $0x70] sm:$0xff] %vm385, %v990
  %1007 = vst.msk [vmem:[%s5 + $0x78] sm:$0xff] %vm385, %v991
  // Predicated region
  $region22: #{unet2d_forward.45} parent=0 // pred_check
    _
  $region23: #{unet2d_forward.45} parent=0 // pred_check_branch
    %1009 = sbr.rel (0) target = $region25
  $region24: #{unet2d_forward.45} parent=0 // pred_region
    _
  $region25: #{unet2d_forward.45} parent=0 // pred_fallthru
    _
  // Predicated region
  $region26: #{unet2d_forward.45} parent=0 // pred_check
    _
  $region27: #{unet2d_forward.45} parent=0 // pred_check_branch
    %1011 = sbr.rel (0) target = $region29
  $region28: #{unet2d_forward.45} parent=0 // pred_region
    _
  $region29: #{unet2d_forward.45} parent=0 // pred_fallthru
    _

// kernel: unet2d_forward.47
$region0: #{unet2d_forward.47}
  #allocation0 [shape = 'u32[]', space=smem, size = 0x4, offset = 0x4, fixed_abs, tag = 'smem constant byte address 0x4 - core index']
  #allocation1 [shape = 'u32[72,128]{1,0:T(1,128)}', space=vmem, size = 0x9000, scoped, tag = 'internal scratch']
  %s0 = inlined_call_operand.vmem [shape: bf16[128,32], index: 0, kind: input, shape index: {}]
  %s1 = inlined_call_operand.vmem [shape: bf16[32,16], index: 1, kind: input, shape index: {}]
  %s2 = inlined_call_operand.vmem [shape: f32[1,16], index: 2, kind: input, shape index: {}]
  %s3 = inlined_call_operand.vmem [shape: f32[128,16], index: 3, kind: output, shape index: {}]
  %s4 = sld [smem:[#allocation0]]
  $region22: #{unet2d_forward.47} parent=0
    _
  %s6 = ssub.s32 1, %s4
  %s7 = scalar_select 0, %s6, %s4
  // Predicated region
  $region2: #{unet2d_forward.47} parent=0 // pred_check
    _
  $region3: #{unet2d_forward.47} parent=0 // pred_check_branch
    %9 = sbr.rel (0) target = $region5
  $region4: #{unet2d_forward.47} parent=0 // pred_region
    _
  $region5: #{unet2d_forward.47} parent=0 // pred_fallthru
    _
  // Predicated region
  $region6: #{unet2d_forward.47} parent=0 // pred_check
    _
  $region7: #{unet2d_forward.47} parent=0 // pred_check_branch
    %11 = sbr.rel (0) target = $region9
  $region8: #{unet2d_forward.47} parent=0 // pred_region
    _
  $region9: #{unet2d_forward.47} parent=0 // pred_fallthru
    _
  // Predicated region
  $region10: #{unet2d_forward.47} parent=0 // pred_check
    _
  $region11: #{unet2d_forward.47} parent=0 // pred_check_branch
    %13 = sbr.rel (0) target = $region13
  $region12: #{unet2d_forward.47} parent=0 // pred_region
    _
  $region13: #{unet2d_forward.47} parent=0 // pred_fallthru
    _
  %v15 = vld [vmem:[%s0] sm:$0xf]
  %v16 = vld [vmem:[%s0 + $0x4] sm:$0xf]
  %v17 = vld [vmem:[%s0 + $0x8] sm:$0xf]
  %v18 = vld [vmem:[%s0 + $0xc] sm:$0xf]
  %v19 = vld [vmem:[%s0 + $0x10] sm:$0xf]
  %v20 = vld [vmem:[%s0 + $0x14] sm:$0xf]
  %v21 = vld [vmem:[%s0 + $0x18] sm:$0xf]
  %v22 = vld [vmem:[%s0 + $0x1c] sm:$0xf]
  %v23 = vld [vmem:[%s0 + $0x20] sm:$0xf]
  %v24 = vld [vmem:[%s0 + $0x24] sm:$0xf]
  %v25 = vld [vmem:[%s0 + $0x28] sm:$0xf]
  %v26 = vld [vmem:[%s0 + $0x2c] sm:$0xf]
  %v27 = vld [vmem:[%s0 + $0x30] sm:$0xf]
  %v28 = vld [vmem:[%s0 + $0x34] sm:$0xf]
  %v29 = vld [vmem:[%s0 + $0x38] sm:$0xf]
  %v30 = vld [vmem:[%s0 + $0x3c] sm:$0xf]
  %v31 = vld [vmem:[%s1] sm:$0xf]
  %v32 = vld [vmem:[%s1 + $0x4] sm:$0xf]
  %v33 = vld [vmem:[%s1 + $0x8] sm:$0xf]
  %v34 = vld [vmem:[%s1 + $0xc] sm:$0xf]
  %v35 = vld [vmem:[%s2] sm:$0x1]
  %v37 = vperm.slane %v35, 0
  %v55 = vunpack.c.l.b16 %v15
  %v56 = vunpack.c.l.b16 %v16
  %v57 = vunpack.c.l.b16 %v17
  %v58 = vunpack.c.l.b16 %v18
  %v59 = vunpack.c.l.b16 %v19
  %v60 = vunpack.c.l.b16 %v20
  %v61 = vunpack.c.l.b16 %v21
  %v62 = vunpack.c.l.b16 %v22
  %v63 = vunpack.c.l.b16 %v23
  %v64 = vunpack.c.l.b16 %v24
  %v65 = vunpack.c.l.b16 %v25
  %v66 = vunpack.c.l.b16 %v26
  %v67 = vunpack.c.l.b16 %v27
  %v68 = vunpack.c.l.b16 %v28
  %v69 = vunpack.c.l.b16 %v29
  %v70 = vunpack.c.l.b16 %v30
  %v71 = vpack.c.b16 %v56, %v55
  %v72 = vpack.c.b16 %v58, %v57
  %v73 = vpack.c.b16 %v60, %v59
  %v74 = vpack.c.b16 %v62, %v61
  %v75 = vpack.c.b16 %v64, %v63
  %v76 = vpack.c.b16 %v66, %v65
  %v77 = vpack.c.b16 %v68, %v67
  %v78 = vpack.c.b16 %v70, %v69
  %v83 = vunpack.c.l.b16 %v31
  %v84 = vunpack.c.l.b16 %v32
  %v85 = vunpack.c.l.b16 %v33
  %v86 = vunpack.c.l.b16 %v34
  %v87 = vpack.c.b16 %v84, %v83
  %v88 = vpack.c.b16 %v86, %v85
  %vm91 = vcmask 261120
  %v93 = vsel %vm91, %v71, 0
  %v96 = vsel %vm91, %v72, 0
  %v99 = vsel %vm91, %v73, 0
  %v102 = vsel %vm91, %v74, 0
  %v105 = vsel %vm91, %v75, 0
  %v108 = vsel %vm91, %v76, 0
  %v111 = vsel %vm91, %v77, 0
  %v114 = vsel %vm91, %v78, 0
  %116 = vmatpush.bf16.msra.mxu0 0
  %117 = vmatpush.bf16.msra.mxu0 0
  %118 = vmatpush.bf16.msra.mxu0 0
  %119 = vmatpush.bf16.msra.mxu0 0
  %120 = vmatpush.bf16.msra.mxu0 0
  %121 = vmatpush.bf16.msra.mxu0 0
  %122 = vmatpush.bf16.msra.mxu0 %v88
  %123 = vmatpush.bf16.msra.mxu0 %v87
  %124 = vmatmul.bf16.gmra.mxu0 %v93
  %v125 = vpop.f32.mrf.mxu0
  %v126 = vadd.f32 %v37, %v125
  %v127 = vpop.f32.mrf.mxu0
  %v128 = vadd.f32 %v37, %v127
  %129 = vmatmul.bf16.gmra.mxu0 %v96
  %v130 = vpop.f32.mrf.mxu0
  %v131 = vadd.f32 %v37, %v130
  %v132 = vpop.f32.mrf.mxu0
  %v133 = vadd.f32 %v37, %v132
  %134 = vmatmul.bf16.gmra.mxu0 %v99
  %v135 = vpop.f32.mrf.mxu0
  %v136 = vadd.f32 %v37, %v135
  %v137 = vpop.f32.mrf.mxu0
  %v138 = vadd.f32 %v37, %v137
  %139 = vmatmul.bf16.gmra.mxu0 %v102
  %v140 = vpop.f32.mrf.mxu0
  %v141 = vadd.f32 %v37, %v140
  %v142 = vpop.f32.mrf.mxu0
  %v143 = vadd.f32 %v37, %v142
  %144 = vmatmul.bf16.gmra.mxu0 %v105
  %v145 = vpop.f32.mrf.mxu0
  %v146 = vadd.f32 %v37, %v145
  %v147 = vpop.f32.mrf.mxu0
  %v148 = vadd.f32 %v37, %v147
  %149 = vmatmul.bf16.gmra.mxu0 %v108
  %v150 = vpop.f32.mrf.mxu0
  %v151 = vadd.f32 %v37, %v150
  %v152 = vpop.f32.mrf.mxu0
  %v153 = vadd.f32 %v37, %v152
  %154 = vmatmul.bf16.gmra.mxu0 %v111
  %v155 = vpop.f32.mrf.mxu0
  %v156 = vadd.f32 %v37, %v155
  %v157 = vpop.f32.mrf.mxu0
  %v158 = vadd.f32 %v37, %v157
  %159 = vmatmul.bf16.gmra.mxu0 %v114
  %v160 = vpop.f32.mrf.mxu0
  %v161 = vadd.f32 %v37, %v160
  %v162 = vpop.f32.mrf.mxu0
  %v163 = vadd.f32 %v37, %v162
  %164 = vdwg.mxu0
  %vm165 = vcmask 130048
  %166 = vst.msk [vmem:[%s3] sm:$0xff] %vm165, %v126
  %167 = vst.msk [vmem:[%s3 + $0x8] sm:$0xff] %vm165, %v128
  %168 = vst.msk [vmem:[%s3 + $0x10] sm:$0xff] %vm165, %v131
  %169 = vst.msk [vmem:[%s3 + $0x18] sm:$0xff] %vm165, %v133
  %170 = vst.msk [vmem:[%s3 + $0x20] sm:$0xff] %vm165, %v136
  %171 = vst.msk [vmem:[%s3 + $0x28] sm:$0xff] %vm165, %v138
  %172 = vst.msk [vmem:[%s3 + $0x30] sm:$0xff] %vm165, %v141
  %173 = vst.msk [vmem:[%s3 + $0x38] sm:$0xff] %vm165, %v143
  %174 = vst.msk [vmem:[%s3 + $0x40] sm:$0xff] %vm165, %v146
  %175 = vst.msk [vmem:[%s3 + $0x48] sm:$0xff] %vm165, %v148
  %176 = vst.msk [vmem:[%s3 + $0x50] sm:$0xff] %vm165, %v151
  %177 = vst.msk [vmem:[%s3 + $0x58] sm:$0xff] %vm165, %v153
  %178 = vst.msk [vmem:[%s3 + $0x60] sm:$0xff] %vm165, %v156
  %179 = vst.msk [vmem:[%s3 + $0x68] sm:$0xff] %vm165, %v158
  %180 = vst.msk [vmem:[%s3 + $0x70] sm:$0xff] %vm165, %v161
  %181 = vst.msk [vmem:[%s3 + $0x78] sm:$0xff] %vm165, %v163
  // Predicated region
  $region14: #{unet2d_forward.47} parent=0 // pred_check
    _
  $region15: #{unet2d_forward.47} parent=0 // pred_check_branch
    %183 = sbr.rel (0) target = $region17
  $region16: #{unet2d_forward.47} parent=0 // pred_region
    _
  $region17: #{unet2d_forward.47} parent=0 // pred_fallthru
    _
  // Predicated region
  $region18: #{unet2d_forward.47} parent=0 // pred_check
    _
  $region19: #{unet2d_forward.47} parent=0 // pred_check_branch
    %185 = sbr.rel (0) target = $region21
  $region20: #{unet2d_forward.47} parent=0 // pred_region
    _
  $region21: #{unet2d_forward.47} parent=0 // pred_fallthru
    _

// kernel: unet2d_forward.50
$region0: #{unet2d_forward.50}
  #allocation0 [shape = 'u32[]', space=smem, size = 0x4, offset = 0x4, fixed_abs, tag = 'smem constant byte address 0x4 - core index']
  #allocation1 [shape = 'u32[72,128]{1,0:T(1,128)}', space=vmem, size = 0x9000, scoped, tag = 'internal scratch']
  %s0 = inlined_call_operand.vmem [shape: bf16[128,128], index: 0, kind: input, shape index: {}]
  %s1 = inlined_call_operand.vmem [shape: bf16[128,16], index: 1, kind: input, shape index: {}]
  %s2 = inlined_call_operand.vmem [shape: f32[1,16], index: 2, kind: input, shape index: {}]
  %s3 = inlined_call_operand.vmem [shape: f32[128,16], index: 3, kind: output, shape index: {}]
  %s4 = sld [smem:[#allocation0]]
  $region22: #{unet2d_forward.50} parent=0
    _
  %s6 = ssub.s32 1, %s4
  %s7 = scalar_select 0, %s6, %s4
  // Predicated region
  $region2: #{unet2d_forward.50} parent=0 // pred_check
    _
  $region3: #{unet2d_forward.50} parent=0 // pred_check_branch
    %9 = sbr.rel (0) target = $region5
  $region4: #{unet2d_forward.50} parent=0 // pred_region
    _
  $region5: #{unet2d_forward.50} parent=0 // pred_fallthru
    _
  // Predicated region
  $region6: #{unet2d_forward.50} parent=0 // pred_check
    _
  $region7: #{unet2d_forward.50} parent=0 // pred_check_branch
    %11 = sbr.rel (0) target = $region9
  $region8: #{unet2d_forward.50} parent=0 // pred_region
    _
  $region9: #{unet2d_forward.50} parent=0 // pred_fallthru
    _
  // Predicated region
  $region10: #{unet2d_forward.50} parent=0 // pred_check
    _
  $region11: #{unet2d_forward.50} parent=0 // pred_check_branch
    %13 = sbr.rel (0) target = $region13
  $region12: #{unet2d_forward.50} parent=0 // pred_region
    _
  $region13: #{unet2d_forward.50} parent=0 // pred_fallthru
    _
  %v14 = vld [vmem:[%s0] sm:$0xf]
  %v15 = vld [vmem:[%s0 + $0x4] sm:$0xf]
  %v16 = vld [vmem:[%s0 + $0x8] sm:$0xf]
  %v17 = vld [vmem:[%s0 + $0xc] sm:$0xf]
  %v18 = vld [vmem:[%s0 + $0x10] sm:$0xf]
  %v19 = vld [vmem:[%s0 + $0x14] sm:$0xf]
  %v20 = vld [vmem:[%s0 + $0x18] sm:$0xf]
  %v21 = vld [vmem:[%s0 + $0x1c] sm:$0xf]
  %v22 = vld [vmem:[%s0 + $0x20] sm:$0xf]
  %v23 = vld [vmem:[%s0 + $0x24] sm:$0xf]
  %v24 = vld [vmem:[%s0 + $0x28] sm:$0xf]
  %v25 = vld [vmem:[%s0 + $0x2c] sm:$0xf]
  %v26 = vld [vmem:[%s0 + $0x30] sm:$0xf]
  %v27 = vld [vmem:[%s0 + $0x34] sm:$0xf]
  %v28 = vld [vmem:[%s0 + $0x38] sm:$0xf]
  %v29 = vld [vmem:[%s0 + $0x3c] sm:$0xf]
  %v30 = vld [vmem:[%s1] sm:$0xf]
  %v31 = vld [vmem:[%s1 + $0x4] sm:$0xf]
  %v32 = vld [vmem:[%s1 + $0x8] sm:$0xf]
  %v33 = vld [vmem:[%s1 + $0xc] sm:$0xf]
  %v34 = vld [vmem:[%s1 + $0x10] sm:$0xf]
  %v35 = vld [vmem:[%s1 + $0x14] sm:$0xf]
  %v36 = vld [vmem:[%s1 + $0x18] sm:$0xf]
  %v37 = vld [vmem:[%s1 + $0x1c] sm:$0xf]
  %v38 = vld [vmem:[%s1 + $0x20] sm:$0xf]
  %v39 = vld [vmem:[%s1 + $0x24] sm:$0xf]
  %v40 = vld [vmem:[%s1 + $0x28] sm:$0xf]
  %v41 = vld [vmem:[%s1 + $0x2c] sm:$0xf]
  %v42 = vld [vmem:[%s1 + $0x30] sm:$0xf]
  %v43 = vld [vmem:[%s1 + $0x34] sm:$0xf]
  %v44 = vld [vmem:[%s1 + $0x38] sm:$0xf]
  %v45 = vld [vmem:[%s1 + $0x3c] sm:$0xf]
  %v46 = vld [vmem:[%s2] sm:$0x1]
  %v48 = vperm.slane %v46, 0
  %v66 = vunpack.c.l.b16 %v14
  %v67 = vunpack.c.l.b16 %v15
  %v68 = vunpack.c.l.b16 %v16
  %v69 = vunpack.c.l.b16 %v17
  %v70 = vunpack.c.l.b16 %v18
  %v71 = vunpack.c.l.b16 %v19
  %v72 = vunpack.c.l.b16 %v20
  %v73 = vunpack.c.l.b16 %v21
  %v74 = vunpack.c.l.b16 %v22
  %v75 = vunpack.c.l.b16 %v23
  %v76 = vunpack.c.l.b16 %v24
  %v77 = vunpack.c.l.b16 %v25
  %v78 = vunpack.c.l.b16 %v26
  %v79 = vunpack.c.l.b16 %v27
  %v80 = vunpack.c.l.b16 %v28
  %v81 = vunpack.c.l.b16 %v29
  %v82 = vpack.c.b16 %v67, %v66
  %v83 = vpack.c.b16 %v69, %v68
  %v84 = vpack.c.b16 %v71, %v70
  %v85 = vpack.c.b16 %v73, %v72
  %v86 = vpack.c.b16 %v75, %v74
  %v87 = vpack.c.b16 %v77, %v76
  %v88 = vpack.c.b16 %v79, %v78
  %v89 = vpack.c.b16 %v81, %v80
  %v114 = vunpack.c.l.b16 %v30
  %v115 = vunpack.c.l.b16 %v31
  %v116 = vunpack.c.l.b16 %v32
  %v117 = vunpack.c.l.b16 %v33
  %v118 = vunpack.c.l.b16 %v34
  %v119 = vunpack.c.l.b16 %v35
  %v120 = vunpack.c.l.b16 %v36
  %v121 = vunpack.c.l.b16 %v37
  %v122 = vunpack.c.l.b16 %v38
  %v123 = vunpack.c.l.b16 %v39
  %v124 = vunpack.c.l.b16 %v40
  %v125 = vunpack.c.l.b16 %v41
  %v126 = vunpack.c.l.b16 %v42
  %v127 = vunpack.c.l.b16 %v43
  %v128 = vunpack.c.l.b16 %v44
  %v129 = vunpack.c.l.b16 %v45
  %v130 = vpack.c.b16 %v115, %v114
  %v131 = vpack.c.b16 %v117, %v116
  %v132 = vpack.c.b16 %v119, %v118
  %v133 = vpack.c.b16 %v121, %v120
  %v134 = vpack.c.b16 %v123, %v122
  %v135 = vpack.c.b16 %v125, %v124
  %v136 = vpack.c.b16 %v127, %v126
  %v137 = vpack.c.b16 %v129, %v128
  %146 = vmatpush.bf16.msra.mxu0 %v137
  %147 = vmatpush.bf16.msra.mxu0 %v136
  %148 = vmatpush.bf16.msra.mxu0 %v135
  %149 = vmatpush.bf16.msra.mxu0 %v134
  %150 = vmatpush.bf16.msra.mxu0 %v133
  %151 = vmatpush.bf16.msra.mxu0 %v132
  %152 = vmatpush.bf16.msra.mxu0 %v131
  %153 = vmatpush.bf16.msra.mxu0 %v130
  %154 = vmatmul.bf16.gmra.mxu0 %v82
  %v155 = vpop.f32.mrf.mxu0
  %v156 = vadd.f32 %v48, %v155
  %v157 = vpop.f32.mrf.mxu0
  %v158 = vadd.f32 %v48, %v157
  %159 = vmatmul.bf16.gmra.mxu0 %v83
  %v160 = vpop.f32.mrf.mxu0
  %v161 = vadd.f32 %v48, %v160
  %v162 = vpop.f32.mrf.mxu0
  %v163 = vadd.f32 %v48, %v162
  %164 = vmatmul.bf16.gmra.mxu0 %v84
  %v165 = vpop.f32.mrf.mxu0
  %v166 = vadd.f32 %v48, %v165
  %v167 = vpop.f32.mrf.mxu0
  %v168 = vadd.f32 %v48, %v167
  %169 = vmatmul.bf16.gmra.mxu0 %v85
  %v170 = vpop.f32.mrf.mxu0
  %v171 = vadd.f32 %v48, %v170
  %v172 = vpop.f32.mrf.mxu0
  %v173 = vadd.f32 %v48, %v172
  %174 = vmatmul.bf16.gmra.mxu0 %v86
  %v175 = vpop.f32.mrf.mxu0
  %v176 = vadd.f32 %v48, %v175
  %v177 = vpop.f32.mrf.mxu0
  %v178 = vadd.f32 %v48, %v177
  %179 = vmatmul.bf16.gmra.mxu0 %v87
  %v180 = vpop.f32.mrf.mxu0
  %v181 = vadd.f32 %v48, %v180
  %v182 = vpop.f32.mrf.mxu0
  %v183 = vadd.f32 %v48, %v182
  %184 = vmatmul.bf16.gmra.mxu0 %v88
  %v185 = vpop.f32.mrf.mxu0
  %v186 = vadd.f32 %v48, %v185
  %v187 = vpop.f32.mrf.mxu0
  %v188 = vadd.f32 %v48, %v187
  %189 = vmatmul.bf16.gmra.mxu0 %v89
  %v190 = vpop.f32.mrf.mxu0
  %v191 = vadd.f32 %v48, %v190
  %v192 = vpop.f32.mrf.mxu0
  %v193 = vadd.f32 %v48, %v192
  %194 = vdwg.mxu0
  %vm195 = vcmask 130048
  %196 = vst.msk [vmem:[%s3] sm:$0xff] %vm195, %v156
  %197 = vst.msk [vmem:[%s3 + $0x8] sm:$0xff] %vm195, %v158
  %198 = vst.msk [vmem:[%s3 + $0x10] sm:$0xff] %vm195, %v161
  %199 = vst.msk [vmem:[%s3 + $0x18] sm:$0xff] %vm195, %v163
  %200 = vst.msk [vmem:[%s3 + $0x20] sm:$0xff] %vm195, %v166
  %201 = vst.msk [vmem:[%s3 + $0x28] sm:$0xff] %vm195, %v168
  %202 = vst.msk [vmem:[%s3 + $0x30] sm:$0xff] %vm195, %v171
  %203 = vst.msk [vmem:[%s3 + $0x38] sm:$0xff] %vm195, %v173
  %204 = vst.msk [vmem:[%s3 + $0x40] sm:$0xff] %vm195, %v176
  %205 = vst.msk [vmem:[%s3 + $0x48] sm:$0xff] %vm195, %v178
  %206 = vst.msk [vmem:[%s3 + $0x50] sm:$0xff] %vm195, %v181
  %207 = vst.msk [vmem:[%s3 + $0x58] sm:$0xff] %vm195, %v183
  %208 = vst.msk [vmem:[%s3 + $0x60] sm:$0xff] %vm195, %v186
  %209 = vst.msk [vmem:[%s3 + $0x68] sm:$0xff] %vm195, %v188
  %210 = vst.msk [vmem:[%s3 + $0x70] sm:$0xff] %vm195, %v191
  %211 = vst.msk [vmem:[%s3 + $0x78] sm:$0xff] %vm195, %v193
  // Predicated region
  $region14: #{unet2d_forward.50} parent=0 // pred_check
    _
  $region15: #{unet2d_forward.50} parent=0 // pred_check_branch
    %213 = sbr.rel (0) target = $region17
  $region16: #{unet2d_forward.50} parent=0 // pred_region
    _
  $region17: #{unet2d_forward.50} parent=0 // pred_fallthru
    _
  // Predicated region
  $region18: #{unet2d_forward.50} parent=0 // pred_check
    _
  $region19: #{unet2d_forward.50} parent=0 // pred_check_branch
    %215 = sbr.rel (0) target = $region21
  $region20: #{unet2d_forward.50} parent=0 // pred_region
    _
  $region21: #{unet2d_forward.50} parent=0 // pred_fallthru
    _

// kernel: unet2d_forward.53
$region0: #{unet2d_forward.53}
  #allocation0 [shape = 'u32[]', space=smem, size = 0x4, offset = 0x4, fixed_abs, tag = 'smem constant byte address 0x4 - core index']
  #allocation1 [shape = 'u32[72,128]{1,0:T(1,128)}', space=vmem, size = 0x9000, scoped, tag = 'internal scratch']
  %s0 = inlined_call_operand.vmem [shape: bf16[512,16], index: 0, kind: input, shape index: {}]
  %s1 = inlined_call_operand.vmem [shape: bf16[16,3], index: 1, kind: input, shape index: {}]
  %s2 = inlined_call_operand.vmem [shape: f32[1,3], index: 2, kind: input, shape index: {}]
  %s3 = inlined_call_operand.vmem [shape: f32[512,3], index: 3, kind: output, shape index: {}]
  %s4 = sld [smem:[#allocation0]]
  $region22: #{unet2d_forward.53} parent=0
    _
  %s6 = ssub.s32 1, %s4
  %s7 = scalar_select 0, %s6, %s4
  // Predicated region
  $region2: #{unet2d_forward.53} parent=0 // pred_check
    _
  $region3: #{unet2d_forward.53} parent=0 // pred_check_branch
    %9 = sbr.rel (0) target = $region5
  $region4: #{unet2d_forward.53} parent=0 // pred_region
    _
  $region5: #{unet2d_forward.53} parent=0 // pred_fallthru
    _
  // Predicated region
  $region6: #{unet2d_forward.53} parent=0 // pred_check
    _
  $region7: #{unet2d_forward.53} parent=0 // pred_check_branch
    %11 = sbr.rel (0) target = $region9
  $region8: #{unet2d_forward.53} parent=0 // pred_region
    _
  $region9: #{unet2d_forward.53} parent=0 // pred_fallthru
    _
  // Predicated region
  $region10: #{unet2d_forward.53} parent=0 // pred_check
    _
  $region11: #{unet2d_forward.53} parent=0 // pred_check_branch
    %13 = sbr.rel (0) target = $region13
  $region12: #{unet2d_forward.53} parent=0 // pred_region
    _
  $region13: #{unet2d_forward.53} parent=0 // pred_fallthru
    _
  %v15 = vld [vmem:[%s0] sm:$0xf]
  %v16 = vld [vmem:[%s0 + $0x4] sm:$0xf]
  %v17 = vld [vmem:[%s0 + $0x8] sm:$0xf]
  %v18 = vld [vmem:[%s0 + $0xc] sm:$0xf]
  %v19 = vld [vmem:[%s0 + $0x10] sm:$0xf]
  %v20 = vld [vmem:[%s0 + $0x14] sm:$0xf]
  %v21 = vld [vmem:[%s0 + $0x18] sm:$0xf]
  %v22 = vld [vmem:[%s0 + $0x1c] sm:$0xf]
  %v23 = vld [vmem:[%s0 + $0x20] sm:$0xf]
  %v24 = vld [vmem:[%s0 + $0x24] sm:$0xf]
  %v25 = vld [vmem:[%s0 + $0x28] sm:$0xf]
  %v26 = vld [vmem:[%s0 + $0x2c] sm:$0xf]
  %v27 = vld [vmem:[%s0 + $0x30] sm:$0xf]
  %v28 = vld [vmem:[%s0 + $0x34] sm:$0xf]
  %v29 = vld [vmem:[%s0 + $0x38] sm:$0xf]
  %v30 = vld [vmem:[%s0 + $0x3c] sm:$0xf]
  %v31 = vld [vmem:[%s0 + $0x40] sm:$0xf]
  %v32 = vld [vmem:[%s0 + $0x44] sm:$0xf]
  %v33 = vld [vmem:[%s0 + $0x48] sm:$0xf]
  %v34 = vld [vmem:[%s0 + $0x4c] sm:$0xf]
  %v35 = vld [vmem:[%s0 + $0x50] sm:$0xf]
  %v36 = vld [vmem:[%s0 + $0x54] sm:$0xf]
  %v37 = vld [vmem:[%s0 + $0x58] sm:$0xf]
  %v38 = vld [vmem:[%s0 + $0x5c] sm:$0xf]
  %v39 = vld [vmem:[%s0 + $0x60] sm:$0xf]
  %v40 = vld [vmem:[%s0 + $0x64] sm:$0xf]
  %v41 = vld [vmem:[%s0 + $0x68] sm:$0xf]
  %v42 = vld [vmem:[%s0 + $0x6c] sm:$0xf]
  %v43 = vld [vmem:[%s0 + $0x70] sm:$0xf]
  %v44 = vld [vmem:[%s0 + $0x74] sm:$0xf]
  %v45 = vld [vmem:[%s0 + $0x78] sm:$0xf]
  %v46 = vld [vmem:[%s0 + $0x7c] sm:$0xf]
  %v47 = vld [vmem:[%s0 + $0x80] sm:$0xf]
  %v48 = vld [vmem:[%s0 + $0x84] sm:$0xf]
  %v49 = vld [vmem:[%s0 + $0x88] sm:$0xf]
  %v50 = vld [vmem:[%s0 + $0x8c] sm:$0xf]
  %v51 = vld [vmem:[%s0 + $0x90] sm:$0xf]
  %v52 = vld [vmem:[%s0 + $0x94] sm:$0xf]
  %v53 = vld [vmem:[%s0 + $0x98] sm:$0xf]
  %v54 = vld [vmem:[%s0 + $0x9c] sm:$0xf]
  %v55 = vld [vmem:[%s0 + $0xa0] sm:$0xf]
  %v56 = vld [vmem:[%s0 + $0xa4] sm:$0xf]
  %v57 = vld [vmem:[%s0 + $0xa8] sm:$0xf]
  %v58 = vld [vmem:[%s0 + $0xac] sm:$0xf]
  %v59 = vld [vmem:[%s0 + $0xb0] sm:$0xf]
  %v60 = vld [vmem:[%s0 + $0xb4] sm:$0xf]
  %v61 = vld [vmem:[%s0 + $0xb8] sm:$0xf]
  %v62 = vld [vmem:[%s0 + $0xbc] sm:$0xf]
  %v63 = vld [vmem:[%s0 + $0xc0] sm:$0xf]
  %v64 = vld [vmem:[%s0 + $0xc4] sm:$0xf]
  %v65 = vld [vmem:[%s0 + $0xc8] sm:$0xf]
  %v66 = vld [vmem:[%s0 + $0xcc] sm:$0xf]
  %v67 = vld [vmem:[%s0 + $0xd0] sm:$0xf]
  %v68 = vld [vmem:[%s0 + $0xd4] sm:$0xf]
  %v69 = vld [vmem:[%s0 + $0xd8] sm:$0xf]
  %v70 = vld [vmem:[%s0 + $0xdc] sm:$0xf]
  %v71 = vld [vmem:[%s0 + $0xe0] sm:$0xf]
  %v72 = vld [vmem:[%s0 + $0xe4] sm:$0xf]
  %v73 = vld [vmem:[%s0 + $0xe8] sm:$0xf]
  %v74 = vld [vmem:[%s0 + $0xec] sm:$0xf]
  %v75 = vld [vmem:[%s0 + $0xf0] sm:$0xf]
  %v76 = vld [vmem:[%s0 + $0xf4] sm:$0xf]
  %v77 = vld [vmem:[%s0 + $0xf8] sm:$0xf]
  %v78 = vld [vmem:[%s0 + $0xfc] sm:$0xf]
  %v79 = vld [vmem:[%s1] sm:$0xf]
  %v80 = vld [vmem:[%s1 + $0x4] sm:$0xf]
  %v81 = vld [vmem:[%s2] sm:$0x1]
  %v83 = vperm.slane %v81, 0
  %v149 = vunpack.c.l.b16 %v15
  %v150 = vunpack.c.l.b16 %v16
  %v151 = vunpack.c.l.b16 %v17
  %v152 = vunpack.c.l.b16 %v18
  %v153 = vunpack.c.l.b16 %v19
  %v154 = vunpack.c.l.b16 %v20
  %v155 = vunpack.c.l.b16 %v21
  %v156 = vunpack.c.l.b16 %v22
  %v157 = vunpack.c.l.b16 %v23
  %v158 = vunpack.c.l.b16 %v24
  %v159 = vunpack.c.l.b16 %v25
  %v160 = vunpack.c.l.b16 %v26
  %v161 = vunpack.c.l.b16 %v27
  %v162 = vunpack.c.l.b16 %v28
  %v163 = vunpack.c.l.b16 %v29
  %v164 = vunpack.c.l.b16 %v30
  %v165 = vunpack.c.l.b16 %v31
  %v166 = vunpack.c.l.b16 %v32
  %v167 = vunpack.c.l.b16 %v33
  %v168 = vunpack.c.l.b16 %v34
  %v169 = vunpack.c.l.b16 %v35
  %v170 = vunpack.c.l.b16 %v36
  %v171 = vunpack.c.l.b16 %v37
  %v172 = vunpack.c.l.b16 %v38
  %v173 = vunpack.c.l.b16 %v39
  %v174 = vunpack.c.l.b16 %v40
  %v175 = vunpack.c.l.b16 %v41
  %v176 = vunpack.c.l.b16 %v42
  %v177 = vunpack.c.l.b16 %v43
  %v178 = vunpack.c.l.b16 %v44
  %v179 = vunpack.c.l.b16 %v45
  %v180 = vunpack.c.l.b16 %v46
  %v181 = vunpack.c.l.b16 %v47
  %v182 = vunpack.c.l.b16 %v48
  %v183 = vunpack.c.l.b16 %v49
  %v184 = vunpack.c.l.b16 %v50
  %v185 = vunpack.c.l.b16 %v51
  %v186 = vunpack.c.l.b16 %v52
  %v187 = vunpack.c.l.b16 %v53
  %v188 = vunpack.c.l.b16 %v54
  %v189 = vunpack.c.l.b16 %v55
  %v190 = vunpack.c.l.b16 %v56
  %v191 = vunpack.c.l.b16 %v57
  %v192 = vunpack.c.l.b16 %v58
  %v193 = vunpack.c.l.b16 %v59
  %v194 = vunpack.c.l.b16 %v60
  %v195 = vunpack.c.l.b16 %v61
  %v196 = vunpack.c.l.b16 %v62
  %v197 = vunpack.c.l.b16 %v63
  %v198 = vunpack.c.l.b16 %v64
  %v199 = vunpack.c.l.b16 %v65
  %v200 = vunpack.c.l.b16 %v66
  %v201 = vunpack.c.l.b16 %v67
  %v202 = vunpack.c.l.b16 %v68
  %v203 = vunpack.c.l.b16 %v69
  %v204 = vunpack.c.l.b16 %v70
  %v205 = vunpack.c.l.b16 %v71
  %v206 = vunpack.c.l.b16 %v72
  %v207 = vunpack.c.l.b16 %v73
  %v208 = vunpack.c.l.b16 %v74
  %v209 = vunpack.c.l.b16 %v75
  %v210 = vunpack.c.l.b16 %v76
  %v211 = vunpack.c.l.b16 %v77
  %v212 = vunpack.c.l.b16 %v78
  %v213 = vpack.c.b16 %v150, %v149
  %v214 = vpack.c.b16 %v152, %v151
  %v215 = vpack.c.b16 %v154, %v153
  %v216 = vpack.c.b16 %v156, %v155
  %v217 = vpack.c.b16 %v158, %v157
  %v218 = vpack.c.b16 %v160, %v159
  %v219 = vpack.c.b16 %v162, %v161
  %v220 = vpack.c.b16 %v164, %v163
  %v221 = vpack.c.b16 %v166, %v165
  %v222 = vpack.c.b16 %v168, %v167
  %v223 = vpack.c.b16 %v170, %v169
  %v224 = vpack.c.b16 %v172, %v171
  %v225 = vpack.c.b16 %v174, %v173
  %v226 = vpack.c.b16 %v176, %v175
  %v227 = vpack.c.b16 %v178, %v177
  %v228 = vpack.c.b16 %v180, %v179
  %v229 = vpack.c.b16 %v182, %v181
  %v230 = vpack.c.b16 %v184, %v183
  %v231 = vpack.c.b16 %v186, %v185
  %v232 = vpack.c.b16 %v188, %v187
  %v233 = vpack.c.b16 %v190, %v189
  %v234 = vpack.c.b16 %v192, %v191
  %v235 = vpack.c.b16 %v194, %v193
  %v236 = vpack.c.b16 %v196, %v195
  %v237 = vpack.c.b16 %v198, %v197
  %v238 = vpack.c.b16 %v200, %v199
  %v239 = vpack.c.b16 %v202, %v201
  %v240 = vpack.c.b16 %v204, %v203
  %v241 = vpack.c.b16 %v206, %v205
  %v242 = vpack.c.b16 %v208, %v207
  %v243 = vpack.c.b16 %v210, %v209
  %v244 = vpack.c.b16 %v212, %v211
  %v247 = vunpack.c.l.b16 %v79
  %v248 = vunpack.c.l.b16 %v80
  %v249 = vpack.c.b16 %v248, %v247
  %vm251 = vcmask 130048
  %v253 = vsel %vm251, %v213, 0
  %v256 = vsel %vm251, %v214, 0
  %v259 = vsel %vm251, %v215, 0
  %v262 = vsel %vm251, %v216, 0
  %v265 = vsel %vm251, %v217, 0
  %v268 = vsel %vm251, %v218, 0
  %v271 = vsel %vm251, %v219, 0
  %v274 = vsel %vm251, %v220, 0
  %v277 = vsel %vm251, %v221, 0
  %v280 = vsel %vm251, %v222, 0
  %v283 = vsel %vm251, %v223, 0
  %v286 = vsel %vm251, %v224, 0
  %v289 = vsel %vm251, %v225, 0
  %v292 = vsel %vm251, %v226, 0
  %v295 = vsel %vm251, %v227, 0
  %v298 = vsel %vm251, %v228, 0
  %v301 = vsel %vm251, %v229, 0
  %v304 = vsel %vm251, %v230, 0
  %v307 = vsel %vm251, %v231, 0
  %v310 = vsel %vm251, %v232, 0
  %v313 = vsel %vm251, %v233, 0
  %v316 = vsel %vm251, %v234, 0
  %v319 = vsel %vm251, %v235, 0
  %v322 = vsel %vm251, %v236, 0
  %v325 = vsel %vm251, %v237, 0
  %v328 = vsel %vm251, %v238, 0
  %v331 = vsel %vm251, %v239, 0
  %v334 = vsel %vm251, %v240, 0
  %v337 = vsel %vm251, %v241, 0
  %v340 = vsel %vm251, %v242, 0
  %v343 = vsel %vm251, %v243, 0
  %v346 = vsel %vm251, %v244, 0
  %348 = vmatpush.bf16.msra.mxu0 0
  %349 = vmatpush.bf16.msra.mxu0 0
  %350 = vmatpush.bf16.msra.mxu0 0
  %351 = vmatpush.bf16.msra.mxu0 0
  %352 = vmatpush.bf16.msra.mxu0 0
  %353 = vmatpush.bf16.msra.mxu0 0
  %354 = vmatpush.bf16.msra.mxu0 0
  %355 = vmatpush.bf16.msra.mxu0 %v249
  %356 = vmatmul.bf16.gmra.mxu0 %v253
  %v357 = vpop.f32.mrf.mxu0
  %v358 = vadd.f32 %v83, %v357
  %v359 = vpop.f32.mrf.mxu0
  %v360 = vadd.f32 %v83, %v359
  %361 = vmatmul.bf16.gmra.mxu0 %v256
  %v362 = vpop.f32.mrf.mxu0
  %v363 = vadd.f32 %v83, %v362
  %v364 = vpop.f32.mrf.mxu0
  %v365 = vadd.f32 %v83, %v364
  %366 = vmatmul.bf16.gmra.mxu0 %v259
  %v367 = vpop.f32.mrf.mxu0
  %v368 = vadd.f32 %v83, %v367
  %v369 = vpop.f32.mrf.mxu0
  %v370 = vadd.f32 %v83, %v369
  %371 = vmatmul.bf16.gmra.mxu0 %v262
  %v372 = vpop.f32.mrf.mxu0
  %v373 = vadd.f32 %v83, %v372
  %v374 = vpop.f32.mrf.mxu0
  %v375 = vadd.f32 %v83, %v374
  %376 = vmatmul.bf16.gmra.mxu0 %v265
  %v377 = vpop.f32.mrf.mxu0
  %v378 = vadd.f32 %v83, %v377
  %v379 = vpop.f32.mrf.mxu0
  %v380 = vadd.f32 %v83, %v379
  %381 = vmatmul.bf16.gmra.mxu0 %v268
  %v382 = vpop.f32.mrf.mxu0
  %v383 = vadd.f32 %v83, %v382
  %v384 = vpop.f32.mrf.mxu0
  %v385 = vadd.f32 %v83, %v384
  %386 = vmatmul.bf16.gmra.mxu0 %v271
  %v387 = vpop.f32.mrf.mxu0
  %v388 = vadd.f32 %v83, %v387
  %v389 = vpop.f32.mrf.mxu0
  %v390 = vadd.f32 %v83, %v389
  %391 = vmatmul.bf16.gmra.mxu0 %v274
  %v392 = vpop.f32.mrf.mxu0
  %v393 = vadd.f32 %v83, %v392
  %v394 = vpop.f32.mrf.mxu0
  %v395 = vadd.f32 %v83, %v394
  %396 = vmatmul.bf16.gmra.mxu0 %v277
  %v397 = vpop.f32.mrf.mxu0
  %v398 = vadd.f32 %v83, %v397
  %v399 = vpop.f32.mrf.mxu0
  %v400 = vadd.f32 %v83, %v399
  %401 = vmatmul.bf16.gmra.mxu0 %v280
  %v402 = vpop.f32.mrf.mxu0
  %v403 = vadd.f32 %v83, %v402
  %v404 = vpop.f32.mrf.mxu0
  %v405 = vadd.f32 %v83, %v404
  %406 = vmatmul.bf16.gmra.mxu0 %v283
  %v407 = vpop.f32.mrf.mxu0
  %v408 = vadd.f32 %v83, %v407
  %v409 = vpop.f32.mrf.mxu0
  %v410 = vadd.f32 %v83, %v409
  %411 = vmatmul.bf16.gmra.mxu0 %v286
  %v412 = vpop.f32.mrf.mxu0
  %v413 = vadd.f32 %v83, %v412
  %v414 = vpop.f32.mrf.mxu0
  %v415 = vadd.f32 %v83, %v414
  %416 = vmatmul.bf16.gmra.mxu0 %v289
  %v417 = vpop.f32.mrf.mxu0
  %v418 = vadd.f32 %v83, %v417
  %v419 = vpop.f32.mrf.mxu0
  %v420 = vadd.f32 %v83, %v419
  %421 = vmatmul.bf16.gmra.mxu0 %v292
  %v422 = vpop.f32.mrf.mxu0
  %v423 = vadd.f32 %v83, %v422
  %v424 = vpop.f32.mrf.mxu0
  %v425 = vadd.f32 %v83, %v424
  %426 = vmatmul.bf16.gmra.mxu0 %v295
  %v427 = vpop.f32.mrf.mxu0
  %v428 = vadd.f32 %v83, %v427
  %v429 = vpop.f32.mrf.mxu0
  %v430 = vadd.f32 %v83, %v429
  %431 = vmatmul.bf16.gmra.mxu0 %v298
  %v432 = vpop.f32.mrf.mxu0
  %v433 = vadd.f32 %v83, %v432
  %v434 = vpop.f32.mrf.mxu0
  %v435 = vadd.f32 %v83, %v434
  %436 = vmatmul.bf16.gmra.mxu0 %v301
  %v437 = vpop.f32.mrf.mxu0
  %v438 = vadd.f32 %v83, %v437
  %v439 = vpop.f32.mrf.mxu0
  %v440 = vadd.f32 %v83, %v439
  %441 = vmatmul.bf16.gmra.mxu0 %v304
  %v442 = vpop.f32.mrf.mxu0
  %v443 = vadd.f32 %v83, %v442
  %v444 = vpop.f32.mrf.mxu0
  %v445 = vadd.f32 %v83, %v444
  %446 = vmatmul.bf16.gmra.mxu0 %v307
  %v447 = vpop.f32.mrf.mxu0
  %v448 = vadd.f32 %v83, %v447
  %v449 = vpop.f32.mrf.mxu0
  %v450 = vadd.f32 %v83, %v449
  %451 = vmatmul.bf16.gmra.mxu0 %v310
  %v452 = vpop.f32.mrf.mxu0
  %v453 = vadd.f32 %v83, %v452
  %v454 = vpop.f32.mrf.mxu0
  %v455 = vadd.f32 %v83, %v454
  %456 = vmatmul.bf16.gmra.mxu0 %v313
  %v457 = vpop.f32.mrf.mxu0
  %v458 = vadd.f32 %v83, %v457
  %v459 = vpop.f32.mrf.mxu0
  %v460 = vadd.f32 %v83, %v459
  %461 = vmatmul.bf16.gmra.mxu0 %v316
  %v462 = vpop.f32.mrf.mxu0
  %v463 = vadd.f32 %v83, %v462
  %v464 = vpop.f32.mrf.mxu0
  %v465 = vadd.f32 %v83, %v464
  %466 = vmatmul.bf16.gmra.mxu0 %v319
  %v467 = vpop.f32.mrf.mxu0
  %v468 = vadd.f32 %v83, %v467
  %v469 = vpop.f32.mrf.mxu0
  %v470 = vadd.f32 %v83, %v469
  %471 = vmatmul.bf16.gmra.mxu0 %v322
  %v472 = vpop.f32.mrf.mxu0
  %v473 = vadd.f32 %v83, %v472
  %v474 = vpop.f32.mrf.mxu0
  %v475 = vadd.f32 %v83, %v474
  %476 = vmatmul.bf16.gmra.mxu0 %v325
  %v477 = vpop.f32.mrf.mxu0
  %v478 = vadd.f32 %v83, %v477
  %v479 = vpop.f32.mrf.mxu0
  %v480 = vadd.f32 %v83, %v479
  %481 = vmatmul.bf16.gmra.mxu0 %v328
  %v482 = vpop.f32.mrf.mxu0
  %v483 = vadd.f32 %v83, %v482
  %v484 = vpop.f32.mrf.mxu0
  %v485 = vadd.f32 %v83, %v484
  %486 = vmatmul.bf16.gmra.mxu0 %v331
  %v487 = vpop.f32.mrf.mxu0
  %v488 = vadd.f32 %v83, %v487
  %v489 = vpop.f32.mrf.mxu0
  %v490 = vadd.f32 %v83, %v489
  %491 = vmatmul.bf16.gmra.mxu0 %v334
  %v492 = vpop.f32.mrf.mxu0
  %v493 = vadd.f32 %v83, %v492
  %v494 = vpop.f32.mrf.mxu0
  %v495 = vadd.f32 %v83, %v494
  %496 = vmatmul.bf16.gmra.mxu0 %v337
  %v497 = vpop.f32.mrf.mxu0
  %v498 = vadd.f32 %v83, %v497
  %v499 = vpop.f32.mrf.mxu0
  %v500 = vadd.f32 %v83, %v499
  %501 = vmatmul.bf16.gmra.mxu0 %v340
  %v502 = vpop.f32.mrf.mxu0
  %v503 = vadd.f32 %v83, %v502
  %v504 = vpop.f32.mrf.mxu0
  %v505 = vadd.f32 %v83, %v504
  %506 = vmatmul.bf16.gmra.mxu0 %v343
  %v507 = vpop.f32.mrf.mxu0
  %v508 = vadd.f32 %v83, %v507
  %v509 = vpop.f32.mrf.mxu0
  %v510 = vadd.f32 %v83, %v509
  %511 = vmatmul.bf16.gmra.mxu0 %v346
  %v512 = vpop.f32.mrf.mxu0
  %v513 = vadd.f32 %v83, %v512
  %v514 = vpop.f32.mrf.mxu0
  %v515 = vadd.f32 %v83, %v514
  %516 = vdwg.mxu0
  %vm517 = vcmask 23552
  %518 = vst.msk [vmem:[%s3] sm:$0xff] %vm517, %v358
  %519 = vst.msk [vmem:[%s3 + $0x8] sm:$0xff] %vm517, %v360
  %520 = vst.msk [vmem:[%s3 + $0x10] sm:$0xff] %vm517, %v363
  %521 = vst.msk [vmem:[%s3 + $0x18] sm:$0xff] %vm517, %v365
  %522 = vst.msk [vmem:[%s3 + $0x20] sm:$0xff] %vm517, %v368
  %523 = vst.msk [vmem:[%s3 + $0x28] sm:$0xff] %vm517, %v370
  %524 = vst.msk [vmem:[%s3 + $0x30] sm:$0xff] %vm517, %v373
  %525 = vst.msk [vmem:[%s3 + $0x38] sm:$0xff] %vm517, %v375
  %526 = vst.msk [vmem:[%s3 + $0x40] sm:$0xff] %vm517, %v378
  %527 = vst.msk [vmem:[%s3 + $0x48] sm:$0xff] %vm517, %v380
  %528 = vst.msk [vmem:[%s3 + $0x50] sm:$0xff] %vm517, %v383
  %529 = vst.msk [vmem:[%s3 + $0x58] sm:$0xff] %vm517, %v385
  %530 = vst.msk [vmem:[%s3 + $0x60] sm:$0xff] %vm517, %v388
  %531 = vst.msk [vmem:[%s3 + $0x68] sm:$0xff] %vm517, %v390
  %532 = vst.msk [vmem:[%s3 + $0x70] sm:$0xff] %vm517, %v393
  %533 = vst.msk [vmem:[%s3 + $0x78] sm:$0xff] %vm517, %v395
  %534 = vst.msk [vmem:[%s3 + $0x80] sm:$0xff] %vm517, %v398
  %535 = vst.msk [vmem:[%s3 + $0x88] sm:$0xff] %vm517, %v400
  %536 = vst.msk [vmem:[%s3 + $0x90] sm:$0xff] %vm517, %v403
  %537 = vst.msk [vmem:[%s3 + $0x98] sm:$0xff] %vm517, %v405
  %538 = vst.msk [vmem:[%s3 + $0xa0] sm:$0xff] %vm517, %v408
  %539 = vst.msk [vmem:[%s3 + $0xa8] sm:$0xff] %vm517, %v410
  %540 = vst.msk [vmem:[%s3 + $0xb0] sm:$0xff] %vm517, %v413
  %541 = vst.msk [vmem:[%s3 + $0xb8] sm:$0xff] %vm517, %v415
  %542 = vst.msk [vmem:[%s3 + $0xc0] sm:$0xff] %vm517, %v418
  %543 = vst.msk [vmem:[%s3 + $0xc8] sm:$0xff] %vm517, %v420
  %544 = vst.msk [vmem:[%s3 + $0xd0] sm:$0xff] %vm517, %v423
  %545 = vst.msk [vmem:[%s3 + $0xd8] sm:$0xff] %vm517, %v425
  %546 = vst.msk [vmem:[%s3 + $0xe0] sm:$0xff] %vm517, %v428
  %547 = vst.msk [vmem:[%s3 + $0xe8] sm:$0xff] %vm517, %v430
  %548 = vst.msk [vmem:[%s3 + $0xf0] sm:$0xff] %vm517, %v433
  %549 = vst.msk [vmem:[%s3 + $0xf8] sm:$0xff] %vm517, %v435
  %550 = vst.msk [vmem:[%s3 + $0x100] sm:$0xff] %vm517, %v438
  %551 = vst.msk [vmem:[%s3 + $0x108] sm:$0xff] %vm517, %v440
  %552 = vst.msk [vmem:[%s3 + $0x110] sm:$0xff] %vm517, %v443
  %553 = vst.msk [vmem:[%s3 + $0x118] sm:$0xff] %vm517, %v445
  %554 = vst.msk [vmem:[%s3 + $0x120] sm:$0xff] %vm517, %v448
  %555 = vst.msk [vmem:[%s3 + $0x128] sm:$0xff] %vm517, %v450
  %556 = vst.msk [vmem:[%s3 + $0x130] sm:$0xff] %vm517, %v453
  %557 = vst.msk [vmem:[%s3 + $0x138] sm:$0xff] %vm517, %v455
  %558 = vst.msk [vmem:[%s3 + $0x140] sm:$0xff] %vm517, %v458
  %559 = vst.msk [vmem:[%s3 + $0x148] sm:$0xff] %vm517, %v460
  %560 = vst.msk [vmem:[%s3 + $0x150] sm:$0xff] %vm517, %v463
  %561 = vst.msk [vmem:[%s3 + $0x158] sm:$0xff] %vm517, %v465
  %562 = vst.msk [vmem:[%s3 + $0x160] sm:$0xff] %vm517, %v468
  %563 = vst.msk [vmem:[%s3 + $0x168] sm:$0xff] %vm517, %v470
  %564 = vst.msk [vmem:[%s3 + $0x170] sm:$0xff] %vm517, %v473
  %565 = vst.msk [vmem:[%s3 + $0x178] sm:$0xff] %vm517, %v475
  %566 = vst.msk [vmem:[%s3 + $0x180] sm:$0xff] %vm517, %v478
  %567 = vst.msk [vmem:[%s3 + $0x188] sm:$0xff] %vm517, %v480
  %568 = vst.msk [vmem:[%s3 + $0x190] sm:$0xff] %vm517, %v483
  %569 = vst.msk [vmem:[%s3 + $0x198] sm:$0xff] %vm517, %v485
  %570 = vst.msk [vmem:[%s3 + $0x1a0] sm:$0xff] %vm517, %v488
  %571 = vst.msk [vmem:[%s3 + $0x1a8] sm:$0xff] %vm517, %v490
  %572 = vst.msk [vmem:[%s3 + $0x1b0] sm:$0xff] %vm517, %v493
  %573 = vst.msk [vmem:[%s3 + $0x1b8] sm:$0xff] %vm517, %v495
  %574 = vst.msk [vmem:[%s3 + $0x1c0] sm:$0xff] %vm517, %v498
  %575 = vst.msk [vmem:[%s3 + $0x1c8] sm:$0xff] %vm517, %v500
  %576 = vst.msk [vmem:[%s3 + $0x1d0] sm:$0xff] %vm517, %v503
  %577 = vst.msk [vmem:[%s3 + $0x1d8] sm:$0xff] %vm517, %v505
  %578 = vst.msk [vmem:[%s3 + $0x1e0] sm:$0xff] %vm517, %v508
  %579 = vst.msk [vmem:[%s3 + $0x1e8] sm:$0xff] %vm517, %v510
  %580 = vst.msk [vmem:[%s3 + $0x1f0] sm:$0xff] %vm517, %v513
  %581 = vst.msk [vmem:[%s3 + $0x1f8] sm:$0xff] %vm517, %v515
  // Predicated region
  $region14: #{unet2d_forward.53} parent=0 // pred_check
    _
  $region15: #{unet2d_forward.53} parent=0 // pred_check_branch
    %583 = sbr.rel (0) target = $region17
  $region16: #{unet2d_forward.53} parent=0 // pred_region
    _
  $region17: #{unet2d_forward.53} parent=0 // pred_fallthru
    _
  // Predicated region
  $region18: #{unet2d_forward.53} parent=0 // pred_check
    _
  $region19: #{unet2d_forward.53} parent=0 // pred_check_branch
    %585 = sbr.rel (0) target = $region21
  $region20: #{unet2d_forward.53} parent=0 // pred_region
    _
  $region21: #{unet2d_forward.53} parent=0 // pred_fallthru
    _

// kernel: unet2d_forward.51
$region0: #{unet2d_forward.51}
  #allocation0 [shape = 'u32[]', space=smem, size = 0x4, offset = 0x4, fixed_abs, tag = 'smem constant byte address 0x4 - core index']
  #allocation1 [shape = 'u32[72,128]{1,0:T(1,128)}', space=vmem, size = 0x9000, scoped, tag = 'internal scratch']
  %s0 = inlined_call_operand.vmem [shape: bf16[512,144], index: 0, kind: input, shape index: {}]
  %s1 = inlined_call_operand.vmem [shape: bf16[512,144], index: 1, kind: input, shape index: {}]
  %s2 = inlined_call_operand.vmem [shape: bf16[144,16], index: 2, kind: input, shape index: {}]
  %s3 = inlined_call_operand.vmem [shape: bf16[144,16], index: 3, kind: input, shape index: {}]
  %s4 = inlined_call_operand.vmem [shape: f32[1,16], index: 4, kind: input, shape index: {}]
  %s5 = inlined_call_operand.vmem [shape: f32[512,16], index: 5, kind: output, shape index: {}]
  %s6 = sld [smem:[#allocation0]]
  $region30: #{unet2d_forward.51} parent=0
    _
  %s8 = ssub.s32 1, %s6
  %s9 = scalar_select 0, %s8, %s6
  // Predicated region
  $region2: #{unet2d_forward.51} parent=0 // pred_check
    _
  $region3: #{unet2d_forward.51} parent=0 // pred_check_branch
    %11 = sbr.rel (0) target = $region5
  $region4: #{unet2d_forward.51} parent=0 // pred_region
    _
  $region5: #{unet2d_forward.51} parent=0 // pred_fallthru
    _
  // Predicated region
  $region6: #{unet2d_forward.51} parent=0 // pred_check
    _
  $region7: #{unet2d_forward.51} parent=0 // pred_check_branch
    %13 = sbr.rel (0) target = $region9
  $region8: #{unet2d_forward.51} parent=0 // pred_region
    _
  $region9: #{unet2d_forward.51} parent=0 // pred_fallthru
    _
  // Predicated region
  $region10: #{unet2d_forward.51} parent=0 // pred_check
    _
  $region11: #{unet2d_forward.51} parent=0 // pred_check_branch
    %15 = sbr.rel (0) target = $region13
  $region12: #{unet2d_forward.51} parent=0 // pred_region
    _
  $region13: #{unet2d_forward.51} parent=0 // pred_fallthru
    _
  // Predicated region
  $region14: #{unet2d_forward.51} parent=0 // pred_check
    _
  $region15: #{unet2d_forward.51} parent=0 // pred_check_branch
    %17 = sbr.rel (0) target = $region17
  $region16: #{unet2d_forward.51} parent=0 // pred_region
    _
  $region17: #{unet2d_forward.51} parent=0 // pred_fallthru
    _
  // Predicated region
  $region18: #{unet2d_forward.51} parent=0 // pred_check
    _
  $region19: #{unet2d_forward.51} parent=0 // pred_check_branch
    %19 = sbr.rel (0) target = $region21
  $region20: #{unet2d_forward.51} parent=0 // pred_region
    _
  $region21: #{unet2d_forward.51} parent=0 // pred_fallthru
    _
  %v21 = vld [vmem:[%s0] sm:$0xff]
  %v22 = vld [vmem:[%s0 + $0x8] sm:$0xff]
  %v23 = vld [vmem:[%s0 + $0x10] sm:$0xff]
  %v24 = vld [vmem:[%s0 + $0x18] sm:$0xff]
  %v25 = vld [vmem:[%s0 + $0x20] sm:$0xff]
  %v26 = vld [vmem:[%s0 + $0x28] sm:$0xff]
  %v27 = vld [vmem:[%s0 + $0x30] sm:$0xff]
  %v28 = vld [vmem:[%s0 + $0x38] sm:$0xff]
  %v29 = vld [vmem:[%s0 + $0x40] sm:$0xff]
  %v30 = vld [vmem:[%s0 + $0x48] sm:$0xff]
  %v31 = vld [vmem:[%s0 + $0x50] sm:$0xff]
  %v32 = vld [vmem:[%s0 + $0x58] sm:$0xff]
  %v33 = vld [vmem:[%s0 + $0x60] sm:$0xff]
  %v34 = vld [vmem:[%s0 + $0x68] sm:$0xff]
  %v35 = vld [vmem:[%s0 + $0x70] sm:$0xff]
  %v36 = vld [vmem:[%s0 + $0x78] sm:$0xff]
  %v37 = vld [vmem:[%s0 + $0x80] sm:$0xff]
  %v38 = vld [vmem:[%s0 + $0x88] sm:$0xff]
  %v39 = vld [vmem:[%s0 + $0x90] sm:$0xff]
  %v40 = vld [vmem:[%s0 + $0x98] sm:$0xff]
  %v41 = vld [vmem:[%s0 + $0xa0] sm:$0xff]
  %v42 = vld [vmem:[%s0 + $0xa8] sm:$0xff]
  %v43 = vld [vmem:[%s0 + $0xb0] sm:$0xff]
  %v44 = vld [vmem:[%s0 + $0xb8] sm:$0xff]
  %v45 = vld [vmem:[%s0 + $0xc0] sm:$0xff]
  %v46 = vld [vmem:[%s0 + $0xc8] sm:$0xff]
  %v47 = vld [vmem:[%s0 + $0xd0] sm:$0xff]
  %v48 = vld [vmem:[%s0 + $0xd8] sm:$0xff]
  %v49 = vld [vmem:[%s0 + $0xe0] sm:$0xff]
  %v50 = vld [vmem:[%s0 + $0xe8] sm:$0xff]
  %v51 = vld [vmem:[%s0 + $0xf0] sm:$0xff]
  %v52 = vld [vmem:[%s0 + $0xf8] sm:$0xff]
  %v53 = vld [vmem:[%s0 + $0x100] sm:$0xff]
  %v54 = vld [vmem:[%s0 + $0x108] sm:$0xff]
  %v55 = vld [vmem:[%s0 + $0x110] sm:$0xff]
  %v56 = vld [vmem:[%s0 + $0x118] sm:$0xff]
  %v57 = vld [vmem:[%s0 + $0x120] sm:$0xff]
  %v58 = vld [vmem:[%s0 + $0x128] sm:$0xff]
  %v59 = vld [vmem:[%s0 + $0x130] sm:$0xff]
  %v60 = vld [vmem:[%s0 + $0x138] sm:$0xff]
  %v61 = vld [vmem:[%s0 + $0x140] sm:$0xff]
  %v62 = vld [vmem:[%s0 + $0x148] sm:$0xff]
  %v63 = vld [vmem:[%s0 + $0x150] sm:$0xff]
  %v64 = vld [vmem:[%s0 + $0x158] sm:$0xff]
  %v65 = vld [vmem:[%s0 + $0x160] sm:$0xff]
  %v66 = vld [vmem:[%s0 + $0x168] sm:$0xff]
  %v67 = vld [vmem:[%s0 + $0x170] sm:$0xff]
  %v68 = vld [vmem:[%s0 + $0x178] sm:$0xff]
  %v69 = vld [vmem:[%s0 + $0x180] sm:$0xff]
  %v70 = vld [vmem:[%s0 + $0x188] sm:$0xff]
  %v71 = vld [vmem:[%s0 + $0x190] sm:$0xff]
  %v72 = vld [vmem:[%s0 + $0x198] sm:$0xff]
  %v73 = vld [vmem:[%s0 + $0x1a0] sm:$0xff]
  %v74 = vld [vmem:[%s0 + $0x1a8] sm:$0xff]
  %v75 = vld [vmem:[%s0 + $0x1b0] sm:$0xff]
  %v76 = vld [vmem:[%s0 + $0x1b8] sm:$0xff]
  %v77 = vld [vmem:[%s0 + $0x1c0] sm:$0xff]
  %v78 = vld [vmem:[%s0 + $0x1c8] sm:$0xff]
  %v79 = vld [vmem:[%s0 + $0x1d0] sm:$0xff]
  %v80 = vld [vmem:[%s0 + $0x1d8] sm:$0xff]
  %v81 = vld [vmem:[%s0 + $0x1e0] sm:$0xff]
  %v82 = vld [vmem:[%s0 + $0x1e8] sm:$0xff]
  %v83 = vld [vmem:[%s0 + $0x1f0] sm:$0xff]
  %v84 = vld [vmem:[%s0 + $0x1f8] sm:$0xff]
  %v85 = vld [vmem:[%s2] sm:$0xf]
  %v86 = vld [vmem:[%s2 + $0x4] sm:$0xf]
  %v87 = vld [vmem:[%s2 + $0x8] sm:$0xf]
  %v88 = vld [vmem:[%s2 + $0xc] sm:$0xf]
  %v89 = vld [vmem:[%s2 + $0x10] sm:$0xf]
  %v90 = vld [vmem:[%s2 + $0x14] sm:$0xf]
  %v91 = vld [vmem:[%s2 + $0x18] sm:$0xf]
  %v92 = vld [vmem:[%s2 + $0x1c] sm:$0xf]
  %v93 = vld [vmem:[%s2 + $0x20] sm:$0xf]
  %v94 = vld [vmem:[%s2 + $0x24] sm:$0xf]
  %v95 = vld [vmem:[%s2 + $0x28] sm:$0xf]
  %v96 = vld [vmem:[%s2 + $0x2c] sm:$0xf]
  %v97 = vld [vmem:[%s2 + $0x30] sm:$0xf]
  %v98 = vld [vmem:[%s2 + $0x34] sm:$0xf]
  %v99 = vld [vmem:[%s2 + $0x38] sm:$0xf]
  %v100 = vld [vmem:[%s2 + $0x3c] sm:$0xf]
  %v101 = vld [vmem:[%s2 + $0x40] sm:$0xf]
  %v102 = vld [vmem:[%s2 + $0x44] sm:$0xf]
  %v103 = vld [vmem:[%s1] sm:$0xff]
  %v104 = vld [vmem:[%s1 + $0x8] sm:$0xff]
  %v105 = vld [vmem:[%s1 + $0x10] sm:$0xff]
  %v106 = vld [vmem:[%s1 + $0x18] sm:$0xff]
  %v107 = vld [vmem:[%s1 + $0x20] sm:$0xff]
  %v108 = vld [vmem:[%s1 + $0x28] sm:$0xff]
  %v109 = vld [vmem:[%s1 + $0x30] sm:$0xff]
  %v110 = vld [vmem:[%s1 + $0x38] sm:$0xff]
  %v111 = vld [vmem:[%s1 + $0x40] sm:$0xff]
  %v112 = vld [vmem:[%s1 + $0x48] sm:$0xff]
  %v113 = vld [vmem:[%s1 + $0x50] sm:$0xff]
  %v114 = vld [vmem:[%s1 + $0x58] sm:$0xff]
  %v115 = vld [vmem:[%s1 + $0x60] sm:$0xff]
  %v116 = vld [vmem:[%s1 + $0x68] sm:$0xff]
  %v117 = vld [vmem:[%s1 + $0x70] sm:$0xff]
  %v118 = vld [vmem:[%s1 + $0x78] sm:$0xff]
  %v119 = vld [vmem:[%s1 + $0x80] sm:$0xff]
  %v120 = vld [vmem:[%s1 + $0x88] sm:$0xff]
  %v121 = vld [vmem:[%s1 + $0x90] sm:$0xff]
  %v122 = vld [vmem:[%s1 + $0x98] sm:$0xff]
  %v123 = vld [vmem:[%s1 + $0xa0] sm:$0xff]
  %v124 = vld [vmem:[%s1 + $0xa8] sm:$0xff]
  %v125 = vld [vmem:[%s1 + $0xb0] sm:$0xff]
  %v126 = vld [vmem:[%s1 + $0xb8] sm:$0xff]
  %v127 = vld [vmem:[%s1 + $0xc0] sm:$0xff]
  %v128 = vld [vmem:[%s1 + $0xc8] sm:$0xff]
  %v129 = vld [vmem:[%s1 + $0xd0] sm:$0xff]
  %v130 = vld [vmem:[%s1 + $0xd8] sm:$0xff]
  %v131 = vld [vmem:[%s1 + $0xe0] sm:$0xff]
  %v132 = vld [vmem:[%s1 + $0xe8] sm:$0xff]
  %v133 = vld [vmem:[%s1 + $0xf0] sm:$0xff]
  %v134 = vld [vmem:[%s1 + $0xf8] sm:$0xff]
  %v135 = vld [vmem:[%s1 + $0x100] sm:$0xff]
  %v136 = vld [vmem:[%s1 + $0x108] sm:$0xff]
  %v137 = vld [vmem:[%s1 + $0x110] sm:$0xff]
  %v138 = vld [vmem:[%s1 + $0x118] sm:$0xff]
  %v139 = vld [vmem:[%s1 + $0x120] sm:$0xff]
  %v140 = vld [vmem:[%s1 + $0x128] sm:$0xff]
  %v141 = vld [vmem:[%s1 + $0x130] sm:$0xff]
  %v142 = vld [vmem:[%s1 + $0x138] sm:$0xff]
  %v143 = vld [vmem:[%s1 + $0x140] sm:$0xff]
  %v144 = vld [vmem:[%s1 + $0x148] sm:$0xff]
  %v145 = vld [vmem:[%s1 + $0x150] sm:$0xff]
  %v146 = vld [vmem:[%s1 + $0x158] sm:$0xff]
  %v147 = vld [vmem:[%s1 + $0x160] sm:$0xff]
  %v148 = vld [vmem:[%s1 + $0x168] sm:$0xff]
  %v149 = vld [vmem:[%s1 + $0x170] sm:$0xff]
  %v150 = vld [vmem:[%s1 + $0x178] sm:$0xff]
  %v151 = vld [vmem:[%s1 + $0x180] sm:$0xff]
  %v152 = vld [vmem:[%s1 + $0x188] sm:$0xff]
  %v153 = vld [vmem:[%s1 + $0x190] sm:$0xff]
  %v154 = vld [vmem:[%s1 + $0x198] sm:$0xff]
  %v155 = vld [vmem:[%s1 + $0x1a0] sm:$0xff]
  %v156 = vld [vmem:[%s1 + $0x1a8] sm:$0xff]
  %v157 = vld [vmem:[%s1 + $0x1b0] sm:$0xff]
  %v158 = vld [vmem:[%s1 + $0x1b8] sm:$0xff]
  %v159 = vld [vmem:[%s1 + $0x1c0] sm:$0xff]
  %v160 = vld [vmem:[%s1 + $0x1c8] sm:$0xff]
  %v161 = vld [vmem:[%s1 + $0x1d0] sm:$0xff]
  %v162 = vld [vmem:[%s1 + $0x1d8] sm:$0xff]
  %v163 = vld [vmem:[%s1 + $0x1e0] sm:$0xff]
  %v164 = vld [vmem:[%s1 + $0x1e8] sm:$0xff]
  %v165 = vld [vmem:[%s1 + $0x1f0] sm:$0xff]
  %v166 = vld [vmem:[%s1 + $0x1f8] sm:$0xff]
  %v167 = vld [vmem:[%s3] sm:$0xf]
  %v168 = vld [vmem:[%s3 + $0x4] sm:$0xf]
  %v169 = vld [vmem:[%s3 + $0x8] sm:$0xf]
  %v170 = vld [vmem:[%s3 + $0xc] sm:$0xf]
  %v171 = vld [vmem:[%s3 + $0x10] sm:$0xf]
  %v172 = vld [vmem:[%s3 + $0x14] sm:$0xf]
  %v173 = vld [vmem:[%s3 + $0x18] sm:$0xf]
  %v174 = vld [vmem:[%s3 + $0x1c] sm:$0xf]
  %v175 = vld [vmem:[%s3 + $0x20] sm:$0xf]
  %v176 = vld [vmem:[%s3 + $0x24] sm:$0xf]
  %v177 = vld [vmem:[%s3 + $0x28] sm:$0xf]
  %v178 = vld [vmem:[%s3 + $0x2c] sm:$0xf]
  %v179 = vld [vmem:[%s3 + $0x30] sm:$0xf]
  %v180 = vld [vmem:[%s3 + $0x34] sm:$0xf]
  %v181 = vld [vmem:[%s3 + $0x38] sm:$0xf]
  %v182 = vld [vmem:[%s3 + $0x3c] sm:$0xf]
  %v183 = vld [vmem:[%s3 + $0x40] sm:$0xf]
  %v184 = vld [vmem:[%s3 + $0x44] sm:$0xf]
  %v249 = vunpack.c.l.b16 %v103
  %v250 = vunpack.c.h.b16 %v103
  %v251 = vunpack.c.l.b16 %v104
  %v252 = vunpack.c.h.b16 %v104
  %v253 = vunpack.c.l.b16 %v105
  %v254 = vunpack.c.h.b16 %v105
  %v255 = vunpack.c.l.b16 %v106
  %v256 = vunpack.c.h.b16 %v106
  %v257 = vunpack.c.l.b16 %v107
  %v258 = vunpack.c.h.b16 %v107
  %v259 = vunpack.c.l.b16 %v108
  %v260 = vunpack.c.h.b16 %v108
  %v261 = vunpack.c.l.b16 %v109
  %v262 = vunpack.c.h.b16 %v109
  %v263 = vunpack.c.l.b16 %v110
  %v264 = vunpack.c.h.b16 %v110
  %v265 = vunpack.c.l.b16 %v111
  %v266 = vunpack.c.h.b16 %v111
  %v267 = vunpack.c.l.b16 %v112
  %v268 = vunpack.c.h.b16 %v112
  %v269 = vunpack.c.l.b16 %v113
  %v270 = vunpack.c.h.b16 %v113
  %v271 = vunpack.c.l.b16 %v114
  %v272 = vunpack.c.h.b16 %v114
  %v273 = vunpack.c.l.b16 %v115
  %v274 = vunpack.c.h.b16 %v115
  %v275 = vunpack.c.l.b16 %v116
  %v276 = vunpack.c.h.b16 %v116
  %v277 = vunpack.c.l.b16 %v117
  %v278 = vunpack.c.h.b16 %v117
  %v279 = vunpack.c.l.b16 %v118
  %v280 = vunpack.c.h.b16 %v118
  %v281 = vunpack.c.l.b16 %v119
  %v282 = vunpack.c.h.b16 %v119
  %v283 = vunpack.c.l.b16 %v120
  %v284 = vunpack.c.h.b16 %v120
  %v285 = vunpack.c.l.b16 %v121
  %v286 = vunpack.c.h.b16 %v121
  %v287 = vunpack.c.l.b16 %v122
  %v288 = vunpack.c.h.b16 %v122
  %v289 = vunpack.c.l.b16 %v123
  %v290 = vunpack.c.h.b16 %v123
  %v291 = vunpack.c.l.b16 %v124
  %v292 = vunpack.c.h.b16 %v124
  %v293 = vunpack.c.l.b16 %v125
  %v294 = vunpack.c.h.b16 %v125
  %v295 = vunpack.c.l.b16 %v126
  %v296 = vunpack.c.h.b16 %v126
  %v297 = vunpack.c.l.b16 %v127
  %v298 = vunpack.c.h.b16 %v127
  %v299 = vunpack.c.l.b16 %v128
  %v300 = vunpack.c.h.b16 %v128
  %v301 = vunpack.c.l.b16 %v129
  %v302 = vunpack.c.h.b16 %v129
  %v303 = vunpack.c.l.b16 %v130
  %v304 = vunpack.c.h.b16 %v130
  %v305 = vunpack.c.l.b16 %v131
  %v306 = vunpack.c.h.b16 %v131
  %v307 = vunpack.c.l.b16 %v132
  %v308 = vunpack.c.h.b16 %v132
  %v309 = vunpack.c.l.b16 %v133
  %v310 = vunpack.c.h.b16 %v133
  %v311 = vunpack.c.l.b16 %v134
  %v312 = vunpack.c.h.b16 %v134
  %v313 = vunpack.c.l.b16 %v135
  %v314 = vunpack.c.h.b16 %v135
  %v315 = vunpack.c.l.b16 %v136
  %v316 = vunpack.c.h.b16 %v136
  %v317 = vunpack.c.l.b16 %v137
  %v318 = vunpack.c.h.b16 %v137
  %v319 = vunpack.c.l.b16 %v138
  %v320 = vunpack.c.h.b16 %v138
  %v321 = vunpack.c.l.b16 %v139
  %v322 = vunpack.c.h.b16 %v139
  %v323 = vunpack.c.l.b16 %v140
  %v324 = vunpack.c.h.b16 %v140
  %v325 = vunpack.c.l.b16 %v141
  %v326 = vunpack.c.h.b16 %v141
  %v327 = vunpack.c.l.b16 %v142
  %v328 = vunpack.c.h.b16 %v142
  %v329 = vunpack.c.l.b16 %v143
  %v330 = vunpack.c.h.b16 %v143
  %v331 = vunpack.c.l.b16 %v144
  %v332 = vunpack.c.h.b16 %v144
  %v333 = vunpack.c.l.b16 %v145
  %v334 = vunpack.c.h.b16 %v145
  %v335 = vunpack.c.l.b16 %v146
  %v336 = vunpack.c.h.b16 %v146
  %v337 = vunpack.c.l.b16 %v147
  %v338 = vunpack.c.h.b16 %v147
  %v339 = vunpack.c.l.b16 %v148
  %v340 = vunpack.c.h.b16 %v148
  %v341 = vunpack.c.l.b16 %v149
  %v342 = vunpack.c.h.b16 %v149
  %v343 = vunpack.c.l.b16 %v150
  %v344 = vunpack.c.h.b16 %v150
  %v345 = vunpack.c.l.b16 %v151
  %v346 = vunpack.c.h.b16 %v151
  %v347 = vunpack.c.l.b16 %v152
  %v348 = vunpack.c.h.b16 %v152
  %v349 = vunpack.c.l.b16 %v153
  %v350 = vunpack.c.h.b16 %v153
  %v351 = vunpack.c.l.b16 %v154
  %v352 = vunpack.c.h.b16 %v154
  %v353 = vunpack.c.l.b16 %v155
  %v354 = vunpack.c.h.b16 %v155
  %v355 = vunpack.c.l.b16 %v156
  %v356 = vunpack.c.h.b16 %v156
  %v357 = vunpack.c.l.b16 %v157
  %v358 = vunpack.c.h.b16 %v157
  %v359 = vunpack.c.l.b16 %v158
  %v360 = vunpack.c.h.b16 %v158
  %v361 = vunpack.c.l.b16 %v159
  %v362 = vunpack.c.h.b16 %v159
  %v363 = vunpack.c.l.b16 %v160
  %v364 = vunpack.c.h.b16 %v160
  %v365 = vunpack.c.l.b16 %v161
  %v366 = vunpack.c.h.b16 %v161
  %v367 = vunpack.c.l.b16 %v162
  %v368 = vunpack.c.h.b16 %v162
  %v369 = vunpack.c.l.b16 %v163
  %v370 = vunpack.c.h.b16 %v163
  %v371 = vunpack.c.l.b16 %v164
  %v372 = vunpack.c.h.b16 %v164
  %v373 = vunpack.c.l.b16 %v165
  %v374 = vunpack.c.h.b16 %v165
  %v375 = vunpack.c.l.b16 %v166
  %v376 = vunpack.c.h.b16 %v166
  %v377 = vpack.c.b16 %v251, %v249
  %v378 = vpack.c.b16 %v252, %v250
  %v379 = vpack.c.b16 %v255, %v253
  %v380 = vpack.c.b16 %v256, %v254
  %v381 = vpack.c.b16 %v259, %v257
  %v382 = vpack.c.b16 %v260, %v258
  %v383 = vpack.c.b16 %v263, %v261
  %v384 = vpack.c.b16 %v264, %v262
  %v385 = vpack.c.b16 %v267, %v265
  %v386 = vpack.c.b16 %v268, %v266
  %v387 = vpack.c.b16 %v271, %v269
  %v388 = vpack.c.b16 %v272, %v270
  %v389 = vpack.c.b16 %v275, %v273
  %v390 = vpack.c.b16 %v276, %v274
  %v391 = vpack.c.b16 %v279, %v277
  %v392 = vpack.c.b16 %v280, %v278
  %v393 = vpack.c.b16 %v283, %v281
  %v394 = vpack.c.b16 %v284, %v282
  %v395 = vpack.c.b16 %v287, %v285
  %v396 = vpack.c.b16 %v288, %v286
  %v397 = vpack.c.b16 %v291, %v289
  %v398 = vpack.c.b16 %v292, %v290
  %v399 = vpack.c.b16 %v295, %v293
  %v400 = vpack.c.b16 %v296, %v294
  %v401 = vpack.c.b16 %v299, %v297
  %v402 = vpack.c.b16 %v300, %v298
  %v403 = vpack.c.b16 %v303, %v301
  %v404 = vpack.c.b16 %v304, %v302
  %v405 = vpack.c.b16 %v307, %v305
  %v406 = vpack.c.b16 %v308, %v306
  %v407 = vpack.c.b16 %v311, %v309
  %v408 = vpack.c.b16 %v312, %v310
  %v409 = vpack.c.b16 %v315, %v313
  %v410 = vpack.c.b16 %v316, %v314
  %v411 = vpack.c.b16 %v319, %v317
  %v412 = vpack.c.b16 %v320, %v318
  %v413 = vpack.c.b16 %v323, %v321
  %v414 = vpack.c.b16 %v324, %v322
  %v415 = vpack.c.b16 %v327, %v325
  %v416 = vpack.c.b16 %v328, %v326
  %v417 = vpack.c.b16 %v331, %v329
  %v418 = vpack.c.b16 %v332, %v330
  %v419 = vpack.c.b16 %v335, %v333
  %v420 = vpack.c.b16 %v336, %v334
  %v421 = vpack.c.b16 %v339, %v337
  %v422 = vpack.c.b16 %v340, %v338
  %v423 = vpack.c.b16 %v343, %v341
  %v424 = vpack.c.b16 %v344, %v342
  %v425 = vpack.c.b16 %v347, %v345
  %v426 = vpack.c.b16 %v348, %v346
  %v427 = vpack.c.b16 %v351, %v349
  %v428 = vpack.c.b16 %v352, %v350
  %v429 = vpack.c.b16 %v355, %v353
  %v430 = vpack.c.b16 %v356, %v354
  %v431 = vpack.c.b16 %v359, %v357
  %v432 = vpack.c.b16 %v360, %v358
  %v433 = vpack.c.b16 %v363, %v361
  %v434 = vpack.c.b16 %v364, %v362
  %v435 = vpack.c.b16 %v367, %v365
  %v436 = vpack.c.b16 %v368, %v366
  %v437 = vpack.c.b16 %v371, %v369
  %v438 = vpack.c.b16 %v372, %v370
  %v439 = vpack.c.b16 %v375, %v373
  %v440 = vpack.c.b16 %v376, %v374
  %v491 = vunpack.c.l.b16 %v167
  %v492 = vunpack.c.l.b16 %v168
  %v493 = vunpack.c.l.b16 %v169
  %v494 = vunpack.c.l.b16 %v170
  %v495 = vunpack.c.l.b16 %v171
  %v496 = vunpack.c.l.b16 %v172
  %v497 = vunpack.c.l.b16 %v173
  %v498 = vunpack.c.l.b16 %v174
  %v499 = vunpack.c.l.b16 %v175
  %v500 = vunpack.c.l.b16 %v176
  %v501 = vunpack.c.l.b16 %v177
  %v502 = vunpack.c.l.b16 %v178
  %v503 = vunpack.c.l.b16 %v179
  %v504 = vunpack.c.l.b16 %v180
  %v505 = vunpack.c.l.b16 %v181
  %v506 = vunpack.c.l.b16 %v182
  %v507 = vunpack.c.l.b16 %v183
  %v508 = vunpack.c.l.b16 %v184
  %v509 = vpack.c.b16 %v492, %v491
  %v510 = vpack.c.b16 %v494, %v493
  %v511 = vpack.c.b16 %v496, %v495
  %v512 = vpack.c.b16 %v498, %v497
  %v513 = vpack.c.b16 %v500, %v499
  %v514 = vpack.c.b16 %v502, %v501
  %v515 = vpack.c.b16 %v504, %v503
  %v516 = vpack.c.b16 %v506, %v505
  %v517 = vpack.c.b16 %v508, %v507
  %vm527 = vcmask 130048
  %v529 = vsel %vm527, %v378, 0
  %v532 = vsel %vm527, %v380, 0
  %v535 = vsel %vm527, %v382, 0
  %v538 = vsel %vm527, %v384, 0
  %v541 = vsel %vm527, %v386, 0
  %v544 = vsel %vm527, %v388, 0
  %v547 = vsel %vm527, %v390, 0
  %v550 = vsel %vm527, %v392, 0
  %v553 = vsel %vm527, %v394, 0
  %v556 = vsel %vm527, %v396, 0
  %v559 = vsel %vm527, %v398, 0
  %v562 = vsel %vm527, %v400, 0
  %v565 = vsel %vm527, %v402, 0
  %v568 = vsel %vm527, %v404, 0
  %v571 = vsel %vm527, %v406, 0
  %v574 = vsel %vm527, %v408, 0
  %v577 = vsel %vm527, %v410, 0
  %v580 = vsel %vm527, %v412, 0
  %v583 = vsel %vm527, %v414, 0
  %v586 = vsel %vm527, %v416, 0
  %v589 = vsel %vm527, %v418, 0
  %v592 = vsel %vm527, %v420, 0
  %v595 = vsel %vm527, %v422, 0
  %v598 = vsel %vm527, %v424, 0
  %v601 = vsel %vm527, %v426, 0
  %v604 = vsel %vm527, %v428, 0
  %v607 = vsel %vm527, %v430, 0
  %v610 = vsel %vm527, %v432, 0
  %v613 = vsel %vm527, %v434, 0
  %v616 = vsel %vm527, %v436, 0
  %v619 = vsel %vm527, %v438, 0
  %v622 = vsel %vm527, %v440, 0
  %624 = vmatpush.bf16.msra.mxu0 %v516
  %625 = vmatpush.bf16.msra.mxu0 %v515
  %626 = vmatpush.bf16.msra.mxu0 %v514
  %627 = vmatpush.bf16.msra.mxu0 %v513
  %628 = vmatpush.bf16.msra.mxu0 %v512
  %629 = vmatpush.bf16.msra.mxu0 %v511
  %630 = vmatpush.bf16.msra.mxu0 %v510
  %631 = vmatpush.bf16.msra.mxu0 %v509
  %632 = vmatmul.bf16.gmra.mxu0 %v377
  %v633 = vpop.f32.mrf.mxu0
  %v634 = vadd.f32 0.0, %v633
  %v635 = vpop.f32.mrf.mxu0
  %v636 = vadd.f32 0.0, %v635
  %637 = vmatmul.bf16.gmra.mxu0 %v379
  %v638 = vpop.f32.mrf.mxu0
  %v639 = vadd.f32 0.0, %v638
  %v640 = vpop.f32.mrf.mxu0
  %v641 = vadd.f32 0.0, %v640
  %642 = vmatmul.bf16.gmra.mxu0 %v381
  %v643 = vpop.f32.mrf.mxu0
  %v644 = vadd.f32 0.0, %v643
  %v645 = vpop.f32.mrf.mxu0
  %v646 = vadd.f32 0.0, %v645
  %647 = vmatmul.bf16.gmra.mxu0 %v383
  %v648 = vpop.f32.mrf.mxu0
  %v649 = vadd.f32 0.0, %v648
  %v650 = vpop.f32.mrf.mxu0
  %v651 = vadd.f32 0.0, %v650
  %652 = vmatmul.bf16.gmra.mxu0 %v385
  %v653 = vpop.f32.mrf.mxu0
  %v654 = vadd.f32 0.0, %v653
  %v655 = vpop.f32.mrf.mxu0
  %v656 = vadd.f32 0.0, %v655
  %657 = vmatmul.bf16.gmra.mxu0 %v387
  %v658 = vpop.f32.mrf.mxu0
  %v659 = vadd.f32 0.0, %v658
  %v660 = vpop.f32.mrf.mxu0
  %v661 = vadd.f32 0.0, %v660
  %662 = vmatmul.bf16.gmra.mxu0 %v389
  %v663 = vpop.f32.mrf.mxu0
  %v664 = vadd.f32 0.0, %v663
  %v665 = vpop.f32.mrf.mxu0
  %v666 = vadd.f32 0.0, %v665
  %667 = vmatmul.bf16.gmra.mxu0 %v391
  %v668 = vpop.f32.mrf.mxu0
  %v669 = vadd.f32 0.0, %v668
  %v670 = vpop.f32.mrf.mxu0
  %v671 = vadd.f32 0.0, %v670
  %672 = vmatmul.bf16.gmra.mxu0 %v393
  %v673 = vpop.f32.mrf.mxu0
  %v674 = vadd.f32 0.0, %v673
  %v675 = vpop.f32.mrf.mxu0
  %v676 = vadd.f32 0.0, %v675
  %677 = vmatmul.bf16.gmra.mxu0 %v395
  %v678 = vpop.f32.mrf.mxu0
  %v679 = vadd.f32 0.0, %v678
  %v680 = vpop.f32.mrf.mxu0
  %v681 = vadd.f32 0.0, %v680
  %682 = vmatmul.bf16.gmra.mxu0 %v397
  %v683 = vpop.f32.mrf.mxu0
  %v684 = vadd.f32 0.0, %v683
  %v685 = vpop.f32.mrf.mxu0
  %v686 = vadd.f32 0.0, %v685
  %687 = vmatmul.bf16.gmra.mxu0 %v399
  %v688 = vpop.f32.mrf.mxu0
  %v689 = vadd.f32 0.0, %v688
  %v690 = vpop.f32.mrf.mxu0
  %v691 = vadd.f32 0.0, %v690
  %692 = vmatmul.bf16.gmra.mxu0 %v401
  %v693 = vpop.f32.mrf.mxu0
  %v694 = vadd.f32 0.0, %v693
  %v695 = vpop.f32.mrf.mxu0
  %v696 = vadd.f32 0.0, %v695
  %697 = vmatmul.bf16.gmra.mxu0 %v403
  %v698 = vpop.f32.mrf.mxu0
  %v699 = vadd.f32 0.0, %v698
  %v700 = vpop.f32.mrf.mxu0
  %v701 = vadd.f32 0.0, %v700
  %702 = vmatmul.bf16.gmra.mxu0 %v405
  %v703 = vpop.f32.mrf.mxu0
  %v704 = vadd.f32 0.0, %v703
  %v705 = vpop.f32.mrf.mxu0
  %v706 = vadd.f32 0.0, %v705
  %707 = vmatmul.bf16.gmra.mxu0 %v407
  %v708 = vpop.f32.mrf.mxu0
  %v709 = vadd.f32 0.0, %v708
  %v710 = vpop.f32.mrf.mxu0
  %v711 = vadd.f32 0.0, %v710
  %712 = vmatmul.bf16.gmra.mxu0 %v409
  %v713 = vpop.f32.mrf.mxu0
  %v714 = vadd.f32 0.0, %v713
  %v715 = vpop.f32.mrf.mxu0
  %v716 = vadd.f32 0.0, %v715
  %717 = vmatmul.bf16.gmra.mxu0 %v411
  %v718 = vpop.f32.mrf.mxu0
  %v719 = vadd.f32 0.0, %v718
  %v720 = vpop.f32.mrf.mxu0
  %v721 = vadd.f32 0.0, %v720
  %722 = vmatmul.bf16.gmra.mxu0 %v413
  %v723 = vpop.f32.mrf.mxu0
  %v724 = vadd.f32 0.0, %v723
  %v725 = vpop.f32.mrf.mxu0
  %v726 = vadd.f32 0.0, %v725
  %727 = vmatmul.bf16.gmra.mxu0 %v415
  %v728 = vpop.f32.mrf.mxu0
  %v729 = vadd.f32 0.0, %v728
  %v730 = vpop.f32.mrf.mxu0
  %v731 = vadd.f32 0.0, %v730
  %732 = vmatmul.bf16.gmra.mxu0 %v417
  %v733 = vpop.f32.mrf.mxu0
  %v734 = vadd.f32 0.0, %v733
  %v735 = vpop.f32.mrf.mxu0
  %v736 = vadd.f32 0.0, %v735
  %737 = vmatmul.bf16.gmra.mxu0 %v419
  %v738 = vpop.f32.mrf.mxu0
  %v739 = vadd.f32 0.0, %v738
  %v740 = vpop.f32.mrf.mxu0
  %v741 = vadd.f32 0.0, %v740
  %742 = vmatmul.bf16.gmra.mxu0 %v421
  %v743 = vpop.f32.mrf.mxu0
  %v744 = vadd.f32 0.0, %v743
  %v745 = vpop.f32.mrf.mxu0
  %v746 = vadd.f32 0.0, %v745
  %747 = vmatmul.bf16.gmra.mxu0 %v423
  %v748 = vpop.f32.mrf.mxu0
  %v749 = vadd.f32 0.0, %v748
  %v750 = vpop.f32.mrf.mxu0
  %v751 = vadd.f32 0.0, %v750
  %752 = vmatmul.bf16.gmra.mxu0 %v425
  %v753 = vpop.f32.mrf.mxu0
  %v754 = vadd.f32 0.0, %v753
  %v755 = vpop.f32.mrf.mxu0
  %v756 = vadd.f32 0.0, %v755
  %757 = vmatmul.bf16.gmra.mxu0 %v427
  %v758 = vpop.f32.mrf.mxu0
  %v759 = vadd.f32 0.0, %v758
  %v760 = vpop.f32.mrf.mxu0
  %v761 = vadd.f32 0.0, %v760
  %762 = vmatmul.bf16.gmra.mxu0 %v429
  %v763 = vpop.f32.mrf.mxu0
  %v764 = vadd.f32 0.0, %v763
  %v765 = vpop.f32.mrf.mxu0
  %v766 = vadd.f32 0.0, %v765
  %767 = vmatmul.bf16.gmra.mxu0 %v431
  %v768 = vpop.f32.mrf.mxu0
  %v769 = vadd.f32 0.0, %v768
  %v770 = vpop.f32.mrf.mxu0
  %v771 = vadd.f32 0.0, %v770
  %772 = vmatmul.bf16.gmra.mxu0 %v433
  %v773 = vpop.f32.mrf.mxu0
  %v774 = vadd.f32 0.0, %v773
  %v775 = vpop.f32.mrf.mxu0
  %v776 = vadd.f32 0.0, %v775
  %777 = vmatmul.bf16.gmra.mxu0 %v435
  %v778 = vpop.f32.mrf.mxu0
  %v779 = vadd.f32 0.0, %v778
  %v780 = vpop.f32.mrf.mxu0
  %v781 = vadd.f32 0.0, %v780
  %782 = vmatmul.bf16.gmra.mxu0 %v437
  %v783 = vpop.f32.mrf.mxu0
  %v784 = vadd.f32 0.0, %v783
  %v785 = vpop.f32.mrf.mxu0
  %v786 = vadd.f32 0.0, %v785
  %787 = vmatmul.bf16.gmra.mxu0 %v439
  %v788 = vpop.f32.mrf.mxu0
  %v789 = vadd.f32 0.0, %v788
  %v790 = vpop.f32.mrf.mxu0
  %v791 = vadd.f32 0.0, %v790
  %792 = vdwg.mxu0
  %793 = vmatpush.bf16.msra.mxu0 0
  %794 = vmatpush.bf16.msra.mxu0 0
  %795 = vmatpush.bf16.msra.mxu0 0
  %796 = vmatpush.bf16.msra.mxu0 0
  %797 = vmatpush.bf16.msra.mxu0 0
  %798 = vmatpush.bf16.msra.mxu0 0
  %799 = vmatpush.bf16.msra.mxu0 0
  %800 = vmatpush.bf16.msra.mxu0 %v517
  %801 = vmatmul.bf16.gmra.mxu0 %v529
  %v802 = vpop.f32.mrf.mxu0
  %v803 = vadd.f32 %v634, %v802
  %v804 = vpop.f32.mrf.mxu0
  %v805 = vadd.f32 %v636, %v804
  %806 = vmatmul.bf16.gmra.mxu0 %v532
  %v807 = vpop.f32.mrf.mxu0
  %v808 = vadd.f32 %v639, %v807
  %v809 = vpop.f32.mrf.mxu0
  %v810 = vadd.f32 %v641, %v809
  %811 = vmatmul.bf16.gmra.mxu0 %v535
  %v812 = vpop.f32.mrf.mxu0
  %v813 = vadd.f32 %v644, %v812
  %v814 = vpop.f32.mrf.mxu0
  %v815 = vadd.f32 %v646, %v814
  %816 = vmatmul.bf16.gmra.mxu0 %v538
  %v817 = vpop.f32.mrf.mxu0
  %v818 = vadd.f32 %v649, %v817
  %v819 = vpop.f32.mrf.mxu0
  %v820 = vadd.f32 %v651, %v819
  %821 = vmatmul.bf16.gmra.mxu0 %v541
  %v822 = vpop.f32.mrf.mxu0
  %v823 = vadd.f32 %v654, %v822
  %v824 = vpop.f32.mrf.mxu0
  %v825 = vadd.f32 %v656, %v824
  %826 = vmatmul.bf16.gmra.mxu0 %v544
  %v827 = vpop.f32.mrf.mxu0
  %v828 = vadd.f32 %v659, %v827
  %v829 = vpop.f32.mrf.mxu0
  %v830 = vadd.f32 %v661, %v829
  %831 = vmatmul.bf16.gmra.mxu0 %v547
  %v832 = vpop.f32.mrf.mxu0
  %v833 = vadd.f32 %v664, %v832
  %v834 = vpop.f32.mrf.mxu0
  %v835 = vadd.f32 %v666, %v834
  %836 = vmatmul.bf16.gmra.mxu0 %v550
  %v837 = vpop.f32.mrf.mxu0
  %v838 = vadd.f32 %v669, %v837
  %v839 = vpop.f32.mrf.mxu0
  %v840 = vadd.f32 %v671, %v839
  %841 = vmatmul.bf16.gmra.mxu0 %v553
  %v842 = vpop.f32.mrf.mxu0
  %v843 = vadd.f32 %v674, %v842
  %v844 = vpop.f32.mrf.mxu0
  %v845 = vadd.f32 %v676, %v844
  %846 = vmatmul.bf16.gmra.mxu0 %v556
  %v847 = vpop.f32.mrf.mxu0
  %v848 = vadd.f32 %v679, %v847
  %v849 = vpop.f32.mrf.mxu0
  %v850 = vadd.f32 %v681, %v849
  %851 = vmatmul.bf16.gmra.mxu0 %v559
  %v852 = vpop.f32.mrf.mxu0
  %v853 = vadd.f32 %v684, %v852
  %v854 = vpop.f32.mrf.mxu0
  %v855 = vadd.f32 %v686, %v854
  %856 = vmatmul.bf16.gmra.mxu0 %v562
  %v857 = vpop.f32.mrf.mxu0
  %v858 = vadd.f32 %v689, %v857
  %v859 = vpop.f32.mrf.mxu0
  %v860 = vadd.f32 %v691, %v859
  %861 = vmatmul.bf16.gmra.mxu0 %v565
  %v862 = vpop.f32.mrf.mxu0
  %v863 = vadd.f32 %v694, %v862
  %v864 = vpop.f32.mrf.mxu0
  %v865 = vadd.f32 %v696, %v864
  %866 = vmatmul.bf16.gmra.mxu0 %v568
  %v867 = vpop.f32.mrf.mxu0
  %v868 = vadd.f32 %v699, %v867
  %v869 = vpop.f32.mrf.mxu0
  %v870 = vadd.f32 %v701, %v869
  %871 = vmatmul.bf16.gmra.mxu0 %v571
  %v872 = vpop.f32.mrf.mxu0
  %v873 = vadd.f32 %v704, %v872
  %v874 = vpop.f32.mrf.mxu0
  %v875 = vadd.f32 %v706, %v874
  %876 = vmatmul.bf16.gmra.mxu0 %v574
  %v877 = vpop.f32.mrf.mxu0
  %v878 = vadd.f32 %v709, %v877
  %v879 = vpop.f32.mrf.mxu0
  %v880 = vadd.f32 %v711, %v879
  %881 = vmatmul.bf16.gmra.mxu0 %v577
  %v882 = vpop.f32.mrf.mxu0
  %v883 = vadd.f32 %v714, %v882
  %v884 = vpop.f32.mrf.mxu0
  %v885 = vadd.f32 %v716, %v884
  %886 = vmatmul.bf16.gmra.mxu0 %v580
  %v887 = vpop.f32.mrf.mxu0
  %v888 = vadd.f32 %v719, %v887
  %v889 = vpop.f32.mrf.mxu0
  %v890 = vadd.f32 %v721, %v889
  %891 = vmatmul.bf16.gmra.mxu0 %v583
  %v892 = vpop.f32.mrf.mxu0
  %v893 = vadd.f32 %v724, %v892
  %v894 = vpop.f32.mrf.mxu0
  %v895 = vadd.f32 %v726, %v894
  %896 = vmatmul.bf16.gmra.mxu0 %v586
  %v897 = vpop.f32.mrf.mxu0
  %v898 = vadd.f32 %v729, %v897
  %v899 = vpop.f32.mrf.mxu0
  %v900 = vadd.f32 %v731, %v899
  %901 = vmatmul.bf16.gmra.mxu0 %v589
  %v902 = vpop.f32.mrf.mxu0
  %v903 = vadd.f32 %v734, %v902
  %v904 = vpop.f32.mrf.mxu0
  %v905 = vadd.f32 %v736, %v904
  %906 = vmatmul.bf16.gmra.mxu0 %v592
  %v907 = vpop.f32.mrf.mxu0
  %v908 = vadd.f32 %v739, %v907
  %v909 = vpop.f32.mrf.mxu0
  %v910 = vadd.f32 %v741, %v909
  %911 = vmatmul.bf16.gmra.mxu0 %v595
  %v912 = vpop.f32.mrf.mxu0
  %v913 = vadd.f32 %v744, %v912
  %v914 = vpop.f32.mrf.mxu0
  %v915 = vadd.f32 %v746, %v914
  %916 = vmatmul.bf16.gmra.mxu0 %v598
  %v917 = vpop.f32.mrf.mxu0
  %v918 = vadd.f32 %v749, %v917
  %v919 = vpop.f32.mrf.mxu0
  %v920 = vadd.f32 %v751, %v919
  %921 = vmatmul.bf16.gmra.mxu0 %v601
  %v922 = vpop.f32.mrf.mxu0
  %v923 = vadd.f32 %v754, %v922
  %v924 = vpop.f32.mrf.mxu0
  %v925 = vadd.f32 %v756, %v924
  %926 = vmatmul.bf16.gmra.mxu0 %v604
  %v927 = vpop.f32.mrf.mxu0
  %v928 = vadd.f32 %v759, %v927
  %v929 = vpop.f32.mrf.mxu0
  %v930 = vadd.f32 %v761, %v929
  %931 = vmatmul.bf16.gmra.mxu0 %v607
  %v932 = vpop.f32.mrf.mxu0
  %v933 = vadd.f32 %v764, %v932
  %v934 = vpop.f32.mrf.mxu0
  %v935 = vadd.f32 %v766, %v934
  %936 = vmatmul.bf16.gmra.mxu0 %v610
  %v937 = vpop.f32.mrf.mxu0
  %v938 = vadd.f32 %v769, %v937
  %v939 = vpop.f32.mrf.mxu0
  %v940 = vadd.f32 %v771, %v939
  %941 = vmatmul.bf16.gmra.mxu0 %v613
  %v942 = vpop.f32.mrf.mxu0
  %v943 = vadd.f32 %v774, %v942
  %v944 = vpop.f32.mrf.mxu0
  %v945 = vadd.f32 %v776, %v944
  %946 = vmatmul.bf16.gmra.mxu0 %v616
  %v947 = vpop.f32.mrf.mxu0
  %v948 = vadd.f32 %v779, %v947
  %v949 = vpop.f32.mrf.mxu0
  %v950 = vadd.f32 %v781, %v949
  %951 = vmatmul.bf16.gmra.mxu0 %v619
  %v952 = vpop.f32.mrf.mxu0
  %v953 = vadd.f32 %v784, %v952
  %v954 = vpop.f32.mrf.mxu0
  %v955 = vadd.f32 %v786, %v954
  %956 = vmatmul.bf16.gmra.mxu0 %v622
  %v957 = vpop.f32.mrf.mxu0
  %v958 = vadd.f32 %v789, %v957
  %v959 = vpop.f32.mrf.mxu0
  %v960 = vadd.f32 %v791, %v959
  %961 = vdwg.mxu0
  %v1026 = vunpack.c.l.b16 %v21
  %v1027 = vunpack.c.h.b16 %v21
  %v1028 = vunpack.c.l.b16 %v22
  %v1029 = vunpack.c.h.b16 %v22
  %v1030 = vunpack.c.l.b16 %v23
  %v1031 = vunpack.c.h.b16 %v23
  %v1032 = vunpack.c.l.b16 %v24
  %v1033 = vunpack.c.h.b16 %v24
  %v1034 = vunpack.c.l.b16 %v25
  %v1035 = vunpack.c.h.b16 %v25
  %v1036 = vunpack.c.l.b16 %v26
  %v1037 = vunpack.c.h.b16 %v26
  %v1038 = vunpack.c.l.b16 %v27
  %v1039 = vunpack.c.h.b16 %v27
  %v1040 = vunpack.c.l.b16 %v28
  %v1041 = vunpack.c.h.b16 %v28
  %v1042 = vunpack.c.l.b16 %v29
  %v1043 = vunpack.c.h.b16 %v29
  %v1044 = vunpack.c.l.b16 %v30
  %v1045 = vunpack.c.h.b16 %v30
  %v1046 = vunpack.c.l.b16 %v31
  %v1047 = vunpack.c.h.b16 %v31
  %v1048 = vunpack.c.l.b16 %v32
  %v1049 = vunpack.c.h.b16 %v32
  %v1050 = vunpack.c.l.b16 %v33
  %v1051 = vunpack.c.h.b16 %v33
  %v1052 = vunpack.c.l.b16 %v34
  %v1053 = vunpack.c.h.b16 %v34
  %v1054 = vunpack.c.l.b16 %v35
  %v1055 = vunpack.c.h.b16 %v35
  %v1056 = vunpack.c.l.b16 %v36
  %v1057 = vunpack.c.h.b16 %v36
  %v1058 = vunpack.c.l.b16 %v37
  %v1059 = vunpack.c.h.b16 %v37
  %v1060 = vunpack.c.l.b16 %v38
  %v1061 = vunpack.c.h.b16 %v38
  %v1062 = vunpack.c.l.b16 %v39
  %v1063 = vunpack.c.h.b16 %v39
  %v1064 = vunpack.c.l.b16 %v40
  %v1065 = vunpack.c.h.b16 %v40
  %v1066 = vunpack.c.l.b16 %v41
  %v1067 = vunpack.c.h.b16 %v41
  %v1068 = vunpack.c.l.b16 %v42
  %v1069 = vunpack.c.h.b16 %v42
  %v1070 = vunpack.c.l.b16 %v43
  %v1071 = vunpack.c.h.b16 %v43
  %v1072 = vunpack.c.l.b16 %v44
  %v1073 = vunpack.c.h.b16 %v44
  %v1074 = vunpack.c.l.b16 %v45
  %v1075 = vunpack.c.h.b16 %v45
  %v1076 = vunpack.c.l.b16 %v46
  %v1077 = vunpack.c.h.b16 %v46
  %v1078 = vunpack.c.l.b16 %v47
  %v1079 = vunpack.c.h.b16 %v47
  %v1080 = vunpack.c.l.b16 %v48
  %v1081 = vunpack.c.h.b16 %v48
  %v1082 = vunpack.c.l.b16 %v49
  %v1083 = vunpack.c.h.b16 %v49
  %v1084 = vunpack.c.l.b16 %v50
  %v1085 = vunpack.c.h.b16 %v50
  %v1086 = vunpack.c.l.b16 %v51
  %v1087 = vunpack.c.h.b16 %v51
  %v1088 = vunpack.c.l.b16 %v52
  %v1089 = vunpack.c.h.b16 %v52
  %v1090 = vunpack.c.l.b16 %v53
  %v1091 = vunpack.c.h.b16 %v53
  %v1092 = vunpack.c.l.b16 %v54
  %v1093 = vunpack.c.h.b16 %v54
  %v1094 = vunpack.c.l.b16 %v55
  %v1095 = vunpack.c.h.b16 %v55
  %v1096 = vunpack.c.l.b16 %v56
  %v1097 = vunpack.c.h.b16 %v56
  %v1098 = vunpack.c.l.b16 %v57
  %v1099 = vunpack.c.h.b16 %v57
  %v1100 = vunpack.c.l.b16 %v58
  %v1101 = vunpack.c.h.b16 %v58
  %v1102 = vunpack.c.l.b16 %v59
  %v1103 = vunpack.c.h.b16 %v59
  %v1104 = vunpack.c.l.b16 %v60
  %v1105 = vunpack.c.h.b16 %v60
  %v1106 = vunpack.c.l.b16 %v61
  %v1107 = vunpack.c.h.b16 %v61
  %v1108 = vunpack.c.l.b16 %v62
  %v1109 = vunpack.c.h.b16 %v62
  %v1110 = vunpack.c.l.b16 %v63
  %v1111 = vunpack.c.h.b16 %v63
  %v1112 = vunpack.c.l.b16 %v64
  %v1113 = vunpack.c.h.b16 %v64
  %v1114 = vunpack.c.l.b16 %v65
  %v1115 = vunpack.c.h.b16 %v65
  %v1116 = vunpack.c.l.b16 %v66
  %v1117 = vunpack.c.h.b16 %v66
  %v1118 = vunpack.c.l.b16 %v67
  %v1119 = vunpack.c.h.b16 %v67
  %v1120 = vunpack.c.l.b16 %v68
  %v1121 = vunpack.c.h.b16 %v68
  %v1122 = vunpack.c.l.b16 %v69
  %v1123 = vunpack.c.h.b16 %v69
  %v1124 = vunpack.c.l.b16 %v70
  %v1125 = vunpack.c.h.b16 %v70
  %v1126 = vunpack.c.l.b16 %v71
  %v1127 = vunpack.c.h.b16 %v71
  %v1128 = vunpack.c.l.b16 %v72
  %v1129 = vunpack.c.h.b16 %v72
  %v1130 = vunpack.c.l.b16 %v73
  %v1131 = vunpack.c.h.b16 %v73
  %v1132 = vunpack.c.l.b16 %v74
  %v1133 = vunpack.c.h.b16 %v74
  %v1134 = vunpack.c.l.b16 %v75
  %v1135 = vunpack.c.h.b16 %v75
  %v1136 = vunpack.c.l.b16 %v76
  %v1137 = vunpack.c.h.b16 %v76
  %v1138 = vunpack.c.l.b16 %v77
  %v1139 = vunpack.c.h.b16 %v77
  %v1140 = vunpack.c.l.b16 %v78
  %v1141 = vunpack.c.h.b16 %v78
  %v1142 = vunpack.c.l.b16 %v79
  %v1143 = vunpack.c.h.b16 %v79
  %v1144 = vunpack.c.l.b16 %v80
  %v1145 = vunpack.c.h.b16 %v80
  %v1146 = vunpack.c.l.b16 %v81
  %v1147 = vunpack.c.h.b16 %v81
  %v1148 = vunpack.c.l.b16 %v82
  %v1149 = vunpack.c.h.b16 %v82
  %v1150 = vunpack.c.l.b16 %v83
  %v1151 = vunpack.c.h.b16 %v83
  %v1152 = vunpack.c.l.b16 %v84
  %v1153 = vunpack.c.h.b16 %v84
  %v1154 = vpack.c.b16 %v1028, %v1026
  %v1155 = vpack.c.b16 %v1029, %v1027
  %v1156 = vpack.c.b16 %v1032, %v1030
  %v1157 = vpack.c.b16 %v1033, %v1031
  %v1158 = vpack.c.b16 %v1036, %v1034
  %v1159 = vpack.c.b16 %v1037, %v1035
  %v1160 = vpack.c.b16 %v1040, %v1038
  %v1161 = vpack.c.b16 %v1041, %v1039
  %v1162 = vpack.c.b16 %v1044, %v1042
  %v1163 = vpack.c.b16 %v1045, %v1043
  %v1164 = vpack.c.b16 %v1048, %v1046
  %v1165 = vpack.c.b16 %v1049, %v1047
  %v1166 = vpack.c.b16 %v1052, %v1050
  %v1167 = vpack.c.b16 %v1053, %v1051
  %v1168 = vpack.c.b16 %v1056, %v1054
  %v1169 = vpack.c.b16 %v1057, %v1055
  %v1170 = vpack.c.b16 %v1060, %v1058
  %v1171 = vpack.c.b16 %v1061, %v1059
  %v1172 = vpack.c.b16 %v1064, %v1062
  %v1173 = vpack.c.b16 %v1065, %v1063
  %v1174 = vpack.c.b16 %v1068, %v1066
  %v1175 = vpack.c.b16 %v1069, %v1067
  %v1176 = vpack.c.b16 %v1072, %v1070
  %v1177 = vpack.c.b16 %v1073, %v1071
  %v1178 = vpack.c.b16 %v1076, %v1074
  %v1179 = vpack.c.b16 %v1077, %v1075
  %v1180 = vpack.c.b16 %v1080, %v1078
  %v1181 = vpack.c.b16 %v1081, %v1079
  %v1182 = vpack.c.b16 %v1084, %v1082
  %v1183 = vpack.c.b16 %v1085, %v1083
  %v1184 = vpack.c.b16 %v1088, %v1086
  %v1185 = vpack.c.b16 %v1089, %v1087
  %v1186 = vpack.c.b16 %v1092, %v1090
  %v1187 = vpack.c.b16 %v1093, %v1091
  %v1188 = vpack.c.b16 %v1096, %v1094
  %v1189 = vpack.c.b16 %v1097, %v1095
  %v1190 = vpack.c.b16 %v1100, %v1098
  %v1191 = vpack.c.b16 %v1101, %v1099
  %v1192 = vpack.c.b16 %v1104, %v1102
  %v1193 = vpack.c.b16 %v1105, %v1103
  %v1194 = vpack.c.b16 %v1108, %v1106
  %v1195 = vpack.c.b16 %v1109, %v1107
  %v1196 = vpack.c.b16 %v1112, %v1110
  %v1197 = vpack.c.b16 %v1113, %v1111
  %v1198 = vpack.c.b16 %v1116, %v1114
  %v1199 = vpack.c.b16 %v1117, %v1115
  %v1200 = vpack.c.b16 %v1120, %v1118
  %v1201 = vpack.c.b16 %v1121, %v1119
  %v1202 = vpack.c.b16 %v1124, %v1122
  %v1203 = vpack.c.b16 %v1125, %v1123
  %v1204 = vpack.c.b16 %v1128, %v1126
  %v1205 = vpack.c.b16 %v1129, %v1127
  %v1206 = vpack.c.b16 %v1132, %v1130
  %v1207 = vpack.c.b16 %v1133, %v1131
  %v1208 = vpack.c.b16 %v1136, %v1134
  %v1209 = vpack.c.b16 %v1137, %v1135
  %v1210 = vpack.c.b16 %v1140, %v1138
  %v1211 = vpack.c.b16 %v1141, %v1139
  %v1212 = vpack.c.b16 %v1144, %v1142
  %v1213 = vpack.c.b16 %v1145, %v1143
  %v1214 = vpack.c.b16 %v1148, %v1146
  %v1215 = vpack.c.b16 %v1149, %v1147
  %v1216 = vpack.c.b16 %v1152, %v1150
  %v1217 = vpack.c.b16 %v1153, %v1151
  %v1268 = vunpack.c.l.b16 %v85
  %v1269 = vunpack.c.l.b16 %v86
  %v1270 = vunpack.c.l.b16 %v87
  %v1271 = vunpack.c.l.b16 %v88
  %v1272 = vunpack.c.l.b16 %v89
  %v1273 = vunpack.c.l.b16 %v90
  %v1274 = vunpack.c.l.b16 %v91
  %v1275 = vunpack.c.l.b16 %v92
  %v1276 = vunpack.c.l.b16 %v93
  %v1277 = vunpack.c.l.b16 %v94
  %v1278 = vunpack.c.l.b16 %v95
  %v1279 = vunpack.c.l.b16 %v96
  %v1280 = vunpack.c.l.b16 %v97
  %v1281 = vunpack.c.l.b16 %v98
  %v1282 = vunpack.c.l.b16 %v99
  %v1283 = vunpack.c.l.b16 %v100
  %v1284 = vunpack.c.l.b16 %v101
  %v1285 = vunpack.c.l.b16 %v102
  %v1286 = vpack.c.b16 %v1269, %v1268
  %v1287 = vpack.c.b16 %v1271, %v1270
  %v1288 = vpack.c.b16 %v1273, %v1272
  %v1289 = vpack.c.b16 %v1275, %v1274
  %v1290 = vpack.c.b16 %v1277, %v1276
  %v1291 = vpack.c.b16 %v1279, %v1278
  %v1292 = vpack.c.b16 %v1281, %v1280
  %v1293 = vpack.c.b16 %v1283, %v1282
  %v1294 = vpack.c.b16 %v1285, %v1284
  %v1305 = vsel %vm527, %v1155, 0
  %v1308 = vsel %vm527, %v1157, 0
  %v1311 = vsel %vm527, %v1159, 0
  %v1314 = vsel %vm527, %v1161, 0
  %v1317 = vsel %vm527, %v1163, 0
  %v1320 = vsel %vm527, %v1165, 0
  %v1323 = vsel %vm527, %v1167, 0
  %v1326 = vsel %vm527, %v1169, 0
  %v1329 = vsel %vm527, %v1171, 0
  %v1332 = vsel %vm527, %v1173, 0
  %v1335 = vsel %vm527, %v1175, 0
  %v1338 = vsel %vm527, %v1177, 0
  %v1341 = vsel %vm527, %v1179, 0
  %v1344 = vsel %vm527, %v1181, 0
  %v1347 = vsel %vm527, %v1183, 0
  %v1350 = vsel %vm527, %v1185, 0
  %v1353 = vsel %vm527, %v1187, 0
  %v1356 = vsel %vm527, %v1189, 0
  %v1359 = vsel %vm527, %v1191, 0
  %v1362 = vsel %vm527, %v1193, 0
  %v1365 = vsel %vm527, %v1195, 0
  %v1368 = vsel %vm527, %v1197, 0
  %v1371 = vsel %vm527, %v1199, 0
  %v1374 = vsel %vm527, %v1201, 0
  %v1377 = vsel %vm527, %v1203, 0
  %v1380 = vsel %vm527, %v1205, 0
  %v1383 = vsel %vm527, %v1207, 0
  %v1386 = vsel %vm527, %v1209, 0
  %v1389 = vsel %vm527, %v1211, 0
  %v1392 = vsel %vm527, %v1213, 0
  %v1395 = vsel %vm527, %v1215, 0
  %v1398 = vsel %vm527, %v1217, 0
  %1400 = vmatpush.bf16.msra.mxu0 %v1293
  %1401 = vmatpush.bf16.msra.mxu0 %v1292
  %1402 = vmatpush.bf16.msra.mxu0 %v1291
  %1403 = vmatpush.bf16.msra.mxu0 %v1290
  %1404 = vmatpush.bf16.msra.mxu0 %v1289
  %1405 = vmatpush.bf16.msra.mxu0 %v1288
  %1406 = vmatpush.bf16.msra.mxu0 %v1287
  %1407 = vmatpush.bf16.msra.mxu0 %v1286
  %1408 = vmatmul.bf16.gmra.mxu0 %v1154
  %v1409 = vpop.f32.mrf.mxu0
  %v1410 = vadd.f32 %v803, %v1409
  %v1411 = vpop.f32.mrf.mxu0
  %v1412 = vadd.f32 %v805, %v1411
  %1413 = vmatmul.bf16.gmra.mxu0 %v1156
  %v1414 = vpop.f32.mrf.mxu0
  %v1415 = vadd.f32 %v808, %v1414
  %v1416 = vpop.f32.mrf.mxu0
  %v1417 = vadd.f32 %v810, %v1416
  %1418 = vmatmul.bf16.gmra.mxu0 %v1158
  %v1419 = vpop.f32.mrf.mxu0
  %v1420 = vadd.f32 %v813, %v1419
  %v1421 = vpop.f32.mrf.mxu0
  %v1422 = vadd.f32 %v815, %v1421
  %1423 = vmatmul.bf16.gmra.mxu0 %v1160
  %v1424 = vpop.f32.mrf.mxu0
  %v1425 = vadd.f32 %v818, %v1424
  %v1426 = vpop.f32.mrf.mxu0
  %v1427 = vadd.f32 %v820, %v1426
  %1428 = vmatmul.bf16.gmra.mxu0 %v1162
  %v1429 = vpop.f32.mrf.mxu0
  %v1430 = vadd.f32 %v823, %v1429
  %v1431 = vpop.f32.mrf.mxu0
  %v1432 = vadd.f32 %v825, %v1431
  %1433 = vmatmul.bf16.gmra.mxu0 %v1164
  %v1434 = vpop.f32.mrf.mxu0
  %v1435 = vadd.f32 %v828, %v1434
  %v1436 = vpop.f32.mrf.mxu0
  %v1437 = vadd.f32 %v830, %v1436
  %1438 = vmatmul.bf16.gmra.mxu0 %v1166
  %v1439 = vpop.f32.mrf.mxu0
  %v1440 = vadd.f32 %v833, %v1439
  %v1441 = vpop.f32.mrf.mxu0
  %v1442 = vadd.f32 %v835, %v1441
  %1443 = vmatmul.bf16.gmra.mxu0 %v1168
  %v1444 = vpop.f32.mrf.mxu0
  %v1445 = vadd.f32 %v838, %v1444
  %v1446 = vpop.f32.mrf.mxu0
  %v1447 = vadd.f32 %v840, %v1446
  %1448 = vmatmul.bf16.gmra.mxu0 %v1170
  %v1449 = vpop.f32.mrf.mxu0
  %v1450 = vadd.f32 %v843, %v1449
  %v1451 = vpop.f32.mrf.mxu0
  %v1452 = vadd.f32 %v845, %v1451
  %1453 = vmatmul.bf16.gmra.mxu0 %v1172
  %v1454 = vpop.f32.mrf.mxu0
  %v1455 = vadd.f32 %v848, %v1454
  %v1456 = vpop.f32.mrf.mxu0
  %v1457 = vadd.f32 %v850, %v1456
  %1458 = vmatmul.bf16.gmra.mxu0 %v1174
  %v1459 = vpop.f32.mrf.mxu0
  %v1460 = vadd.f32 %v853, %v1459
  %v1461 = vpop.f32.mrf.mxu0
  %v1462 = vadd.f32 %v855, %v1461
  %1463 = vmatmul.bf16.gmra.mxu0 %v1176
  %v1464 = vpop.f32.mrf.mxu0
  %v1465 = vadd.f32 %v858, %v1464
  %v1466 = vpop.f32.mrf.mxu0
  %v1467 = vadd.f32 %v860, %v1466
  %1468 = vmatmul.bf16.gmra.mxu0 %v1178
  %v1469 = vpop.f32.mrf.mxu0
  %v1470 = vadd.f32 %v863, %v1469
  %v1471 = vpop.f32.mrf.mxu0
  %v1472 = vadd.f32 %v865, %v1471
  %1473 = vmatmul.bf16.gmra.mxu0 %v1180
  %v1474 = vpop.f32.mrf.mxu0
  %v1475 = vadd.f32 %v868, %v1474
  %v1476 = vpop.f32.mrf.mxu0
  %v1477 = vadd.f32 %v870, %v1476
  %1478 = vmatmul.bf16.gmra.mxu0 %v1182
  %v1479 = vpop.f32.mrf.mxu0
  %v1480 = vadd.f32 %v873, %v1479
  %v1481 = vpop.f32.mrf.mxu0
  %v1482 = vadd.f32 %v875, %v1481
  %1483 = vmatmul.bf16.gmra.mxu0 %v1184
  %v1484 = vpop.f32.mrf.mxu0
  %v1485 = vadd.f32 %v878, %v1484
  %v1486 = vpop.f32.mrf.mxu0
  %v1487 = vadd.f32 %v880, %v1486
  %1488 = vmatmul.bf16.gmra.mxu0 %v1186
  %v1489 = vpop.f32.mrf.mxu0
  %v1490 = vadd.f32 %v883, %v1489
  %v1491 = vpop.f32.mrf.mxu0
  %v1492 = vadd.f32 %v885, %v1491
  %1493 = vmatmul.bf16.gmra.mxu0 %v1188
  %v1494 = vpop.f32.mrf.mxu0
  %v1495 = vadd.f32 %v888, %v1494
  %v1496 = vpop.f32.mrf.mxu0
  %v1497 = vadd.f32 %v890, %v1496
  %1498 = vmatmul.bf16.gmra.mxu0 %v1190
  %v1499 = vpop.f32.mrf.mxu0
  %v1500 = vadd.f32 %v893, %v1499
  %v1501 = vpop.f32.mrf.mxu0
  %v1502 = vadd.f32 %v895, %v1501
  %1503 = vmatmul.bf16.gmra.mxu0 %v1192
  %v1504 = vpop.f32.mrf.mxu0
  %v1505 = vadd.f32 %v898, %v1504
  %v1506 = vpop.f32.mrf.mxu0
  %v1507 = vadd.f32 %v900, %v1506
  %1508 = vmatmul.bf16.gmra.mxu0 %v1194
  %v1509 = vpop.f32.mrf.mxu0
  %v1510 = vadd.f32 %v903, %v1509
  %v1511 = vpop.f32.mrf.mxu0
  %v1512 = vadd.f32 %v905, %v1511
  %1513 = vmatmul.bf16.gmra.mxu0 %v1196
  %v1514 = vpop.f32.mrf.mxu0
  %v1515 = vadd.f32 %v908, %v1514
  %v1516 = vpop.f32.mrf.mxu0
  %v1517 = vadd.f32 %v910, %v1516
  %1518 = vmatmul.bf16.gmra.mxu0 %v1198
  %v1519 = vpop.f32.mrf.mxu0
  %v1520 = vadd.f32 %v913, %v1519
  %v1521 = vpop.f32.mrf.mxu0
  %v1522 = vadd.f32 %v915, %v1521
  %1523 = vmatmul.bf16.gmra.mxu0 %v1200
  %v1524 = vpop.f32.mrf.mxu0
  %v1525 = vadd.f32 %v918, %v1524
  %v1526 = vpop.f32.mrf.mxu0
  %v1527 = vadd.f32 %v920, %v1526
  %1528 = vmatmul.bf16.gmra.mxu0 %v1202
  %v1529 = vpop.f32.mrf.mxu0
  %v1530 = vadd.f32 %v923, %v1529
  %v1531 = vpop.f32.mrf.mxu0
  %v1532 = vadd.f32 %v925, %v1531
  %1533 = vmatmul.bf16.gmra.mxu0 %v1204
  %v1534 = vpop.f32.mrf.mxu0
  %v1535 = vadd.f32 %v928, %v1534
  %v1536 = vpop.f32.mrf.mxu0
  %v1537 = vadd.f32 %v930, %v1536
  %1538 = vmatmul.bf16.gmra.mxu0 %v1206
  %v1539 = vpop.f32.mrf.mxu0
  %v1540 = vadd.f32 %v933, %v1539
  %v1541 = vpop.f32.mrf.mxu0
  %v1542 = vadd.f32 %v935, %v1541
  %1543 = vmatmul.bf16.gmra.mxu0 %v1208
  %v1544 = vpop.f32.mrf.mxu0
  %v1545 = vadd.f32 %v938, %v1544
  %v1546 = vpop.f32.mrf.mxu0
  %v1547 = vadd.f32 %v940, %v1546
  %1548 = vmatmul.bf16.gmra.mxu0 %v1210
  %v1549 = vpop.f32.mrf.mxu0
  %v1550 = vadd.f32 %v943, %v1549
  %v1551 = vpop.f32.mrf.mxu0
  %v1552 = vadd.f32 %v945, %v1551
  %1553 = vmatmul.bf16.gmra.mxu0 %v1212
  %v1554 = vpop.f32.mrf.mxu0
  %v1555 = vadd.f32 %v948, %v1554
  %v1556 = vpop.f32.mrf.mxu0
  %v1557 = vadd.f32 %v950, %v1556
  %1558 = vmatmul.bf16.gmra.mxu0 %v1214
  %v1559 = vpop.f32.mrf.mxu0
  %v1560 = vadd.f32 %v953, %v1559
  %v1561 = vpop.f32.mrf.mxu0
  %v1562 = vadd.f32 %v955, %v1561
  %1563 = vmatmul.bf16.gmra.mxu0 %v1216
  %v1564 = vpop.f32.mrf.mxu0
  %v1565 = vadd.f32 %v958, %v1564
  %v1566 = vpop.f32.mrf.mxu0
  %v1567 = vadd.f32 %v960, %v1566
  %1568 = vdwg.mxu0
  %1569 = vmatpush.bf16.msra.mxu0 0
  %1570 = vmatpush.bf16.msra.mxu0 0
  %1571 = vmatpush.bf16.msra.mxu0 0
  %1572 = vmatpush.bf16.msra.mxu0 0
  %1573 = vmatpush.bf16.msra.mxu0 0
  %1574 = vmatpush.bf16.msra.mxu0 0
  %1575 = vmatpush.bf16.msra.mxu0 0
  %1576 = vmatpush.bf16.msra.mxu0 %v1294
  %1577 = vmatmul.bf16.gmra.mxu0 %v1305
  %v1578 = vpop.f32.mrf.mxu0
  %v1579 = vadd.f32 %v1410, %v1578
  %v1580 = vpop.f32.mrf.mxu0
  %v1581 = vadd.f32 %v1412, %v1580
  %1582 = vmatmul.bf16.gmra.mxu0 %v1308
  %v1583 = vpop.f32.mrf.mxu0
  %v1584 = vadd.f32 %v1415, %v1583
  %v1585 = vpop.f32.mrf.mxu0
  %v1586 = vadd.f32 %v1417, %v1585
  %1587 = vmatmul.bf16.gmra.mxu0 %v1311
  %v1588 = vpop.f32.mrf.mxu0
  %v1589 = vadd.f32 %v1420, %v1588
  %v1590 = vpop.f32.mrf.mxu0
  %v1591 = vadd.f32 %v1422, %v1590
  %1592 = vmatmul.bf16.gmra.mxu0 %v1314
  %v1593 = vpop.f32.mrf.mxu0
  %v1594 = vadd.f32 %v1425, %v1593
  %v1595 = vpop.f32.mrf.mxu0
  %v1596 = vadd.f32 %v1427, %v1595
  %1597 = vmatmul.bf16.gmra.mxu0 %v1317
  %v1598 = vpop.f32.mrf.mxu0
  %v1599 = vadd.f32 %v1430, %v1598
  %v1600 = vpop.f32.mrf.mxu0
  %v1601 = vadd.f32 %v1432, %v1600
  %1602 = vmatmul.bf16.gmra.mxu0 %v1320
  %v1603 = vpop.f32.mrf.mxu0
  %v1604 = vadd.f32 %v1435, %v1603
  %v1605 = vpop.f32.mrf.mxu0
  %v1606 = vadd.f32 %v1437, %v1605
  %1607 = vmatmul.bf16.gmra.mxu0 %v1323
  %v1608 = vpop.f32.mrf.mxu0
  %v1609 = vadd.f32 %v1440, %v1608
  %v1610 = vpop.f32.mrf.mxu0
  %v1611 = vadd.f32 %v1442, %v1610
  %1612 = vmatmul.bf16.gmra.mxu0 %v1326
  %v1613 = vpop.f32.mrf.mxu0
  %v1614 = vadd.f32 %v1445, %v1613
  %v1615 = vpop.f32.mrf.mxu0
  %v1616 = vadd.f32 %v1447, %v1615
  %1617 = vmatmul.bf16.gmra.mxu0 %v1329
  %v1618 = vpop.f32.mrf.mxu0
  %v1619 = vadd.f32 %v1450, %v1618
  %v1620 = vpop.f32.mrf.mxu0
  %v1621 = vadd.f32 %v1452, %v1620
  %1622 = vmatmul.bf16.gmra.mxu0 %v1332
  %v1623 = vpop.f32.mrf.mxu0
  %v1624 = vadd.f32 %v1455, %v1623
  %v1625 = vpop.f32.mrf.mxu0
  %v1626 = vadd.f32 %v1457, %v1625
  %1627 = vmatmul.bf16.gmra.mxu0 %v1335
  %v1628 = vpop.f32.mrf.mxu0
  %v1629 = vadd.f32 %v1460, %v1628
  %v1630 = vpop.f32.mrf.mxu0
  %v1631 = vadd.f32 %v1462, %v1630
  %1632 = vmatmul.bf16.gmra.mxu0 %v1338
  %v1633 = vpop.f32.mrf.mxu0
  %v1634 = vadd.f32 %v1465, %v1633
  %v1635 = vpop.f32.mrf.mxu0
  %v1636 = vadd.f32 %v1467, %v1635
  %1637 = vmatmul.bf16.gmra.mxu0 %v1341
  %v1638 = vpop.f32.mrf.mxu0
  %v1639 = vadd.f32 %v1470, %v1638
  %v1640 = vpop.f32.mrf.mxu0
  %v1641 = vadd.f32 %v1472, %v1640
  %1642 = vmatmul.bf16.gmra.mxu0 %v1344
  %v1643 = vpop.f32.mrf.mxu0
  %v1644 = vadd.f32 %v1475, %v1643
  %v1645 = vpop.f32.mrf.mxu0
  %v1646 = vadd.f32 %v1477, %v1645
  %1647 = vmatmul.bf16.gmra.mxu0 %v1347
  %v1648 = vpop.f32.mrf.mxu0
  %v1649 = vadd.f32 %v1480, %v1648
  %v1650 = vpop.f32.mrf.mxu0
  %v1651 = vadd.f32 %v1482, %v1650
  %1652 = vmatmul.bf16.gmra.mxu0 %v1350
  %v1653 = vpop.f32.mrf.mxu0
  %v1654 = vadd.f32 %v1485, %v1653
  %v1655 = vpop.f32.mrf.mxu0
  %v1656 = vadd.f32 %v1487, %v1655
  %1657 = vmatmul.bf16.gmra.mxu0 %v1353
  %v1658 = vpop.f32.mrf.mxu0
  %v1659 = vadd.f32 %v1490, %v1658
  %v1660 = vpop.f32.mrf.mxu0
  %v1661 = vadd.f32 %v1492, %v1660
  %1662 = vmatmul.bf16.gmra.mxu0 %v1356
  %v1663 = vpop.f32.mrf.mxu0
  %v1664 = vadd.f32 %v1495, %v1663
  %v1665 = vpop.f32.mrf.mxu0
  %v1666 = vadd.f32 %v1497, %v1665
  %1667 = vmatmul.bf16.gmra.mxu0 %v1359
  %v1668 = vpop.f32.mrf.mxu0
  %v1669 = vadd.f32 %v1500, %v1668
  %v1670 = vpop.f32.mrf.mxu0
  %v1671 = vadd.f32 %v1502, %v1670
  %1672 = vmatmul.bf16.gmra.mxu0 %v1362
  %v1673 = vpop.f32.mrf.mxu0
  %v1674 = vadd.f32 %v1505, %v1673
  %v1675 = vpop.f32.mrf.mxu0
  %v1676 = vadd.f32 %v1507, %v1675
  %1677 = vmatmul.bf16.gmra.mxu0 %v1365
  %v1678 = vpop.f32.mrf.mxu0
  %v1679 = vadd.f32 %v1510, %v1678
  %v1680 = vpop.f32.mrf.mxu0
  %v1681 = vadd.f32 %v1512, %v1680
  %1682 = vmatmul.bf16.gmra.mxu0 %v1368
  %v1683 = vpop.f32.mrf.mxu0
  %v1684 = vadd.f32 %v1515, %v1683
  %v1685 = vpop.f32.mrf.mxu0
  %v1686 = vadd.f32 %v1517, %v1685
  %1687 = vmatmul.bf16.gmra.mxu0 %v1371
  %v1688 = vpop.f32.mrf.mxu0
  %v1689 = vadd.f32 %v1520, %v1688
  %v1690 = vpop.f32.mrf.mxu0
  %v1691 = vadd.f32 %v1522, %v1690
  %1692 = vmatmul.bf16.gmra.mxu0 %v1374
  %v1693 = vpop.f32.mrf.mxu0
  %v1694 = vadd.f32 %v1525, %v1693
  %v1695 = vpop.f32.mrf.mxu0
  %v1696 = vadd.f32 %v1527, %v1695
  %1697 = vmatmul.bf16.gmra.mxu0 %v1377
  %v1698 = vpop.f32.mrf.mxu0
  %v1699 = vadd.f32 %v1530, %v1698
  %v1700 = vpop.f32.mrf.mxu0
  %v1701 = vadd.f32 %v1532, %v1700
  %1702 = vmatmul.bf16.gmra.mxu0 %v1380
  %v1703 = vpop.f32.mrf.mxu0
  %v1704 = vadd.f32 %v1535, %v1703
  %v1705 = vpop.f32.mrf.mxu0
  %v1706 = vadd.f32 %v1537, %v1705
  %1707 = vmatmul.bf16.gmra.mxu0 %v1383
  %v1708 = vpop.f32.mrf.mxu0
  %v1709 = vadd.f32 %v1540, %v1708
  %v1710 = vpop.f32.mrf.mxu0
  %v1711 = vadd.f32 %v1542, %v1710
  %1712 = vmatmul.bf16.gmra.mxu0 %v1386
  %v1713 = vpop.f32.mrf.mxu0
  %v1714 = vadd.f32 %v1545, %v1713
  %v1715 = vpop.f32.mrf.mxu0
  %v1716 = vadd.f32 %v1547, %v1715
  %1717 = vmatmul.bf16.gmra.mxu0 %v1389
  %v1718 = vpop.f32.mrf.mxu0
  %v1719 = vadd.f32 %v1550, %v1718
  %v1720 = vpop.f32.mrf.mxu0
  %v1721 = vadd.f32 %v1552, %v1720
  %1722 = vmatmul.bf16.gmra.mxu0 %v1392
  %v1723 = vpop.f32.mrf.mxu0
  %v1724 = vadd.f32 %v1555, %v1723
  %v1725 = vpop.f32.mrf.mxu0
  %v1726 = vadd.f32 %v1557, %v1725
  %1727 = vmatmul.bf16.gmra.mxu0 %v1395
  %v1728 = vpop.f32.mrf.mxu0
  %v1729 = vadd.f32 %v1560, %v1728
  %v1730 = vpop.f32.mrf.mxu0
  %v1731 = vadd.f32 %v1562, %v1730
  %1732 = vmatmul.bf16.gmra.mxu0 %v1398
  %v1733 = vpop.f32.mrf.mxu0
  %v1734 = vadd.f32 %v1565, %v1733
  %v1735 = vpop.f32.mrf.mxu0
  %v1736 = vadd.f32 %v1567, %v1735
  %1737 = vdwg.mxu0
  %v1738 = vld [vmem:[%s4] sm:$0x1]
  %v1740 = vperm.slane %v1738, 0
  %v1742 = vadd.f32 %v1579, %v1740
  %v1743 = vadd.f32 %v1581, %v1740
  %v1744 = vadd.f32 %v1584, %v1740
  %v1745 = vadd.f32 %v1586, %v1740
  %v1746 = vadd.f32 %v1589, %v1740
  %v1747 = vadd.f32 %v1591, %v1740
  %v1748 = vadd.f32 %v1594, %v1740
  %v1749 = vadd.f32 %v1596, %v1740
  %v1750 = vadd.f32 %v1599, %v1740
  %v1751 = vadd.f32 %v1601, %v1740
  %v1752 = vadd.f32 %v1604, %v1740
  %v1753 = vadd.f32 %v1606, %v1740
  %v1754 = vadd.f32 %v1609, %v1740
  %v1755 = vadd.f32 %v1611, %v1740
  %v1756 = vadd.f32 %v1614, %v1740
  %v1757 = vadd.f32 %v1616, %v1740
  %v1758 = vadd.f32 %v1619, %v1740
  %v1759 = vadd.f32 %v1621, %v1740
  %v1760 = vadd.f32 %v1624, %v1740
  %v1761 = vadd.f32 %v1626, %v1740
  %v1762 = vadd.f32 %v1629, %v1740
  %v1763 = vadd.f32 %v1631, %v1740
  %v1764 = vadd.f32 %v1634, %v1740
  %v1765 = vadd.f32 %v1636, %v1740
  %v1766 = vadd.f32 %v1639, %v1740
  %v1767 = vadd.f32 %v1641, %v1740
  %v1768 = vadd.f32 %v1644, %v1740
  %v1769 = vadd.f32 %v1646, %v1740
  %v1770 = vadd.f32 %v1649, %v1740
  %v1771 = vadd.f32 %v1651, %v1740
  %v1772 = vadd.f32 %v1654, %v1740
  %v1773 = vadd.f32 %v1656, %v1740
  %v1774 = vadd.f32 %v1659, %v1740
  %v1775 = vadd.f32 %v1661, %v1740
  %v1776 = vadd.f32 %v1664, %v1740
  %v1777 = vadd.f32 %v1666, %v1740
  %v1778 = vadd.f32 %v1669, %v1740
  %v1779 = vadd.f32 %v1671, %v1740
  %v1780 = vadd.f32 %v1674, %v1740
  %v1781 = vadd.f32 %v1676, %v1740
  %v1782 = vadd.f32 %v1679, %v1740
  %v1783 = vadd.f32 %v1681, %v1740
  %v1784 = vadd.f32 %v1684, %v1740
  %v1785 = vadd.f32 %v1686, %v1740
  %v1786 = vadd.f32 %v1689, %v1740
  %v1787 = vadd.f32 %v1691, %v1740
  %v1788 = vadd.f32 %v1694, %v1740
  %v1789 = vadd.f32 %v1696, %v1740
  %v1790 = vadd.f32 %v1699, %v1740
  %v1791 = vadd.f32 %v1701, %v1740
  %v1792 = vadd.f32 %v1704, %v1740
  %v1793 = vadd.f32 %v1706, %v1740
  %v1794 = vadd.f32 %v1709, %v1740
  %v1795 = vadd.f32 %v1711, %v1740
  %v1796 = vadd.f32 %v1714, %v1740
  %v1797 = vadd.f32 %v1716, %v1740
  %v1798 = vadd.f32 %v1719, %v1740
  %v1799 = vadd.f32 %v1721, %v1740
  %v1800 = vadd.f32 %v1724, %v1740
  %v1801 = vadd.f32 %v1726, %v1740
  %v1802 = vadd.f32 %v1729, %v1740
  %v1803 = vadd.f32 %v1731, %v1740
  %v1804 = vadd.f32 %v1734, %v1740
  %v1805 = vadd.f32 %v1736, %v1740
  %v1806 = vmax.f32 %v1742, 0.0
  %v1807 = vmax.f32 %v1743, 0.0
  %v1808 = vmax.f32 %v1744, 0.0
  %v1809 = vmax.f32 %v1745, 0.0
  %v1810 = vmax.f32 %v1746, 0.0
  %v1811 = vmax.f32 %v1747, 0.0
  %v1812 = vmax.f32 %v1748, 0.0
  %v1813 = vmax.f32 %v1749, 0.0
  %v1814 = vmax.f32 %v1750, 0.0
  %v1815 = vmax.f32 %v1751, 0.0
  %v1816 = vmax.f32 %v1752, 0.0
  %v1817 = vmax.f32 %v1753, 0.0
  %v1818 = vmax.f32 %v1754, 0.0
  %v1819 = vmax.f32 %v1755, 0.0
  %v1820 = vmax.f32 %v1756, 0.0
  %v1821 = vmax.f32 %v1757, 0.0
  %v1822 = vmax.f32 %v1758, 0.0
  %v1823 = vmax.f32 %v1759, 0.0
  %v1824 = vmax.f32 %v1760, 0.0
  %v1825 = vmax.f32 %v1761, 0.0
  %v1826 = vmax.f32 %v1762, 0.0
  %v1827 = vmax.f32 %v1763, 0.0
  %v1828 = vmax.f32 %v1764, 0.0
  %v1829 = vmax.f32 %v1765, 0.0
  %v1830 = vmax.f32 %v1766, 0.0
  %v1831 = vmax.f32 %v1767, 0.0
  %v1832 = vmax.f32 %v1768, 0.0
  %v1833 = vmax.f32 %v1769, 0.0
  %v1834 = vmax.f32 %v1770, 0.0
  %v1835 = vmax.f32 %v1771, 0.0
  %v1836 = vmax.f32 %v1772, 0.0
  %v1837 = vmax.f32 %v1773, 0.0
  %v1838 = vmax.f32 %v1774, 0.0
  %v1839 = vmax.f32 %v1775, 0.0
  %v1840 = vmax.f32 %v1776, 0.0
  %v1841 = vmax.f32 %v1777, 0.0
  %v1842 = vmax.f32 %v1778, 0.0
  %v1843 = vmax.f32 %v1779, 0.0
  %v1844 = vmax.f32 %v1780, 0.0
  %v1845 = vmax.f32 %v1781, 0.0
  %v1846 = vmax.f32 %v1782, 0.0
  %v1847 = vmax.f32 %v1783, 0.0
  %v1848 = vmax.f32 %v1784, 0.0
  %v1849 = vmax.f32 %v1785, 0.0
  %v1850 = vmax.f32 %v1786, 0.0
  %v1851 = vmax.f32 %v1787, 0.0
  %v1852 = vmax.f32 %v1788, 0.0
  %v1853 = vmax.f32 %v1789, 0.0
  %v1854 = vmax.f32 %v1790, 0.0
  %v1855 = vmax.f32 %v1791, 0.0
  %v1856 = vmax.f32 %v1792, 0.0
  %v1857 = vmax.f32 %v1793, 0.0
  %v1858 = vmax.f32 %v1794, 0.0
  %v1859 = vmax.f32 %v1795, 0.0
  %v1860 = vmax.f32 %v1796, 0.0
  %v1861 = vmax.f32 %v1797, 0.0
  %v1862 = vmax.f32 %v1798, 0.0
  %v1863 = vmax.f32 %v1799, 0.0
  %v1864 = vmax.f32 %v1800, 0.0
  %v1865 = vmax.f32 %v1801, 0.0
  %v1866 = vmax.f32 %v1802, 0.0
  %v1867 = vmax.f32 %v1803, 0.0
  %v1868 = vmax.f32 %v1804, 0.0
  %v1869 = vmax.f32 %v1805, 0.0
  %1870 = vst.msk [vmem:[%s5] sm:$0xff] %vm527, %v1806
  %1871 = vst.msk [vmem:[%s5 + $0x8] sm:$0xff] %vm527, %v1807
  %1872 = vst.msk [vmem:[%s5 + $0x10] sm:$0xff] %vm527, %v1808
  %1873 = vst.msk [vmem:[%s5 + $0x18] sm:$0xff] %vm527, %v1809
  %1874 = vst.msk [vmem:[%s5 + $0x20] sm:$0xff] %vm527, %v1810
  %1875 = vst.msk [vmem:[%s5 + $0x28] sm:$0xff] %vm527, %v1811
  %1876 = vst.msk [vmem:[%s5 + $0x30] sm:$0xff] %vm527, %v1812
  %1877 = vst.msk [vmem:[%s5 + $0x38] sm:$0xff] %vm527, %v1813
  %1878 = vst.msk [vmem:[%s5 + $0x40] sm:$0xff] %vm527, %v1814
  %1879 = vst.msk [vmem:[%s5 + $0x48] sm:$0xff] %vm527, %v1815
  %1880 = vst.msk [vmem:[%s5 + $0x50] sm:$0xff] %vm527, %v1816
  %1881 = vst.msk [vmem:[%s5 + $0x58] sm:$0xff] %vm527, %v1817
  %1882 = vst.msk [vmem:[%s5 + $0x60] sm:$0xff] %vm527, %v1818
  %1883 = vst.msk [vmem:[%s5 + $0x68] sm:$0xff] %vm527, %v1819
  %1884 = vst.msk [vmem:[%s5 + $0x70] sm:$0xff] %vm527, %v1820
  %1885 = vst.msk [vmem:[%s5 + $0x78] sm:$0xff] %vm527, %v1821
  %1886 = vst.msk [vmem:[%s5 + $0x80] sm:$0xff] %vm527, %v1822
  %1887 = vst.msk [vmem:[%s5 + $0x88] sm:$0xff] %vm527, %v1823
  %1888 = vst.msk [vmem:[%s5 + $0x90] sm:$0xff] %vm527, %v1824
  %1889 = vst.msk [vmem:[%s5 + $0x98] sm:$0xff] %vm527, %v1825
  %1890 = vst.msk [vmem:[%s5 + $0xa0] sm:$0xff] %vm527, %v1826
  %1891 = vst.msk [vmem:[%s5 + $0xa8] sm:$0xff] %vm527, %v1827
  %1892 = vst.msk [vmem:[%s5 + $0xb0] sm:$0xff] %vm527, %v1828
  %1893 = vst.msk [vmem:[%s5 + $0xb8] sm:$0xff] %vm527, %v1829
  %1894 = vst.msk [vmem:[%s5 + $0xc0] sm:$0xff] %vm527, %v1830
  %1895 = vst.msk [vmem:[%s5 + $0xc8] sm:$0xff] %vm527, %v1831
  %1896 = vst.msk [vmem:[%s5 + $0xd0] sm:$0xff] %vm527, %v1832
  %1897 = vst.msk [vmem:[%s5 + $0xd8] sm:$0xff] %vm527, %v1833
  %1898 = vst.msk [vmem:[%s5 + $0xe0] sm:$0xff] %vm527, %v1834
  %1899 = vst.msk [vmem:[%s5 + $0xe8] sm:$0xff] %vm527, %v1835
  %1900 = vst.msk [vmem:[%s5 + $0xf0] sm:$0xff] %vm527, %v1836
  %1901 = vst.msk [vmem:[%s5 + $0xf8] sm:$0xff] %vm527, %v1837
  %1902 = vst.msk [vmem:[%s5 + $0x100] sm:$0xff] %vm527, %v1838
  %1903 = vst.msk [vmem:[%s5 + $0x108] sm:$0xff] %vm527, %v1839
  %1904 = vst.msk [vmem:[%s5 + $0x110] sm:$0xff] %vm527, %v1840
  %1905 = vst.msk [vmem:[%s5 + $0x118] sm:$0xff] %vm527, %v1841
  %1906 = vst.msk [vmem:[%s5 + $0x120] sm:$0xff] %vm527, %v1842
  %1907 = vst.msk [vmem:[%s5 + $0x128] sm:$0xff] %vm527, %v1843
  %1908 = vst.msk [vmem:[%s5 + $0x130] sm:$0xff] %vm527, %v1844
  %1909 = vst.msk [vmem:[%s5 + $0x138] sm:$0xff] %vm527, %v1845
  %1910 = vst.msk [vmem:[%s5 + $0x140] sm:$0xff] %vm527, %v1846
  %1911 = vst.msk [vmem:[%s5 + $0x148] sm:$0xff] %vm527, %v1847
  %1912 = vst.msk [vmem:[%s5 + $0x150] sm:$0xff] %vm527, %v1848
  %1913 = vst.msk [vmem:[%s5 + $0x158] sm:$0xff] %vm527, %v1849
  %1914 = vst.msk [vmem:[%s5 + $0x160] sm:$0xff] %vm527, %v1850
  %1915 = vst.msk [vmem:[%s5 + $0x168] sm:$0xff] %vm527, %v1851
  %1916 = vst.msk [vmem:[%s5 + $0x170] sm:$0xff] %vm527, %v1852
  %1917 = vst.msk [vmem:[%s5 + $0x178] sm:$0xff] %vm527, %v1853
  %1918 = vst.msk [vmem:[%s5 + $0x180] sm:$0xff] %vm527, %v1854
  %1919 = vst.msk [vmem:[%s5 + $0x188] sm:$0xff] %vm527, %v1855
  %1920 = vst.msk [vmem:[%s5 + $0x190] sm:$0xff] %vm527, %v1856
  %1921 = vst.msk [vmem:[%s5 + $0x198] sm:$0xff] %vm527, %v1857
  %1922 = vst.msk [vmem:[%s5 + $0x1a0] sm:$0xff] %vm527, %v1858
  %1923 = vst.msk [vmem:[%s5 + $0x1a8] sm:$0xff] %vm527, %v1859
  %1924 = vst.msk [vmem:[%s5 + $0x1b0] sm:$0xff] %vm527, %v1860
  %1925 = vst.msk [vmem:[%s5 + $0x1b8] sm:$0xff] %vm527, %v1861
  %1926 = vst.msk [vmem:[%s5 + $0x1c0] sm:$0xff] %vm527, %v1862
  %1927 = vst.msk [vmem:[%s5 + $0x1c8] sm:$0xff] %vm527, %v1863
  %1928 = vst.msk [vmem:[%s5 + $0x1d0] sm:$0xff] %vm527, %v1864
  %1929 = vst.msk [vmem:[%s5 + $0x1d8] sm:$0xff] %vm527, %v1865
  %1930 = vst.msk [vmem:[%s5 + $0x1e0] sm:$0xff] %vm527, %v1866
  %1931 = vst.msk [vmem:[%s5 + $0x1e8] sm:$0xff] %vm527, %v1867
  %1932 = vst.msk [vmem:[%s5 + $0x1f0] sm:$0xff] %vm527, %v1868
  %1933 = vst.msk [vmem:[%s5 + $0x1f8] sm:$0xff] %vm527, %v1869
  // Predicated region
  $region22: #{unet2d_forward.51} parent=0 // pred_check
    _
  $region23: #{unet2d_forward.51} parent=0 // pred_check_branch
    %1935 = sbr.rel (0) target = $region25
  $region24: #{unet2d_forward.51} parent=0 // pred_region
    _
  $region25: #{unet2d_forward.51} parent=0 // pred_fallthru
    _
  // Predicated region
  $region26: #{unet2d_forward.51} parent=0 // pred_check
    _
  $region27: #{unet2d_forward.51} parent=0 // pred_check_branch
    %1937 = sbr.rel (0) target = $region29
  $region28: #{unet2d_forward.51} parent=0 // pred_region
    _
  $region29: #{unet2d_forward.51} parent=0 // pred_fallthru
    _

</llo_original>
